<compile_context>
chip_gen: v5e
topology: v5e:2x2
jax: 0.10.0
libtpu: 0.0.40
codegen_flags: <defaults>
</compile_context>

<pallas_src>
import jax
import jax.numpy as jnp
from jax.experimental import pallas as pl
from jax.experimental.pallas import tpu as pltpu


def _round_up(a, b):
    return (a + b - 1) // b * b


# ---------------------------------------------------------------------------
# Fused UpConv kernel
# ---------------------------------------------------------------------------
def upconv_pallas(x1t, x2f, p, *, H, W):
    N, HW, Cin = x1t.shape
    Cout = p["w1k"].shape[1]
    Ho, Wo = 2 * H, 2 * W
    S = Ho * Wo
    CP = max(Cin, Cout)
    ALIGN = max(128, _round_up(Wo + 1, 128))   # lane-aligned halo, >= Wo+1
    WIDE = S + 2 * ALIGN

    def kernel(x1_ref, x2_ref, wt_ref, bt_ref,
               w1_ref, s1_ref, b1_ref, w2_ref, s2_ref, b2_ref,
               wd_ref, bd_ref, o_ref, xpad_ref):

        # ---- boundary masks (in-kernel iota; only left/right are needed) ----
        xpos = jax.lax.broadcasted_iota(jnp.int32, (1, S), 1) % Wo
        not_l = xpos > 0
        not_r = xpos < (Wo - 1)

        # ---- zero-fill the flat halo once per image (both sides) -----------
        zeros_halo = jnp.zeros((CP, ALIGN), jnp.float32)
        xpad_ref[:, 0:ALIGN] = zeros_halo
        xpad_ref[:, ALIGN + S:WIDE] = zeros_halo

        # ------------------------------------------------------------------
        # 1) ConvTranspose2d(Cin, Cin, 2, stride=2) + 2x2 interleave + skip
        #    x1 comes in pre-transposed (HW, Cin); one matmul, columns
        #    ordered (a, b, co) for the 2x2 kernel offsets.
        # ------------------------------------------------------------------
        d = jnp.dot(x1_ref[0], wt_ref[...],
                    preferred_element_type=jnp.float32)            # (HW, 4*Cin)

        def row_interleave(a, b):                                   # rows alternate a, b
            R, C = a.shape
            ab = jnp.concatenate([a.reshape(R, 1, C), b.reshape(R, 1, C)], axis=1)
            return ab.reshape(2 * R, C)

        # x-interleave: rows become h*2W + (2w + b)
        m0 = row_interleave(d[:, 0 * Cin:1 * Cin], d[:, 1 * Cin:2 * Cin])   # a = 0
        m1 = row_interleave(d[:, 2 * Cin:3 * Cin], d[:, 3 * Cin:4 * Cin])   # a = 1
        # y-interleave: rows become (2h+a)*2W + x
        up = jnp.concatenate([m0.reshape(H, 1, Wo, Cin),
                              m1.reshape(H, 1, Wo, Cin)], axis=1).reshape(S, Cin)

        # channels-major, deconv bias + skip connection, staged into scratch
        x = up.T + bt_ref[...] + x2_ref[0]                          # (Cin, S)
        xpad_ref[0:Cin, ALIGN:ALIGN + S] = x

        # 1x1 downsample residual straight into the output block
        o_ref[0] = jnp.dot(wd_ref[...], x,
                           preferred_element_type=jnp.float32) + bd_ref[...]

        # ------------------------------------------------------------------
        # 3x3 conv as 9 per-tap matmuls accumulated in f32.
        # Top/bottom borders come from the zero halo; only dx=+-1 need masks.
        # ------------------------------------------------------------------
        def conv3x3(C, w_ref):
            # center tap: aligned, unmasked
            acc = jnp.dot(w_ref[4], xpad_ref[0:C, ALIGN:ALIGN + S],
                          preferred_element_type=jnp.float32)        # (Cout, S)
            k = 0
            for dy in (-1, 0, 1):
                for dx in (-1, 0, 1):
                    if dy == 0 and dx == 0:
                        k += 1
                        continue
                    off = ALIGN + dy * Wo + dx
                    tap = xpad_ref[0:C, off:off + S]                  # contiguous slice
                    if dx == -1:
                        tap = jnp.where(not_l, tap, 0.0)
                    elif dx == 1:
                        tap = jnp.where(not_r, tap, 0.0)
                    acc = acc + jnp.dot(w_ref[k], tap,
                                        preferred_element_type=jnp.float32)
                    k += 1
            return acc

        # 2) conv1 3x3 + bn1 (folded) + relu
        h1 = jnp.maximum(conv3x3(Cin, w1_ref) * s1_ref[...] + b1_ref[...], 0.0)
        xpad_ref[0:Cout, ALIGN:ALIGN + S] = h1

        # 3) conv2 3x3 + bn2 (folded)
        h2 = conv3x3(Cout, w2_ref) * s2_ref[...] + b2_ref[...]

        # 4) add residual (already in o_ref) + relu
        o_ref[0] = jnp.maximum(h2 + o_ref[0], 0.0)                    # (Cout, S)

    def rep(a):
        nd = a.ndim
        return pl.BlockSpec(a.shape, lambda n, _nd=nd: (0,) * _nd)

    # scoped-VMEM budget: declared scratch + double-buffered blocks + weights
    # + headroom for in-kernel temporaries.
    f32b = 4
    need = (CP * WIDE
            + 2 * (HW * Cin + Cin * S + Cout * S)
            + (4 * Cin * Cin + 9 * Cout * Cin + 9 * Cout * Cout + Cout * Cin)
            + (4 * Cin * HW + Cin * S + 4 * CP * S)) * f32b
    vmem_limit = int(min(max(2 * need, 32 * 1024 * 1024), 100 * 1024 * 1024))

    return pl.pallas_call(
        kernel,
        out_shape=jax.ShapeDtypeStruct((N, Cout, S), jnp.float32),
        grid=(N,),
        in_specs=[
            pl.BlockSpec((1, HW, Cin), lambda n: (n, 0, 0)),
            pl.BlockSpec((1, Cin, S), lambda n: (n, 0, 0)),
            rep(p["wt"]), rep(p["bt"]),
            rep(p["w1k"]), rep(p["s1"]), rep(p["b1"]),
            rep(p["w2k"]), rep(p["s2"]), rep(p["b2"]),
            rep(p["wd"]), rep(p["bd"]),
        ],
        out_specs=pl.BlockSpec((1, Cout, S), lambda n: (n, 0, 0)),
        scratch_shapes=[
            pltpu.VMEM((CP, WIDE), jnp.float32),    # flat padded activation
        ],
        compiler_params=pltpu.CompilerParams(
            dimension_semantics=("parallel",),
            vmem_limit_bytes=vmem_limit),
    )(x1t, x2f, p["wt"], p["bt"], p["w1k"], p["s1"], p["b1"],
      p["w2k"], p["s2"], p["b2"], p["wd"], p["bd"])


def upconv_forward(x1_nchw, x2_nchw, p):
    """NCHW in / NCHW out; only cheap reshapes plus one small x1 transpose."""
    N, Cin, H, W = x1_nchw.shape
    Cout = p["w1k"].shape[1]
    x1t = jnp.transpose(x1_nchw.reshape(N, Cin, H * W), (0, 2, 1))   # (N, HW, Cin)
    x2f = x2_nchw.reshape(N, Cin, 4 * H * W)
    out = upconv_pallas(x1t, x2f, p, H=H, W=W)
    return out.reshape(N, Cout, 2 * H, 2 * W)


# ---------------------------------------------------------------------------
# Parameters (deterministic, synthetic) and their kernel-layout reorganization
# ---------------------------------------------------------------------------
def init_params(key, in_ch, out_ch, eps=1e-5):
    ks = jax.random.split(key, 16)
    raw = {
        # ConvTranspose2d weight: (in_ch, out_ch=in_ch, 2, 2), with bias
        "wt_t": 0.1 * jax.random.normal(ks[0], (in_ch, in_ch, 2, 2), jnp.float32),
        "bt":   0.1 * jax.random.normal(ks[1], (in_ch,), jnp.float32),
        # BasicBlock convs (PyTorch OIHW), no bias
        "w1":   0.1 * jax.random.normal(ks[2], (out_ch, in_ch, 3, 3), jnp.float32),
        "w2":   0.1 * jax.random.normal(ks[3], (out_ch, out_ch, 3, 3), jnp.float32),
        # downsample Conv2d(in_ch, out_ch, 1), with bias
        "wd":   0.1 * jax.random.normal(ks[4], (out_ch, in_ch, 1, 1), jnp.float32),
        "bd":   0.1 * jax.random.normal(ks[5], (out_ch,), jnp.float32),
        # BatchNorm params (inference mode)
        "g1":  1.0 + 0.1 * jax.random.normal(ks[6], (out_ch,), jnp.float32),
        "be1": 0.1 * jax.random.normal(ks[7], (out_ch,), jnp.float32),
        "m1":  0.1 * jax.random.normal(ks[8], (out_ch,), jnp.float32),
        "v1":  1.0 + 0.1 * jnp.abs(jax.random.normal(ks[9], (out_ch,), jnp.float32)),
        "g2":  1.0 + 0.1 * jax.random.normal(ks[10], (out_ch,), jnp.float32),
        "be2": 0.1 * jax.random.normal(ks[11], (out_ch,), jnp.float32),
        "m2":  0.1 * jax.random.normal(ks[12], (out_ch,), jnp.float32),
        "v2":  1.0 + 0.1 * jnp.abs(jax.random.normal(ks[13], (out_ch,), jnp.float32)),
    }
    s1 = raw["g1"] / jnp.sqrt(raw["v1"] + eps)
    b1 = raw["be1"] - raw["m1"] * s1
    s2 = raw["g2"] / jnp.sqrt(raw["v2"] + eps)
    b2 = raw["be2"] - raw["m2"] * s2
    p = {
        # (Cin, 2, 2, Cout) -> (Cin, 4*Cout); column = (2a+b)*Cout + co
        "wt": jnp.transpose(raw["wt_t"], (0, 2, 3, 1)).reshape(in_ch, 4 * in_ch),
        "bt": raw["bt"].reshape(in_ch, 1),
        # OIHW -> (9, O, I); tap index k = (dy+1)*3 + (dx+1)
        "w1k": jnp.transpose(raw["w1"], (2, 3, 0, 1)).reshape(9, out_ch, in_ch),
        "w2k": jnp.transpose(raw["w2"], (2, 3, 0, 1)).reshape(9, out_ch, out_ch),
        "s1": s1.reshape(out_ch, 1), "b1": b1.reshape(out_ch, 1),
        "s2": s2.reshape(out_ch, 1), "b2": b2.reshape(out_ch, 1),
        "wd": raw["wd"].reshape(out_ch, in_ch),
        "bd": raw["bd"].reshape(out_ch, 1),
    }
    return p, raw


# ---------------------------------------------------------------------------
# Pure-JAX reference (sanity check only)
# ---------------------------------------------------------------------------
def ref_forward_nchw(x1, x2, raw, p):
    hp = jax.lax.Precision.HIGHEST
    N, Cin, H, W = x1.shape
    up = jnp.einsum("nchw,cdab->ndhawb", x1, raw["wt_t"],
                    precision=hp).reshape(N, Cin, 2 * H, 2 * W)
    up = up + raw["bt"][None, :, None, None]
    x = up + x2

    def conv3(z, w):
        return jax.lax.conv_general_dilated(
            z, w, (1, 1), "SAME", dimension_numbers=("NCHW", "OIHW", "NCHW"),
            precision=hp)

    s1 = p["s1"][:, 0][None, :, None, None]
    b1 = p["b1"][:, 0][None, :, None, None]
    s2 = p["s2"][:, 0][None, :, None, None]
    b2 = p["b2"][:, 0][None, :, None, None]
    h = jnp.maximum(conv3(x, raw["w1"]) * s1 + b1, 0.0)
    h = conv3(h, raw["w2"]) * s2 + b2
    res = jnp.einsum("nchw,oc->nohw", x, raw["wd"][:, :, 0, 0], precision=hp)
    res = res + raw["bd"][None, :, None, None]
    return jnp.maximum(h + res, 0.0)


if __name__ == "__main__":
    in_ch, out_ch = 4, 8
    N, H, W = 2, 16, 16

    key = jax.random.PRNGKey(0)
    k1, k2, kp = jax.random.split(key, 3)
    x1 = jax.random.normal(k1, (N, in_ch, H, W), jnp.float32)          # NCHW
    x2 = jax.random.normal(k2, (N, in_ch, 2 * H, 2 * W), jnp.float32)  # NCHW

    params, raw = init_params(kp, in_ch, out_ch)

    out = jax.block_until_ready(upconv_forward(x1, x2, params))
    assert out.shape == (N, out_ch, 2 * H, 2 * W)

    ref = jax.block_until_ready(ref_forward_nchw(x1, x2, raw, params))
    max_diff = float(jnp.max(jnp.abs(out - ref)))
    assert jnp.allclose(out, ref, atol=1e-4, rtol=1e-4), f"max|diff|={max_diff}"

    print("KERNEL_OK")
</pallas_src>

<mosaic_0001>
module attributes {stable_mosaic.version = 11 : i64} {
  func.func @kernel(%arg0: i32, %arg1: memref<1x256x4xf32, #tpu.memory_space<vmem>>, %arg2: memref<1x4x1024xf32, #tpu.memory_space<vmem>>, %arg3: memref<4x16xf32, #tpu.memory_space<vmem>>, %arg4: memref<4x1xf32, #tpu.memory_space<vmem>>, %arg5: memref<9x8x4xf32, #tpu.memory_space<vmem>>, %arg6: memref<8x1xf32, #tpu.memory_space<vmem>>, %arg7: memref<8x1xf32, #tpu.memory_space<vmem>>, %arg8: memref<9x8x8xf32, #tpu.memory_space<vmem>>, %arg9: memref<8x1xf32, #tpu.memory_space<vmem>>, %arg10: memref<8x1xf32, #tpu.memory_space<vmem>>, %arg11: memref<8x4xf32, #tpu.memory_space<vmem>>, %arg12: memref<8x1xf32, #tpu.memory_space<vmem>>, %arg13: memref<1x8x1024xf32, #tpu.memory_space<vmem>>, %arg14: memref<8x1280xf32, #tpu.memory_space<vmem>>) attributes {dimension_semantics = [#tpu.dimension_semantics<parallel>], iteration_bounds = array<i64: 2>, scalar_prefetch = 0 : i64, scratch_operands = 1 : i64, tpu.core_type = #tpu.core_type<tc>, window_params = [{transform_indices = @transform_0, window_bounds = array<i64: 1, 256, 4>}, {transform_indices = @transform_1, window_bounds = array<i64: 1, 4, 1024>}, {pipeline_mode = #tpu.pipeline_mode<synchronous>, transform_indices = @transform_2, window_bounds = array<i64: 4, 16>}, {pipeline_mode = #tpu.pipeline_mode<synchronous>, transform_indices = @transform_3, window_bounds = array<i64: 4, 1>}, {pipeline_mode = #tpu.pipeline_mode<synchronous>, transform_indices = @transform_4, window_bounds = array<i64: 9, 8, 4>}, {pipeline_mode = #tpu.pipeline_mode<synchronous>, transform_indices = @transform_5, window_bounds = array<i64: 8, 1>}, {pipeline_mode = #tpu.pipeline_mode<synchronous>, transform_indices = @transform_6, window_bounds = array<i64: 8, 1>}, {pipeline_mode = #tpu.pipeline_mode<synchronous>, transform_indices = @transform_7, window_bounds = array<i64: 9, 8, 8>}, {pipeline_mode = #tpu.pipeline_mode<synchronous>, transform_indices = @transform_8, window_bounds = array<i64: 8, 1>}, {pipeline_mode = #tpu.pipeline_mode<synchronous>, transform_indices = @transform_9, window_bounds = array<i64: 8, 1>}, {pipeline_mode = #tpu.pipeline_mode<synchronous>, transform_indices = @transform_10, window_bounds = array<i64: 8, 4>}, {pipeline_mode = #tpu.pipeline_mode<synchronous>, transform_indices = @transform_11, window_bounds = array<i64: 8, 1>}, {transform_indices = @transform_12, window_bounds = array<i64: 1, 8, 1024>}]} {
    %0 = tpu.iota {dimensions = array<i32: 1>} : vector<1x1024xi32>
    %c32_i32 = arith.constant 32 : i32
    %c0_i32 = arith.constant 0 : i32
    %1 = arith.cmpi eq, %c32_i32, %c0_i32 : i32
    %c1_i32 = arith.constant 1 : i32
    %2 = arith.select %1, %c1_i32, %c32_i32 : i32
    %3 = vector.broadcast %2 : i32 to vector<1x1024xi32>
    %4 = arith.remsi %0, %3 : vector<1x1024xi32>
    %c0_i32_0 = arith.constant 0 : i32
    %5 = vector.broadcast %c0_i32_0 : i32 to vector<1x1024xi32>
    %6 = arith.cmpi ne, %4, %5 : vector<1x1024xi32>
    %c0_i32_1 = arith.constant 0 : i32
    %7 = vector.broadcast %c0_i32_1 : i32 to vector<1x1024xi32>
    %8 = arith.cmpi slt, %4, %7 : vector<1x1024xi32>
    %c0_i32_2 = arith.constant 0 : i32
    %9 = arith.cmpi slt, %2, %c0_i32_2 : i32
    %10 = vector.broadcast %9 : i1 to vector<1x1024xi1>
    %11 = vector.broadcast %10 : vector<1x1024xi1> to vector<1x1024xi1>
    %12 = arith.xori %8, %11 : vector<1x1024xi1>
    %13 = arith.andi %12, %6 : vector<1x1024xi1>
    %14 = vector.broadcast %2 : i32 to vector<1x1024xi32>
    %15 = arith.addi %4, %14 : vector<1x1024xi32>
    %16 = arith.select %13, %15, %4 : vector<1x1024xi1>, vector<1x1024xi32>
    %c0_i32_3 = arith.constant 0 : i32
    %17 = vector.broadcast %c0_i32_3 : i32 to vector<1x1024xi32>
    %18 = arith.cmpi sgt, %16, %17 : vector<1x1024xi32>
    %c31_i32 = arith.constant 31 : i32
    %19 = vector.broadcast %c31_i32 : i32 to vector<1x1024xi32>
    %20 = arith.cmpi slt, %16, %19 : vector<1x1024xi32>
    %cst = arith.constant 0.000000e+00 : f32
    %21 = vector.broadcast %cst : f32 to vector<8x128xf32>
    %c0 = arith.constant 0 : index
    %c0_4 = arith.constant 0 : index
    %22 = vector.load %arg14[%c0, %c0_4] : memref<8x1280xf32, #tpu.memory_space<vmem>>, vector<8x128xf32>
    tpu.vector_store %arg14[%c0, %c0_4], %21 {strides = array<i32>} : memref<8x1280xf32, #tpu.memory_space<vmem>>, vector<8x128xf32>,
    %c0_5 = arith.constant 0 : index
    %c1152 = arith.constant 1152 : index
    %23 = vector.load %arg14[%c0_5, %c1152] : memref<8x1280xf32, #tpu.memory_space<vmem>>, vector<8x128xf32>
    tpu.vector_store %arg14[%c0_5, %c1152], %21 {strides = array<i32>} : memref<8x1280xf32, #tpu.memory_space<vmem>>, vector<8x128xf32>,
    %c0_6 = arith.constant 0 : index
    %c0_7 = arith.constant 0 : index
    %c0_8 = arith.constant 0 : index
    %24 = vector.load %arg1[%c0_6, %c0_7, %c0_8] : memref<1x256x4xf32, #tpu.memory_space<vmem>>, vector<1x256x4xf32>
    %25 = vector.shape_cast %24 : vector<1x256x4xf32> to vector<256x4xf32>
    %c0_9 = arith.constant 0 : index
    %c0_10 = arith.constant 0 : index
    %26 = vector.load %arg3[%c0_9, %c0_10] : memref<4x16xf32, #tpu.memory_space<vmem>>, vector<4x16xf32>
    %cst_11 = arith.constant dense<0.000000e+00> : vector<256x16xf32>
    %27 = tpu.matmul %25, %26, %cst_11 {dimension_numbers = #tpu.dot_dimension_numbers<[1], [0], [0], [1], [0, 0, 1, 1], [], []>} : vector<256x4xf32>, vector<4x16xf32>, vector<256x16xf32> -> vector<256x16xf32>
    %28 = vector.extract_strided_slice %27 {offsets = [0, 0], sizes = [256, 4], strides = [1, 1]} : vector<256x16xf32> to vector<256x4xf32>
    %29 = vector.extract_strided_slice %27 {offsets = [0, 4], sizes = [256, 4], strides = [1, 1]} : vector<256x16xf32> to vector<256x4xf32>
    %30 = vector.shape_cast %28 : vector<256x4xf32> to vector<256x1x4xf32>
    %31 = vector.shape_cast %29 : vector<256x4xf32> to vector<256x1x4xf32>
    %32 = tpu.concatenate %30, %31 in 1 : vector<256x1x4xf32>, vector<256x1x4xf32> -> vector<256x2x4xf32>
    %33 = vector.shape_cast %32 : vector<256x2x4xf32> to vector<512x4xf32>
    %34 = vector.extract_strided_slice %27 {offsets = [0, 8], sizes = [256, 4], strides = [1, 1]} : vector<256x16xf32> to vector<256x4xf32>
    %35 = vector.extract_strided_slice %27 {offsets = [0, 12], sizes = [256, 4], strides = [1, 1]} : vector<256x16xf32> to vector<256x4xf32>
    %36 = vector.shape_cast %34 : vector<256x4xf32> to vector<256x1x4xf32>
    %37 = vector.shape_cast %35 : vector<256x4xf32> to vector<256x1x4xf32>
    %38 = tpu.concatenate %36, %37 in 1 : vector<256x1x4xf32>, vector<256x1x4xf32> -> vector<256x2x4xf32>
    %39 = vector.shape_cast %38 : vector<256x2x4xf32> to vector<512x4xf32>
    %40 = vector.shape_cast %33 : vector<512x4xf32> to vector<16x1x32x4xf32>
    %41 = vector.shape_cast %39 : vector<512x4xf32> to vector<16x1x32x4xf32>
    %42 = tpu.concatenate %40, %41 in 1 : vector<16x1x32x4xf32>, vector<16x1x32x4xf32> -> vector<16x2x32x4xf32>
    %43 = vector.shape_cast %42 : vector<16x2x32x4xf32> to vector<1024x4xf32>
    %44 = tpu.transpose %43, [1, 0] : vector<1024x4xf32> -> vector<4x1024xf32>
    %c0_12 = arith.constant 0 : index
    %c0_13 = arith.constant 0 : index
    %45 = vector.load %arg4[%c0_12, %c0_13] : memref<4x1xf32, #tpu.memory_space<vmem>>, vector<4x1xf32>
    %46 = vector.broadcast %45 : vector<4x1xf32> to vector<4x1024xf32>
    %47 = arith.addf %44, %46 : vector<4x1024xf32>
    %c0_14 = arith.constant 0 : index
    %c0_15 = arith.constant 0 : index
    %c0_16 = arith.constant 0 : index
    %48 = vector.load %arg2[%c0_14, %c0_15, %c0_16] : memref<1x4x1024xf32, #tpu.memory_space<vmem>>, vector<1x4x1024xf32>
    %49 = vector.shape_cast %48 : vector<1x4x1024xf32> to vector<4x1024xf32>
    %50 = arith.addf %47, %49 : vector<4x1024xf32>
    %c0_17 = arith.constant 0 : index
    %c128 = arith.constant 128 : index
    %51 = vector.load %arg14[%c0_17, %c128] : memref<8x1280xf32, #tpu.memory_space<vmem>>, vector<4x1024xf32>
    tpu.vector_store %arg14[%c0_17, %c128], %50 {strides = array<i32>} : memref<8x1280xf32, #tpu.memory_space<vmem>>, vector<4x1024xf32>,
    %c0_18 = arith.constant 0 : index
    %c0_19 = arith.constant 0 : index
    %52 = vector.load %arg11[%c0_18, %c0_19] : memref<8x4xf32, #tpu.memory_space<vmem>>, vector<8x4xf32>
    %cst_20 = arith.constant dense<0.000000e+00> : vector<8x1024xf32>
    %53 = tpu.matmul %52, %50, %cst_20 {dimension_numbers = #tpu.dot_dimension_numbers<[1], [0], [0], [1], [0, 0, 1, 1], [], []>} : vector<8x4xf32>, vector<4x1024xf32>, vector<8x1024xf32> -> vector<8x1024xf32>
    %c0_21 = arith.constant 0 : index
    %c0_22 = arith.constant 0 : index
    %54 = vector.load %arg12[%c0_21, %c0_22] : memref<8x1xf32, #tpu.memory_space<vmem>>, vector<8x1xf32>
    %55 = vector.broadcast %54 : vector<8x1xf32> to vector<8x1024xf32>
    %56 = arith.addf %53, %55 : vector<8x1024xf32>
    %c0_23 = arith.constant 0 : index
    %c0_24 = arith.constant 0 : index
    %c0_25 = arith.constant 0 : index
    %57 = vector.load %arg13[%c0_23, %c0_24, %c0_25] : memref<1x8x1024xf32, #tpu.memory_space<vmem>>, vector<1x8x1024xf32>
    %58 = vector.shape_cast %57 : vector<1x8x1024xf32> to vector<8x1024xf32>
    %59 = vector.shape_cast %56 : vector<8x1024xf32> to vector<1x8x1024xf32>
    tpu.vector_store %arg13[%c0_23, %c0_24, %c0_25], %59 {strides = array<i32>} : memref<1x8x1024xf32, #tpu.memory_space<vmem>>, vector<1x8x1024xf32>,
    %c4 = arith.constant 4 : index
    %c0_26 = arith.constant 0 : index
    %c0_27 = arith.constant 0 : index
    %60 = vector.load %arg5[%c4, %c0_26, %c0_27] : memref<9x8x4xf32, #tpu.memory_space<vmem>>, vector<1x8x4xf32>
    %61 = vector.shape_cast %60 : vector<1x8x4xf32> to vector<8x4xf32>
    %c0_28 = arith.constant 0 : index
    %c128_29 = arith.constant 128 : index
    %62 = vector.load %arg14[%c0_28, %c128_29] : memref<8x1280xf32, #tpu.memory_space<vmem>>, vector<4x1024xf32>
    %cst_30 = arith.constant dense<0.000000e+00> : vector<8x1024xf32>
    %63 = tpu.matmul %61, %62, %cst_30 {dimension_numbers = #tpu.dot_dimension_numbers<[1], [0], [0], [1], [0, 0, 1, 1], [], []>} : vector<8x4xf32>, vector<4x1024xf32>, vector<8x1024xf32> -> vector<8x1024xf32>
    %c0_31 = arith.constant 0 : index
    %c95 = arith.constant 95 : index
    %64 = vector.load %arg14[%c0_31, %c95] : memref<8x1280xf32, #tpu.memory_space<vmem>>, vector<4x1024xf32>
    %cst_32 = arith.constant 0.000000e+00 : f32
    %65 = vector.shape_cast %18 : vector<1x1024xi1> to vector<1x1024xi1>
    %66 = vector.broadcast %65 : vector<1x1024xi1> to vector<4x1024xi1>
    %67 = vector.broadcast %cst_32 : f32 to vector<4x1024xf32>
    %68 = arith.select %66, %64, %67 : vector<4x1024xi1>, vector<4x1024xf32>
    %c0_33 = arith.constant 0 : index
    %c0_34 = arith.constant 0 : index
    %c0_35 = arith.constant 0 : index
    %69 = vector.load %arg5[%c0_33, %c0_34, %c0_35] : memref<9x8x4xf32, #tpu.memory_space<vmem>>, vector<1x8x4xf32>
    %70 = vector.shape_cast %69 : vector<1x8x4xf32> to vector<8x4xf32>
    %cst_36 = arith.constant dense<0.000000e+00> : vector<8x1024xf32>
    %71 = tpu.matmul %70, %68, %cst_36 {dimension_numbers = #tpu.dot_dimension_numbers<[1], [0], [0], [1], [0, 0, 1, 1], [], []>} : vector<8x4xf32>, vector<4x1024xf32>, vector<8x1024xf32> -> vector<8x1024xf32>
    %72 = arith.addf %63, %71 : vector<8x1024xf32>
    %c0_37 = arith.constant 0 : index
    %c96 = arith.constant 96 : index
    %73 = vector.load %arg14[%c0_37, %c96] : memref<8x1280xf32, #tpu.memory_space<vmem>>, vector<4x1024xf32>
    %c1 = arith.constant 1 : index
    %c0_38 = arith.constant 0 : index
    %c0_39 = arith.constant 0 : index
    %74 = vector.load %arg5[%c1, %c0_38, %c0_39] : memref<9x8x4xf32, #tpu.memory_space<vmem>>, vector<1x8x4xf32>
    %75 = vector.shape_cast %74 : vector<1x8x4xf32> to vector<8x4xf32>
    %cst_40 = arith.constant dense<0.000000e+00> : vector<8x1024xf32>
    %76 = tpu.matmul %75, %73, %cst_40 {dimension_numbers = #tpu.dot_dimension_numbers<[1], [0], [0], [1], [0, 0, 1, 1], [], []>} : vector<8x4xf32>, vector<4x1024xf32>, vector<8x1024xf32> -> vector<8x1024xf32>
    %77 = arith.addf %72, %76 : vector<8x1024xf32>
    %c0_41 = arith.constant 0 : index
    %c97 = arith.constant 97 : index
    %78 = vector.load %arg14[%c0_41, %c97] : memref<8x1280xf32, #tpu.memory_space<vmem>>, vector<4x1024xf32>
    %cst_42 = arith.constant 0.000000e+00 : f32
    %79 = vector.shape_cast %20 : vector<1x1024xi1> to vector<1x1024xi1>
    %80 = vector.broadcast %79 : vector<1x1024xi1> to vector<4x1024xi1>
    %81 = vector.broadcast %cst_42 : f32 to vector<4x1024xf32>
    %82 = arith.select %80, %78, %81 : vector<4x1024xi1>, vector<4x1024xf32>
    %c2 = arith.constant 2 : index
    %c0_43 = arith.constant 0 : index
    %c0_44 = arith.constant 0 : index
    %83 = vector.load %arg5[%c2, %c0_43, %c0_44] : memref<9x8x4xf32, #tpu.memory_space<vmem>>, vector<1x8x4xf32>
    %84 = vector.shape_cast %83 : vector<1x8x4xf32> to vector<8x4xf32>
    %cst_45 = arith.constant dense<0.000000e+00> : vector<8x1024xf32>
    %85 = tpu.matmul %84, %82, %cst_45 {dimension_numbers = #tpu.dot_dimension_numbers<[1], [0], [0], [1], [0, 0, 1, 1], [], []>} : vector<8x4xf32>, vector<4x1024xf32>, vector<8x1024xf32> -> vector<8x1024xf32>
    %86 = arith.addf %77, %85 : vector<8x1024xf32>
    %c0_46 = arith.constant 0 : index
    %c127 = arith.constant 127 : index
    %87 = vector.load %arg14[%c0_46, %c127] : memref<8x1280xf32, #tpu.memory_space<vmem>>, vector<4x1024xf32>
    %cst_47 = arith.constant 0.000000e+00 : f32
    %88 = vector.shape_cast %18 : vector<1x1024xi1> to vector<1x1024xi1>
    %89 = vector.broadcast %88 : vector<1x1024xi1> to vector<4x1024xi1>
    %90 = vector.broadcast %cst_47 : f32 to vector<4x1024xf32>
    %91 = arith.select %89, %87, %90 : vector<4x1024xi1>, vector<4x1024xf32>
    %c3 = arith.constant 3 : index
    %c0_48 = arith.constant 0 : index
    %c0_49 = arith.constant 0 : index
    %92 = vector.load %arg5[%c3, %c0_48, %c0_49] : memref<9x8x4xf32, #tpu.memory_space<vmem>>, vector<1x8x4xf32>
    %93 = vector.shape_cast %92 : vector<1x8x4xf32> to vector<8x4xf32>
    %cst_50 = arith.constant dense<0.000000e+00> : vector<8x1024xf32>
    %94 = tpu.matmul %93, %91, %cst_50 {dimension_numbers = #tpu.dot_dimension_numbers<[1], [0], [0], [1], [0, 0, 1, 1], [], []>} : vector<8x4xf32>, vector<4x1024xf32>, vector<8x1024xf32> -> vector<8x1024xf32>
    %95 = arith.addf %86, %94 : vector<8x1024xf32>
    %c0_51 = arith.constant 0 : index
    %c129 = arith.constant 129 : index
    %96 = vector.load %arg14[%c0_51, %c129] : memref<8x1280xf32, #tpu.memory_space<vmem>>, vector<4x1024xf32>
    %cst_52 = arith.constant 0.000000e+00 : f32
    %97 = vector.shape_cast %20 : vector<1x1024xi1> to vector<1x1024xi1>
    %98 = vector.broadcast %97 : vector<1x1024xi1> to vector<4x1024xi1>
    %99 = vector.broadcast %cst_52 : f32 to vector<4x1024xf32>
    %100 = arith.select %98, %96, %99 : vector<4x1024xi1>, vector<4x1024xf32>
    %c5 = arith.constant 5 : index
    %c0_53 = arith.constant 0 : index
    %c0_54 = arith.constant 0 : index
    %101 = vector.load %arg5[%c5, %c0_53, %c0_54] : memref<9x8x4xf32, #tpu.memory_space<vmem>>, vector<1x8x4xf32>
    %102 = vector.shape_cast %101 : vector<1x8x4xf32> to vector<8x4xf32>
    %cst_55 = arith.constant dense<0.000000e+00> : vector<8x1024xf32>
    %103 = tpu.matmul %102, %100, %cst_55 {dimension_numbers = #tpu.dot_dimension_numbers<[1], [0], [0], [1], [0, 0, 1, 1], [], []>} : vector<8x4xf32>, vector<4x1024xf32>, vector<8x1024xf32> -> vector<8x1024xf32>
    %104 = arith.addf %95, %103 : vector<8x1024xf32>
    %c0_56 = arith.constant 0 : index
    %c159 = arith.constant 159 : index
    %105 = vector.load %arg14[%c0_56, %c159] : memref<8x1280xf32, #tpu.memory_space<vmem>>, vector<4x1024xf32>
    %cst_57 = arith.constant 0.000000e+00 : f32
    %106 = vector.shape_cast %18 : vector<1x1024xi1> to vector<1x1024xi1>
    %107 = vector.broadcast %106 : vector<1x1024xi1> to vector<4x1024xi1>
    %108 = vector.broadcast %cst_57 : f32 to vector<4x1024xf32>
    %109 = arith.select %107, %105, %108 : vector<4x1024xi1>, vector<4x1024xf32>
    %c6 = arith.constant 6 : index
    %c0_58 = arith.constant 0 : index
    %c0_59 = arith.constant 0 : index
    %110 = vector.load %arg5[%c6, %c0_58, %c0_59] : memref<9x8x4xf32, #tpu.memory_space<vmem>>, vector<1x8x4xf32>
    %111 = vector.shape_cast %110 : vector<1x8x4xf32> to vector<8x4xf32>
    %cst_60 = arith.constant dense<0.000000e+00> : vector<8x1024xf32>
    %112 = tpu.matmul %111, %109, %cst_60 {dimension_numbers = #tpu.dot_dimension_numbers<[1], [0], [0], [1], [0, 0, 1, 1], [], []>} : vector<8x4xf32>, vector<4x1024xf32>, vector<8x1024xf32> -> vector<8x1024xf32>
    %113 = arith.addf %104, %112 : vector<8x1024xf32>
    %c0_61 = arith.constant 0 : index
    %c160 = arith.constant 160 : index
    %114 = vector.load %arg14[%c0_61, %c160] : memref<8x1280xf32, #tpu.memory_space<vmem>>, vector<4x1024xf32>
    %c7 = arith.constant 7 : index
    %c0_62 = arith.constant 0 : index
    %c0_63 = arith.constant 0 : index
    %115 = vector.load %arg5[%c7, %c0_62, %c0_63] : memref<9x8x4xf32, #tpu.memory_space<vmem>>, vector<1x8x4xf32>
    %116 = vector.shape_cast %115 : vector<1x8x4xf32> to vector<8x4xf32>
    %cst_64 = arith.constant dense<0.000000e+00> : vector<8x1024xf32>
    %117 = tpu.matmul %116, %114, %cst_64 {dimension_numbers = #tpu.dot_dimension_numbers<[1], [0], [0], [1], [0, 0, 1, 1], [], []>} : vector<8x4xf32>, vector<4x1024xf32>, vector<8x1024xf32> -> vector<8x1024xf32>
    %118 = arith.addf %113, %117 : vector<8x1024xf32>
    %c0_65 = arith.constant 0 : index
    %c161 = arith.constant 161 : index
    %119 = vector.load %arg14[%c0_65, %c161] : memref<8x1280xf32, #tpu.memory_space<vmem>>, vector<4x1024xf32>
    %cst_66 = arith.constant 0.000000e+00 : f32
    %120 = vector.shape_cast %20 : vector<1x1024xi1> to vector<1x1024xi1>
    %121 = vector.broadcast %120 : vector<1x1024xi1> to vector<4x1024xi1>
    %122 = vector.broadcast %cst_66 : f32 to vector<4x1024xf32>
    %123 = arith.select %121, %119, %122 : vector<4x1024xi1>, vector<4x1024xf32>
    %c8 = arith.constant 8 : index
    %c0_67 = arith.constant 0 : index
    %c0_68 = arith.constant 0 : index
    %124 = vector.load %arg5[%c8, %c0_67, %c0_68] : memref<9x8x4xf32, #tpu.memory_space<vmem>>, vector<1x8x4xf32>
    %125 = vector.shape_cast %124 : vector<1x8x4xf32> to vector<8x4xf32>
    %cst_69 = arith.constant dense<0.000000e+00> : vector<8x1024xf32>
    %126 = tpu.matmul %125, %123, %cst_69 {dimension_numbers = #tpu.dot_dimension_numbers<[1], [0], [0], [1], [0, 0, 1, 1], [], []>} : vector<8x4xf32>, vector<4x1024xf32>, vector<8x1024xf32> -> vector<8x1024xf32>
    %127 = arith.addf %118, %126 : vector<8x1024xf32>
    %c0_70 = arith.constant 0 : index
    %c0_71 = arith.constant 0 : index
    %128 = vector.load %arg6[%c0_70, %c0_71] : memref<8x1xf32, #tpu.memory_space<vmem>>, vector<8x1xf32>
    %129 = vector.broadcast %128 : vector<8x1xf32> to vector<8x1024xf32>
    %130 = arith.mulf %127, %129 : vector<8x1024xf32>
    %c0_72 = arith.constant 0 : index
    %c0_73 = arith.constant 0 : index
    %131 = vector.load %arg7[%c0_72, %c0_73] : memref<8x1xf32, #tpu.memory_space<vmem>>, vector<8x1xf32>
    %132 = vector.broadcast %131 : vector<8x1xf32> to vector<8x1024xf32>
    %133 = arith.addf %130, %132 : vector<8x1024xf32>
    %cst_74 = arith.constant 0.000000e+00 : f32
    %134 = vector.broadcast %cst_74 : f32 to vector<8x1024xf32>
    %135 = arith.maximumf %133, %134 : vector<8x1024xf32>
    %c0_75 = arith.constant 0 : index
    %c128_76 = arith.constant 128 : index
    %136 = vector.load %arg14[%c0_75, %c128_76] : memref<8x1280xf32, #tpu.memory_space<vmem>>, vector<8x1024xf32>
    tpu.vector_store %arg14[%c0_75, %c128_76], %135 {strides = array<i32>} : memref<8x1280xf32, #tpu.memory_space<vmem>>, vector<8x1024xf32>,
    %c4_77 = arith.constant 4 : index
    %c0_78 = arith.constant 0 : index
    %c0_79 = arith.constant 0 : index
    %137 = vector.load %arg8[%c4_77, %c0_78, %c0_79] : memref<9x8x8xf32, #tpu.memory_space<vmem>>, vector<1x8x8xf32>
    %138 = vector.shape_cast %137 : vector<1x8x8xf32> to vector<8x8xf32>
    %c0_80 = arith.constant 0 : index
    %c128_81 = arith.constant 128 : index
    %139 = vector.load %arg14[%c0_80, %c128_81] : memref<8x1280xf32, #tpu.memory_space<vmem>>, vector<8x1024xf32>
    %cst_82 = arith.constant dense<0.000000e+00> : vector<8x1024xf32>
    %140 = tpu.matmul %138, %139, %cst_82 {dimension_numbers = #tpu.dot_dimension_numbers<[1], [0], [0], [1], [0, 0, 1, 1], [], []>} : vector<8x8xf32>, vector<8x1024xf32>, vector<8x1024xf32> -> vector<8x1024xf32>
    %c0_83 = arith.constant 0 : index
    %c95_84 = arith.constant 95 : index
    %141 = vector.load %arg14[%c0_83, %c95_84] : memref<8x1280xf32, #tpu.memory_space<vmem>>, vector<8x1024xf32>
    %cst_85 = arith.constant 0.000000e+00 : f32
    %142 = vector.shape_cast %18 : vector<1x1024xi1> to vector<1x1024xi1>
    %143 = vector.broadcast %142 : vector<1x1024xi1> to vector<8x1024xi1>
    %144 = vector.broadcast %cst_85 : f32 to vector<8x1024xf32>
    %145 = arith.select %143, %141, %144 : vector<8x1024xi1>, vector<8x1024xf32>
    %c0_86 = arith.constant 0 : index
    %c0_87 = arith.constant 0 : index
    %c0_88 = arith.constant 0 : index
    %146 = vector.load %arg8[%c0_86, %c0_87, %c0_88] : memref<9x8x8xf32, #tpu.memory_space<vmem>>, vector<1x8x8xf32>
    %147 = vector.shape_cast %146 : vector<1x8x8xf32> to vector<8x8xf32>
    %cst_89 = arith.constant dense<0.000000e+00> : vector<8x1024xf32>
    %148 = tpu.matmul %147, %145, %cst_89 {dimension_numbers = #tpu.dot_dimension_numbers<[1], [0], [0], [1], [0, 0, 1, 1], [], []>} : vector<8x8xf32>, vector<8x1024xf32>, vector<8x1024xf32> -> vector<8x1024xf32>
    %149 = arith.addf %140, %148 : vector<8x1024xf32>
    %c0_90 = arith.constant 0 : index
    %c96_91 = arith.constant 96 : index
    %150 = vector.load %arg14[%c0_90, %c96_91] : memref<8x1280xf32, #tpu.memory_space<vmem>>, vector<8x1024xf32>
    %c1_92 = arith.constant 1 : index
    %c0_93 = arith.constant 0 : index
    %c0_94 = arith.constant 0 : index
    %151 = vector.load %arg8[%c1_92, %c0_93, %c0_94] : memref<9x8x8xf32, #tpu.memory_space<vmem>>, vector<1x8x8xf32>
    %152 = vector.shape_cast %151 : vector<1x8x8xf32> to vector<8x8xf32>
    %cst_95 = arith.constant dense<0.000000e+00> : vector<8x1024xf32>
    %153 = tpu.matmul %152, %150, %cst_95 {dimension_numbers = #tpu.dot_dimension_numbers<[1], [0], [0], [1], [0, 0, 1, 1], [], []>} : vector<8x8xf32>, vector<8x1024xf32>, vector<8x1024xf32> -> vector<8x1024xf32>
    %154 = arith.addf %149, %153 : vector<8x1024xf32>
    %c0_96 = arith.constant 0 : index
    %c97_97 = arith.constant 97 : index
    %155 = vector.load %arg14[%c0_96, %c97_97] : memref<8x1280xf32, #tpu.memory_space<vmem>>, vector<8x1024xf32>
    %cst_98 = arith.constant 0.000000e+00 : f32
    %156 = vector.shape_cast %20 : vector<1x1024xi1> to vector<1x1024xi1>
    %157 = vector.broadcast %156 : vector<1x1024xi1> to vector<8x1024xi1>
    %158 = vector.broadcast %cst_98 : f32 to vector<8x1024xf32>
    %159 = arith.select %157, %155, %158 : vector<8x1024xi1>, vector<8x1024xf32>
    %c2_99 = arith.constant 2 : index
    %c0_100 = arith.constant 0 : index
    %c0_101 = arith.constant 0 : index
    %160 = vector.load %arg8[%c2_99, %c0_100, %c0_101] : memref<9x8x8xf32, #tpu.memory_space<vmem>>, vector<1x8x8xf32>
    %161 = vector.shape_cast %160 : vector<1x8x8xf32> to vector<8x8xf32>
    %cst_102 = arith.constant dense<0.000000e+00> : vector<8x1024xf32>
    %162 = tpu.matmul %161, %159, %cst_102 {dimension_numbers = #tpu.dot_dimension_numbers<[1], [0], [0], [1], [0, 0, 1, 1], [], []>} : vector<8x8xf32>, vector<8x1024xf32>, vector<8x1024xf32> -> vector<8x1024xf32>
    %163 = arith.addf %154, %162 : vector<8x1024xf32>
    %c0_103 = arith.constant 0 : index
    %c127_104 = arith.constant 127 : index
    %164 = vector.load %arg14[%c0_103, %c127_104] : memref<8x1280xf32, #tpu.memory_space<vmem>>, vector<8x1024xf32>
    %cst_105 = arith.constant 0.000000e+00 : f32
    %165 = vector.shape_cast %18 : vector<1x1024xi1> to vector<1x1024xi1>
    %166 = vector.broadcast %165 : vector<1x1024xi1> to vector<8x1024xi1>
    %167 = vector.broadcast %cst_105 : f32 to vector<8x1024xf32>
    %168 = arith.select %166, %164, %167 : vector<8x1024xi1>, vector<8x1024xf32>
    %c3_106 = arith.constant 3 : index
    %c0_107 = arith.constant 0 : index
    %c0_108 = arith.constant 0 : index
    %169 = vector.load %arg8[%c3_106, %c0_107, %c0_108] : memref<9x8x8xf32, #tpu.memory_space<vmem>>, vector<1x8x8xf32>
    %170 = vector.shape_cast %169 : vector<1x8x8xf32> to vector<8x8xf32>
    %cst_109 = arith.constant dense<0.000000e+00> : vector<8x1024xf32>
    %171 = tpu.matmul %170, %168, %cst_109 {dimension_numbers = #tpu.dot_dimension_numbers<[1], [0], [0], [1], [0, 0, 1, 1], [], []>} : vector<8x8xf32>, vector<8x1024xf32>, vector<8x1024xf32> -> vector<8x1024xf32>
    %172 = arith.addf %163, %171 : vector<8x1024xf32>
    %c0_110 = arith.constant 0 : index
    %c129_111 = arith.constant 129 : index
    %173 = vector.load %arg14[%c0_110, %c129_111] : memref<8x1280xf32, #tpu.memory_space<vmem>>, vector<8x1024xf32>
    %cst_112 = arith.constant 0.000000e+00 : f32
    %174 = vector.shape_cast %20 : vector<1x1024xi1> to vector<1x1024xi1>
    %175 = vector.broadcast %174 : vector<1x1024xi1> to vector<8x1024xi1>
    %176 = vector.broadcast %cst_112 : f32 to vector<8x1024xf32>
    %177 = arith.select %175, %173, %176 : vector<8x1024xi1>, vector<8x1024xf32>
    %c5_113 = arith.constant 5 : index
    %c0_114 = arith.constant 0 : index
    %c0_115 = arith.constant 0 : index
    %178 = vector.load %arg8[%c5_113, %c0_114, %c0_115] : memref<9x8x8xf32, #tpu.memory_space<vmem>>, vector<1x8x8xf32>
    %179 = vector.shape_cast %178 : vector<1x8x8xf32> to vector<8x8xf32>
    %cst_116 = arith.constant dense<0.000000e+00> : vector<8x1024xf32>
    %180 = tpu.matmul %179, %177, %cst_116 {dimension_numbers = #tpu.dot_dimension_numbers<[1], [0], [0], [1], [0, 0, 1, 1], [], []>} : vector<8x8xf32>, vector<8x1024xf32>, vector<8x1024xf32> -> vector<8x1024xf32>
    %181 = arith.addf %172, %180 : vector<8x1024xf32>
    %c0_117 = arith.constant 0 : index
    %c159_118 = arith.constant 159 : index
    %182 = vector.load %arg14[%c0_117, %c159_118] : memref<8x1280xf32, #tpu.memory_space<vmem>>, vector<8x1024xf32>
    %cst_119 = arith.constant 0.000000e+00 : f32
    %183 = vector.shape_cast %18 : vector<1x1024xi1> to vector<1x1024xi1>
    %184 = vector.broadcast %183 : vector<1x1024xi1> to vector<8x1024xi1>
    %185 = vector.broadcast %cst_119 : f32 to vector<8x1024xf32>
    %186 = arith.select %184, %182, %185 : vector<8x1024xi1>, vector<8x1024xf32>
    %c6_120 = arith.constant 6 : index
    %c0_121 = arith.constant 0 : index
    %c0_122 = arith.constant 0 : index
    %187 = vector.load %arg8[%c6_120, %c0_121, %c0_122] : memref<9x8x8xf32, #tpu.memory_space<vmem>>, vector<1x8x8xf32>
    %188 = vector.shape_cast %187 : vector<1x8x8xf32> to vector<8x8xf32>
    %cst_123 = arith.constant dense<0.000000e+00> : vector<8x1024xf32>
    %189 = tpu.matmul %188, %186, %cst_123 {dimension_numbers = #tpu.dot_dimension_numbers<[1], [0], [0], [1], [0, 0, 1, 1], [], []>} : vector<8x8xf32>, vector<8x1024xf32>, vector<8x1024xf32> -> vector<8x1024xf32>
    %190 = arith.addf %181, %189 : vector<8x1024xf32>
    %c0_124 = arith.constant 0 : index
    %c160_125 = arith.constant 160 : index
    %191 = vector.load %arg14[%c0_124, %c160_125] : memref<8x1280xf32, #tpu.memory_space<vmem>>, vector<8x1024xf32>
    %c7_126 = arith.constant 7 : index
    %c0_127 = arith.constant 0 : index
    %c0_128 = arith.constant 0 : index
    %192 = vector.load %arg8[%c7_126, %c0_127, %c0_128] : memref<9x8x8xf32, #tpu.memory_space<vmem>>, vector<1x8x8xf32>
    %193 = vector.shape_cast %192 : vector<1x8x8xf32> to vector<8x8xf32>
    %cst_129 = arith.constant dense<0.000000e+00> : vector<8x1024xf32>
    %194 = tpu.matmul %193, %191, %cst_129 {dimension_numbers = #tpu.dot_dimension_numbers<[1], [0], [0], [1], [0, 0, 1, 1], [], []>} : vector<8x8xf32>, vector<8x1024xf32>, vector<8x1024xf32> -> vector<8x1024xf32>
    %195 = arith.addf %190, %194 : vector<8x1024xf32>
    %c0_130 = arith.constant 0 : index
    %c161_131 = arith.constant 161 : index
    %196 = vector.load %arg14[%c0_130, %c161_131] : memref<8x1280xf32, #tpu.memory_space<vmem>>, vector<8x1024xf32>
    %cst_132 = arith.constant 0.000000e+00 : f32
    %197 = vector.shape_cast %20 : vector<1x1024xi1> to vector<1x1024xi1>
    %198 = vector.broadcast %197 : vector<1x1024xi1> to vector<8x1024xi1>
    %199 = vector.broadcast %cst_132 : f32 to vector<8x1024xf32>
    %200 = arith.select %198, %196, %199 : vector<8x1024xi1>, vector<8x1024xf32>
    %c8_133 = arith.constant 8 : index
    %c0_134 = arith.constant 0 : index
    %c0_135 = arith.constant 0 : index
    %201 = vector.load %arg8[%c8_133, %c0_134, %c0_135] : memref<9x8x8xf32, #tpu.memory_space<vmem>>, vector<1x8x8xf32>
    %202 = vector.shape_cast %201 : vector<1x8x8xf32> to vector<8x8xf32>
    %cst_136 = arith.constant dense<0.000000e+00> : vector<8x1024xf32>
    %203 = tpu.matmul %202, %200, %cst_136 {dimension_numbers = #tpu.dot_dimension_numbers<[1], [0], [0], [1], [0, 0, 1, 1], [], []>} : vector<8x8xf32>, vector<8x1024xf32>, vector<8x1024xf32> -> vector<8x1024xf32>
    %204 = arith.addf %195, %203 : vector<8x1024xf32>
    %c0_137 = arith.constant 0 : index
    %c0_138 = arith.constant 0 : index
    %205 = vector.load %arg9[%c0_137, %c0_138] : memref<8x1xf32, #tpu.memory_space<vmem>>, vector<8x1xf32>
    %206 = vector.broadcast %205 : vector<8x1xf32> to vector<8x1024xf32>
    %207 = arith.mulf %204, %206 : vector<8x1024xf32>
    %c0_139 = arith.constant 0 : index
    %c0_140 = arith.constant 0 : index
    %208 = vector.load %arg10[%c0_139, %c0_140] : memref<8x1xf32, #tpu.memory_space<vmem>>, vector<8x1xf32>
    %209 = vector.broadcast %208 : vector<8x1xf32> to vector<8x1024xf32>
    %210 = arith.addf %207, %209 : vector<8x1024xf32>
    %c0_141 = arith.constant 0 : index
    %c0_142 = arith.constant 0 : index
    %c0_143 = arith.constant 0 : index
    %211 = vector.load %arg13[%c0_141, %c0_142, %c0_143] : memref<1x8x1024xf32, #tpu.memory_space<vmem>>, vector<1x8x1024xf32>
    %212 = vector.shape_cast %211 : vector<1x8x1024xf32> to vector<8x1024xf32>
    %213 = arith.addf %210, %212 : vector<8x1024xf32>
    %cst_144 = arith.constant 0.000000e+00 : f32
    %214 = vector.broadcast %cst_144 : f32 to vector<8x1024xf32>
    %215 = arith.maximumf %213, %214 : vector<8x1024xf32>
    %c0_145 = arith.constant 0 : index
    %c0_146 = arith.constant 0 : index
    %c0_147 = arith.constant 0 : index
    %216 = vector.load %arg13[%c0_145, %c0_146, %c0_147] : memref<1x8x1024xf32, #tpu.memory_space<vmem>>, vector<1x8x1024xf32>
    %217 = vector.shape_cast %216 : vector<1x8x1024xf32> to vector<8x1024xf32>
    %218 = vector.shape_cast %215 : vector<8x1024xf32> to vector<1x8x1024xf32>
    tpu.vector_store %arg13[%c0_145, %c0_146, %c0_147], %218 {strides = array<i32>} : memref<1x8x1024xf32, #tpu.memory_space<vmem>>, vector<1x8x1024xf32>,
    return
  }
  func.func @transform_0(%arg0: i32) -> (i32, i32, i32) {
    %c0_i32 = arith.constant 0 : i32
    %c0_i32_0 = arith.constant 0 : i32
    %c0_i32_1 = arith.constant 0 : i32
    return %arg0, %c0_i32, %c0_i32_0 : i32, i32, i32
  }
  func.func @transform_1(%arg0: i32) -> (i32, i32, i32) {
    %c0_i32 = arith.constant 0 : i32
    %c0_i32_0 = arith.constant 0 : i32
    %c0_i32_1 = arith.constant 0 : i32
    return %arg0, %c0_i32, %c0_i32_0 : i32, i32, i32
  }
  func.func @transform_2(%arg0: i32) -> (i32, i32) {
    %c0_i32 = arith.constant 0 : i32
    %c0_i32_0 = arith.constant 0 : i32
    %c0_i32_1 = arith.constant 0 : i32
    return %c0_i32, %c0_i32_0 : i32, i32
  }
  func.func @transform_3(%arg0: i32) -> (i32, i32) {
    %c0_i32 = arith.constant 0 : i32
    %c0_i32_0 = arith.constant 0 : i32
    %c0_i32_1 = arith.constant 0 : i32
    return %c0_i32, %c0_i32_0 : i32, i32
  }
  func.func @transform_4(%arg0: i32) -> (i32, i32, i32) {
    %c0_i32 = arith.constant 0 : i32
    %c0_i32_0 = arith.constant 0 : i32
    %c0_i32_1 = arith.constant 0 : i32
    %c0_i32_2 = arith.constant 0 : i32
    return %c0_i32, %c0_i32_0, %c0_i32_1 : i32, i32, i32
  }
  func.func @transform_5(%arg0: i32) -> (i32, i32) {
    %c0_i32 = arith.constant 0 : i32
    %c0_i32_0 = arith.constant 0 : i32
    %c0_i32_1 = arith.constant 0 : i32
    return %c0_i32, %c0_i32_0 : i32, i32
  }
  func.func @transform_6(%arg0: i32) -> (i32, i32) {
    %c0_i32 = arith.constant 0 : i32
    %c0_i32_0 = arith.constant 0 : i32
    %c0_i32_1 = arith.constant 0 : i32
    return %c0_i32, %c0_i32_0 : i32, i32
  }
  func.func @transform_7(%arg0: i32) -> (i32, i32, i32) {
    %c0_i32 = arith.constant 0 : i32
    %c0_i32_0 = arith.constant 0 : i32
    %c0_i32_1 = arith.constant 0 : i32
    %c0_i32_2 = arith.constant 0 : i32
    return %c0_i32, %c0_i32_0, %c0_i32_1 : i32, i32, i32
  }
  func.func @transform_8(%arg0: i32) -> (i32, i32) {
    %c0_i32 = arith.constant 0 : i32
    %c0_i32_0 = arith.constant 0 : i32
    %c0_i32_1 = arith.constant 0 : i32
    return %c0_i32, %c0_i32_0 : i32, i32
  }
  func.func @transform_9(%arg0: i32) -> (i32, i32) {
    %c0_i32 = arith.constant 0 : i32
    %c0_i32_0 = arith.constant 0 : i32
    %c0_i32_1 = arith.constant 0 : i32
    return %c0_i32, %c0_i32_0 : i32, i32
  }
  func.func @transform_10(%arg0: i32) -> (i32, i32) {
    %c0_i32 = arith.constant 0 : i32
    %c0_i32_0 = arith.constant 0 : i32
    %c0_i32_1 = arith.constant 0 : i32
    return %c0_i32, %c0_i32_0 : i32, i32
  }
  func.func @transform_11(%arg0: i32) -> (i32, i32) {
    %c0_i32 = arith.constant 0 : i32
    %c0_i32_0 = arith.constant 0 : i32
    %c0_i32_1 = arith.constant 0 : i32
    return %c0_i32, %c0_i32_0 : i32, i32
  }
  func.func @transform_12(%arg0: i32) -> (i32, i32, i32) {
    %c0_i32 = arith.constant 0 : i32
    %c0_i32_0 = arith.constant 0 : i32
    %c0_i32_1 = arith.constant 0 : i32
    return %arg0, %c0_i32, %c0_i32_0 : i32, i32, i32
  }
}

</mosaic_0001>

<llo_original>
// kernel: tpu_custom_call.1
$region0: #{tpu_custom_call.1}
  #allocation0 [shape = 'u32[]', space=smem, size = 0x4, offset = 0x4, fixed_abs, tag = 'smem constant byte address 0x4 - core index']
  #allocation1 [shape = 'u32[72,128]{1,0:T(1,128)}', space=vmem, size = 0x9000, scoped, tag = 'internal scratch']
  #allocation2 [shape = 'f32[8,1280]{1,0:T(8,128)}', space=vmem, size = 0xa000, scoped, tag = 'scratch operand']
  %s0 = inlined_call_operand.vmem [shape: f32[2,256,4], index: 0, kind: input, shape index: {}]
  %s1 = inlined_call_operand.vmem [shape: f32[2,4,1024], index: 1, kind: input, shape index: {}]
  %s2 = inlined_call_operand.vmem [shape: f32[4,16], index: 2, kind: input, shape index: {}]
  %s3 = inlined_call_operand.vmem [shape: f32[4,1], index: 3, kind: input, shape index: {}]
  %s4 = inlined_call_operand.vmem [shape: f32[9,8,4], index: 4, kind: input, shape index: {}]
  %s5 = inlined_call_operand.vmem [shape: f32[8,1], index: 5, kind: input, shape index: {}]
  %s6 = inlined_call_operand.vmem [shape: f32[8,1], index: 6, kind: input, shape index: {}]
  %s7 = inlined_call_operand.vmem [shape: f32[9,8,8], index: 7, kind: input, shape index: {}]
  %s8 = inlined_call_operand.vmem [shape: f32[8,1], index: 8, kind: input, shape index: {}]
  %s9 = inlined_call_operand.vmem [shape: f32[8,1], index: 9, kind: input, shape index: {}]
  %s10 = inlined_call_operand.vmem [shape: f32[8,4], index: 10, kind: input, shape index: {}]
  %s11 = inlined_call_operand.vmem [shape: f32[8,1], index: 11, kind: input, shape index: {}]
  %s12 = inlined_call_operand.hbm [shape: f32[2,8,1024], index: 12, kind: output, shape index: {}]
  %s13 = sld [smem:[#allocation0]]
  $region81: #{tpu_custom_call.1} parent=0
    _
  %s15 = ssub.s32 1, %s13
  %s16 = scalar_select 0, %s15, %s13
  $region1: #{tpu_custom_call.1} parent=0
    #allocation3 [shape = 'u8[65536]{0}', space=vmem, size = 0x10000, scoped, tag = 'output window, operand 0']
    #allocation4 [shape = 's32[2]{0}', space=sflag, size = 0x8, scoped, tag = 'scoped memory for tpu_custom_call.1']
    %17 = vsyncpa [#allocation4], 0
    %s18 = scalar_lea.sflag [#allocation4], 1
    %19 = vsyncpa %s18, 0
    loop: start=0, step=1, limit=4
    $region2: #{tpu_custom_call.1} parent=1 // loop_pre_header
      _
    $region3: #{tpu_custom_call.1} parent=1 // loop_header
      %s21 = sphi 0, %s25
      %p22 = scmp.ge.s32.totalorder %s21, 4
      %s31 = sphi 0, %s33
      %s34 = sphi 0, %s31
      %s35 = sphi 0, %s34
      %s51 = sphi 0, %s35
      %s57 = sphi 0, %s59
      %s60 = sphi 0, %s57
      %s61 = sphi 0, %s60
      %s77 = sphi 0, %s61
      %s81 = sphi 0, %s81
      %s83 = sphi 0, %s81
      %s84 = sphi 0, %s83
      %s98 = sphi 0, %s84
      %s102 = sphi 0, %s102
      %s104 = sphi 0, %s102
      %s105 = sphi 0, %s104
      %s119 = sphi 0, %s105
      %s123 = sphi 0, %s123
      %s125 = sphi 0, %s123
      %s126 = sphi 0, %s125
      %s140 = sphi 0, %s126
      %s144 = sphi 0, %s144
      %s146 = sphi 0, %s144
      %s147 = sphi 0, %s146
      %s161 = sphi 0, %s147
      %s165 = sphi 0, %s165
      %s167 = sphi 0, %s165
      %s168 = sphi 0, %s167
      %s182 = sphi 0, %s168
      %s186 = sphi 0, %s186
      %s188 = sphi 0, %s186
      %s189 = sphi 0, %s188
      %s203 = sphi 0, %s189
      %s207 = sphi 0, %s207
      %s209 = sphi 0, %s207
      %s210 = sphi 0, %s209
      %s224 = sphi 0, %s210
      %s228 = sphi 0, %s228
      %s230 = sphi 0, %s228
      %s231 = sphi 0, %s230
      %s245 = sphi 0, %s231
      %s249 = sphi 0, %s249
      %s251 = sphi 0, %s249
      %s252 = sphi 0, %s251
      %s266 = sphi 0, %s252
      %s270 = sphi 0, %s270
      %s272 = sphi 0, %s270
      %s273 = sphi 0, %s272
      %s287 = sphi 0, %s273
      %s293 = sphi 0, %s295
      %s296 = sphi 0, %s293
      %s297 = sphi 0, %s296
      %s313 = sphi 0, %s297
    $region4: #{tpu_custom_call.1} parent=1 // loop_header_branch
      %24 = sbr.rel (%p22) target = $region8
    $region5: #{tpu_custom_call.1} parent=1 // loop_body
      %s26 = ssub.s32 %s21, 1
      %s27 = ssub.s32 %s21, 2
      %s28 = sadd.s32 %s21, 1
      %s29 = ssub.s32 %s21, %s28
      %p30 = scmp.eq.s32.totalorder %s29, 0
      %s32 = sadd.s32 %s31, 1
      %s33 = scalar_select %p30, %s31, %s32
      %p36 = pneg %p30
      %p37 = scmp.eq.s32.totalorder %s21, 1
      %p38 = por %p36, %p37
      %p39 = scmp.ne.s32.totalorder %s31, %s34
      %p40 = scmp.eq.s32.totalorder %s21, 0
      %p41 = por %p39, %p40
      %p42 = scmp.ne.s32.totalorder %s31, %s34
      %p43 = scmp.eq.s32.totalorder %s26, 1
      %p44 = por %p42, %p43
      %p45 = scmp.ne.s32.totalorder %s34, %s35
      %p46 = scmp.eq.s32.totalorder %s26, 0
      %p47 = por %p45, %p46
      %p48 = scmp.ne.s32.totalorder %s34, %s35
      %p49 = scmp.eq.s32.totalorder %s27, 1
      %p50 = por %p48, %p49
      %p52 = scmp.ne.s32.totalorder %s35, %s51
      %p53 = scmp.eq.s32.totalorder %s27, 0
      %p54 = por %p52, %p53
      %s55 = ssub.s32 %s21, %s28
      %p56 = scmp.eq.s32.totalorder %s55, 0
      %s58 = sadd.s32 %s57, 1
      %s59 = scalar_select %p56, %s57, %s58
      %p62 = pneg %p56
      %p63 = scmp.eq.s32.totalorder %s21, 1
      %p64 = por %p62, %p63
      %p65 = scmp.ne.s32.totalorder %s57, %s60
      %p66 = scmp.eq.s32.totalorder %s21, 0
      %p67 = por %p65, %p66
      %p68 = scmp.ne.s32.totalorder %s57, %s60
      %p69 = scmp.eq.s32.totalorder %s26, 1
      %p70 = por %p68, %p69
      %p71 = scmp.ne.s32.totalorder %s60, %s61
      %p72 = scmp.eq.s32.totalorder %s26, 0
      %p73 = por %p71, %p72
      %p74 = scmp.ne.s32.totalorder %s60, %s61
      %p75 = scmp.eq.s32.totalorder %s27, 1
      %p76 = por %p74, %p75
      %p78 = scmp.ne.s32.totalorder %s61, %s77
      %p79 = scmp.eq.s32.totalorder %s27, 0
      %p80 = por %p78, %p79
      %s82 = sadd.s32 %s81, 1
      %p85 = scmp.eq.s32.totalorder %s21, 1
      %p86 = scmp.ne.s32.totalorder %s81, %s83
      %p87 = scmp.eq.s32.totalorder %s21, 0
      %p88 = por %p86, %p87
      %p89 = scmp.ne.s32.totalorder %s81, %s83
      %p90 = scmp.eq.s32.totalorder %s26, 1
      %p91 = por %p89, %p90
      %p92 = scmp.ne.s32.totalorder %s83, %s84
      %p93 = scmp.eq.s32.totalorder %s26, 0
      %p94 = por %p92, %p93
      %p95 = scmp.ne.s32.totalorder %s83, %s84
      %p96 = scmp.eq.s32.totalorder %s27, 1
      %p97 = por %p95, %p96
      %p99 = scmp.ne.s32.totalorder %s84, %s98
      %p100 = scmp.eq.s32.totalorder %s27, 0
      %p101 = por %p99, %p100
      %s103 = sadd.s32 %s102, 1
      %p106 = scmp.eq.s32.totalorder %s21, 1
      %p107 = scmp.ne.s32.totalorder %s102, %s104
      %p108 = scmp.eq.s32.totalorder %s21, 0
      %p109 = por %p107, %p108
      %p110 = scmp.ne.s32.totalorder %s102, %s104
      %p111 = scmp.eq.s32.totalorder %s26, 1
      %p112 = por %p110, %p111
      %p113 = scmp.ne.s32.totalorder %s104, %s105
      %p114 = scmp.eq.s32.totalorder %s26, 0
      %p115 = por %p113, %p114
      %p116 = scmp.ne.s32.totalorder %s104, %s105
      %p117 = scmp.eq.s32.totalorder %s27, 1
      %p118 = por %p116, %p117
      %p120 = scmp.ne.s32.totalorder %s105, %s119
      %p121 = scmp.eq.s32.totalorder %s27, 0
      %p122 = por %p120, %p121
      %s124 = sadd.s32 %s123, 1
      %p127 = scmp.eq.s32.totalorder %s21, 1
      %p128 = scmp.ne.s32.totalorder %s123, %s125
      %p129 = scmp.eq.s32.totalorder %s21, 0
      %p130 = por %p128, %p129
      %p131 = scmp.ne.s32.totalorder %s123, %s125
      %p132 = scmp.eq.s32.totalorder %s26, 1
      %p133 = por %p131, %p132
      %p134 = scmp.ne.s32.totalorder %s125, %s126
      %p135 = scmp.eq.s32.totalorder %s26, 0
      %p136 = por %p134, %p135
      %p137 = scmp.ne.s32.totalorder %s125, %s126
      %p138 = scmp.eq.s32.totalorder %s27, 1
      %p139 = por %p137, %p138
      %p141 = scmp.ne.s32.totalorder %s126, %s140
      %p142 = scmp.eq.s32.totalorder %s27, 0
      %p143 = por %p141, %p142
      %s145 = sadd.s32 %s144, 1
      %p148 = scmp.eq.s32.totalorder %s21, 1
      %p149 = scmp.ne.s32.totalorder %s144, %s146
      %p150 = scmp.eq.s32.totalorder %s21, 0
      %p151 = por %p149, %p150
      %p152 = scmp.ne.s32.totalorder %s144, %s146
      %p153 = scmp.eq.s32.totalorder %s26, 1
      %p154 = por %p152, %p153
      %p155 = scmp.ne.s32.totalorder %s146, %s147
      %p156 = scmp.eq.s32.totalorder %s26, 0
      %p157 = por %p155, %p156
      %p158 = scmp.ne.s32.totalorder %s146, %s147
      %p159 = scmp.eq.s32.totalorder %s27, 1
      %p160 = por %p158, %p159
      %p162 = scmp.ne.s32.totalorder %s147, %s161
      %p163 = scmp.eq.s32.totalorder %s27, 0
      %p164 = por %p162, %p163
      %s166 = sadd.s32 %s165, 1
      %p169 = scmp.eq.s32.totalorder %s21, 1
      %p170 = scmp.ne.s32.totalorder %s165, %s167
      %p171 = scmp.eq.s32.totalorder %s21, 0
      %p172 = por %p170, %p171
      %p173 = scmp.ne.s32.totalorder %s165, %s167
      %p174 = scmp.eq.s32.totalorder %s26, 1
      %p175 = por %p173, %p174
      %p176 = scmp.ne.s32.totalorder %s167, %s168
      %p177 = scmp.eq.s32.totalorder %s26, 0
      %p178 = por %p176, %p177
      %p179 = scmp.ne.s32.totalorder %s167, %s168
      %p180 = scmp.eq.s32.totalorder %s27, 1
      %p181 = por %p179, %p180
      %p183 = scmp.ne.s32.totalorder %s168, %s182
      %p184 = scmp.eq.s32.totalorder %s27, 0
      %p185 = por %p183, %p184
      %s187 = sadd.s32 %s186, 1
      %p190 = scmp.eq.s32.totalorder %s21, 1
      %p191 = scmp.ne.s32.totalorder %s186, %s188
      %p192 = scmp.eq.s32.totalorder %s21, 0
      %p193 = por %p191, %p192
      %p194 = scmp.ne.s32.totalorder %s186, %s188
      %p195 = scmp.eq.s32.totalorder %s26, 1
      %p196 = por %p194, %p195
      %p197 = scmp.ne.s32.totalorder %s188, %s189
      %p198 = scmp.eq.s32.totalorder %s26, 0
      %p199 = por %p197, %p198
      %p200 = scmp.ne.s32.totalorder %s188, %s189
      %p201 = scmp.eq.s32.totalorder %s27, 1
      %p202 = por %p200, %p201
      %p204 = scmp.ne.s32.totalorder %s189, %s203
      %p205 = scmp.eq.s32.totalorder %s27, 0
      %p206 = por %p204, %p205
      %s208 = sadd.s32 %s207, 1
      %p211 = scmp.eq.s32.totalorder %s21, 1
      %p212 = scmp.ne.s32.totalorder %s207, %s209
      %p213 = scmp.eq.s32.totalorder %s21, 0
      %p214 = por %p212, %p213
      %p215 = scmp.ne.s32.totalorder %s207, %s209
      %p216 = scmp.eq.s32.totalorder %s26, 1
      %p217 = por %p215, %p216
      %p218 = scmp.ne.s32.totalorder %s209, %s210
      %p219 = scmp.eq.s32.totalorder %s26, 0
      %p220 = por %p218, %p219
      %p221 = scmp.ne.s32.totalorder %s209, %s210
      %p222 = scmp.eq.s32.totalorder %s27, 1
      %p223 = por %p221, %p222
      %p225 = scmp.ne.s32.totalorder %s210, %s224
      %p226 = scmp.eq.s32.totalorder %s27, 0
      %p227 = por %p225, %p226
      %s229 = sadd.s32 %s228, 1
      %p232 = scmp.eq.s32.totalorder %s21, 1
      %p233 = scmp.ne.s32.totalorder %s228, %s230
      %p234 = scmp.eq.s32.totalorder %s21, 0
      %p235 = por %p233, %p234
      %p236 = scmp.ne.s32.totalorder %s228, %s230
      %p237 = scmp.eq.s32.totalorder %s26, 1
      %p238 = por %p236, %p237
      %p239 = scmp.ne.s32.totalorder %s230, %s231
      %p240 = scmp.eq.s32.totalorder %s26, 0
      %p241 = por %p239, %p240
      %p242 = scmp.ne.s32.totalorder %s230, %s231
      %p243 = scmp.eq.s32.totalorder %s27, 1
      %p244 = por %p242, %p243
      %p246 = scmp.ne.s32.totalorder %s231, %s245
      %p247 = scmp.eq.s32.totalorder %s27, 0
      %p248 = por %p246, %p247
      %s250 = sadd.s32 %s249, 1
      %p253 = scmp.eq.s32.totalorder %s21, 1
      %p254 = scmp.ne.s32.totalorder %s249, %s251
      %p255 = scmp.eq.s32.totalorder %s21, 0
      %p256 = por %p254, %p255
      %p257 = scmp.ne.s32.totalorder %s249, %s251
      %p258 = scmp.eq.s32.totalorder %s26, 1
      %p259 = por %p257, %p258
      %p260 = scmp.ne.s32.totalorder %s251, %s252
      %p261 = scmp.eq.s32.totalorder %s26, 0
      %p262 = por %p260, %p261
      %p263 = scmp.ne.s32.totalorder %s251, %s252
      %p264 = scmp.eq.s32.totalorder %s27, 1
      %p265 = por %p263, %p264
      %p267 = scmp.ne.s32.totalorder %s252, %s266
      %p268 = scmp.eq.s32.totalorder %s27, 0
      %p269 = por %p267, %p268
      %s271 = sadd.s32 %s270, 1
      %p274 = scmp.eq.s32.totalorder %s21, 1
      %p275 = scmp.ne.s32.totalorder %s270, %s272
      %p276 = scmp.eq.s32.totalorder %s21, 0
      %p277 = por %p275, %p276
      %p278 = scmp.ne.s32.totalorder %s270, %s272
      %p279 = scmp.eq.s32.totalorder %s26, 1
      %p280 = por %p278, %p279
      %p281 = scmp.ne.s32.totalorder %s272, %s273
      %p282 = scmp.eq.s32.totalorder %s26, 0
      %p283 = por %p281, %p282
      %p284 = scmp.ne.s32.totalorder %s272, %s273
      %p285 = scmp.eq.s32.totalorder %s27, 1
      %p286 = por %p284, %p285
      %p288 = scmp.ne.s32.totalorder %s273, %s287
      %p289 = scmp.eq.s32.totalorder %s27, 0
      %p290 = por %p288, %p289
      %s291 = ssub.s32 %s21, %s28
      %p292 = scmp.eq.s32.totalorder %s291, 0
      %s294 = sadd.s32 %s293, 1
      %s295 = scalar_select %p292, %s293, %s294
      %p298 = pneg %p292
      %p299 = scmp.eq.s32.totalorder %s21, 1
      %p300 = por %p298, %p299
      %p301 = scmp.ne.s32.totalorder %s293, %s296
      %p302 = scmp.eq.s32.totalorder %s21, 0
      %p303 = por %p301, %p302
      %p304 = scmp.ne.s32.totalorder %s293, %s296
      %p305 = scmp.eq.s32.totalorder %s26, 1
      %p306 = por %p304, %p305
      %p307 = scmp.ne.s32.totalorder %s296, %s297
      %p308 = scmp.eq.s32.totalorder %s26, 0
      %p309 = por %p307, %p308
      %p310 = scmp.ne.s32.totalorder %s296, %s297
      %p311 = scmp.eq.s32.totalorder %s27, 1
      %p312 = por %p310, %p311
      %p314 = scmp.ne.s32.totalorder %s297, %s313
      %p315 = scmp.eq.s32.totalorder %s27, 0
      %p316 = por %p314, %p315
      %p317 = scmp.le.s32.totalorder 1, %s21
      %p318 = scmp.lt.s32.totalorder %s21, 3
      %p319 = pnand %p317, %p318
      %p320 = pneg %p319
      // Predicated region
      $region9: #{tpu_custom_call.1} parent=5 // pred_check
        _
      $region10: #{tpu_custom_call.1} parent=5 // pred_check_branch
        %322 = sbr.rel (%p319) target = $region12
      $region11: #{tpu_custom_call.1} parent=5 // pred_region
        %s323 = ssub.s32 %s21, 1
        // Predicated region
        $region13: #{tpu_custom_call.1} parent=11 // pred_check
          %p324 = pneg %p94
        $region14: #{tpu_custom_call.1} parent=11 // pred_check_branch
          %326 = sbr.rel (%p324) target = $region16
        $region15: #{tpu_custom_call.1} parent=11 // pred_region
          _
        $region16: #{tpu_custom_call.1} parent=11 // pred_fallthru
          _
        // Predicated region
        $region17: #{tpu_custom_call.1} parent=11 // pred_check
          %p327 = pneg %p115
        $region18: #{tpu_custom_call.1} parent=11 // pred_check_branch
          %329 = sbr.rel (%p327) target = $region20
        $region19: #{tpu_custom_call.1} parent=11 // pred_region
          _
        $region20: #{tpu_custom_call.1} parent=11 // pred_fallthru
          _
        // Predicated region
        $region21: #{tpu_custom_call.1} parent=11 // pred_check
          %p330 = pneg %p136
        $region22: #{tpu_custom_call.1} parent=11 // pred_check_branch
          %332 = sbr.rel (%p330) target = $region24
        $region23: #{tpu_custom_call.1} parent=11 // pred_region
          _
        $region24: #{tpu_custom_call.1} parent=11 // pred_fallthru
          _
        // Predicated region
        $region25: #{tpu_custom_call.1} parent=11 // pred_check
          %p333 = pneg %p157
        $region26: #{tpu_custom_call.1} parent=11 // pred_check_branch
          %335 = sbr.rel (%p333) target = $region28
        $region27: #{tpu_custom_call.1} parent=11 // pred_region
          _
        $region28: #{tpu_custom_call.1} parent=11 // pred_fallthru
          _
        // Predicated region
        $region29: #{tpu_custom_call.1} parent=11 // pred_check
          %p336 = pneg %p178
        $region30: #{tpu_custom_call.1} parent=11 // pred_check_branch
          %338 = sbr.rel (%p336) target = $region32
        $region31: #{tpu_custom_call.1} parent=11 // pred_region
          _
        $region32: #{tpu_custom_call.1} parent=11 // pred_fallthru
          _
        // Predicated region
        $region33: #{tpu_custom_call.1} parent=11 // pred_check
          %p339 = pneg %p199
        $region34: #{tpu_custom_call.1} parent=11 // pred_check_branch
          %341 = sbr.rel (%p339) target = $region36
        $region35: #{tpu_custom_call.1} parent=11 // pred_region
          _
        $region36: #{tpu_custom_call.1} parent=11 // pred_fallthru
          _
        // Predicated region
        $region37: #{tpu_custom_call.1} parent=11 // pred_check
          %p342 = pneg %p220
        $region38: #{tpu_custom_call.1} parent=11 // pred_check_branch
          %344 = sbr.rel (%p342) target = $region40
        $region39: #{tpu_custom_call.1} parent=11 // pred_region
          _
        $region40: #{tpu_custom_call.1} parent=11 // pred_fallthru
          _
        // Predicated region
        $region41: #{tpu_custom_call.1} parent=11 // pred_check
          %p345 = pneg %p241
        $region42: #{tpu_custom_call.1} parent=11 // pred_check_branch
          %347 = sbr.rel (%p345) target = $region44
        $region43: #{tpu_custom_call.1} parent=11 // pred_region
          _
        $region44: #{tpu_custom_call.1} parent=11 // pred_fallthru
          _
        // Predicated region
        $region45: #{tpu_custom_call.1} parent=11 // pred_check
          %p348 = pneg %p262
        $region46: #{tpu_custom_call.1} parent=11 // pred_check_branch
          %350 = sbr.rel (%p348) target = $region48
        $region47: #{tpu_custom_call.1} parent=11 // pred_region
          _
        $region48: #{tpu_custom_call.1} parent=11 // pred_fallthru
          _
        // Predicated region
        $region49: #{tpu_custom_call.1} parent=11 // pred_check
          %p351 = pneg %p283
        $region50: #{tpu_custom_call.1} parent=11 // pred_check_branch
          %353 = sbr.rel (%p351) target = $region52
        $region51: #{tpu_custom_call.1} parent=11 // pred_region
          _
        $region52: #{tpu_custom_call.1} parent=11 // pred_fallthru
          _
      $region12: #{tpu_custom_call.1} parent=5 // pred_fallthru
        _
      %p354 = scmp.lt.s32.totalorder %s21, 2
      // Predicated region
      $region53: #{tpu_custom_call.1} parent=5 // pred_check
        %p355 = pneg %p354
      $region54: #{tpu_custom_call.1} parent=5 // pred_check_branch
        %357 = sbr.rel (%p355) target = $region56
      $region55: #{tpu_custom_call.1} parent=5 // pred_region
        // Predicated region
        $region57: #{tpu_custom_call.1} parent=55 // pred_check
          %p358 = pneg %p41
        $region58: #{tpu_custom_call.1} parent=55 // pred_check_branch
          %360 = sbr.rel (%p358) target = $region60
        $region59: #{tpu_custom_call.1} parent=55 // pred_region
          %p361 = scmp.lt.s32.totalorder %s21, 1
          %s362 = scalar_select %p361, %s21, 1
          %s363 = smul.addr %s362, 32
          %s364 = smul.addr %s363, 8
          %s365 = scalar_lea.vmem %s0, %s364
        $region60: #{tpu_custom_call.1} parent=55 // pred_fallthru
          _
        // Predicated region
        $region61: #{tpu_custom_call.1} parent=55 // pred_check
          %p366 = pneg %p67
        $region62: #{tpu_custom_call.1} parent=55 // pred_check_branch
          %368 = sbr.rel (%p366) target = $region64
        $region63: #{tpu_custom_call.1} parent=55 // pred_region
          %p369 = scmp.lt.s32.totalorder %s21, 1
          %s370 = scalar_select %p369, %s21, 1
          %s371 = smul.addr %s370, 8
          %s372 = smul.addr %s371, 4
          %s373 = scalar_lea.vmem %s1, %s372
        $region64: #{tpu_custom_call.1} parent=55 // pred_fallthru
          _
      $region56: #{tpu_custom_call.1} parent=5 // pred_fallthru
        _
      %p374 = scmp.le.s32.totalorder 1, %s21
      %p375 = scmp.lt.s32.totalorder %s21, 3
      %p376 = pnand %p374, %p375
      %p377 = pneg %p376
      // Predicated region
      $region65: #{tpu_custom_call.1} parent=5 // pred_check
        _
      $region66: #{tpu_custom_call.1} parent=5 // pred_check_branch
        %379 = sbr.rel (%p376) target = $region68
      $region67: #{tpu_custom_call.1} parent=5 // pred_region
        %s380 = ssub.s32 %s21, 1
        %p381 = scmp.lt.s32.totalorder %s26, 1
        %s382 = scalar_select %p381, %s26, 1
        %s383 = smul.addr %s382, 32
        %s384 = smul.addr %s383, 8
        %s385 = scalar_lea.vmem %s0, %s384
        %p386 = pneg %p47
        %p387 = pneg %p44
        %p388 = scmp.lt.s32.totalorder %s26, 1
        %s389 = scalar_select %p388, %s26, 1
        %s390 = smul.addr %s389, 8
        %s391 = smul.addr %s390, 4
        %s392 = scalar_lea.vmem %s1, %s391
        %p393 = pneg %p73
        %p394 = pneg %p70
        %p395 = pneg %p94
        %p396 = pneg %p91
        %p397 = pneg %p115
        %p398 = pneg %p112
        %p399 = pneg %p136
        %p400 = pneg %p133
        %p401 = pneg %p157
        %p402 = pneg %p154
        %p403 = pneg %p178
        %p404 = pneg %p175
        %p405 = pneg %p199
        %p406 = pneg %p196
        %p407 = pneg %p220
        %p408 = pneg %p217
        %p409 = pneg %p241
        %p410 = pneg %p238
        %p411 = pneg %p262
        %p412 = pneg %p259
        %p413 = pneg %p283
        %p414 = pneg %p280
        %p415 = pneg %p309
        %p416 = pneg %p306
        %s417 = sand.u32 %s296, 1
        %s418 = scalar_lea.sflag [#allocation4], %s417
        %s419 = sand.u32 %s296, 1
        %s420 = smul.addr %s419, 64
        %s421 = scalar_lea.vmem [#allocation3], %s420
        %p422 = scmp.lt.s32.totalorder %s26, 1
        %s423 = scalar_select %p422, %s26, 1
        %s424 = smul.addr %s423, 32
        %s425 = smul.addr %s424, 8
        %s426 = scalar_lea.vmem %s0, %s425
        %p427 = scmp.lt.s32.totalorder %s26, 1
        %s428 = scalar_select %p427, %s26, 1
        %s429 = smul.addr %s428, 8
        %s430 = smul.addr %s429, 4
        %s431 = scalar_lea.vmem %s1, %s430
        %v432 = vlaneseq
        %v433 = vand.u32 %v432, 127
        %v434 = vadd.s32 %v433, 128
        %v435 = vadd.s32 %v433, 256
        %v436 = vadd.s32 %v433, 384
        %v437 = vadd.s32 %v433, 512
        %v438 = vadd.s32 %v433, 640
        %v439 = vadd.s32 %v433, 768
        %v440 = vadd.s32 %v433, 896
        %vm441 = vcmp.lt.s32.totalorder %v433, 0
        %v442 = vsub.s32 0, %v433
        %v443 = vsel %vm441, %v442, %v433
        %v444 = vshrl.u32 %v443, 5
        %v445 = vand.u32 %v443, 31
        %v446 = vsub.s32 0, %v445
        %v447 = vsel %vm441, %v446, %v445
        %vm448 = vcmp.lt.s32.totalorder %v434, 0
        %v449 = vsub.s32 0, %v434
        %v450 = vsel %vm448, %v449, %v434
        %v451 = vshrl.u32 %v450, 5
        %v452 = vand.u32 %v450, 31
        %v453 = vsub.s32 0, %v452
        %v454 = vsel %vm448, %v453, %v452
        %vm455 = vcmp.lt.s32.totalorder %v435, 0
        %v456 = vsub.s32 0, %v435
        %v457 = vsel %vm455, %v456, %v435
        %v458 = vshrl.u32 %v457, 5
        %v459 = vand.u32 %v457, 31
        %v460 = vsub.s32 0, %v459
        %v461 = vsel %vm455, %v460, %v459
        %vm462 = vcmp.lt.s32.totalorder %v436, 0
        %v463 = vsub.s32 0, %v436
        %v464 = vsel %vm462, %v463, %v436
        %v465 = vshrl.u32 %v464, 5
        %v466 = vand.u32 %v464, 31
        %v467 = vsub.s32 0, %v466
        %v468 = vsel %vm462, %v467, %v466
        %vm469 = vcmp.lt.s32.totalorder %v437, 0
        %v470 = vsub.s32 0, %v437
        %v471 = vsel %vm469, %v470, %v437
        %v472 = vshrl.u32 %v471, 5
        %v473 = vand.u32 %v471, 31
        %v474 = vsub.s32 0, %v473
        %v475 = vsel %vm469, %v474, %v473
        %vm476 = vcmp.lt.s32.totalorder %v438, 0
        %v477 = vsub.s32 0, %v438
        %v478 = vsel %vm476, %v477, %v438
        %v479 = vshrl.u32 %v478, 5
        %v480 = vand.u32 %v478, 31
        %v481 = vsub.s32 0, %v480
        %v482 = vsel %vm476, %v481, %v480
        %vm483 = vcmp.lt.s32.totalorder %v439, 0
        %v484 = vsub.s32 0, %v439
        %v485 = vsel %vm483, %v484, %v439
        %v486 = vshrl.u32 %v485, 5
        %v487 = vand.u32 %v485, 31
        %v488 = vsub.s32 0, %v487
        %v489 = vsel %vm483, %v488, %v487
        %vm490 = vcmp.lt.s32.totalorder %v440, 0
        %v491 = vsub.s32 0, %v440
        %v492 = vsel %vm490, %v491, %v440
        %v493 = vshrl.u32 %v492, 5
        %v494 = vand.u32 %v492, 31
        %v495 = vsub.s32 0, %v494
        %v496 = vsel %vm490, %v495, %v494
        %vm497 = vcmp.ne.s32.totalorder %v447, 0
        %vm498 = vcmp.ne.s32.totalorder %v454, 0
        %vm499 = vcmp.ne.s32.totalorder %v461, 0
        %vm500 = vcmp.ne.s32.totalorder %v468, 0
        %vm501 = vcmp.ne.s32.totalorder %v475, 0
        %vm502 = vcmp.ne.s32.totalorder %v482, 0
        %vm503 = vcmp.ne.s32.totalorder %v489, 0
        %vm504 = vcmp.ne.s32.totalorder %v496, 0
        %vm505 = vcmp.lt.s32.totalorder %v447, 0
        %vm506 = vcmp.lt.s32.totalorder %v454, 0
        %vm507 = vcmp.lt.s32.totalorder %v461, 0
        %vm508 = vcmp.lt.s32.totalorder %v468, 0
        %vm509 = vcmp.lt.s32.totalorder %v475, 0
        %vm510 = vcmp.lt.s32.totalorder %v482, 0
        %vm511 = vcmp.lt.s32.totalorder %v489, 0
        %vm512 = vcmp.lt.s32.totalorder %v496, 0
        %vm513 = vmand %vm505, %vm497
        %vm514 = vmand %vm506, %vm498
        %vm515 = vmand %vm507, %vm499
        %vm516 = vmand %vm508, %vm500
        %vm517 = vmand %vm509, %vm501
        %vm518 = vmand %vm510, %vm502
        %vm519 = vmand %vm511, %vm503
        %vm520 = vmand %vm512, %vm504
        %v521 = vadd.s32 %v447, 32
        %v522 = vadd.s32 %v454, 32
        %v523 = vadd.s32 %v461, 32
        %v524 = vadd.s32 %v468, 32
        %v525 = vadd.s32 %v475, 32
        %v526 = vadd.s32 %v482, 32
        %v527 = vadd.s32 %v489, 32
        %v528 = vadd.s32 %v496, 32
        %v529 = vsel %vm513, %v521, %v447
        %v530 = vsel %vm514, %v522, %v454
        %v531 = vsel %vm515, %v523, %v461
        %v532 = vsel %vm516, %v524, %v468
        %v533 = vsel %vm517, %v525, %v475
        %v534 = vsel %vm518, %v526, %v482
        %v535 = vsel %vm519, %v527, %v489
        %v536 = vsel %vm520, %v528, %v496
        %vm537 = vcmp.gt.s32.totalorder %v529, 0
        %vm538 = vcmp.gt.s32.totalorder %v530, 0
        %vm539 = vcmp.gt.s32.totalorder %v531, 0
        %vm540 = vcmp.gt.s32.totalorder %v532, 0
        %vm541 = vcmp.gt.s32.totalorder %v533, 0
        %vm542 = vcmp.gt.s32.totalorder %v534, 0
        %vm543 = vcmp.gt.s32.totalorder %v535, 0
        %vm544 = vcmp.gt.s32.totalorder %v536, 0
        %vm545 = vcmp.lt.s32.totalorder %v529, 31
        %vm546 = vcmp.lt.s32.totalorder %v530, 31
        %vm547 = vcmp.lt.s32.totalorder %v531, 31
        %vm548 = vcmp.lt.s32.totalorder %v532, 31
        %vm549 = vcmp.lt.s32.totalorder %v533, 31
        %vm550 = vcmp.lt.s32.totalorder %v534, 31
        %vm551 = vcmp.lt.s32.totalorder %v535, 31
        %vm552 = vcmp.lt.s32.totalorder %v536, 31
        %553 = vst [vmem:[#allocation2] sm:$0xff] 0.0
        %554 = vst [vmem:[#allocation2 + $0x48] sm:$0xff] 0.0
        %v555 = vld [vmem:[%s426] sm:$0xff]
        %v556 = vld [vmem:[%s426 + $0x8] sm:$0xff]
        %v557 = vld [vmem:[%s426 + $0x10] sm:$0xff]
        %v558 = vld [vmem:[%s426 + $0x18] sm:$0xff]
        %v559 = vld [vmem:[%s426 + $0x20] sm:$0xff]
        %v560 = vld [vmem:[%s426 + $0x28] sm:$0xff]
        %v561 = vld [vmem:[%s426 + $0x30] sm:$0xff]
        %v562 = vld [vmem:[%s426 + $0x38] sm:$0xff]
        %v563 = vld [vmem:[%s426 + $0x40] sm:$0xff]
        %v564 = vld [vmem:[%s426 + $0x48] sm:$0xff]
        %v565 = vld [vmem:[%s426 + $0x50] sm:$0xff]
        %v566 = vld [vmem:[%s426 + $0x58] sm:$0xff]
        %v567 = vld [vmem:[%s426 + $0x60] sm:$0xff]
        %v568 = vld [vmem:[%s426 + $0x68] sm:$0xff]
        %v569 = vld [vmem:[%s426 + $0x70] sm:$0xff]
        %v570 = vld [vmem:[%s426 + $0x78] sm:$0xff]
        %v571 = vld [vmem:[%s426 + $0x80] sm:$0xff]
        %v572 = vld [vmem:[%s426 + $0x88] sm:$0xff]
        %v573 = vld [vmem:[%s426 + $0x90] sm:$0xff]
        %v574 = vld [vmem:[%s426 + $0x98] sm:$0xff]
        %v575 = vld [vmem:[%s426 + $0xa0] sm:$0xff]
        %v576 = vld [vmem:[%s426 + $0xa8] sm:$0xff]
        %v577 = vld [vmem:[%s426 + $0xb0] sm:$0xff]
        %v578 = vld [vmem:[%s426 + $0xb8] sm:$0xff]
        %v579 = vld [vmem:[%s426 + $0xc0] sm:$0xff]
        %v580 = vld [vmem:[%s426 + $0xc8] sm:$0xff]
        %v581 = vld [vmem:[%s426 + $0xd0] sm:$0xff]
        %v582 = vld [vmem:[%s426 + $0xd8] sm:$0xff]
        %v583 = vld [vmem:[%s426 + $0xe0] sm:$0xff]
        %v584 = vld [vmem:[%s426 + $0xe8] sm:$0xff]
        %v585 = vld [vmem:[%s426 + $0xf0] sm:$0xff]
        %v586 = vld [vmem:[%s426 + $0xf8] sm:$0xff]
        %v587 = vld [vmem:[%s2] sm:$0xf]
        %vm588 = vcmask 31744
        %v590 = vsel %vm588, %v555, 0
        %v593 = vsel %vm588, %v556, 0
        %v596 = vsel %vm588, %v557, 0
        %v599 = vsel %vm588, %v558, 0
        %v602 = vsel %vm588, %v559, 0
        %v605 = vsel %vm588, %v560, 0
        %v608 = vsel %vm588, %v561, 0
        %v611 = vsel %vm588, %v562, 0
        %v614 = vsel %vm588, %v563, 0
        %v617 = vsel %vm588, %v564, 0
        %v620 = vsel %vm588, %v565, 0
        %v623 = vsel %vm588, %v566, 0
        %v626 = vsel %vm588, %v567, 0
        %v629 = vsel %vm588, %v568, 0
        %v632 = vsel %vm588, %v569, 0
        %v635 = vsel %vm588, %v570, 0
        %v638 = vsel %vm588, %v571, 0
        %v641 = vsel %vm588, %v572, 0
        %v644 = vsel %vm588, %v573, 0
        %v647 = vsel %vm588, %v574, 0
        %v650 = vsel %vm588, %v575, 0
        %v653 = vsel %vm588, %v576, 0
        %v656 = vsel %vm588, %v577, 0
        %v659 = vsel %vm588, %v578, 0
        %v662 = vsel %vm588, %v579, 0
        %v665 = vsel %vm588, %v580, 0
        %v668 = vsel %vm588, %v581, 0
        %v671 = vsel %vm588, %v582, 0
        %v674 = vsel %vm588, %v583, 0
        %v677 = vsel %vm588, %v584, 0
        %v680 = vsel %vm588, %v585, 0
        %v683 = vsel %vm588, %v586, 0
        %vm685 = vcmask 1043456
        %v687 = vsel %vm685, %v587, 0
        %689 = vmatpush.msra.mxu0 0.0
        %690 = vmatpush.msra.mxu0 0.0
        %691 = vmatpush.msra.mxu0 0.0
        %692 = vmatpush.msra.mxu0 0.0
        %693 = vmatpush.msra.mxu0 0.0
        %694 = vmatpush.msra.mxu0 0.0
        %695 = vmatpush.msra.mxu0 0.0
        %696 = vmatpush.msra.mxu0 0.0
        %697 = vmatpush.msra.mxu0 0.0
        %698 = vmatpush.msra.mxu0 0.0
        %699 = vmatpush.msra.mxu0 0.0
        %700 = vmatpush.msra.mxu0 0.0
        %701 = vmatpush.msra.mxu0 0.0
        %702 = vmatpush.msra.mxu0 0.0
        %703 = vmatpush.msra.mxu0 0.0
        %704 = vmatpush.msra.mxu0 %v687
        %705 = vmatmul.f32.gmra.mxu0 %v590
        %v706 = vpop.f32.mrf.mxu0
        %v707 = vadd.f32 0.0, %v706
        %708 = vmatmul.f32.gmra.mxu0 %v593
        %v709 = vpop.f32.mrf.mxu0
        %v710 = vadd.f32 0.0, %v709
        %711 = vmatmul.f32.gmra.mxu0 %v596
        %v712 = vpop.f32.mrf.mxu0
        %v713 = vadd.f32 0.0, %v712
        %714 = vmatmul.f32.gmra.mxu0 %v599
        %v715 = vpop.f32.mrf.mxu0
        %v716 = vadd.f32 0.0, %v715
        %717 = vmatmul.f32.gmra.mxu0 %v602
        %v718 = vpop.f32.mrf.mxu0
        %v719 = vadd.f32 0.0, %v718
        %720 = vmatmul.f32.gmra.mxu0 %v605
        %v721 = vpop.f32.mrf.mxu0
        %v722 = vadd.f32 0.0, %v721
        %723 = vmatmul.f32.gmra.mxu0 %v608
        %v724 = vpop.f32.mrf.mxu0
        %v725 = vadd.f32 0.0, %v724
        %726 = vmatmul.f32.gmra.mxu0 %v611
        %v727 = vpop.f32.mrf.mxu0
        %v728 = vadd.f32 0.0, %v727
        %729 = vmatmul.f32.gmra.mxu0 %v614
        %v730 = vpop.f32.mrf.mxu0
        %v731 = vadd.f32 0.0, %v730
        %732 = vmatmul.f32.gmra.mxu0 %v617
        %v733 = vpop.f32.mrf.mxu0
        %v734 = vadd.f32 0.0, %v733
        %735 = vmatmul.f32.gmra.mxu0 %v620
        %v736 = vpop.f32.mrf.mxu0
        %v737 = vadd.f32 0.0, %v736
        %738 = vmatmul.f32.gmra.mxu0 %v623
        %v739 = vpop.f32.mrf.mxu0
        %v740 = vadd.f32 0.0, %v739
        %741 = vmatmul.f32.gmra.mxu0 %v626
        %v742 = vpop.f32.mrf.mxu0
        %v743 = vadd.f32 0.0, %v742
        %744 = vmatmul.f32.gmra.mxu0 %v629
        %v745 = vpop.f32.mrf.mxu0
        %v746 = vadd.f32 0.0, %v745
        %747 = vmatmul.f32.gmra.mxu0 %v632
        %v748 = vpop.f32.mrf.mxu0
        %v749 = vadd.f32 0.0, %v748
        %750 = vmatmul.f32.gmra.mxu0 %v635
        %v751 = vpop.f32.mrf.mxu0
        %v752 = vadd.f32 0.0, %v751
        %753 = vmatmul.f32.gmra.mxu0 %v638
        %v754 = vpop.f32.mrf.mxu0
        %v755 = vadd.f32 0.0, %v754
        %756 = vmatmul.f32.gmra.mxu0 %v641
        %v757 = vpop.f32.mrf.mxu0
        %v758 = vadd.f32 0.0, %v757
        %759 = vmatmul.f32.gmra.mxu0 %v644
        %v760 = vpop.f32.mrf.mxu0
        %v761 = vadd.f32 0.0, %v760
        %762 = vmatmul.f32.gmra.mxu0 %v647
        %v763 = vpop.f32.mrf.mxu0
        %v764 = vadd.f32 0.0, %v763
        %765 = vmatmul.f32.gmra.mxu0 %v650
        %v766 = vpop.f32.mrf.mxu0
        %v767 = vadd.f32 0.0, %v766
        %768 = vmatmul.f32.gmra.mxu0 %v653
        %v769 = vpop.f32.mrf.mxu0
        %v770 = vadd.f32 0.0, %v769
        %771 = vmatmul.f32.gmra.mxu0 %v656
        %v772 = vpop.f32.mrf.mxu0
        %v773 = vadd.f32 0.0, %v772
        %774 = vmatmul.f32.gmra.mxu0 %v659
        %v775 = vpop.f32.mrf.mxu0
        %v776 = vadd.f32 0.0, %v775
        %777 = vmatmul.f32.gmra.mxu0 %v662
        %v778 = vpop.f32.mrf.mxu0
        %v779 = vadd.f32 0.0, %v778
        %780 = vmatmul.f32.gmra.mxu0 %v665
        %v781 = vpop.f32.mrf.mxu0
        %v782 = vadd.f32 0.0, %v781
        %783 = vmatmul.f32.gmra.mxu0 %v668
        %v784 = vpop.f32.mrf.mxu0
        %v785 = vadd.f32 0.0, %v784
        %786 = vmatmul.f32.gmra.mxu0 %v671
        %v787 = vpop.f32.mrf.mxu0
        %v788 = vadd.f32 0.0, %v787
        %789 = vmatmul.f32.gmra.mxu0 %v674
        %v790 = vpop.f32.mrf.mxu0
        %v791 = vadd.f32 0.0, %v790
        %792 = vmatmul.f32.gmra.mxu0 %v677
        %v793 = vpop.f32.mrf.mxu0
        %v794 = vadd.f32 0.0, %v793
        %795 = vmatmul.f32.gmra.mxu0 %v680
        %v796 = vpop.f32.mrf.mxu0
        %v797 = vadd.f32 0.0, %v796
        %798 = vmatmul.f32.gmra.mxu0 %v683
        %v799 = vpop.f32.mrf.mxu0
        %v800 = vadd.f32 0.0, %v799
        %801 = vdwg.mxu0
        %v834 = vrot.slane %v707, 1
        %v835 = vrot.slane %v707, 2
        %v836 = vrot.slane %v707, 3
        %v837 = vrot.slane %v707, 4
        %v838 = vrot.slane %v707, 5
        %v839 = vrot.slane %v707, 6
        %v840 = vrot.slane %v707, 7
        %v841 = vrot.slane %v710, 1
        %v842 = vrot.slane %v710, 2
        %v843 = vrot.slane %v710, 3
        %v844 = vrot.slane %v710, 4
        %v845 = vrot.slane %v710, 5
        %v846 = vrot.slane %v710, 6
        %v847 = vrot.slane %v710, 7
        %v848 = vrot.slane %v713, 1
        %v849 = vrot.slane %v713, 2
        %v850 = vrot.slane %v713, 3
        %v851 = vrot.slane %v713, 4
        %v852 = vrot.slane %v713, 5
        %v853 = vrot.slane %v713, 6
        %v854 = vrot.slane %v713, 7
        %v855 = vrot.slane %v716, 1
        %v856 = vrot.slane %v716, 2
        %v857 = vrot.slane %v716, 3
        %v858 = vrot.slane %v716, 4
        %v859 = vrot.slane %v716, 5
        %v860 = vrot.slane %v716, 6
        %v861 = vrot.slane %v716, 7
        %v862 = vrot.slane %v719, 1
        %v863 = vrot.slane %v719, 2
        %v864 = vrot.slane %v719, 3
        %v865 = vrot.slane %v719, 4
        %v866 = vrot.slane %v719, 5
        %v867 = vrot.slane %v719, 6
        %v868 = vrot.slane %v719, 7
        %v869 = vrot.slane %v722, 1
        %v870 = vrot.slane %v722, 2
        %v871 = vrot.slane %v722, 3
        %v872 = vrot.slane %v722, 4
        %v873 = vrot.slane %v722, 5
        %v874 = vrot.slane %v722, 6
        %v875 = vrot.slane %v722, 7
        %v876 = vrot.slane %v725, 1
        %v877 = vrot.slane %v725, 2
        %v878 = vrot.slane %v725, 3
        %v879 = vrot.slane %v725, 4
        %v880 = vrot.slane %v725, 5
        %v881 = vrot.slane %v725, 6
        %v882 = vrot.slane %v725, 7
        %v883 = vrot.slane %v728, 1
        %v884 = vrot.slane %v728, 2
        %v885 = vrot.slane %v728, 3
        %v886 = vrot.slane %v728, 4
        %v887 = vrot.slane %v728, 5
        %v888 = vrot.slane %v728, 6
        %v889 = vrot.slane %v728, 7
        %v890 = vrot.slane %v731, 1
        %v891 = vrot.slane %v731, 2
        %v892 = vrot.slane %v731, 3
        %v893 = vrot.slane %v731, 4
        %v894 = vrot.slane %v731, 5
        %v895 = vrot.slane %v731, 6
        %v896 = vrot.slane %v731, 7
        %v897 = vrot.slane %v734, 1
        %v898 = vrot.slane %v734, 2
        %v899 = vrot.slane %v734, 3
        %v900 = vrot.slane %v734, 4
        %v901 = vrot.slane %v734, 5
        %v902 = vrot.slane %v734, 6
        %v903 = vrot.slane %v734, 7
        %v904 = vrot.slane %v737, 1
        %v905 = vrot.slane %v737, 2
        %v906 = vrot.slane %v737, 3
        %v907 = vrot.slane %v737, 4
        %v908 = vrot.slane %v737, 5
        %v909 = vrot.slane %v737, 6
        %v910 = vrot.slane %v737, 7
        %v911 = vrot.slane %v740, 1
        %v912 = vrot.slane %v740, 2
        %v913 = vrot.slane %v740, 3
        %v914 = vrot.slane %v740, 4
        %v915 = vrot.slane %v740, 5
        %v916 = vrot.slane %v740, 6
        %v917 = vrot.slane %v740, 7
        %v918 = vrot.slane %v743, 1
        %v919 = vrot.slane %v743, 2
        %v920 = vrot.slane %v743, 3
        %v921 = vrot.slane %v743, 4
        %v922 = vrot.slane %v743, 5
        %v923 = vrot.slane %v743, 6
        %v924 = vrot.slane %v743, 7
        %v925 = vrot.slane %v746, 1
        %v926 = vrot.slane %v746, 2
        %v927 = vrot.slane %v746, 3
        %v928 = vrot.slane %v746, 4
        %v929 = vrot.slane %v746, 5
        %v930 = vrot.slane %v746, 6
        %v931 = vrot.slane %v746, 7
        %v932 = vrot.slane %v749, 1
        %v933 = vrot.slane %v749, 2
        %v934 = vrot.slane %v749, 3
        %v935 = vrot.slane %v749, 4
        %v936 = vrot.slane %v749, 5
        %v937 = vrot.slane %v749, 6
        %v938 = vrot.slane %v749, 7
        %v939 = vrot.slane %v752, 1
        %v940 = vrot.slane %v752, 2
        %v941 = vrot.slane %v752, 3
        %v942 = vrot.slane %v752, 4
        %v943 = vrot.slane %v752, 5
        %v944 = vrot.slane %v752, 6
        %v945 = vrot.slane %v752, 7
        %v946 = vrot.slane %v755, 1
        %v947 = vrot.slane %v755, 2
        %v948 = vrot.slane %v755, 3
        %v949 = vrot.slane %v755, 4
        %v950 = vrot.slane %v755, 5
        %v951 = vrot.slane %v755, 6
        %v952 = vrot.slane %v755, 7
        %v953 = vrot.slane %v758, 1
        %v954 = vrot.slane %v758, 2
        %v955 = vrot.slane %v758, 3
        %v956 = vrot.slane %v758, 4
        %v957 = vrot.slane %v758, 5
        %v958 = vrot.slane %v758, 6
        %v959 = vrot.slane %v758, 7
        %v960 = vrot.slane %v761, 1
        %v961 = vrot.slane %v761, 2
        %v962 = vrot.slane %v761, 3
        %v963 = vrot.slane %v761, 4
        %v964 = vrot.slane %v761, 5
        %v965 = vrot.slane %v761, 6
        %v966 = vrot.slane %v761, 7
        %v967 = vrot.slane %v764, 1
        %v968 = vrot.slane %v764, 2
        %v969 = vrot.slane %v764, 3
        %v970 = vrot.slane %v764, 4
        %v971 = vrot.slane %v764, 5
        %v972 = vrot.slane %v764, 6
        %v973 = vrot.slane %v764, 7
        %v974 = vrot.slane %v767, 1
        %v975 = vrot.slane %v767, 2
        %v976 = vrot.slane %v767, 3
        %v977 = vrot.slane %v767, 4
        %v978 = vrot.slane %v767, 5
        %v979 = vrot.slane %v767, 6
        %v980 = vrot.slane %v767, 7
        %v981 = vrot.slane %v770, 1
        %v982 = vrot.slane %v770, 2
        %v983 = vrot.slane %v770, 3
        %v984 = vrot.slane %v770, 4
        %v985 = vrot.slane %v770, 5
        %v986 = vrot.slane %v770, 6
        %v987 = vrot.slane %v770, 7
        %v988 = vrot.slane %v773, 1
        %v989 = vrot.slane %v773, 2
        %v990 = vrot.slane %v773, 3
        %v991 = vrot.slane %v773, 4
        %v992 = vrot.slane %v773, 5
        %v993 = vrot.slane %v773, 6
        %v994 = vrot.slane %v773, 7
        %v995 = vrot.slane %v776, 1
        %v996 = vrot.slane %v776, 2
        %v997 = vrot.slane %v776, 3
        %v998 = vrot.slane %v776, 4
        %v999 = vrot.slane %v776, 5
        %v1000 = vrot.slane %v776, 6
        %v1001 = vrot.slane %v776, 7
        %v1002 = vrot.slane %v779, 1
        %v1003 = vrot.slane %v779, 2
        %v1004 = vrot.slane %v779, 3
        %v1005 = vrot.slane %v779, 4
        %v1006 = vrot.slane %v779, 5
        %v1007 = vrot.slane %v779, 6
        %v1008 = vrot.slane %v779, 7
        %v1009 = vrot.slane %v782, 1
        %v1010 = vrot.slane %v782, 2
        %v1011 = vrot.slane %v782, 3
        %v1012 = vrot.slane %v782, 4
        %v1013 = vrot.slane %v782, 5
        %v1014 = vrot.slane %v782, 6
        %v1015 = vrot.slane %v782, 7
        %v1016 = vrot.slane %v785, 1
        %v1017 = vrot.slane %v785, 2
        %v1018 = vrot.slane %v785, 3
        %v1019 = vrot.slane %v785, 4
        %v1020 = vrot.slane %v785, 5
        %v1021 = vrot.slane %v785, 6
        %v1022 = vrot.slane %v785, 7
        %v1023 = vrot.slane %v788, 1
        %v1024 = vrot.slane %v788, 2
        %v1025 = vrot.slane %v788, 3
        %v1026 = vrot.slane %v788, 4
        %v1027 = vrot.slane %v788, 5
        %v1028 = vrot.slane %v788, 6
        %v1029 = vrot.slane %v788, 7
        %v1030 = vrot.slane %v791, 1
        %v1031 = vrot.slane %v791, 2
        %v1032 = vrot.slane %v791, 3
        %v1033 = vrot.slane %v791, 4
        %v1034 = vrot.slane %v791, 5
        %v1035 = vrot.slane %v791, 6
        %v1036 = vrot.slane %v791, 7
        %v1037 = vrot.slane %v794, 1
        %v1038 = vrot.slane %v794, 2
        %v1039 = vrot.slane %v794, 3
        %v1040 = vrot.slane %v794, 4
        %v1041 = vrot.slane %v794, 5
        %v1042 = vrot.slane %v794, 6
        %v1043 = vrot.slane %v794, 7
        %v1044 = vrot.slane %v797, 1
        %v1045 = vrot.slane %v797, 2
        %v1046 = vrot.slane %v797, 3
        %v1047 = vrot.slane %v797, 4
        %v1048 = vrot.slane %v797, 5
        %v1049 = vrot.slane %v797, 6
        %v1050 = vrot.slane %v797, 7
        %v1051 = vrot.slane %v800, 1
        %v1052 = vrot.slane %v800, 2
        %v1053 = vrot.slane %v800, 3
        %v1054 = vrot.slane %v800, 4
        %v1055 = vrot.slane %v800, 5
        %v1056 = vrot.slane %v800, 6
        %v1057 = vrot.slane %v800, 7
        %v1282 = vperm.slane %v707, 0
        %v1283 = vperm.slane %v834, 0
        %v1284 = vperm.slane %v835, 0
        %v1285 = vperm.slane %v836, 0
        %v1286 = vperm.slane %v837, 0
        %v1287 = vperm.slane %v838, 0
        %v1288 = vperm.slane %v839, 0
        %v1289 = vperm.slane %v840, 0
        %v1290 = vperm.slane %v710, 0
        %v1291 = vperm.slane %v841, 0
        %v1292 = vperm.slane %v842, 0
        %v1293 = vperm.slane %v843, 0
        %v1294 = vperm.slane %v844, 0
        %v1295 = vperm.slane %v845, 0
        %v1296 = vperm.slane %v846, 0
        %v1297 = vperm.slane %v847, 0
        %v1298 = vperm.slane %v713, 0
        %v1299 = vperm.slane %v848, 0
        %v1300 = vperm.slane %v849, 0
        %v1301 = vperm.slane %v850, 0
        %v1302 = vperm.slane %v851, 0
        %v1303 = vperm.slane %v852, 0
        %v1304 = vperm.slane %v853, 0
        %v1305 = vperm.slane %v854, 0
        %v1306 = vperm.slane %v716, 0
        %v1307 = vperm.slane %v855, 0
        %v1308 = vperm.slane %v856, 0
        %v1309 = vperm.slane %v857, 0
        %v1310 = vperm.slane %v858, 0
        %v1311 = vperm.slane %v859, 0
        %v1312 = vperm.slane %v860, 0
        %v1313 = vperm.slane %v861, 0
        %v1314 = vperm.slane %v719, 0
        %v1315 = vperm.slane %v862, 0
        %v1316 = vperm.slane %v863, 0
        %v1317 = vperm.slane %v864, 0
        %v1318 = vperm.slane %v865, 0
        %v1319 = vperm.slane %v866, 0
        %v1320 = vperm.slane %v867, 0
        %v1321 = vperm.slane %v868, 0
        %v1322 = vperm.slane %v722, 0
        %v1323 = vperm.slane %v869, 0
        %v1324 = vperm.slane %v870, 0
        %v1325 = vperm.slane %v871, 0
        %v1326 = vperm.slane %v872, 0
        %v1327 = vperm.slane %v873, 0
        %v1328 = vperm.slane %v874, 0
        %v1329 = vperm.slane %v875, 0
        %v1330 = vperm.slane %v725, 0
        %v1331 = vperm.slane %v876, 0
        %v1332 = vperm.slane %v877, 0
        %v1333 = vperm.slane %v878, 0
        %v1334 = vperm.slane %v879, 0
        %v1335 = vperm.slane %v880, 0
        %v1336 = vperm.slane %v881, 0
        %v1337 = vperm.slane %v882, 0
        %v1338 = vperm.slane %v728, 0
        %v1339 = vperm.slane %v883, 0
        %v1340 = vperm.slane %v884, 0
        %v1341 = vperm.slane %v885, 0
        %v1342 = vperm.slane %v886, 0
        %v1343 = vperm.slane %v887, 0
        %v1344 = vperm.slane %v888, 0
        %v1345 = vperm.slane %v889, 0
        %v1346 = vperm.slane %v731, 0
        %v1347 = vperm.slane %v890, 0
        %v1348 = vperm.slane %v891, 0
        %v1349 = vperm.slane %v892, 0
        %v1350 = vperm.slane %v893, 0
        %v1351 = vperm.slane %v894, 0
        %v1352 = vperm.slane %v895, 0
        %v1353 = vperm.slane %v896, 0
        %v1354 = vperm.slane %v734, 0
        %v1355 = vperm.slane %v897, 0
        %v1356 = vperm.slane %v898, 0
        %v1357 = vperm.slane %v899, 0
        %v1358 = vperm.slane %v900, 0
        %v1359 = vperm.slane %v901, 0
        %v1360 = vperm.slane %v902, 0
        %v1361 = vperm.slane %v903, 0
        %v1362 = vperm.slane %v737, 0
        %v1363 = vperm.slane %v904, 0
        %v1364 = vperm.slane %v905, 0
        %v1365 = vperm.slane %v906, 0
        %v1366 = vperm.slane %v907, 0
        %v1367 = vperm.slane %v908, 0
        %v1368 = vperm.slane %v909, 0
        %v1369 = vperm.slane %v910, 0
        %v1370 = vperm.slane %v740, 0
        %v1371 = vperm.slane %v911, 0
        %v1372 = vperm.slane %v912, 0
        %v1373 = vperm.slane %v913, 0
        %v1374 = vperm.slane %v914, 0
        %v1375 = vperm.slane %v915, 0
        %v1376 = vperm.slane %v916, 0
        %v1377 = vperm.slane %v917, 0
        %v1378 = vperm.slane %v743, 0
        %v1379 = vperm.slane %v918, 0
        %v1380 = vperm.slane %v919, 0
        %v1381 = vperm.slane %v920, 0
        %v1382 = vperm.slane %v921, 0
        %v1383 = vperm.slane %v922, 0
        %v1384 = vperm.slane %v923, 0
        %v1385 = vperm.slane %v924, 0
        %v1386 = vperm.slane %v746, 0
        %v1387 = vperm.slane %v925, 0
        %v1388 = vperm.slane %v926, 0
        %v1389 = vperm.slane %v927, 0
        %v1390 = vperm.slane %v928, 0
        %v1391 = vperm.slane %v929, 0
        %v1392 = vperm.slane %v930, 0
        %v1393 = vperm.slane %v931, 0
        %v1394 = vperm.slane %v749, 0
        %v1395 = vperm.slane %v932, 0
        %v1396 = vperm.slane %v933, 0
        %v1397 = vperm.slane %v934, 0
        %v1398 = vperm.slane %v935, 0
        %v1399 = vperm.slane %v936, 0
        %v1400 = vperm.slane %v937, 0
        %v1401 = vperm.slane %v938, 0
        %v1402 = vperm.slane %v752, 0
        %v1403 = vperm.slane %v939, 0
        %v1404 = vperm.slane %v940, 0
        %v1405 = vperm.slane %v941, 0
        %v1406 = vperm.slane %v942, 0
        %v1407 = vperm.slane %v943, 0
        %v1408 = vperm.slane %v944, 0
        %v1409 = vperm.slane %v945, 0
        %v1410 = vperm.slane %v755, 0
        %v1411 = vperm.slane %v946, 0
        %v1412 = vperm.slane %v947, 0
        %v1413 = vperm.slane %v948, 0
        %v1414 = vperm.slane %v949, 0
        %v1415 = vperm.slane %v950, 0
        %v1416 = vperm.slane %v951, 0
        %v1417 = vperm.slane %v952, 0
        %v1418 = vperm.slane %v758, 0
        %v1419 = vperm.slane %v953, 0
        %v1420 = vperm.slane %v954, 0
        %v1421 = vperm.slane %v955, 0
        %v1422 = vperm.slane %v956, 0
        %v1423 = vperm.slane %v957, 0
        %v1424 = vperm.slane %v958, 0
        %v1425 = vperm.slane %v959, 0
        %v1426 = vperm.slane %v761, 0
        %v1427 = vperm.slane %v960, 0
        %v1428 = vperm.slane %v961, 0
        %v1429 = vperm.slane %v962, 0
        %v1430 = vperm.slane %v963, 0
        %v1431 = vperm.slane %v964, 0
        %v1432 = vperm.slane %v965, 0
        %v1433 = vperm.slane %v966, 0
        %v1434 = vperm.slane %v764, 0
        %v1435 = vperm.slane %v967, 0
        %v1436 = vperm.slane %v968, 0
        %v1437 = vperm.slane %v969, 0
        %v1438 = vperm.slane %v970, 0
        %v1439 = vperm.slane %v971, 0
        %v1440 = vperm.slane %v972, 0
        %v1441 = vperm.slane %v973, 0
        %v1442 = vperm.slane %v767, 0
        %v1443 = vperm.slane %v974, 0
        %v1444 = vperm.slane %v975, 0
        %v1445 = vperm.slane %v976, 0
        %v1446 = vperm.slane %v977, 0
        %v1447 = vperm.slane %v978, 0
        %v1448 = vperm.slane %v979, 0
        %v1449 = vperm.slane %v980, 0
        %v1450 = vperm.slane %v770, 0
        %v1451 = vperm.slane %v981, 0
        %v1452 = vperm.slane %v982, 0
        %v1453 = vperm.slane %v983, 0
        %v1454 = vperm.slane %v984, 0
        %v1455 = vperm.slane %v985, 0
        %v1456 = vperm.slane %v986, 0
        %v1457 = vperm.slane %v987, 0
        %v1458 = vperm.slane %v773, 0
        %v1459 = vperm.slane %v988, 0
        %v1460 = vperm.slane %v989, 0
        %v1461 = vperm.slane %v990, 0
        %v1462 = vperm.slane %v991, 0
        %v1463 = vperm.slane %v992, 0
        %v1464 = vperm.slane %v993, 0
        %v1465 = vperm.slane %v994, 0
        %v1466 = vperm.slane %v776, 0
        %v1467 = vperm.slane %v995, 0
        %v1468 = vperm.slane %v996, 0
        %v1469 = vperm.slane %v997, 0
        %v1470 = vperm.slane %v998, 0
        %v1471 = vperm.slane %v999, 0
        %v1472 = vperm.slane %v1000, 0
        %v1473 = vperm.slane %v1001, 0
        %v1474 = vperm.slane %v779, 0
        %v1475 = vperm.slane %v1002, 0
        %v1476 = vperm.slane %v1003, 0
        %v1477 = vperm.slane %v1004, 0
        %v1478 = vperm.slane %v1005, 0
        %v1479 = vperm.slane %v1006, 0
        %v1480 = vperm.slane %v1007, 0
        %v1481 = vperm.slane %v1008, 0
        %v1482 = vperm.slane %v782, 0
        %v1483 = vperm.slane %v1009, 0
        %v1484 = vperm.slane %v1010, 0
        %v1485 = vperm.slane %v1011, 0
        %v1486 = vperm.slane %v1012, 0
        %v1487 = vperm.slane %v1013, 0
        %v1488 = vperm.slane %v1014, 0
        %v1489 = vperm.slane %v1015, 0
        %v1490 = vperm.slane %v785, 0
        %v1491 = vperm.slane %v1016, 0
        %v1492 = vperm.slane %v1017, 0
        %v1493 = vperm.slane %v1018, 0
        %v1494 = vperm.slane %v1019, 0
        %v1495 = vperm.slane %v1020, 0
        %v1496 = vperm.slane %v1021, 0
        %v1497 = vperm.slane %v1022, 0
        %v1498 = vperm.slane %v788, 0
        %v1499 = vperm.slane %v1023, 0
        %v1500 = vperm.slane %v1024, 0
        %v1501 = vperm.slane %v1025, 0
        %v1502 = vperm.slane %v1026, 0
        %v1503 = vperm.slane %v1027, 0
        %v1504 = vperm.slane %v1028, 0
        %v1505 = vperm.slane %v1029, 0
        %v1506 = vperm.slane %v791, 0
        %v1507 = vperm.slane %v1030, 0
        %v1508 = vperm.slane %v1031, 0
        %v1509 = vperm.slane %v1032, 0
        %v1510 = vperm.slane %v1033, 0
        %v1511 = vperm.slane %v1034, 0
        %v1512 = vperm.slane %v1035, 0
        %v1513 = vperm.slane %v1036, 0
        %v1514 = vperm.slane %v794, 0
        %v1515 = vperm.slane %v1037, 0
        %v1516 = vperm.slane %v1038, 0
        %v1517 = vperm.slane %v1039, 0
        %v1518 = vperm.slane %v1040, 0
        %v1519 = vperm.slane %v1041, 0
        %v1520 = vperm.slane %v1042, 0
        %v1521 = vperm.slane %v1043, 0
        %v1522 = vperm.slane %v797, 0
        %v1523 = vperm.slane %v1044, 0
        %v1524 = vperm.slane %v1045, 0
        %v1525 = vperm.slane %v1046, 0
        %v1526 = vperm.slane %v1047, 0
        %v1527 = vperm.slane %v1048, 0
        %v1528 = vperm.slane %v1049, 0
        %v1529 = vperm.slane %v1050, 0
        %v1530 = vperm.slane %v800, 0
        %v1531 = vperm.slane %v1051, 0
        %v1532 = vperm.slane %v1052, 0
        %v1533 = vperm.slane %v1053, 0
        %v1534 = vperm.slane %v1054, 0
        %v1535 = vperm.slane %v1055, 0
        %v1536 = vperm.slane %v1056, 0
        %v1537 = vperm.slane %v1057, 0
        %1538 = vrot.lane.b32.xlu0 %v1282, 124
        %v1539 = vpop.permute.xlu0 %1538
        %1540 = vrot.lane.b32.xlu0 %v1283, 124
        %v1541 = vpop.permute.xlu0 %1540
        %1542 = vrot.lane.b32.xlu0 %v1284, 124
        %v1543 = vpop.permute.xlu0 %1542
        %1544 = vrot.lane.b32.xlu0 %v1285, 124
        %v1545 = vpop.permute.xlu0 %1544
        %1546 = vrot.lane.b32.xlu0 %v1286, 124
        %v1547 = vpop.permute.xlu0 %1546
        %1548 = vrot.lane.b32.xlu0 %v1287, 124
        %v1549 = vpop.permute.xlu0 %1548
        %1550 = vrot.lane.b32.xlu0 %v1288, 124
        %v1551 = vpop.permute.xlu0 %1550
        %1552 = vrot.lane.b32.xlu0 %v1289, 124
        %v1553 = vpop.permute.xlu0 %1552
        %1554 = vrot.lane.b32.xlu0 %v1290, 124
        %v1555 = vpop.permute.xlu0 %1554
        %1556 = vrot.lane.b32.xlu0 %v1291, 124
        %v1557 = vpop.permute.xlu0 %1556
        %1558 = vrot.lane.b32.xlu0 %v1292, 124
        %v1559 = vpop.permute.xlu0 %1558
        %1560 = vrot.lane.b32.xlu0 %v1293, 124
        %v1561 = vpop.permute.xlu0 %1560
        %1562 = vrot.lane.b32.xlu0 %v1294, 124
        %v1563 = vpop.permute.xlu0 %1562
        %1564 = vrot.lane.b32.xlu0 %v1295, 124
        %v1565 = vpop.permute.xlu0 %1564
        %1566 = vrot.lane.b32.xlu0 %v1296, 124
        %v1567 = vpop.permute.xlu0 %1566
        %1568 = vrot.lane.b32.xlu0 %v1297, 124
        %v1569 = vpop.permute.xlu0 %1568
        %1570 = vrot.lane.b32.xlu0 %v1298, 124
        %v1571 = vpop.permute.xlu0 %1570
        %1572 = vrot.lane.b32.xlu0 %v1299, 124
        %v1573 = vpop.permute.xlu0 %1572
        %1574 = vrot.lane.b32.xlu0 %v1300, 124
        %v1575 = vpop.permute.xlu0 %1574
        %1576 = vrot.lane.b32.xlu0 %v1301, 124
        %v1577 = vpop.permute.xlu0 %1576
        %1578 = vrot.lane.b32.xlu0 %v1302, 124
        %v1579 = vpop.permute.xlu0 %1578
        %1580 = vrot.lane.b32.xlu0 %v1303, 124
        %v1581 = vpop.permute.xlu0 %1580
        %1582 = vrot.lane.b32.xlu0 %v1304, 124
        %v1583 = vpop.permute.xlu0 %1582
        %1584 = vrot.lane.b32.xlu0 %v1305, 124
        %v1585 = vpop.permute.xlu0 %1584
        %1586 = vrot.lane.b32.xlu0 %v1306, 124
        %v1587 = vpop.permute.xlu0 %1586
        %1588 = vrot.lane.b32.xlu0 %v1307, 124
        %v1589 = vpop.permute.xlu0 %1588
        %1590 = vrot.lane.b32.xlu0 %v1308, 124
        %v1591 = vpop.permute.xlu0 %1590
        %1592 = vrot.lane.b32.xlu0 %v1309, 124
        %v1593 = vpop.permute.xlu0 %1592
        %1594 = vrot.lane.b32.xlu0 %v1310, 124
        %v1595 = vpop.permute.xlu0 %1594
        %1596 = vrot.lane.b32.xlu0 %v1311, 124
        %v1597 = vpop.permute.xlu0 %1596
        %1598 = vrot.lane.b32.xlu0 %v1312, 124
        %v1599 = vpop.permute.xlu0 %1598
        %1600 = vrot.lane.b32.xlu0 %v1313, 124
        %v1601 = vpop.permute.xlu0 %1600
        %1602 = vrot.lane.b32.xlu0 %v1314, 124
        %v1603 = vpop.permute.xlu0 %1602
        %1604 = vrot.lane.b32.xlu0 %v1315, 124
        %v1605 = vpop.permute.xlu0 %1604
        %1606 = vrot.lane.b32.xlu0 %v1316, 124
        %v1607 = vpop.permute.xlu0 %1606
        %1608 = vrot.lane.b32.xlu0 %v1317, 124
        %v1609 = vpop.permute.xlu0 %1608
        %1610 = vrot.lane.b32.xlu0 %v1318, 124
        %v1611 = vpop.permute.xlu0 %1610
        %1612 = vrot.lane.b32.xlu0 %v1319, 124
        %v1613 = vpop.permute.xlu0 %1612
        %1614 = vrot.lane.b32.xlu0 %v1320, 124
        %v1615 = vpop.permute.xlu0 %1614
        %1616 = vrot.lane.b32.xlu0 %v1321, 124
        %v1617 = vpop.permute.xlu0 %1616
        %1618 = vrot.lane.b32.xlu0 %v1322, 124
        %v1619 = vpop.permute.xlu0 %1618
        %1620 = vrot.lane.b32.xlu0 %v1323, 124
        %v1621 = vpop.permute.xlu0 %1620
        %1622 = vrot.lane.b32.xlu0 %v1324, 124
        %v1623 = vpop.permute.xlu0 %1622
        %1624 = vrot.lane.b32.xlu0 %v1325, 124
        %v1625 = vpop.permute.xlu0 %1624
        %1626 = vrot.lane.b32.xlu0 %v1326, 124
        %v1627 = vpop.permute.xlu0 %1626
        %1628 = vrot.lane.b32.xlu0 %v1327, 124
        %v1629 = vpop.permute.xlu0 %1628
        %1630 = vrot.lane.b32.xlu0 %v1328, 124
        %v1631 = vpop.permute.xlu0 %1630
        %1632 = vrot.lane.b32.xlu0 %v1329, 124
        %v1633 = vpop.permute.xlu0 %1632
        %1634 = vrot.lane.b32.xlu0 %v1330, 124
        %v1635 = vpop.permute.xlu0 %1634
        %1636 = vrot.lane.b32.xlu0 %v1331, 124
        %v1637 = vpop.permute.xlu0 %1636
        %1638 = vrot.lane.b32.xlu0 %v1332, 124
        %v1639 = vpop.permute.xlu0 %1638
        %1640 = vrot.lane.b32.xlu0 %v1333, 124
        %v1641 = vpop.permute.xlu0 %1640
        %1642 = vrot.lane.b32.xlu0 %v1334, 124
        %v1643 = vpop.permute.xlu0 %1642
        %1644 = vrot.lane.b32.xlu0 %v1335, 124
        %v1645 = vpop.permute.xlu0 %1644
        %1646 = vrot.lane.b32.xlu0 %v1336, 124
        %v1647 = vpop.permute.xlu0 %1646
        %1648 = vrot.lane.b32.xlu0 %v1337, 124
        %v1649 = vpop.permute.xlu0 %1648
        %1650 = vrot.lane.b32.xlu0 %v1338, 124
        %v1651 = vpop.permute.xlu0 %1650
        %1652 = vrot.lane.b32.xlu0 %v1339, 124
        %v1653 = vpop.permute.xlu0 %1652
        %1654 = vrot.lane.b32.xlu0 %v1340, 124
        %v1655 = vpop.permute.xlu0 %1654
        %1656 = vrot.lane.b32.xlu0 %v1341, 124
        %v1657 = vpop.permute.xlu0 %1656
        %1658 = vrot.lane.b32.xlu0 %v1342, 124
        %v1659 = vpop.permute.xlu0 %1658
        %1660 = vrot.lane.b32.xlu0 %v1343, 124
        %v1661 = vpop.permute.xlu0 %1660
        %1662 = vrot.lane.b32.xlu0 %v1344, 124
        %v1663 = vpop.permute.xlu0 %1662
        %1664 = vrot.lane.b32.xlu0 %v1345, 124
        %v1665 = vpop.permute.xlu0 %1664
        %1666 = vrot.lane.b32.xlu0 %v1346, 124
        %v1667 = vpop.permute.xlu0 %1666
        %1668 = vrot.lane.b32.xlu0 %v1347, 124
        %v1669 = vpop.permute.xlu0 %1668
        %1670 = vrot.lane.b32.xlu0 %v1348, 124
        %v1671 = vpop.permute.xlu0 %1670
        %1672 = vrot.lane.b32.xlu0 %v1349, 124
        %v1673 = vpop.permute.xlu0 %1672
        %1674 = vrot.lane.b32.xlu0 %v1350, 124
        %v1675 = vpop.permute.xlu0 %1674
        %1676 = vrot.lane.b32.xlu0 %v1351, 124
        %v1677 = vpop.permute.xlu0 %1676
        %1678 = vrot.lane.b32.xlu0 %v1352, 124
        %v1679 = vpop.permute.xlu0 %1678
        %1680 = vrot.lane.b32.xlu0 %v1353, 124
        %v1681 = vpop.permute.xlu0 %1680
        %1682 = vrot.lane.b32.xlu0 %v1354, 124
        %v1683 = vpop.permute.xlu0 %1682
        %1684 = vrot.lane.b32.xlu0 %v1355, 124
        %v1685 = vpop.permute.xlu0 %1684
        %1686 = vrot.lane.b32.xlu0 %v1356, 124
        %v1687 = vpop.permute.xlu0 %1686
        %1688 = vrot.lane.b32.xlu0 %v1357, 124
        %v1689 = vpop.permute.xlu0 %1688
        %1690 = vrot.lane.b32.xlu0 %v1358, 124
        %v1691 = vpop.permute.xlu0 %1690
        %1692 = vrot.lane.b32.xlu0 %v1359, 124
        %v1693 = vpop.permute.xlu0 %1692
        %1694 = vrot.lane.b32.xlu0 %v1360, 124
        %v1695 = vpop.permute.xlu0 %1694
        %1696 = vrot.lane.b32.xlu0 %v1361, 124
        %v1697 = vpop.permute.xlu0 %1696
        %1698 = vrot.lane.b32.xlu0 %v1362, 124
        %v1699 = vpop.permute.xlu0 %1698
        %1700 = vrot.lane.b32.xlu0 %v1363, 124
        %v1701 = vpop.permute.xlu0 %1700
        %1702 = vrot.lane.b32.xlu0 %v1364, 124
        %v1703 = vpop.permute.xlu0 %1702
        %1704 = vrot.lane.b32.xlu0 %v1365, 124
        %v1705 = vpop.permute.xlu0 %1704
        %1706 = vrot.lane.b32.xlu0 %v1366, 124
        %v1707 = vpop.permute.xlu0 %1706
        %1708 = vrot.lane.b32.xlu0 %v1367, 124
        %v1709 = vpop.permute.xlu0 %1708
        %1710 = vrot.lane.b32.xlu0 %v1368, 124
        %v1711 = vpop.permute.xlu0 %1710
        %1712 = vrot.lane.b32.xlu0 %v1369, 124
        %v1713 = vpop.permute.xlu0 %1712
        %1714 = vrot.lane.b32.xlu0 %v1370, 124
        %v1715 = vpop.permute.xlu0 %1714
        %1716 = vrot.lane.b32.xlu0 %v1371, 124
        %v1717 = vpop.permute.xlu0 %1716
        %1718 = vrot.lane.b32.xlu0 %v1372, 124
        %v1719 = vpop.permute.xlu0 %1718
        %1720 = vrot.lane.b32.xlu0 %v1373, 124
        %v1721 = vpop.permute.xlu0 %1720
        %1722 = vrot.lane.b32.xlu0 %v1374, 124
        %v1723 = vpop.permute.xlu0 %1722
        %1724 = vrot.lane.b32.xlu0 %v1375, 124
        %v1725 = vpop.permute.xlu0 %1724
        %1726 = vrot.lane.b32.xlu0 %v1376, 124
        %v1727 = vpop.permute.xlu0 %1726
        %1728 = vrot.lane.b32.xlu0 %v1377, 124
        %v1729 = vpop.permute.xlu0 %1728
        %1730 = vrot.lane.b32.xlu0 %v1378, 124
        %v1731 = vpop.permute.xlu0 %1730
        %1732 = vrot.lane.b32.xlu0 %v1379, 124
        %v1733 = vpop.permute.xlu0 %1732
        %1734 = vrot.lane.b32.xlu0 %v1380, 124
        %v1735 = vpop.permute.xlu0 %1734
        %1736 = vrot.lane.b32.xlu0 %v1381, 124
        %v1737 = vpop.permute.xlu0 %1736
        %1738 = vrot.lane.b32.xlu0 %v1382, 124
        %v1739 = vpop.permute.xlu0 %1738
        %1740 = vrot.lane.b32.xlu0 %v1383, 124
        %v1741 = vpop.permute.xlu0 %1740
        %1742 = vrot.lane.b32.xlu0 %v1384, 124
        %v1743 = vpop.permute.xlu0 %1742
        %1744 = vrot.lane.b32.xlu0 %v1385, 124
        %v1745 = vpop.permute.xlu0 %1744
        %1746 = vrot.lane.b32.xlu0 %v1386, 124
        %v1747 = vpop.permute.xlu0 %1746
        %1748 = vrot.lane.b32.xlu0 %v1387, 124
        %v1749 = vpop.permute.xlu0 %1748
        %1750 = vrot.lane.b32.xlu0 %v1388, 124
        %v1751 = vpop.permute.xlu0 %1750
        %1752 = vrot.lane.b32.xlu0 %v1389, 124
        %v1753 = vpop.permute.xlu0 %1752
        %1754 = vrot.lane.b32.xlu0 %v1390, 124
        %v1755 = vpop.permute.xlu0 %1754
        %1756 = vrot.lane.b32.xlu0 %v1391, 124
        %v1757 = vpop.permute.xlu0 %1756
        %1758 = vrot.lane.b32.xlu0 %v1392, 124
        %v1759 = vpop.permute.xlu0 %1758
        %1760 = vrot.lane.b32.xlu0 %v1393, 124
        %v1761 = vpop.permute.xlu0 %1760
        %1762 = vrot.lane.b32.xlu0 %v1394, 124
        %v1763 = vpop.permute.xlu0 %1762
        %1764 = vrot.lane.b32.xlu0 %v1395, 124
        %v1765 = vpop.permute.xlu0 %1764
        %1766 = vrot.lane.b32.xlu0 %v1396, 124
        %v1767 = vpop.permute.xlu0 %1766
        %1768 = vrot.lane.b32.xlu0 %v1397, 124
        %v1769 = vpop.permute.xlu0 %1768
        %1770 = vrot.lane.b32.xlu0 %v1398, 124
        %v1771 = vpop.permute.xlu0 %1770
        %1772 = vrot.lane.b32.xlu0 %v1399, 124
        %v1773 = vpop.permute.xlu0 %1772
        %1774 = vrot.lane.b32.xlu0 %v1400, 124
        %v1775 = vpop.permute.xlu0 %1774
        %1776 = vrot.lane.b32.xlu0 %v1401, 124
        %v1777 = vpop.permute.xlu0 %1776
        %1778 = vrot.lane.b32.xlu0 %v1402, 124
        %v1779 = vpop.permute.xlu0 %1778
        %1780 = vrot.lane.b32.xlu0 %v1403, 124
        %v1781 = vpop.permute.xlu0 %1780
        %1782 = vrot.lane.b32.xlu0 %v1404, 124
        %v1783 = vpop.permute.xlu0 %1782
        %1784 = vrot.lane.b32.xlu0 %v1405, 124
        %v1785 = vpop.permute.xlu0 %1784
        %1786 = vrot.lane.b32.xlu0 %v1406, 124
        %v1787 = vpop.permute.xlu0 %1786
        %1788 = vrot.lane.b32.xlu0 %v1407, 124
        %v1789 = vpop.permute.xlu0 %1788
        %1790 = vrot.lane.b32.xlu0 %v1408, 124
        %v1791 = vpop.permute.xlu0 %1790
        %1792 = vrot.lane.b32.xlu0 %v1409, 124
        %v1793 = vpop.permute.xlu0 %1792
        %1794 = vrot.lane.b32.xlu0 %v1410, 124
        %v1795 = vpop.permute.xlu0 %1794
        %1796 = vrot.lane.b32.xlu0 %v1411, 124
        %v1797 = vpop.permute.xlu0 %1796
        %1798 = vrot.lane.b32.xlu0 %v1412, 124
        %v1799 = vpop.permute.xlu0 %1798
        %1800 = vrot.lane.b32.xlu0 %v1413, 124
        %v1801 = vpop.permute.xlu0 %1800
        %1802 = vrot.lane.b32.xlu0 %v1414, 124
        %v1803 = vpop.permute.xlu0 %1802
        %1804 = vrot.lane.b32.xlu0 %v1415, 124
        %v1805 = vpop.permute.xlu0 %1804
        %1806 = vrot.lane.b32.xlu0 %v1416, 124
        %v1807 = vpop.permute.xlu0 %1806
        %1808 = vrot.lane.b32.xlu0 %v1417, 124
        %v1809 = vpop.permute.xlu0 %1808
        %1810 = vrot.lane.b32.xlu0 %v1418, 124
        %v1811 = vpop.permute.xlu0 %1810
        %1812 = vrot.lane.b32.xlu0 %v1419, 124
        %v1813 = vpop.permute.xlu0 %1812
        %1814 = vrot.lane.b32.xlu0 %v1420, 124
        %v1815 = vpop.permute.xlu0 %1814
        %1816 = vrot.lane.b32.xlu0 %v1421, 124
        %v1817 = vpop.permute.xlu0 %1816
        %1818 = vrot.lane.b32.xlu0 %v1422, 124
        %v1819 = vpop.permute.xlu0 %1818
        %1820 = vrot.lane.b32.xlu0 %v1423, 124
        %v1821 = vpop.permute.xlu0 %1820
        %1822 = vrot.lane.b32.xlu0 %v1424, 124
        %v1823 = vpop.permute.xlu0 %1822
        %1824 = vrot.lane.b32.xlu0 %v1425, 124
        %v1825 = vpop.permute.xlu0 %1824
        %1826 = vrot.lane.b32.xlu0 %v1426, 124
        %v1827 = vpop.permute.xlu0 %1826
        %1828 = vrot.lane.b32.xlu0 %v1427, 124
        %v1829 = vpop.permute.xlu0 %1828
        %1830 = vrot.lane.b32.xlu0 %v1428, 124
        %v1831 = vpop.permute.xlu0 %1830
        %1832 = vrot.lane.b32.xlu0 %v1429, 124
        %v1833 = vpop.permute.xlu0 %1832
        %1834 = vrot.lane.b32.xlu0 %v1430, 124
        %v1835 = vpop.permute.xlu0 %1834
        %1836 = vrot.lane.b32.xlu0 %v1431, 124
        %v1837 = vpop.permute.xlu0 %1836
        %1838 = vrot.lane.b32.xlu0 %v1432, 124
        %v1839 = vpop.permute.xlu0 %1838
        %1840 = vrot.lane.b32.xlu0 %v1433, 124
        %v1841 = vpop.permute.xlu0 %1840
        %1842 = vrot.lane.b32.xlu0 %v1434, 124
        %v1843 = vpop.permute.xlu0 %1842
        %1844 = vrot.lane.b32.xlu0 %v1435, 124
        %v1845 = vpop.permute.xlu0 %1844
        %1846 = vrot.lane.b32.xlu0 %v1436, 124
        %v1847 = vpop.permute.xlu0 %1846
        %1848 = vrot.lane.b32.xlu0 %v1437, 124
        %v1849 = vpop.permute.xlu0 %1848
        %1850 = vrot.lane.b32.xlu0 %v1438, 124
        %v1851 = vpop.permute.xlu0 %1850
        %1852 = vrot.lane.b32.xlu0 %v1439, 124
        %v1853 = vpop.permute.xlu0 %1852
        %1854 = vrot.lane.b32.xlu0 %v1440, 124
        %v1855 = vpop.permute.xlu0 %1854
        %1856 = vrot.lane.b32.xlu0 %v1441, 124
        %v1857 = vpop.permute.xlu0 %1856
        %1858 = vrot.lane.b32.xlu0 %v1442, 124
        %v1859 = vpop.permute.xlu0 %1858
        %1860 = vrot.lane.b32.xlu0 %v1443, 124
        %v1861 = vpop.permute.xlu0 %1860
        %1862 = vrot.lane.b32.xlu0 %v1444, 124
        %v1863 = vpop.permute.xlu0 %1862
        %1864 = vrot.lane.b32.xlu0 %v1445, 124
        %v1865 = vpop.permute.xlu0 %1864
        %1866 = vrot.lane.b32.xlu0 %v1446, 124
        %v1867 = vpop.permute.xlu0 %1866
        %1868 = vrot.lane.b32.xlu0 %v1447, 124
        %v1869 = vpop.permute.xlu0 %1868
        %1870 = vrot.lane.b32.xlu0 %v1448, 124
        %v1871 = vpop.permute.xlu0 %1870
        %1872 = vrot.lane.b32.xlu0 %v1449, 124
        %v1873 = vpop.permute.xlu0 %1872
        %1874 = vrot.lane.b32.xlu0 %v1450, 124
        %v1875 = vpop.permute.xlu0 %1874
        %1876 = vrot.lane.b32.xlu0 %v1451, 124
        %v1877 = vpop.permute.xlu0 %1876
        %1878 = vrot.lane.b32.xlu0 %v1452, 124
        %v1879 = vpop.permute.xlu0 %1878
        %1880 = vrot.lane.b32.xlu0 %v1453, 124
        %v1881 = vpop.permute.xlu0 %1880
        %1882 = vrot.lane.b32.xlu0 %v1454, 124
        %v1883 = vpop.permute.xlu0 %1882
        %1884 = vrot.lane.b32.xlu0 %v1455, 124
        %v1885 = vpop.permute.xlu0 %1884
        %1886 = vrot.lane.b32.xlu0 %v1456, 124
        %v1887 = vpop.permute.xlu0 %1886
        %1888 = vrot.lane.b32.xlu0 %v1457, 124
        %v1889 = vpop.permute.xlu0 %1888
        %1890 = vrot.lane.b32.xlu0 %v1458, 124
        %v1891 = vpop.permute.xlu0 %1890
        %1892 = vrot.lane.b32.xlu0 %v1459, 124
        %v1893 = vpop.permute.xlu0 %1892
        %1894 = vrot.lane.b32.xlu0 %v1460, 124
        %v1895 = vpop.permute.xlu0 %1894
        %1896 = vrot.lane.b32.xlu0 %v1461, 124
        %v1897 = vpop.permute.xlu0 %1896
        %1898 = vrot.lane.b32.xlu0 %v1462, 124
        %v1899 = vpop.permute.xlu0 %1898
        %1900 = vrot.lane.b32.xlu0 %v1463, 124
        %v1901 = vpop.permute.xlu0 %1900
        %1902 = vrot.lane.b32.xlu0 %v1464, 124
        %v1903 = vpop.permute.xlu0 %1902
        %1904 = vrot.lane.b32.xlu0 %v1465, 124
        %v1905 = vpop.permute.xlu0 %1904
        %1906 = vrot.lane.b32.xlu0 %v1466, 124
        %v1907 = vpop.permute.xlu0 %1906
        %1908 = vrot.lane.b32.xlu0 %v1467, 124
        %v1909 = vpop.permute.xlu0 %1908
        %1910 = vrot.lane.b32.xlu0 %v1468, 124
        %v1911 = vpop.permute.xlu0 %1910
        %1912 = vrot.lane.b32.xlu0 %v1469, 124
        %v1913 = vpop.permute.xlu0 %1912
        %1914 = vrot.lane.b32.xlu0 %v1470, 124
        %v1915 = vpop.permute.xlu0 %1914
        %1916 = vrot.lane.b32.xlu0 %v1471, 124
        %v1917 = vpop.permute.xlu0 %1916
        %1918 = vrot.lane.b32.xlu0 %v1472, 124
        %v1919 = vpop.permute.xlu0 %1918
        %1920 = vrot.lane.b32.xlu0 %v1473, 124
        %v1921 = vpop.permute.xlu0 %1920
        %1922 = vrot.lane.b32.xlu0 %v1474, 124
        %v1923 = vpop.permute.xlu0 %1922
        %1924 = vrot.lane.b32.xlu0 %v1475, 124
        %v1925 = vpop.permute.xlu0 %1924
        %1926 = vrot.lane.b32.xlu0 %v1476, 124
        %v1927 = vpop.permute.xlu0 %1926
        %1928 = vrot.lane.b32.xlu0 %v1477, 124
        %v1929 = vpop.permute.xlu0 %1928
        %1930 = vrot.lane.b32.xlu0 %v1478, 124
        %v1931 = vpop.permute.xlu0 %1930
        %1932 = vrot.lane.b32.xlu0 %v1479, 124
        %v1933 = vpop.permute.xlu0 %1932
        %1934 = vrot.lane.b32.xlu0 %v1480, 124
        %v1935 = vpop.permute.xlu0 %1934
        %1936 = vrot.lane.b32.xlu0 %v1481, 124
        %v1937 = vpop.permute.xlu0 %1936
        %1938 = vrot.lane.b32.xlu0 %v1482, 124
        %v1939 = vpop.permute.xlu0 %1938
        %1940 = vrot.lane.b32.xlu0 %v1483, 124
        %v1941 = vpop.permute.xlu0 %1940
        %1942 = vrot.lane.b32.xlu0 %v1484, 124
        %v1943 = vpop.permute.xlu0 %1942
        %1944 = vrot.lane.b32.xlu0 %v1485, 124
        %v1945 = vpop.permute.xlu0 %1944
        %1946 = vrot.lane.b32.xlu0 %v1486, 124
        %v1947 = vpop.permute.xlu0 %1946
        %1948 = vrot.lane.b32.xlu0 %v1487, 124
        %v1949 = vpop.permute.xlu0 %1948
        %1950 = vrot.lane.b32.xlu0 %v1488, 124
        %v1951 = vpop.permute.xlu0 %1950
        %1952 = vrot.lane.b32.xlu0 %v1489, 124
        %v1953 = vpop.permute.xlu0 %1952
        %1954 = vrot.lane.b32.xlu0 %v1490, 124
        %v1955 = vpop.permute.xlu0 %1954
        %1956 = vrot.lane.b32.xlu0 %v1491, 124
        %v1957 = vpop.permute.xlu0 %1956
        %1958 = vrot.lane.b32.xlu0 %v1492, 124
        %v1959 = vpop.permute.xlu0 %1958
        %1960 = vrot.lane.b32.xlu0 %v1493, 124
        %v1961 = vpop.permute.xlu0 %1960
        %1962 = vrot.lane.b32.xlu0 %v1494, 124
        %v1963 = vpop.permute.xlu0 %1962
        %1964 = vrot.lane.b32.xlu0 %v1495, 124
        %v1965 = vpop.permute.xlu0 %1964
        %1966 = vrot.lane.b32.xlu0 %v1496, 124
        %v1967 = vpop.permute.xlu0 %1966
        %1968 = vrot.lane.b32.xlu0 %v1497, 124
        %v1969 = vpop.permute.xlu0 %1968
        %1970 = vrot.lane.b32.xlu0 %v1498, 124
        %v1971 = vpop.permute.xlu0 %1970
        %1972 = vrot.lane.b32.xlu0 %v1499, 124
        %v1973 = vpop.permute.xlu0 %1972
        %1974 = vrot.lane.b32.xlu0 %v1500, 124
        %v1975 = vpop.permute.xlu0 %1974
        %1976 = vrot.lane.b32.xlu0 %v1501, 124
        %v1977 = vpop.permute.xlu0 %1976
        %1978 = vrot.lane.b32.xlu0 %v1502, 124
        %v1979 = vpop.permute.xlu0 %1978
        %1980 = vrot.lane.b32.xlu0 %v1503, 124
        %v1981 = vpop.permute.xlu0 %1980
        %1982 = vrot.lane.b32.xlu0 %v1504, 124
        %v1983 = vpop.permute.xlu0 %1982
        %1984 = vrot.lane.b32.xlu0 %v1505, 124
        %v1985 = vpop.permute.xlu0 %1984
        %1986 = vrot.lane.b32.xlu0 %v1506, 124
        %v1987 = vpop.permute.xlu0 %1986
        %1988 = vrot.lane.b32.xlu0 %v1507, 124
        %v1989 = vpop.permute.xlu0 %1988
        %1990 = vrot.lane.b32.xlu0 %v1508, 124
        %v1991 = vpop.permute.xlu0 %1990
        %1992 = vrot.lane.b32.xlu0 %v1509, 124
        %v1993 = vpop.permute.xlu0 %1992
        %1994 = vrot.lane.b32.xlu0 %v1510, 124
        %v1995 = vpop.permute.xlu0 %1994
        %1996 = vrot.lane.b32.xlu0 %v1511, 124
        %v1997 = vpop.permute.xlu0 %1996
        %1998 = vrot.lane.b32.xlu0 %v1512, 124
        %v1999 = vpop.permute.xlu0 %1998
        %2000 = vrot.lane.b32.xlu0 %v1513, 124
        %v2001 = vpop.permute.xlu0 %2000
        %2002 = vrot.lane.b32.xlu0 %v1514, 124
        %v2003 = vpop.permute.xlu0 %2002
        %2004 = vrot.lane.b32.xlu0 %v1515, 124
        %v2005 = vpop.permute.xlu0 %2004
        %2006 = vrot.lane.b32.xlu0 %v1516, 124
        %v2007 = vpop.permute.xlu0 %2006
        %2008 = vrot.lane.b32.xlu0 %v1517, 124
        %v2009 = vpop.permute.xlu0 %2008
        %2010 = vrot.lane.b32.xlu0 %v1518, 124
        %v2011 = vpop.permute.xlu0 %2010
        %2012 = vrot.lane.b32.xlu0 %v1519, 124
        %v2013 = vpop.permute.xlu0 %2012
        %2014 = vrot.lane.b32.xlu0 %v1520, 124
        %v2015 = vpop.permute.xlu0 %2014
        %2016 = vrot.lane.b32.xlu0 %v1521, 124
        %v2017 = vpop.permute.xlu0 %2016
        %2018 = vrot.lane.b32.xlu0 %v1522, 124
        %v2019 = vpop.permute.xlu0 %2018
        %2020 = vrot.lane.b32.xlu0 %v1523, 124
        %v2021 = vpop.permute.xlu0 %2020
        %2022 = vrot.lane.b32.xlu0 %v1524, 124
        %v2023 = vpop.permute.xlu0 %2022
        %2024 = vrot.lane.b32.xlu0 %v1525, 124
        %v2025 = vpop.permute.xlu0 %2024
        %2026 = vrot.lane.b32.xlu0 %v1526, 124
        %v2027 = vpop.permute.xlu0 %2026
        %2028 = vrot.lane.b32.xlu0 %v1527, 124
        %v2029 = vpop.permute.xlu0 %2028
        %2030 = vrot.lane.b32.xlu0 %v1528, 124
        %v2031 = vpop.permute.xlu0 %2030
        %2032 = vrot.lane.b32.xlu0 %v1529, 124
        %v2033 = vpop.permute.xlu0 %2032
        %2034 = vrot.lane.b32.xlu0 %v1530, 124
        %v2035 = vpop.permute.xlu0 %2034
        %2036 = vrot.lane.b32.xlu0 %v1531, 124
        %v2037 = vpop.permute.xlu0 %2036
        %2038 = vrot.lane.b32.xlu0 %v1532, 124
        %v2039 = vpop.permute.xlu0 %2038
        %2040 = vrot.lane.b32.xlu0 %v1533, 124
        %v2041 = vpop.permute.xlu0 %2040
        %2042 = vrot.lane.b32.xlu0 %v1534, 124
        %v2043 = vpop.permute.xlu0 %2042
        %2044 = vrot.lane.b32.xlu0 %v1535, 124
        %v2045 = vpop.permute.xlu0 %2044
        %2046 = vrot.lane.b32.xlu0 %v1536, 124
        %v2047 = vpop.permute.xlu0 %2046
        %2048 = vrot.lane.b32.xlu0 %v1537, 124
        %v2049 = vpop.permute.xlu0 %2048
        %vm2306 = vcmask 1040384
        %v2307 = vsel %vm2306, %v707, %v1539
        %v2308 = vsel %vm2306, %v834, %v1541
        %v2309 = vsel %vm2306, %v835, %v1543
        %v2310 = vsel %vm2306, %v836, %v1545
        %v2311 = vsel %vm2306, %v837, %v1547
        %v2312 = vsel %vm2306, %v838, %v1549
        %v2313 = vsel %vm2306, %v839, %v1551
        %v2314 = vsel %vm2306, %v840, %v1553
        %v2315 = vsel %vm2306, %v710, %v1555
        %v2316 = vsel %vm2306, %v841, %v1557
        %v2317 = vsel %vm2306, %v842, %v1559
        %v2318 = vsel %vm2306, %v843, %v1561
        %v2319 = vsel %vm2306, %v844, %v1563
        %v2320 = vsel %vm2306, %v845, %v1565
        %v2321 = vsel %vm2306, %v846, %v1567
        %v2322 = vsel %vm2306, %v847, %v1569
        %v2323 = vsel %vm2306, %v713, %v1571
        %v2324 = vsel %vm2306, %v848, %v1573
        %v2325 = vsel %vm2306, %v849, %v1575
        %v2326 = vsel %vm2306, %v850, %v1577
        %v2327 = vsel %vm2306, %v851, %v1579
        %v2328 = vsel %vm2306, %v852, %v1581
        %v2329 = vsel %vm2306, %v853, %v1583
        %v2330 = vsel %vm2306, %v854, %v1585
        %v2331 = vsel %vm2306, %v716, %v1587
        %v2332 = vsel %vm2306, %v855, %v1589
        %v2333 = vsel %vm2306, %v856, %v1591
        %v2334 = vsel %vm2306, %v857, %v1593
        %v2335 = vsel %vm2306, %v858, %v1595
        %v2336 = vsel %vm2306, %v859, %v1597
        %v2337 = vsel %vm2306, %v860, %v1599
        %v2338 = vsel %vm2306, %v861, %v1601
        %v2339 = vsel %vm2306, %v719, %v1603
        %v2340 = vsel %vm2306, %v862, %v1605
        %v2341 = vsel %vm2306, %v863, %v1607
        %v2342 = vsel %vm2306, %v864, %v1609
        %v2343 = vsel %vm2306, %v865, %v1611
        %v2344 = vsel %vm2306, %v866, %v1613
        %v2345 = vsel %vm2306, %v867, %v1615
        %v2346 = vsel %vm2306, %v868, %v1617
        %v2347 = vsel %vm2306, %v722, %v1619
        %v2348 = vsel %vm2306, %v869, %v1621
        %v2349 = vsel %vm2306, %v870, %v1623
        %v2350 = vsel %vm2306, %v871, %v1625
        %v2351 = vsel %vm2306, %v872, %v1627
        %v2352 = vsel %vm2306, %v873, %v1629
        %v2353 = vsel %vm2306, %v874, %v1631
        %v2354 = vsel %vm2306, %v875, %v1633
        %v2355 = vsel %vm2306, %v725, %v1635
        %v2356 = vsel %vm2306, %v876, %v1637
        %v2357 = vsel %vm2306, %v877, %v1639
        %v2358 = vsel %vm2306, %v878, %v1641
        %v2359 = vsel %vm2306, %v879, %v1643
        %v2360 = vsel %vm2306, %v880, %v1645
        %v2361 = vsel %vm2306, %v881, %v1647
        %v2362 = vsel %vm2306, %v882, %v1649
        %v2363 = vsel %vm2306, %v728, %v1651
        %v2364 = vsel %vm2306, %v883, %v1653
        %v2365 = vsel %vm2306, %v884, %v1655
        %v2366 = vsel %vm2306, %v885, %v1657
        %v2367 = vsel %vm2306, %v886, %v1659
        %v2368 = vsel %vm2306, %v887, %v1661
        %v2369 = vsel %vm2306, %v888, %v1663
        %v2370 = vsel %vm2306, %v889, %v1665
        %v2371 = vsel %vm2306, %v731, %v1667
        %v2372 = vsel %vm2306, %v890, %v1669
        %v2373 = vsel %vm2306, %v891, %v1671
        %v2374 = vsel %vm2306, %v892, %v1673
        %v2375 = vsel %vm2306, %v893, %v1675
        %v2376 = vsel %vm2306, %v894, %v1677
        %v2377 = vsel %vm2306, %v895, %v1679
        %v2378 = vsel %vm2306, %v896, %v1681
        %v2379 = vsel %vm2306, %v734, %v1683
        %v2380 = vsel %vm2306, %v897, %v1685
        %v2381 = vsel %vm2306, %v898, %v1687
        %v2382 = vsel %vm2306, %v899, %v1689
        %v2383 = vsel %vm2306, %v900, %v1691
        %v2384 = vsel %vm2306, %v901, %v1693
        %v2385 = vsel %vm2306, %v902, %v1695
        %v2386 = vsel %vm2306, %v903, %v1697
        %v2387 = vsel %vm2306, %v737, %v1699
        %v2388 = vsel %vm2306, %v904, %v1701
        %v2389 = vsel %vm2306, %v905, %v1703
        %v2390 = vsel %vm2306, %v906, %v1705
        %v2391 = vsel %vm2306, %v907, %v1707
        %v2392 = vsel %vm2306, %v908, %v1709
        %v2393 = vsel %vm2306, %v909, %v1711
        %v2394 = vsel %vm2306, %v910, %v1713
        %v2395 = vsel %vm2306, %v740, %v1715
        %v2396 = vsel %vm2306, %v911, %v1717
        %v2397 = vsel %vm2306, %v912, %v1719
        %v2398 = vsel %vm2306, %v913, %v1721
        %v2399 = vsel %vm2306, %v914, %v1723
        %v2400 = vsel %vm2306, %v915, %v1725
        %v2401 = vsel %vm2306, %v916, %v1727
        %v2402 = vsel %vm2306, %v917, %v1729
        %v2403 = vsel %vm2306, %v743, %v1731
        %v2404 = vsel %vm2306, %v918, %v1733
        %v2405 = vsel %vm2306, %v919, %v1735
        %v2406 = vsel %vm2306, %v920, %v1737
        %v2407 = vsel %vm2306, %v921, %v1739
        %v2408 = vsel %vm2306, %v922, %v1741
        %v2409 = vsel %vm2306, %v923, %v1743
        %v2410 = vsel %vm2306, %v924, %v1745
        %v2411 = vsel %vm2306, %v746, %v1747
        %v2412 = vsel %vm2306, %v925, %v1749
        %v2413 = vsel %vm2306, %v926, %v1751
        %v2414 = vsel %vm2306, %v927, %v1753
        %v2415 = vsel %vm2306, %v928, %v1755
        %v2416 = vsel %vm2306, %v929, %v1757
        %v2417 = vsel %vm2306, %v930, %v1759
        %v2418 = vsel %vm2306, %v931, %v1761
        %v2419 = vsel %vm2306, %v749, %v1763
        %v2420 = vsel %vm2306, %v932, %v1765
        %v2421 = vsel %vm2306, %v933, %v1767
        %v2422 = vsel %vm2306, %v934, %v1769
        %v2423 = vsel %vm2306, %v935, %v1771
        %v2424 = vsel %vm2306, %v936, %v1773
        %v2425 = vsel %vm2306, %v937, %v1775
        %v2426 = vsel %vm2306, %v938, %v1777
        %v2427 = vsel %vm2306, %v752, %v1779
        %v2428 = vsel %vm2306, %v939, %v1781
        %v2429 = vsel %vm2306, %v940, %v1783
        %v2430 = vsel %vm2306, %v941, %v1785
        %v2431 = vsel %vm2306, %v942, %v1787
        %v2432 = vsel %vm2306, %v943, %v1789
        %v2433 = vsel %vm2306, %v944, %v1791
        %v2434 = vsel %vm2306, %v945, %v1793
        %v2435 = vsel %vm2306, %v755, %v1795
        %v2436 = vsel %vm2306, %v946, %v1797
        %v2437 = vsel %vm2306, %v947, %v1799
        %v2438 = vsel %vm2306, %v948, %v1801
        %v2439 = vsel %vm2306, %v949, %v1803
        %v2440 = vsel %vm2306, %v950, %v1805
        %v2441 = vsel %vm2306, %v951, %v1807
        %v2442 = vsel %vm2306, %v952, %v1809
        %v2443 = vsel %vm2306, %v758, %v1811
        %v2444 = vsel %vm2306, %v953, %v1813
        %v2445 = vsel %vm2306, %v954, %v1815
        %v2446 = vsel %vm2306, %v955, %v1817
        %v2447 = vsel %vm2306, %v956, %v1819
        %v2448 = vsel %vm2306, %v957, %v1821
        %v2449 = vsel %vm2306, %v958, %v1823
        %v2450 = vsel %vm2306, %v959, %v1825
        %v2451 = vsel %vm2306, %v761, %v1827
        %v2452 = vsel %vm2306, %v960, %v1829
        %v2453 = vsel %vm2306, %v961, %v1831
        %v2454 = vsel %vm2306, %v962, %v1833
        %v2455 = vsel %vm2306, %v963, %v1835
        %v2456 = vsel %vm2306, %v964, %v1837
        %v2457 = vsel %vm2306, %v965, %v1839
        %v2458 = vsel %vm2306, %v966, %v1841
        %v2459 = vsel %vm2306, %v764, %v1843
        %v2460 = vsel %vm2306, %v967, %v1845
        %v2461 = vsel %vm2306, %v968, %v1847
        %v2462 = vsel %vm2306, %v969, %v1849
        %v2463 = vsel %vm2306, %v970, %v1851
        %v2464 = vsel %vm2306, %v971, %v1853
        %v2465 = vsel %vm2306, %v972, %v1855
        %v2466 = vsel %vm2306, %v973, %v1857
        %v2467 = vsel %vm2306, %v767, %v1859
        %v2468 = vsel %vm2306, %v974, %v1861
        %v2469 = vsel %vm2306, %v975, %v1863
        %v2470 = vsel %vm2306, %v976, %v1865
        %v2471 = vsel %vm2306, %v977, %v1867
        %v2472 = vsel %vm2306, %v978, %v1869
        %v2473 = vsel %vm2306, %v979, %v1871
        %v2474 = vsel %vm2306, %v980, %v1873
        %v2475 = vsel %vm2306, %v770, %v1875
        %v2476 = vsel %vm2306, %v981, %v1877
        %v2477 = vsel %vm2306, %v982, %v1879
        %v2478 = vsel %vm2306, %v983, %v1881
        %v2479 = vsel %vm2306, %v984, %v1883
        %v2480 = vsel %vm2306, %v985, %v1885
        %v2481 = vsel %vm2306, %v986, %v1887
        %v2482 = vsel %vm2306, %v987, %v1889
        %v2483 = vsel %vm2306, %v773, %v1891
        %v2484 = vsel %vm2306, %v988, %v1893
        %v2485 = vsel %vm2306, %v989, %v1895
        %v2486 = vsel %vm2306, %v990, %v1897
        %v2487 = vsel %vm2306, %v991, %v1899
        %v2488 = vsel %vm2306, %v992, %v1901
        %v2489 = vsel %vm2306, %v993, %v1903
        %v2490 = vsel %vm2306, %v994, %v1905
        %v2491 = vsel %vm2306, %v776, %v1907
        %v2492 = vsel %vm2306, %v995, %v1909
        %v2493 = vsel %vm2306, %v996, %v1911
        %v2494 = vsel %vm2306, %v997, %v1913
        %v2495 = vsel %vm2306, %v998, %v1915
        %v2496 = vsel %vm2306, %v999, %v1917
        %v2497 = vsel %vm2306, %v1000, %v1919
        %v2498 = vsel %vm2306, %v1001, %v1921
        %v2499 = vsel %vm2306, %v779, %v1923
        %v2500 = vsel %vm2306, %v1002, %v1925
        %v2501 = vsel %vm2306, %v1003, %v1927
        %v2502 = vsel %vm2306, %v1004, %v1929
        %v2503 = vsel %vm2306, %v1005, %v1931
        %v2504 = vsel %vm2306, %v1006, %v1933
        %v2505 = vsel %vm2306, %v1007, %v1935
        %v2506 = vsel %vm2306, %v1008, %v1937
        %v2507 = vsel %vm2306, %v782, %v1939
        %v2508 = vsel %vm2306, %v1009, %v1941
        %v2509 = vsel %vm2306, %v1010, %v1943
        %v2510 = vsel %vm2306, %v1011, %v1945
        %v2511 = vsel %vm2306, %v1012, %v1947
        %v2512 = vsel %vm2306, %v1013, %v1949
        %v2513 = vsel %vm2306, %v1014, %v1951
        %v2514 = vsel %vm2306, %v1015, %v1953
        %v2515 = vsel %vm2306, %v785, %v1955
        %v2516 = vsel %vm2306, %v1016, %v1957
        %v2517 = vsel %vm2306, %v1017, %v1959
        %v2518 = vsel %vm2306, %v1018, %v1961
        %v2519 = vsel %vm2306, %v1019, %v1963
        %v2520 = vsel %vm2306, %v1020, %v1965
        %v2521 = vsel %vm2306, %v1021, %v1967
        %v2522 = vsel %vm2306, %v1022, %v1969
        %v2523 = vsel %vm2306, %v788, %v1971
        %v2524 = vsel %vm2306, %v1023, %v1973
        %v2525 = vsel %vm2306, %v1024, %v1975
        %v2526 = vsel %vm2306, %v1025, %v1977
        %v2527 = vsel %vm2306, %v1026, %v1979
        %v2528 = vsel %vm2306, %v1027, %v1981
        %v2529 = vsel %vm2306, %v1028, %v1983
        %v2530 = vsel %vm2306, %v1029, %v1985
        %v2531 = vsel %vm2306, %v791, %v1987
        %v2532 = vsel %vm2306, %v1030, %v1989
        %v2533 = vsel %vm2306, %v1031, %v1991
        %v2534 = vsel %vm2306, %v1032, %v1993
        %v2535 = vsel %vm2306, %v1033, %v1995
        %v2536 = vsel %vm2306, %v1034, %v1997
        %v2537 = vsel %vm2306, %v1035, %v1999
        %v2538 = vsel %vm2306, %v1036, %v2001
        %v2539 = vsel %vm2306, %v794, %v2003
        %v2540 = vsel %vm2306, %v1037, %v2005
        %v2541 = vsel %vm2306, %v1038, %v2007
        %v2542 = vsel %vm2306, %v1039, %v2009
        %v2543 = vsel %vm2306, %v1040, %v2011
        %v2544 = vsel %vm2306, %v1041, %v2013
        %v2545 = vsel %vm2306, %v1042, %v2015
        %v2546 = vsel %vm2306, %v1043, %v2017
        %v2547 = vsel %vm2306, %v797, %v2019
        %v2548 = vsel %vm2306, %v1044, %v2021
        %v2549 = vsel %vm2306, %v1045, %v2023
        %v2550 = vsel %vm2306, %v1046, %v2025
        %v2551 = vsel %vm2306, %v1047, %v2027
        %v2552 = vsel %vm2306, %v1048, %v2029
        %v2553 = vsel %vm2306, %v1049, %v2031
        %v2554 = vsel %vm2306, %v1050, %v2033
        %v2555 = vsel %vm2306, %v800, %v2035
        %v2556 = vsel %vm2306, %v1051, %v2037
        %v2557 = vsel %vm2306, %v1052, %v2039
        %v2558 = vsel %vm2306, %v1053, %v2041
        %v2559 = vsel %vm2306, %v1054, %v2043
        %v2560 = vsel %vm2306, %v1055, %v2045
        %v2561 = vsel %vm2306, %v1056, %v2047
        %v2562 = vsel %vm2306, %v1057, %v2049
        %2819 = vrot.lane.b32.xlu0 %v2307, 120
        %v2820 = vpop.permute.xlu0 %2819
        %2821 = vrot.lane.b32.xlu0 %v2308, 120
        %v2822 = vpop.permute.xlu0 %2821
        %2823 = vrot.lane.b32.xlu0 %v2309, 120
        %v2824 = vpop.permute.xlu0 %2823
        %2825 = vrot.lane.b32.xlu0 %v2310, 120
        %v2826 = vpop.permute.xlu0 %2825
        %2827 = vrot.lane.b32.xlu0 %v2311, 120
        %v2828 = vpop.permute.xlu0 %2827
        %2829 = vrot.lane.b32.xlu0 %v2312, 120
        %v2830 = vpop.permute.xlu0 %2829
        %2831 = vrot.lane.b32.xlu0 %v2313, 120
        %v2832 = vpop.permute.xlu0 %2831
        %2833 = vrot.lane.b32.xlu0 %v2314, 120
        %v2834 = vpop.permute.xlu0 %2833
        %2835 = vrot.lane.b32.xlu0 %v2315, 120
        %v2836 = vpop.permute.xlu0 %2835
        %2837 = vrot.lane.b32.xlu0 %v2316, 120
        %v2838 = vpop.permute.xlu0 %2837
        %2839 = vrot.lane.b32.xlu0 %v2317, 120
        %v2840 = vpop.permute.xlu0 %2839
        %2841 = vrot.lane.b32.xlu0 %v2318, 120
        %v2842 = vpop.permute.xlu0 %2841
        %2843 = vrot.lane.b32.xlu0 %v2319, 120
        %v2844 = vpop.permute.xlu0 %2843
        %2845 = vrot.lane.b32.xlu0 %v2320, 120
        %v2846 = vpop.permute.xlu0 %2845
        %2847 = vrot.lane.b32.xlu0 %v2321, 120
        %v2848 = vpop.permute.xlu0 %2847
        %2849 = vrot.lane.b32.xlu0 %v2322, 120
        %v2850 = vpop.permute.xlu0 %2849
        %2851 = vrot.lane.b32.xlu0 %v2323, 120
        %v2852 = vpop.permute.xlu0 %2851
        %2853 = vrot.lane.b32.xlu0 %v2324, 120
        %v2854 = vpop.permute.xlu0 %2853
        %2855 = vrot.lane.b32.xlu0 %v2325, 120
        %v2856 = vpop.permute.xlu0 %2855
        %2857 = vrot.lane.b32.xlu0 %v2326, 120
        %v2858 = vpop.permute.xlu0 %2857
        %2859 = vrot.lane.b32.xlu0 %v2327, 120
        %v2860 = vpop.permute.xlu0 %2859
        %2861 = vrot.lane.b32.xlu0 %v2328, 120
        %v2862 = vpop.permute.xlu0 %2861
        %2863 = vrot.lane.b32.xlu0 %v2329, 120
        %v2864 = vpop.permute.xlu0 %2863
        %2865 = vrot.lane.b32.xlu0 %v2330, 120
        %v2866 = vpop.permute.xlu0 %2865
        %2867 = vrot.lane.b32.xlu0 %v2331, 120
        %v2868 = vpop.permute.xlu0 %2867
        %2869 = vrot.lane.b32.xlu0 %v2332, 120
        %v2870 = vpop.permute.xlu0 %2869
        %2871 = vrot.lane.b32.xlu0 %v2333, 120
        %v2872 = vpop.permute.xlu0 %2871
        %2873 = vrot.lane.b32.xlu0 %v2334, 120
        %v2874 = vpop.permute.xlu0 %2873
        %2875 = vrot.lane.b32.xlu0 %v2335, 120
        %v2876 = vpop.permute.xlu0 %2875
        %2877 = vrot.lane.b32.xlu0 %v2336, 120
        %v2878 = vpop.permute.xlu0 %2877
        %2879 = vrot.lane.b32.xlu0 %v2337, 120
        %v2880 = vpop.permute.xlu0 %2879
        %2881 = vrot.lane.b32.xlu0 %v2338, 120
        %v2882 = vpop.permute.xlu0 %2881
        %2883 = vrot.lane.b32.xlu0 %v2339, 120
        %v2884 = vpop.permute.xlu0 %2883
        %2885 = vrot.lane.b32.xlu0 %v2340, 120
        %v2886 = vpop.permute.xlu0 %2885
        %2887 = vrot.lane.b32.xlu0 %v2341, 120
        %v2888 = vpop.permute.xlu0 %2887
        %2889 = vrot.lane.b32.xlu0 %v2342, 120
        %v2890 = vpop.permute.xlu0 %2889
        %2891 = vrot.lane.b32.xlu0 %v2343, 120
        %v2892 = vpop.permute.xlu0 %2891
        %2893 = vrot.lane.b32.xlu0 %v2344, 120
        %v2894 = vpop.permute.xlu0 %2893
        %2895 = vrot.lane.b32.xlu0 %v2345, 120
        %v2896 = vpop.permute.xlu0 %2895
        %2897 = vrot.lane.b32.xlu0 %v2346, 120
        %v2898 = vpop.permute.xlu0 %2897
        %2899 = vrot.lane.b32.xlu0 %v2347, 120
        %v2900 = vpop.permute.xlu0 %2899
        %2901 = vrot.lane.b32.xlu0 %v2348, 120
        %v2902 = vpop.permute.xlu0 %2901
        %2903 = vrot.lane.b32.xlu0 %v2349, 120
        %v2904 = vpop.permute.xlu0 %2903
        %2905 = vrot.lane.b32.xlu0 %v2350, 120
        %v2906 = vpop.permute.xlu0 %2905
        %2907 = vrot.lane.b32.xlu0 %v2351, 120
        %v2908 = vpop.permute.xlu0 %2907
        %2909 = vrot.lane.b32.xlu0 %v2352, 120
        %v2910 = vpop.permute.xlu0 %2909
        %2911 = vrot.lane.b32.xlu0 %v2353, 120
        %v2912 = vpop.permute.xlu0 %2911
        %2913 = vrot.lane.b32.xlu0 %v2354, 120
        %v2914 = vpop.permute.xlu0 %2913
        %2915 = vrot.lane.b32.xlu0 %v2355, 120
        %v2916 = vpop.permute.xlu0 %2915
        %2917 = vrot.lane.b32.xlu0 %v2356, 120
        %v2918 = vpop.permute.xlu0 %2917
        %2919 = vrot.lane.b32.xlu0 %v2357, 120
        %v2920 = vpop.permute.xlu0 %2919
        %2921 = vrot.lane.b32.xlu0 %v2358, 120
        %v2922 = vpop.permute.xlu0 %2921
        %2923 = vrot.lane.b32.xlu0 %v2359, 120
        %v2924 = vpop.permute.xlu0 %2923
        %2925 = vrot.lane.b32.xlu0 %v2360, 120
        %v2926 = vpop.permute.xlu0 %2925
        %2927 = vrot.lane.b32.xlu0 %v2361, 120
        %v2928 = vpop.permute.xlu0 %2927
        %2929 = vrot.lane.b32.xlu0 %v2362, 120
        %v2930 = vpop.permute.xlu0 %2929
        %2931 = vrot.lane.b32.xlu0 %v2363, 120
        %v2932 = vpop.permute.xlu0 %2931
        %2933 = vrot.lane.b32.xlu0 %v2364, 120
        %v2934 = vpop.permute.xlu0 %2933
        %2935 = vrot.lane.b32.xlu0 %v2365, 120
        %v2936 = vpop.permute.xlu0 %2935
        %2937 = vrot.lane.b32.xlu0 %v2366, 120
        %v2938 = vpop.permute.xlu0 %2937
        %2939 = vrot.lane.b32.xlu0 %v2367, 120
        %v2940 = vpop.permute.xlu0 %2939
        %2941 = vrot.lane.b32.xlu0 %v2368, 120
        %v2942 = vpop.permute.xlu0 %2941
        %2943 = vrot.lane.b32.xlu0 %v2369, 120
        %v2944 = vpop.permute.xlu0 %2943
        %2945 = vrot.lane.b32.xlu0 %v2370, 120
        %v2946 = vpop.permute.xlu0 %2945
        %2947 = vrot.lane.b32.xlu0 %v2371, 120
        %v2948 = vpop.permute.xlu0 %2947
        %2949 = vrot.lane.b32.xlu0 %v2372, 120
        %v2950 = vpop.permute.xlu0 %2949
        %2951 = vrot.lane.b32.xlu0 %v2373, 120
        %v2952 = vpop.permute.xlu0 %2951
        %2953 = vrot.lane.b32.xlu0 %v2374, 120
        %v2954 = vpop.permute.xlu0 %2953
        %2955 = vrot.lane.b32.xlu0 %v2375, 120
        %v2956 = vpop.permute.xlu0 %2955
        %2957 = vrot.lane.b32.xlu0 %v2376, 120
        %v2958 = vpop.permute.xlu0 %2957
        %2959 = vrot.lane.b32.xlu0 %v2377, 120
        %v2960 = vpop.permute.xlu0 %2959
        %2961 = vrot.lane.b32.xlu0 %v2378, 120
        %v2962 = vpop.permute.xlu0 %2961
        %2963 = vrot.lane.b32.xlu0 %v2379, 120
        %v2964 = vpop.permute.xlu0 %2963
        %2965 = vrot.lane.b32.xlu0 %v2380, 120
        %v2966 = vpop.permute.xlu0 %2965
        %2967 = vrot.lane.b32.xlu0 %v2381, 120
        %v2968 = vpop.permute.xlu0 %2967
        %2969 = vrot.lane.b32.xlu0 %v2382, 120
        %v2970 = vpop.permute.xlu0 %2969
        %2971 = vrot.lane.b32.xlu0 %v2383, 120
        %v2972 = vpop.permute.xlu0 %2971
        %2973 = vrot.lane.b32.xlu0 %v2384, 120
        %v2974 = vpop.permute.xlu0 %2973
        %2975 = vrot.lane.b32.xlu0 %v2385, 120
        %v2976 = vpop.permute.xlu0 %2975
        %2977 = vrot.lane.b32.xlu0 %v2386, 120
        %v2978 = vpop.permute.xlu0 %2977
        %2979 = vrot.lane.b32.xlu0 %v2387, 120
        %v2980 = vpop.permute.xlu0 %2979
        %2981 = vrot.lane.b32.xlu0 %v2388, 120
        %v2982 = vpop.permute.xlu0 %2981
        %2983 = vrot.lane.b32.xlu0 %v2389, 120
        %v2984 = vpop.permute.xlu0 %2983
        %2985 = vrot.lane.b32.xlu0 %v2390, 120
        %v2986 = vpop.permute.xlu0 %2985
        %2987 = vrot.lane.b32.xlu0 %v2391, 120
        %v2988 = vpop.permute.xlu0 %2987
        %2989 = vrot.lane.b32.xlu0 %v2392, 120
        %v2990 = vpop.permute.xlu0 %2989
        %2991 = vrot.lane.b32.xlu0 %v2393, 120
        %v2992 = vpop.permute.xlu0 %2991
        %2993 = vrot.lane.b32.xlu0 %v2394, 120
        %v2994 = vpop.permute.xlu0 %2993
        %2995 = vrot.lane.b32.xlu0 %v2395, 120
        %v2996 = vpop.permute.xlu0 %2995
        %2997 = vrot.lane.b32.xlu0 %v2396, 120
        %v2998 = vpop.permute.xlu0 %2997
        %2999 = vrot.lane.b32.xlu0 %v2397, 120
        %v3000 = vpop.permute.xlu0 %2999
        %3001 = vrot.lane.b32.xlu0 %v2398, 120
        %v3002 = vpop.permute.xlu0 %3001
        %3003 = vrot.lane.b32.xlu0 %v2399, 120
        %v3004 = vpop.permute.xlu0 %3003
        %3005 = vrot.lane.b32.xlu0 %v2400, 120
        %v3006 = vpop.permute.xlu0 %3005
        %3007 = vrot.lane.b32.xlu0 %v2401, 120
        %v3008 = vpop.permute.xlu0 %3007
        %3009 = vrot.lane.b32.xlu0 %v2402, 120
        %v3010 = vpop.permute.xlu0 %3009
        %3011 = vrot.lane.b32.xlu0 %v2403, 120
        %v3012 = vpop.permute.xlu0 %3011
        %3013 = vrot.lane.b32.xlu0 %v2404, 120
        %v3014 = vpop.permute.xlu0 %3013
        %3015 = vrot.lane.b32.xlu0 %v2405, 120
        %v3016 = vpop.permute.xlu0 %3015
        %3017 = vrot.lane.b32.xlu0 %v2406, 120
        %v3018 = vpop.permute.xlu0 %3017
        %3019 = vrot.lane.b32.xlu0 %v2407, 120
        %v3020 = vpop.permute.xlu0 %3019
        %3021 = vrot.lane.b32.xlu0 %v2408, 120
        %v3022 = vpop.permute.xlu0 %3021
        %3023 = vrot.lane.b32.xlu0 %v2409, 120
        %v3024 = vpop.permute.xlu0 %3023
        %3025 = vrot.lane.b32.xlu0 %v2410, 120
        %v3026 = vpop.permute.xlu0 %3025
        %3027 = vrot.lane.b32.xlu0 %v2411, 120
        %v3028 = vpop.permute.xlu0 %3027
        %3029 = vrot.lane.b32.xlu0 %v2412, 120
        %v3030 = vpop.permute.xlu0 %3029
        %3031 = vrot.lane.b32.xlu0 %v2413, 120
        %v3032 = vpop.permute.xlu0 %3031
        %3033 = vrot.lane.b32.xlu0 %v2414, 120
        %v3034 = vpop.permute.xlu0 %3033
        %3035 = vrot.lane.b32.xlu0 %v2415, 120
        %v3036 = vpop.permute.xlu0 %3035
        %3037 = vrot.lane.b32.xlu0 %v2416, 120
        %v3038 = vpop.permute.xlu0 %3037
        %3039 = vrot.lane.b32.xlu0 %v2417, 120
        %v3040 = vpop.permute.xlu0 %3039
        %3041 = vrot.lane.b32.xlu0 %v2418, 120
        %v3042 = vpop.permute.xlu0 %3041
        %3043 = vrot.lane.b32.xlu0 %v2419, 120
        %v3044 = vpop.permute.xlu0 %3043
        %3045 = vrot.lane.b32.xlu0 %v2420, 120
        %v3046 = vpop.permute.xlu0 %3045
        %3047 = vrot.lane.b32.xlu0 %v2421, 120
        %v3048 = vpop.permute.xlu0 %3047
        %3049 = vrot.lane.b32.xlu0 %v2422, 120
        %v3050 = vpop.permute.xlu0 %3049
        %3051 = vrot.lane.b32.xlu0 %v2423, 120
        %v3052 = vpop.permute.xlu0 %3051
        %3053 = vrot.lane.b32.xlu0 %v2424, 120
        %v3054 = vpop.permute.xlu0 %3053
        %3055 = vrot.lane.b32.xlu0 %v2425, 120
        %v3056 = vpop.permute.xlu0 %3055
        %3057 = vrot.lane.b32.xlu0 %v2426, 120
        %v3058 = vpop.permute.xlu0 %3057
        %3059 = vrot.lane.b32.xlu0 %v2427, 120
        %v3060 = vpop.permute.xlu0 %3059
        %3061 = vrot.lane.b32.xlu0 %v2428, 120
        %v3062 = vpop.permute.xlu0 %3061
        %3063 = vrot.lane.b32.xlu0 %v2429, 120
        %v3064 = vpop.permute.xlu0 %3063
        %3065 = vrot.lane.b32.xlu0 %v2430, 120
        %v3066 = vpop.permute.xlu0 %3065
        %3067 = vrot.lane.b32.xlu0 %v2431, 120
        %v3068 = vpop.permute.xlu0 %3067
        %3069 = vrot.lane.b32.xlu0 %v2432, 120
        %v3070 = vpop.permute.xlu0 %3069
        %3071 = vrot.lane.b32.xlu0 %v2433, 120
        %v3072 = vpop.permute.xlu0 %3071
        %3073 = vrot.lane.b32.xlu0 %v2434, 120
        %v3074 = vpop.permute.xlu0 %3073
        %3075 = vrot.lane.b32.xlu0 %v2435, 120
        %v3076 = vpop.permute.xlu0 %3075
        %3077 = vrot.lane.b32.xlu0 %v2436, 120
        %v3078 = vpop.permute.xlu0 %3077
        %3079 = vrot.lane.b32.xlu0 %v2437, 120
        %v3080 = vpop.permute.xlu0 %3079
        %3081 = vrot.lane.b32.xlu0 %v2438, 120
        %v3082 = vpop.permute.xlu0 %3081
        %3083 = vrot.lane.b32.xlu0 %v2439, 120
        %v3084 = vpop.permute.xlu0 %3083
        %3085 = vrot.lane.b32.xlu0 %v2440, 120
        %v3086 = vpop.permute.xlu0 %3085
        %3087 = vrot.lane.b32.xlu0 %v2441, 120
        %v3088 = vpop.permute.xlu0 %3087
        %3089 = vrot.lane.b32.xlu0 %v2442, 120
        %v3090 = vpop.permute.xlu0 %3089
        %3091 = vrot.lane.b32.xlu0 %v2443, 120
        %v3092 = vpop.permute.xlu0 %3091
        %3093 = vrot.lane.b32.xlu0 %v2444, 120
        %v3094 = vpop.permute.xlu0 %3093
        %3095 = vrot.lane.b32.xlu0 %v2445, 120
        %v3096 = vpop.permute.xlu0 %3095
        %3097 = vrot.lane.b32.xlu0 %v2446, 120
        %v3098 = vpop.permute.xlu0 %3097
        %3099 = vrot.lane.b32.xlu0 %v2447, 120
        %v3100 = vpop.permute.xlu0 %3099
        %3101 = vrot.lane.b32.xlu0 %v2448, 120
        %v3102 = vpop.permute.xlu0 %3101
        %3103 = vrot.lane.b32.xlu0 %v2449, 120
        %v3104 = vpop.permute.xlu0 %3103
        %3105 = vrot.lane.b32.xlu0 %v2450, 120
        %v3106 = vpop.permute.xlu0 %3105
        %3107 = vrot.lane.b32.xlu0 %v2451, 120
        %v3108 = vpop.permute.xlu0 %3107
        %3109 = vrot.lane.b32.xlu0 %v2452, 120
        %v3110 = vpop.permute.xlu0 %3109
        %3111 = vrot.lane.b32.xlu0 %v2453, 120
        %v3112 = vpop.permute.xlu0 %3111
        %3113 = vrot.lane.b32.xlu0 %v2454, 120
        %v3114 = vpop.permute.xlu0 %3113
        %3115 = vrot.lane.b32.xlu0 %v2455, 120
        %v3116 = vpop.permute.xlu0 %3115
        %3117 = vrot.lane.b32.xlu0 %v2456, 120
        %v3118 = vpop.permute.xlu0 %3117
        %3119 = vrot.lane.b32.xlu0 %v2457, 120
        %v3120 = vpop.permute.xlu0 %3119
        %3121 = vrot.lane.b32.xlu0 %v2458, 120
        %v3122 = vpop.permute.xlu0 %3121
        %3123 = vrot.lane.b32.xlu0 %v2459, 120
        %v3124 = vpop.permute.xlu0 %3123
        %3125 = vrot.lane.b32.xlu0 %v2460, 120
        %v3126 = vpop.permute.xlu0 %3125
        %3127 = vrot.lane.b32.xlu0 %v2461, 120
        %v3128 = vpop.permute.xlu0 %3127
        %3129 = vrot.lane.b32.xlu0 %v2462, 120
        %v3130 = vpop.permute.xlu0 %3129
        %3131 = vrot.lane.b32.xlu0 %v2463, 120
        %v3132 = vpop.permute.xlu0 %3131
        %3133 = vrot.lane.b32.xlu0 %v2464, 120
        %v3134 = vpop.permute.xlu0 %3133
        %3135 = vrot.lane.b32.xlu0 %v2465, 120
        %v3136 = vpop.permute.xlu0 %3135
        %3137 = vrot.lane.b32.xlu0 %v2466, 120
        %v3138 = vpop.permute.xlu0 %3137
        %3139 = vrot.lane.b32.xlu0 %v2467, 120
        %v3140 = vpop.permute.xlu0 %3139
        %3141 = vrot.lane.b32.xlu0 %v2468, 120
        %v3142 = vpop.permute.xlu0 %3141
        %3143 = vrot.lane.b32.xlu0 %v2469, 120
        %v3144 = vpop.permute.xlu0 %3143
        %3145 = vrot.lane.b32.xlu0 %v2470, 120
        %v3146 = vpop.permute.xlu0 %3145
        %3147 = vrot.lane.b32.xlu0 %v2471, 120
        %v3148 = vpop.permute.xlu0 %3147
        %3149 = vrot.lane.b32.xlu0 %v2472, 120
        %v3150 = vpop.permute.xlu0 %3149
        %3151 = vrot.lane.b32.xlu0 %v2473, 120
        %v3152 = vpop.permute.xlu0 %3151
        %3153 = vrot.lane.b32.xlu0 %v2474, 120
        %v3154 = vpop.permute.xlu0 %3153
        %3155 = vrot.lane.b32.xlu0 %v2475, 120
        %v3156 = vpop.permute.xlu0 %3155
        %3157 = vrot.lane.b32.xlu0 %v2476, 120
        %v3158 = vpop.permute.xlu0 %3157
        %3159 = vrot.lane.b32.xlu0 %v2477, 120
        %v3160 = vpop.permute.xlu0 %3159
        %3161 = vrot.lane.b32.xlu0 %v2478, 120
        %v3162 = vpop.permute.xlu0 %3161
        %3163 = vrot.lane.b32.xlu0 %v2479, 120
        %v3164 = vpop.permute.xlu0 %3163
        %3165 = vrot.lane.b32.xlu0 %v2480, 120
        %v3166 = vpop.permute.xlu0 %3165
        %3167 = vrot.lane.b32.xlu0 %v2481, 120
        %v3168 = vpop.permute.xlu0 %3167
        %3169 = vrot.lane.b32.xlu0 %v2482, 120
        %v3170 = vpop.permute.xlu0 %3169
        %3171 = vrot.lane.b32.xlu0 %v2483, 120
        %v3172 = vpop.permute.xlu0 %3171
        %3173 = vrot.lane.b32.xlu0 %v2484, 120
        %v3174 = vpop.permute.xlu0 %3173
        %3175 = vrot.lane.b32.xlu0 %v2485, 120
        %v3176 = vpop.permute.xlu0 %3175
        %3177 = vrot.lane.b32.xlu0 %v2486, 120
        %v3178 = vpop.permute.xlu0 %3177
        %3179 = vrot.lane.b32.xlu0 %v2487, 120
        %v3180 = vpop.permute.xlu0 %3179
        %3181 = vrot.lane.b32.xlu0 %v2488, 120
        %v3182 = vpop.permute.xlu0 %3181
        %3183 = vrot.lane.b32.xlu0 %v2489, 120
        %v3184 = vpop.permute.xlu0 %3183
        %3185 = vrot.lane.b32.xlu0 %v2490, 120
        %v3186 = vpop.permute.xlu0 %3185
        %3187 = vrot.lane.b32.xlu0 %v2491, 120
        %v3188 = vpop.permute.xlu0 %3187
        %3189 = vrot.lane.b32.xlu0 %v2492, 120
        %v3190 = vpop.permute.xlu0 %3189
        %3191 = vrot.lane.b32.xlu0 %v2493, 120
        %v3192 = vpop.permute.xlu0 %3191
        %3193 = vrot.lane.b32.xlu0 %v2494, 120
        %v3194 = vpop.permute.xlu0 %3193
        %3195 = vrot.lane.b32.xlu0 %v2495, 120
        %v3196 = vpop.permute.xlu0 %3195
        %3197 = vrot.lane.b32.xlu0 %v2496, 120
        %v3198 = vpop.permute.xlu0 %3197
        %3199 = vrot.lane.b32.xlu0 %v2497, 120
        %v3200 = vpop.permute.xlu0 %3199
        %3201 = vrot.lane.b32.xlu0 %v2498, 120
        %v3202 = vpop.permute.xlu0 %3201
        %3203 = vrot.lane.b32.xlu0 %v2499, 120
        %v3204 = vpop.permute.xlu0 %3203
        %3205 = vrot.lane.b32.xlu0 %v2500, 120
        %v3206 = vpop.permute.xlu0 %3205
        %3207 = vrot.lane.b32.xlu0 %v2501, 120
        %v3208 = vpop.permute.xlu0 %3207
        %3209 = vrot.lane.b32.xlu0 %v2502, 120
        %v3210 = vpop.permute.xlu0 %3209
        %3211 = vrot.lane.b32.xlu0 %v2503, 120
        %v3212 = vpop.permute.xlu0 %3211
        %3213 = vrot.lane.b32.xlu0 %v2504, 120
        %v3214 = vpop.permute.xlu0 %3213
        %3215 = vrot.lane.b32.xlu0 %v2505, 120
        %v3216 = vpop.permute.xlu0 %3215
        %3217 = vrot.lane.b32.xlu0 %v2506, 120
        %v3218 = vpop.permute.xlu0 %3217
        %3219 = vrot.lane.b32.xlu0 %v2507, 120
        %v3220 = vpop.permute.xlu0 %3219
        %3221 = vrot.lane.b32.xlu0 %v2508, 120
        %v3222 = vpop.permute.xlu0 %3221
        %3223 = vrot.lane.b32.xlu0 %v2509, 120
        %v3224 = vpop.permute.xlu0 %3223
        %3225 = vrot.lane.b32.xlu0 %v2510, 120
        %v3226 = vpop.permute.xlu0 %3225
        %3227 = vrot.lane.b32.xlu0 %v2511, 120
        %v3228 = vpop.permute.xlu0 %3227
        %3229 = vrot.lane.b32.xlu0 %v2512, 120
        %v3230 = vpop.permute.xlu0 %3229
        %3231 = vrot.lane.b32.xlu0 %v2513, 120
        %v3232 = vpop.permute.xlu0 %3231
        %3233 = vrot.lane.b32.xlu0 %v2514, 120
        %v3234 = vpop.permute.xlu0 %3233
        %3235 = vrot.lane.b32.xlu0 %v2515, 120
        %v3236 = vpop.permute.xlu0 %3235
        %3237 = vrot.lane.b32.xlu0 %v2516, 120
        %v3238 = vpop.permute.xlu0 %3237
        %3239 = vrot.lane.b32.xlu0 %v2517, 120
        %v3240 = vpop.permute.xlu0 %3239
        %3241 = vrot.lane.b32.xlu0 %v2518, 120
        %v3242 = vpop.permute.xlu0 %3241
        %3243 = vrot.lane.b32.xlu0 %v2519, 120
        %v3244 = vpop.permute.xlu0 %3243
        %3245 = vrot.lane.b32.xlu0 %v2520, 120
        %v3246 = vpop.permute.xlu0 %3245
        %3247 = vrot.lane.b32.xlu0 %v2521, 120
        %v3248 = vpop.permute.xlu0 %3247
        %3249 = vrot.lane.b32.xlu0 %v2522, 120
        %v3250 = vpop.permute.xlu0 %3249
        %3251 = vrot.lane.b32.xlu0 %v2523, 120
        %v3252 = vpop.permute.xlu0 %3251
        %3253 = vrot.lane.b32.xlu0 %v2524, 120
        %v3254 = vpop.permute.xlu0 %3253
        %3255 = vrot.lane.b32.xlu0 %v2525, 120
        %v3256 = vpop.permute.xlu0 %3255
        %3257 = vrot.lane.b32.xlu0 %v2526, 120
        %v3258 = vpop.permute.xlu0 %3257
        %3259 = vrot.lane.b32.xlu0 %v2527, 120
        %v3260 = vpop.permute.xlu0 %3259
        %3261 = vrot.lane.b32.xlu0 %v2528, 120
        %v3262 = vpop.permute.xlu0 %3261
        %3263 = vrot.lane.b32.xlu0 %v2529, 120
        %v3264 = vpop.permute.xlu0 %3263
        %3265 = vrot.lane.b32.xlu0 %v2530, 120
        %v3266 = vpop.permute.xlu0 %3265
        %3267 = vrot.lane.b32.xlu0 %v2531, 120
        %v3268 = vpop.permute.xlu0 %3267
        %3269 = vrot.lane.b32.xlu0 %v2532, 120
        %v3270 = vpop.permute.xlu0 %3269
        %3271 = vrot.lane.b32.xlu0 %v2533, 120
        %v3272 = vpop.permute.xlu0 %3271
        %3273 = vrot.lane.b32.xlu0 %v2534, 120
        %v3274 = vpop.permute.xlu0 %3273
        %3275 = vrot.lane.b32.xlu0 %v2535, 120
        %v3276 = vpop.permute.xlu0 %3275
        %3277 = vrot.lane.b32.xlu0 %v2536, 120
        %v3278 = vpop.permute.xlu0 %3277
        %3279 = vrot.lane.b32.xlu0 %v2537, 120
        %v3280 = vpop.permute.xlu0 %3279
        %3281 = vrot.lane.b32.xlu0 %v2538, 120
        %v3282 = vpop.permute.xlu0 %3281
        %3283 = vrot.lane.b32.xlu0 %v2539, 120
        %v3284 = vpop.permute.xlu0 %3283
        %3285 = vrot.lane.b32.xlu0 %v2540, 120
        %v3286 = vpop.permute.xlu0 %3285
        %3287 = vrot.lane.b32.xlu0 %v2541, 120
        %v3288 = vpop.permute.xlu0 %3287
        %3289 = vrot.lane.b32.xlu0 %v2542, 120
        %v3290 = vpop.permute.xlu0 %3289
        %3291 = vrot.lane.b32.xlu0 %v2543, 120
        %v3292 = vpop.permute.xlu0 %3291
        %3293 = vrot.lane.b32.xlu0 %v2544, 120
        %v3294 = vpop.permute.xlu0 %3293
        %3295 = vrot.lane.b32.xlu0 %v2545, 120
        %v3296 = vpop.permute.xlu0 %3295
        %3297 = vrot.lane.b32.xlu0 %v2546, 120
        %v3298 = vpop.permute.xlu0 %3297
        %3299 = vrot.lane.b32.xlu0 %v2547, 120
        %v3300 = vpop.permute.xlu0 %3299
        %3301 = vrot.lane.b32.xlu0 %v2548, 120
        %v3302 = vpop.permute.xlu0 %3301
        %3303 = vrot.lane.b32.xlu0 %v2549, 120
        %v3304 = vpop.permute.xlu0 %3303
        %3305 = vrot.lane.b32.xlu0 %v2550, 120
        %v3306 = vpop.permute.xlu0 %3305
        %3307 = vrot.lane.b32.xlu0 %v2551, 120
        %v3308 = vpop.permute.xlu0 %3307
        %3309 = vrot.lane.b32.xlu0 %v2552, 120
        %v3310 = vpop.permute.xlu0 %3309
        %3311 = vrot.lane.b32.xlu0 %v2553, 120
        %v3312 = vpop.permute.xlu0 %3311
        %3313 = vrot.lane.b32.xlu0 %v2554, 120
        %v3314 = vpop.permute.xlu0 %3313
        %3315 = vrot.lane.b32.xlu0 %v2555, 120
        %v3316 = vpop.permute.xlu0 %3315
        %3317 = vrot.lane.b32.xlu0 %v2556, 120
        %v3318 = vpop.permute.xlu0 %3317
        %3319 = vrot.lane.b32.xlu0 %v2557, 120
        %v3320 = vpop.permute.xlu0 %3319
        %3321 = vrot.lane.b32.xlu0 %v2558, 120
        %v3322 = vpop.permute.xlu0 %3321
        %3323 = vrot.lane.b32.xlu0 %v2559, 120
        %v3324 = vpop.permute.xlu0 %3323
        %3325 = vrot.lane.b32.xlu0 %v2560, 120
        %v3326 = vpop.permute.xlu0 %3325
        %3327 = vrot.lane.b32.xlu0 %v2561, 120
        %v3328 = vpop.permute.xlu0 %3327
        %3329 = vrot.lane.b32.xlu0 %v2562, 120
        %v3330 = vpop.permute.xlu0 %3329
        %3331 = vst [vmem:[#allocation1] ss:$4 sm:$0xff] %v2307
        %s3332 = scalar_lea.vmem [#allocation1], 1
        %3333 = vst [vmem:[%s3332] ss:$4 sm:$0xff] %v2308
        %s3334 = scalar_lea.vmem [#allocation1], 2
        %3335 = vst [vmem:[%s3334] ss:$4 sm:$0xff] %v2309
        %s3336 = scalar_lea.vmem [#allocation1], 3
        %3337 = vst [vmem:[%s3336] ss:$4 sm:$0xff] %v2310
        %s3338 = scalar_lea.vmem [#allocation1], 32
        %3339 = vst [vmem:[%s3338] ss:$4 sm:$0xff] %v2311
        %s3340 = scalar_lea.vmem [#allocation1], 33
        %3341 = vst [vmem:[%s3340] ss:$4 sm:$0xff] %v2312
        %s3342 = scalar_lea.vmem [#allocation1], 34
        %3343 = vst [vmem:[%s3342] ss:$4 sm:$0xff] %v2313
        %s3344 = scalar_lea.vmem [#allocation1], 35
        %3345 = vst [vmem:[%s3344] ss:$4 sm:$0xff] %v2314
        %v3346 = vld.sshfl [vmem:[#allocation1] sm:$0xff pattern:$0x73625140]
        %v3347 = vld.sshfl [vmem:[#allocation1 + $0x20] sm:$0xff pattern:$0x73625140]
        %3348 = vst [vmem:[#allocation1] ss:$4 sm:$0xff] %v2315
        %3349 = vst [vmem:[%s3332] ss:$4 sm:$0xff] %v2316
        %3350 = vst [vmem:[%s3334] ss:$4 sm:$0xff] %v2317
        %3351 = vst [vmem:[%s3336] ss:$4 sm:$0xff] %v2318
        %3352 = vst [vmem:[%s3338] ss:$4 sm:$0xff] %v2319
        %3353 = vst [vmem:[%s3340] ss:$4 sm:$0xff] %v2320
        %3354 = vst [vmem:[%s3342] ss:$4 sm:$0xff] %v2321
        %3355 = vst [vmem:[%s3344] ss:$4 sm:$0xff] %v2322
        %v3356 = vld.sshfl [vmem:[#allocation1] sm:$0xff pattern:$0x73625140]
        %v3357 = vld.sshfl [vmem:[#allocation1 + $0x20] sm:$0xff pattern:$0x73625140]
        %3358 = vst [vmem:[#allocation1] ss:$4 sm:$0xff] %v2820
        %3359 = vst [vmem:[%s3332] ss:$4 sm:$0xff] %v2822
        %3360 = vst [vmem:[%s3334] ss:$4 sm:$0xff] %v2824
        %3361 = vst [vmem:[%s3336] ss:$4 sm:$0xff] %v2826
        %3362 = vst [vmem:[%s3338] ss:$4 sm:$0xff] %v2828
        %3363 = vst [vmem:[%s3340] ss:$4 sm:$0xff] %v2830
        %3364 = vst [vmem:[%s3342] ss:$4 sm:$0xff] %v2832
        %3365 = vst [vmem:[%s3344] ss:$4 sm:$0xff] %v2834
        %v3366 = vld.sshfl [vmem:[#allocation1] sm:$0xff pattern:$0x73625140]
        %v3367 = vld.sshfl [vmem:[#allocation1 + $0x20] sm:$0xff pattern:$0x73625140]
        %3368 = vst [vmem:[#allocation1] ss:$4 sm:$0xff] %v2836
        %3369 = vst [vmem:[%s3332] ss:$4 sm:$0xff] %v2838
        %3370 = vst [vmem:[%s3334] ss:$4 sm:$0xff] %v2840
        %3371 = vst [vmem:[%s3336] ss:$4 sm:$0xff] %v2842
        %3372 = vst [vmem:[%s3338] ss:$4 sm:$0xff] %v2844
        %3373 = vst [vmem:[%s3340] ss:$4 sm:$0xff] %v2846
        %3374 = vst [vmem:[%s3342] ss:$4 sm:$0xff] %v2848
        %3375 = vst [vmem:[%s3344] ss:$4 sm:$0xff] %v2850
        %v3376 = vld.sshfl [vmem:[#allocation1] sm:$0xff pattern:$0x73625140]
        %v3377 = vld.sshfl [vmem:[#allocation1 + $0x20] sm:$0xff pattern:$0x73625140]
        %3378 = vst [vmem:[#allocation1] ss:$4 sm:$0xff] %v2323
        %3379 = vst [vmem:[%s3332] ss:$4 sm:$0xff] %v2324
        %3380 = vst [vmem:[%s3334] ss:$4 sm:$0xff] %v2325
        %3381 = vst [vmem:[%s3336] ss:$4 sm:$0xff] %v2326
        %3382 = vst [vmem:[%s3338] ss:$4 sm:$0xff] %v2327
        %3383 = vst [vmem:[%s3340] ss:$4 sm:$0xff] %v2328
        %3384 = vst [vmem:[%s3342] ss:$4 sm:$0xff] %v2329
        %3385 = vst [vmem:[%s3344] ss:$4 sm:$0xff] %v2330
        %v3386 = vld.sshfl [vmem:[#allocation1] sm:$0xff pattern:$0x73625140]
        %v3387 = vld.sshfl [vmem:[#allocation1 + $0x20] sm:$0xff pattern:$0x73625140]
        %3388 = vst [vmem:[#allocation1] ss:$4 sm:$0xff] %v2331
        %3389 = vst [vmem:[%s3332] ss:$4 sm:$0xff] %v2332
        %3390 = vst [vmem:[%s3334] ss:$4 sm:$0xff] %v2333
        %3391 = vst [vmem:[%s3336] ss:$4 sm:$0xff] %v2334
        %3392 = vst [vmem:[%s3338] ss:$4 sm:$0xff] %v2335
        %3393 = vst [vmem:[%s3340] ss:$4 sm:$0xff] %v2336
        %3394 = vst [vmem:[%s3342] ss:$4 sm:$0xff] %v2337
        %3395 = vst [vmem:[%s3344] ss:$4 sm:$0xff] %v2338
        %v3396 = vld.sshfl [vmem:[#allocation1] sm:$0xff pattern:$0x73625140]
        %v3397 = vld.sshfl [vmem:[#allocation1 + $0x20] sm:$0xff pattern:$0x73625140]
        %3398 = vst [vmem:[#allocation1] ss:$4 sm:$0xff] %v2852
        %3399 = vst [vmem:[%s3332] ss:$4 sm:$0xff] %v2854
        %3400 = vst [vmem:[%s3334] ss:$4 sm:$0xff] %v2856
        %3401 = vst [vmem:[%s3336] ss:$4 sm:$0xff] %v2858
        %3402 = vst [vmem:[%s3338] ss:$4 sm:$0xff] %v2860
        %3403 = vst [vmem:[%s3340] ss:$4 sm:$0xff] %v2862
        %3404 = vst [vmem:[%s3342] ss:$4 sm:$0xff] %v2864
        %3405 = vst [vmem:[%s3344] ss:$4 sm:$0xff] %v2866
        %v3406 = vld.sshfl [vmem:[#allocation1] sm:$0xff pattern:$0x73625140]
        %v3407 = vld.sshfl [vmem:[#allocation1 + $0x20] sm:$0xff pattern:$0x73625140]
        %3408 = vst [vmem:[#allocation1] ss:$4 sm:$0xff] %v2868
        %3409 = vst [vmem:[%s3332] ss:$4 sm:$0xff] %v2870
        %3410 = vst [vmem:[%s3334] ss:$4 sm:$0xff] %v2872
        %3411 = vst [vmem:[%s3336] ss:$4 sm:$0xff] %v2874
        %3412 = vst [vmem:[%s3338] ss:$4 sm:$0xff] %v2876
        %3413 = vst [vmem:[%s3340] ss:$4 sm:$0xff] %v2878
        %3414 = vst [vmem:[%s3342] ss:$4 sm:$0xff] %v2880
        %3415 = vst [vmem:[%s3344] ss:$4 sm:$0xff] %v2882
        %v3416 = vld.sshfl [vmem:[#allocation1] sm:$0xff pattern:$0x73625140]
        %v3417 = vld.sshfl [vmem:[#allocation1 + $0x20] sm:$0xff pattern:$0x73625140]
        %3418 = vst [vmem:[#allocation1] ss:$4 sm:$0xff] %v2339
        %3419 = vst [vmem:[%s3332] ss:$4 sm:$0xff] %v2340
        %3420 = vst [vmem:[%s3334] ss:$4 sm:$0xff] %v2341
        %3421 = vst [vmem:[%s3336] ss:$4 sm:$0xff] %v2342
        %3422 = vst [vmem:[%s3338] ss:$4 sm:$0xff] %v2343
        %3423 = vst [vmem:[%s3340] ss:$4 sm:$0xff] %v2344
        %3424 = vst [vmem:[%s3342] ss:$4 sm:$0xff] %v2345
        %3425 = vst [vmem:[%s3344] ss:$4 sm:$0xff] %v2346
        %v3426 = vld.sshfl [vmem:[#allocation1] sm:$0xff pattern:$0x73625140]
        %v3427 = vld.sshfl [vmem:[#allocation1 + $0x20] sm:$0xff pattern:$0x73625140]
        %3428 = vst [vmem:[#allocation1] ss:$4 sm:$0xff] %v2347
        %3429 = vst [vmem:[%s3332] ss:$4 sm:$0xff] %v2348
        %3430 = vst [vmem:[%s3334] ss:$4 sm:$0xff] %v2349
        %3431 = vst [vmem:[%s3336] ss:$4 sm:$0xff] %v2350
        %3432 = vst [vmem:[%s3338] ss:$4 sm:$0xff] %v2351
        %3433 = vst [vmem:[%s3340] ss:$4 sm:$0xff] %v2352
        %3434 = vst [vmem:[%s3342] ss:$4 sm:$0xff] %v2353
        %3435 = vst [vmem:[%s3344] ss:$4 sm:$0xff] %v2354
        %v3436 = vld.sshfl [vmem:[#allocation1] sm:$0xff pattern:$0x73625140]
        %v3437 = vld.sshfl [vmem:[#allocation1 + $0x20] sm:$0xff pattern:$0x73625140]
        %3438 = vst [vmem:[#allocation1] ss:$4 sm:$0xff] %v2884
        %3439 = vst [vmem:[%s3332] ss:$4 sm:$0xff] %v2886
        %3440 = vst [vmem:[%s3334] ss:$4 sm:$0xff] %v2888
        %3441 = vst [vmem:[%s3336] ss:$4 sm:$0xff] %v2890
        %3442 = vst [vmem:[%s3338] ss:$4 sm:$0xff] %v2892
        %3443 = vst [vmem:[%s3340] ss:$4 sm:$0xff] %v2894
        %3444 = vst [vmem:[%s3342] ss:$4 sm:$0xff] %v2896
        %3445 = vst [vmem:[%s3344] ss:$4 sm:$0xff] %v2898
        %v3446 = vld.sshfl [vmem:[#allocation1] sm:$0xff pattern:$0x73625140]
        %v3447 = vld.sshfl [vmem:[#allocation1 + $0x20] sm:$0xff pattern:$0x73625140]
        %3448 = vst [vmem:[#allocation1] ss:$4 sm:$0xff] %v2900
        %3449 = vst [vmem:[%s3332] ss:$4 sm:$0xff] %v2902
        %3450 = vst [vmem:[%s3334] ss:$4 sm:$0xff] %v2904
        %3451 = vst [vmem:[%s3336] ss:$4 sm:$0xff] %v2906
        %3452 = vst [vmem:[%s3338] ss:$4 sm:$0xff] %v2908
        %3453 = vst [vmem:[%s3340] ss:$4 sm:$0xff] %v2910
        %3454 = vst [vmem:[%s3342] ss:$4 sm:$0xff] %v2912
        %3455 = vst [vmem:[%s3344] ss:$4 sm:$0xff] %v2914
        %v3456 = vld.sshfl [vmem:[#allocation1] sm:$0xff pattern:$0x73625140]
        %v3457 = vld.sshfl [vmem:[#allocation1 + $0x20] sm:$0xff pattern:$0x73625140]
        %3458 = vst [vmem:[#allocation1] ss:$4 sm:$0xff] %v2355
        %3459 = vst [vmem:[%s3332] ss:$4 sm:$0xff] %v2356
        %3460 = vst [vmem:[%s3334] ss:$4 sm:$0xff] %v2357
        %3461 = vst [vmem:[%s3336] ss:$4 sm:$0xff] %v2358
        %3462 = vst [vmem:[%s3338] ss:$4 sm:$0xff] %v2359
        %3463 = vst [vmem:[%s3340] ss:$4 sm:$0xff] %v2360
        %3464 = vst [vmem:[%s3342] ss:$4 sm:$0xff] %v2361
        %3465 = vst [vmem:[%s3344] ss:$4 sm:$0xff] %v2362
        %v3466 = vld.sshfl [vmem:[#allocation1] sm:$0xff pattern:$0x73625140]
        %v3467 = vld.sshfl [vmem:[#allocation1 + $0x20] sm:$0xff pattern:$0x73625140]
        %3468 = vst [vmem:[#allocation1] ss:$4 sm:$0xff] %v2363
        %3469 = vst [vmem:[%s3332] ss:$4 sm:$0xff] %v2364
        %3470 = vst [vmem:[%s3334] ss:$4 sm:$0xff] %v2365
        %3471 = vst [vmem:[%s3336] ss:$4 sm:$0xff] %v2366
        %3472 = vst [vmem:[%s3338] ss:$4 sm:$0xff] %v2367
        %3473 = vst [vmem:[%s3340] ss:$4 sm:$0xff] %v2368
        %3474 = vst [vmem:[%s3342] ss:$4 sm:$0xff] %v2369
        %3475 = vst [vmem:[%s3344] ss:$4 sm:$0xff] %v2370
        %v3476 = vld.sshfl [vmem:[#allocation1] sm:$0xff pattern:$0x73625140]
        %v3477 = vld.sshfl [vmem:[#allocation1 + $0x20] sm:$0xff pattern:$0x73625140]
        %3478 = vst [vmem:[#allocation1] ss:$4 sm:$0xff] %v2916
        %3479 = vst [vmem:[%s3332] ss:$4 sm:$0xff] %v2918
        %3480 = vst [vmem:[%s3334] ss:$4 sm:$0xff] %v2920
        %3481 = vst [vmem:[%s3336] ss:$4 sm:$0xff] %v2922
        %3482 = vst [vmem:[%s3338] ss:$4 sm:$0xff] %v2924
        %3483 = vst [vmem:[%s3340] ss:$4 sm:$0xff] %v2926
        %3484 = vst [vmem:[%s3342] ss:$4 sm:$0xff] %v2928
        %3485 = vst [vmem:[%s3344] ss:$4 sm:$0xff] %v2930
        %v3486 = vld.sshfl [vmem:[#allocation1] sm:$0xff pattern:$0x73625140]
        %v3487 = vld.sshfl [vmem:[#allocation1 + $0x20] sm:$0xff pattern:$0x73625140]
        %3488 = vst [vmem:[#allocation1] ss:$4 sm:$0xff] %v2932
        %3489 = vst [vmem:[%s3332] ss:$4 sm:$0xff] %v2934
        %3490 = vst [vmem:[%s3334] ss:$4 sm:$0xff] %v2936
        %3491 = vst [vmem:[%s3336] ss:$4 sm:$0xff] %v2938
        %3492 = vst [vmem:[%s3338] ss:$4 sm:$0xff] %v2940
        %3493 = vst [vmem:[%s3340] ss:$4 sm:$0xff] %v2942
        %3494 = vst [vmem:[%s3342] ss:$4 sm:$0xff] %v2944
        %3495 = vst [vmem:[%s3344] ss:$4 sm:$0xff] %v2946
        %v3496 = vld.sshfl [vmem:[#allocation1] sm:$0xff pattern:$0x73625140]
        %v3497 = vld.sshfl [vmem:[#allocation1 + $0x20] sm:$0xff pattern:$0x73625140]
        %3498 = vst [vmem:[#allocation1] ss:$4 sm:$0xff] %v2371
        %3499 = vst [vmem:[%s3332] ss:$4 sm:$0xff] %v2372
        %3500 = vst [vmem:[%s3334] ss:$4 sm:$0xff] %v2373
        %3501 = vst [vmem:[%s3336] ss:$4 sm:$0xff] %v2374
        %3502 = vst [vmem:[%s3338] ss:$4 sm:$0xff] %v2375
        %3503 = vst [vmem:[%s3340] ss:$4 sm:$0xff] %v2376
        %3504 = vst [vmem:[%s3342] ss:$4 sm:$0xff] %v2377
        %3505 = vst [vmem:[%s3344] ss:$4 sm:$0xff] %v2378
        %v3506 = vld.sshfl [vmem:[#allocation1] sm:$0xff pattern:$0x73625140]
        %v3507 = vld.sshfl [vmem:[#allocation1 + $0x20] sm:$0xff pattern:$0x73625140]
        %3508 = vst [vmem:[#allocation1] ss:$4 sm:$0xff] %v2379
        %3509 = vst [vmem:[%s3332] ss:$4 sm:$0xff] %v2380
        %3510 = vst [vmem:[%s3334] ss:$4 sm:$0xff] %v2381
        %3511 = vst [vmem:[%s3336] ss:$4 sm:$0xff] %v2382
        %3512 = vst [vmem:[%s3338] ss:$4 sm:$0xff] %v2383
        %3513 = vst [vmem:[%s3340] ss:$4 sm:$0xff] %v2384
        %3514 = vst [vmem:[%s3342] ss:$4 sm:$0xff] %v2385
        %3515 = vst [vmem:[%s3344] ss:$4 sm:$0xff] %v2386
        %v3516 = vld.sshfl [vmem:[#allocation1] sm:$0xff pattern:$0x73625140]
        %v3517 = vld.sshfl [vmem:[#allocation1 + $0x20] sm:$0xff pattern:$0x73625140]
        %3518 = vst [vmem:[#allocation1] ss:$4 sm:$0xff] %v2948
        %3519 = vst [vmem:[%s3332] ss:$4 sm:$0xff] %v2950
        %3520 = vst [vmem:[%s3334] ss:$4 sm:$0xff] %v2952
        %3521 = vst [vmem:[%s3336] ss:$4 sm:$0xff] %v2954
        %3522 = vst [vmem:[%s3338] ss:$4 sm:$0xff] %v2956
        %3523 = vst [vmem:[%s3340] ss:$4 sm:$0xff] %v2958
        %3524 = vst [vmem:[%s3342] ss:$4 sm:$0xff] %v2960
        %3525 = vst [vmem:[%s3344] ss:$4 sm:$0xff] %v2962
        %v3526 = vld.sshfl [vmem:[#allocation1] sm:$0xff pattern:$0x73625140]
        %v3527 = vld.sshfl [vmem:[#allocation1 + $0x20] sm:$0xff pattern:$0x73625140]
        %3528 = vst [vmem:[#allocation1] ss:$4 sm:$0xff] %v2964
        %3529 = vst [vmem:[%s3332] ss:$4 sm:$0xff] %v2966
        %3530 = vst [vmem:[%s3334] ss:$4 sm:$0xff] %v2968
        %3531 = vst [vmem:[%s3336] ss:$4 sm:$0xff] %v2970
        %3532 = vst [vmem:[%s3338] ss:$4 sm:$0xff] %v2972
        %3533 = vst [vmem:[%s3340] ss:$4 sm:$0xff] %v2974
        %3534 = vst [vmem:[%s3342] ss:$4 sm:$0xff] %v2976
        %3535 = vst [vmem:[%s3344] ss:$4 sm:$0xff] %v2978
        %v3536 = vld.sshfl [vmem:[#allocation1] sm:$0xff pattern:$0x73625140]
        %v3537 = vld.sshfl [vmem:[#allocation1 + $0x20] sm:$0xff pattern:$0x73625140]
        %3538 = vst [vmem:[#allocation1] ss:$4 sm:$0xff] %v2387
        %3539 = vst [vmem:[%s3332] ss:$4 sm:$0xff] %v2388
        %3540 = vst [vmem:[%s3334] ss:$4 sm:$0xff] %v2389
        %3541 = vst [vmem:[%s3336] ss:$4 sm:$0xff] %v2390
        %3542 = vst [vmem:[%s3338] ss:$4 sm:$0xff] %v2391
        %3543 = vst [vmem:[%s3340] ss:$4 sm:$0xff] %v2392
        %3544 = vst [vmem:[%s3342] ss:$4 sm:$0xff] %v2393
        %3545 = vst [vmem:[%s3344] ss:$4 sm:$0xff] %v2394
        %v3546 = vld.sshfl [vmem:[#allocation1] sm:$0xff pattern:$0x73625140]
        %v3547 = vld.sshfl [vmem:[#allocation1 + $0x20] sm:$0xff pattern:$0x73625140]
        %3548 = vst [vmem:[#allocation1] ss:$4 sm:$0xff] %v2395
        %3549 = vst [vmem:[%s3332] ss:$4 sm:$0xff] %v2396
        %3550 = vst [vmem:[%s3334] ss:$4 sm:$0xff] %v2397
        %3551 = vst [vmem:[%s3336] ss:$4 sm:$0xff] %v2398
        %3552 = vst [vmem:[%s3338] ss:$4 sm:$0xff] %v2399
        %3553 = vst [vmem:[%s3340] ss:$4 sm:$0xff] %v2400
        %3554 = vst [vmem:[%s3342] ss:$4 sm:$0xff] %v2401
        %3555 = vst [vmem:[%s3344] ss:$4 sm:$0xff] %v2402
        %v3556 = vld.sshfl [vmem:[#allocation1] sm:$0xff pattern:$0x73625140]
        %v3557 = vld.sshfl [vmem:[#allocation1 + $0x20] sm:$0xff pattern:$0x73625140]
        %3558 = vst [vmem:[#allocation1] ss:$4 sm:$0xff] %v2980
        %3559 = vst [vmem:[%s3332] ss:$4 sm:$0xff] %v2982
        %3560 = vst [vmem:[%s3334] ss:$4 sm:$0xff] %v2984
        %3561 = vst [vmem:[%s3336] ss:$4 sm:$0xff] %v2986
        %3562 = vst [vmem:[%s3338] ss:$4 sm:$0xff] %v2988
        %3563 = vst [vmem:[%s3340] ss:$4 sm:$0xff] %v2990
        %3564 = vst [vmem:[%s3342] ss:$4 sm:$0xff] %v2992
        %3565 = vst [vmem:[%s3344] ss:$4 sm:$0xff] %v2994
        %v3566 = vld.sshfl [vmem:[#allocation1] sm:$0xff pattern:$0x73625140]
        %v3567 = vld.sshfl [vmem:[#allocation1 + $0x20] sm:$0xff pattern:$0x73625140]
        %3568 = vst [vmem:[#allocation1] ss:$4 sm:$0xff] %v2996
        %3569 = vst [vmem:[%s3332] ss:$4 sm:$0xff] %v2998
        %3570 = vst [vmem:[%s3334] ss:$4 sm:$0xff] %v3000
        %3571 = vst [vmem:[%s3336] ss:$4 sm:$0xff] %v3002
        %3572 = vst [vmem:[%s3338] ss:$4 sm:$0xff] %v3004
        %3573 = vst [vmem:[%s3340] ss:$4 sm:$0xff] %v3006
        %3574 = vst [vmem:[%s3342] ss:$4 sm:$0xff] %v3008
        %3575 = vst [vmem:[%s3344] ss:$4 sm:$0xff] %v3010
        %v3576 = vld.sshfl [vmem:[#allocation1] sm:$0xff pattern:$0x73625140]
        %v3577 = vld.sshfl [vmem:[#allocation1 + $0x20] sm:$0xff pattern:$0x73625140]
        %3578 = vst [vmem:[#allocation1] ss:$4 sm:$0xff] %v2403
        %3579 = vst [vmem:[%s3332] ss:$4 sm:$0xff] %v2404
        %3580 = vst [vmem:[%s3334] ss:$4 sm:$0xff] %v2405
        %3581 = vst [vmem:[%s3336] ss:$4 sm:$0xff] %v2406
        %3582 = vst [vmem:[%s3338] ss:$4 sm:$0xff] %v2407
        %3583 = vst [vmem:[%s3340] ss:$4 sm:$0xff] %v2408
        %3584 = vst [vmem:[%s3342] ss:$4 sm:$0xff] %v2409
        %3585 = vst [vmem:[%s3344] ss:$4 sm:$0xff] %v2410
        %v3586 = vld.sshfl [vmem:[#allocation1] sm:$0xff pattern:$0x73625140]
        %v3587 = vld.sshfl [vmem:[#allocation1 + $0x20] sm:$0xff pattern:$0x73625140]
        %3588 = vst [vmem:[#allocation1] ss:$4 sm:$0xff] %v2411
        %3589 = vst [vmem:[%s3332] ss:$4 sm:$0xff] %v2412
        %3590 = vst [vmem:[%s3334] ss:$4 sm:$0xff] %v2413
        %3591 = vst [vmem:[%s3336] ss:$4 sm:$0xff] %v2414
        %3592 = vst [vmem:[%s3338] ss:$4 sm:$0xff] %v2415
        %3593 = vst [vmem:[%s3340] ss:$4 sm:$0xff] %v2416
        %3594 = vst [vmem:[%s3342] ss:$4 sm:$0xff] %v2417
        %3595 = vst [vmem:[%s3344] ss:$4 sm:$0xff] %v2418
        %v3596 = vld.sshfl [vmem:[#allocation1] sm:$0xff pattern:$0x73625140]
        %v3597 = vld.sshfl [vmem:[#allocation1 + $0x20] sm:$0xff pattern:$0x73625140]
        %3598 = vst [vmem:[#allocation1] ss:$4 sm:$0xff] %v3012
        %3599 = vst [vmem:[%s3332] ss:$4 sm:$0xff] %v3014
        %3600 = vst [vmem:[%s3334] ss:$4 sm:$0xff] %v3016
        %3601 = vst [vmem:[%s3336] ss:$4 sm:$0xff] %v3018
        %3602 = vst [vmem:[%s3338] ss:$4 sm:$0xff] %v3020
        %3603 = vst [vmem:[%s3340] ss:$4 sm:$0xff] %v3022
        %3604 = vst [vmem:[%s3342] ss:$4 sm:$0xff] %v3024
        %3605 = vst [vmem:[%s3344] ss:$4 sm:$0xff] %v3026
        %v3606 = vld.sshfl [vmem:[#allocation1] sm:$0xff pattern:$0x73625140]
        %v3607 = vld.sshfl [vmem:[#allocation1 + $0x20] sm:$0xff pattern:$0x73625140]
        %3608 = vst [vmem:[#allocation1] ss:$4 sm:$0xff] %v3028
        %3609 = vst [vmem:[%s3332] ss:$4 sm:$0xff] %v3030
        %3610 = vst [vmem:[%s3334] ss:$4 sm:$0xff] %v3032
        %3611 = vst [vmem:[%s3336] ss:$4 sm:$0xff] %v3034
        %3612 = vst [vmem:[%s3338] ss:$4 sm:$0xff] %v3036
        %3613 = vst [vmem:[%s3340] ss:$4 sm:$0xff] %v3038
        %3614 = vst [vmem:[%s3342] ss:$4 sm:$0xff] %v3040
        %3615 = vst [vmem:[%s3344] ss:$4 sm:$0xff] %v3042
        %v3616 = vld.sshfl [vmem:[#allocation1] sm:$0xff pattern:$0x73625140]
        %v3617 = vld.sshfl [vmem:[#allocation1 + $0x20] sm:$0xff pattern:$0x73625140]
        %3618 = vst [vmem:[#allocation1] ss:$4 sm:$0xff] %v2419
        %3619 = vst [vmem:[%s3332] ss:$4 sm:$0xff] %v2420
        %3620 = vst [vmem:[%s3334] ss:$4 sm:$0xff] %v2421
        %3621 = vst [vmem:[%s3336] ss:$4 sm:$0xff] %v2422
        %3622 = vst [vmem:[%s3338] ss:$4 sm:$0xff] %v2423
        %3623 = vst [vmem:[%s3340] ss:$4 sm:$0xff] %v2424
        %3624 = vst [vmem:[%s3342] ss:$4 sm:$0xff] %v2425
        %3625 = vst [vmem:[%s3344] ss:$4 sm:$0xff] %v2426
        %v3626 = vld.sshfl [vmem:[#allocation1] sm:$0xff pattern:$0x73625140]
        %v3627 = vld.sshfl [vmem:[#allocation1 + $0x20] sm:$0xff pattern:$0x73625140]
        %3628 = vst [vmem:[#allocation1] ss:$4 sm:$0xff] %v2427
        %3629 = vst [vmem:[%s3332] ss:$4 sm:$0xff] %v2428
        %3630 = vst [vmem:[%s3334] ss:$4 sm:$0xff] %v2429
        %3631 = vst [vmem:[%s3336] ss:$4 sm:$0xff] %v2430
        %3632 = vst [vmem:[%s3338] ss:$4 sm:$0xff] %v2431
        %3633 = vst [vmem:[%s3340] ss:$4 sm:$0xff] %v2432
        %3634 = vst [vmem:[%s3342] ss:$4 sm:$0xff] %v2433
        %3635 = vst [vmem:[%s3344] ss:$4 sm:$0xff] %v2434
        %v3636 = vld.sshfl [vmem:[#allocation1] sm:$0xff pattern:$0x73625140]
        %v3637 = vld.sshfl [vmem:[#allocation1 + $0x20] sm:$0xff pattern:$0x73625140]
        %3638 = vst [vmem:[#allocation1] ss:$4 sm:$0xff] %v3044
        %3639 = vst [vmem:[%s3332] ss:$4 sm:$0xff] %v3046
        %3640 = vst [vmem:[%s3334] ss:$4 sm:$0xff] %v3048
        %3641 = vst [vmem:[%s3336] ss:$4 sm:$0xff] %v3050
        %3642 = vst [vmem:[%s3338] ss:$4 sm:$0xff] %v3052
        %3643 = vst [vmem:[%s3340] ss:$4 sm:$0xff] %v3054
        %3644 = vst [vmem:[%s3342] ss:$4 sm:$0xff] %v3056
        %3645 = vst [vmem:[%s3344] ss:$4 sm:$0xff] %v3058
        %v3646 = vld.sshfl [vmem:[#allocation1] sm:$0xff pattern:$0x73625140]
        %v3647 = vld.sshfl [vmem:[#allocation1 + $0x20] sm:$0xff pattern:$0x73625140]
        %3648 = vst [vmem:[#allocation1] ss:$4 sm:$0xff] %v3060
        %3649 = vst [vmem:[%s3332] ss:$4 sm:$0xff] %v3062
        %3650 = vst [vmem:[%s3334] ss:$4 sm:$0xff] %v3064
        %3651 = vst [vmem:[%s3336] ss:$4 sm:$0xff] %v3066
        %3652 = vst [vmem:[%s3338] ss:$4 sm:$0xff] %v3068
        %3653 = vst [vmem:[%s3340] ss:$4 sm:$0xff] %v3070
        %3654 = vst [vmem:[%s3342] ss:$4 sm:$0xff] %v3072
        %3655 = vst [vmem:[%s3344] ss:$4 sm:$0xff] %v3074
        %v3656 = vld.sshfl [vmem:[#allocation1] sm:$0xff pattern:$0x73625140]
        %v3657 = vld.sshfl [vmem:[#allocation1 + $0x20] sm:$0xff pattern:$0x73625140]
        %3658 = vst [vmem:[#allocation1] ss:$4 sm:$0xff] %v2435
        %3659 = vst [vmem:[%s3332] ss:$4 sm:$0xff] %v2436
        %3660 = vst [vmem:[%s3334] ss:$4 sm:$0xff] %v2437
        %3661 = vst [vmem:[%s3336] ss:$4 sm:$0xff] %v2438
        %3662 = vst [vmem:[%s3338] ss:$4 sm:$0xff] %v2439
        %3663 = vst [vmem:[%s3340] ss:$4 sm:$0xff] %v2440
        %3664 = vst [vmem:[%s3342] ss:$4 sm:$0xff] %v2441
        %3665 = vst [vmem:[%s3344] ss:$4 sm:$0xff] %v2442
        %v3666 = vld.sshfl [vmem:[#allocation1] sm:$0xff pattern:$0x73625140]
        %v3667 = vld.sshfl [vmem:[#allocation1 + $0x20] sm:$0xff pattern:$0x73625140]
        %3668 = vst [vmem:[#allocation1] ss:$4 sm:$0xff] %v2443
        %3669 = vst [vmem:[%s3332] ss:$4 sm:$0xff] %v2444
        %3670 = vst [vmem:[%s3334] ss:$4 sm:$0xff] %v2445
        %3671 = vst [vmem:[%s3336] ss:$4 sm:$0xff] %v2446
        %3672 = vst [vmem:[%s3338] ss:$4 sm:$0xff] %v2447
        %3673 = vst [vmem:[%s3340] ss:$4 sm:$0xff] %v2448
        %3674 = vst [vmem:[%s3342] ss:$4 sm:$0xff] %v2449
        %3675 = vst [vmem:[%s3344] ss:$4 sm:$0xff] %v2450
        %v3676 = vld.sshfl [vmem:[#allocation1] sm:$0xff pattern:$0x73625140]
        %v3677 = vld.sshfl [vmem:[#allocation1 + $0x20] sm:$0xff pattern:$0x73625140]
        %3678 = vst [vmem:[#allocation1] ss:$4 sm:$0xff] %v3076
        %3679 = vst [vmem:[%s3332] ss:$4 sm:$0xff] %v3078
        %3680 = vst [vmem:[%s3334] ss:$4 sm:$0xff] %v3080
        %3681 = vst [vmem:[%s3336] ss:$4 sm:$0xff] %v3082
        %3682 = vst [vmem:[%s3338] ss:$4 sm:$0xff] %v3084
        %3683 = vst [vmem:[%s3340] ss:$4 sm:$0xff] %v3086
        %3684 = vst [vmem:[%s3342] ss:$4 sm:$0xff] %v3088
        %3685 = vst [vmem:[%s3344] ss:$4 sm:$0xff] %v3090
        %v3686 = vld.sshfl [vmem:[#allocation1] sm:$0xff pattern:$0x73625140]
        %v3687 = vld.sshfl [vmem:[#allocation1 + $0x20] sm:$0xff pattern:$0x73625140]
        %3688 = vst [vmem:[#allocation1] ss:$4 sm:$0xff] %v3092
        %3689 = vst [vmem:[%s3332] ss:$4 sm:$0xff] %v3094
        %3690 = vst [vmem:[%s3334] ss:$4 sm:$0xff] %v3096
        %3691 = vst [vmem:[%s3336] ss:$4 sm:$0xff] %v3098
        %3692 = vst [vmem:[%s3338] ss:$4 sm:$0xff] %v3100
        %3693 = vst [vmem:[%s3340] ss:$4 sm:$0xff] %v3102
        %3694 = vst [vmem:[%s3342] ss:$4 sm:$0xff] %v3104
        %3695 = vst [vmem:[%s3344] ss:$4 sm:$0xff] %v3106
        %v3696 = vld.sshfl [vmem:[#allocation1] sm:$0xff pattern:$0x73625140]
        %v3697 = vld.sshfl [vmem:[#allocation1 + $0x20] sm:$0xff pattern:$0x73625140]
        %3698 = vst [vmem:[#allocation1] ss:$4 sm:$0xff] %v2451
        %3699 = vst [vmem:[%s3332] ss:$4 sm:$0xff] %v2452
        %3700 = vst [vmem:[%s3334] ss:$4 sm:$0xff] %v2453
        %3701 = vst [vmem:[%s3336] ss:$4 sm:$0xff] %v2454
        %3702 = vst [vmem:[%s3338] ss:$4 sm:$0xff] %v2455
        %3703 = vst [vmem:[%s3340] ss:$4 sm:$0xff] %v2456
        %3704 = vst [vmem:[%s3342] ss:$4 sm:$0xff] %v2457
        %3705 = vst [vmem:[%s3344] ss:$4 sm:$0xff] %v2458
        %v3706 = vld.sshfl [vmem:[#allocation1] sm:$0xff pattern:$0x73625140]
        %v3707 = vld.sshfl [vmem:[#allocation1 + $0x20] sm:$0xff pattern:$0x73625140]
        %3708 = vst [vmem:[#allocation1] ss:$4 sm:$0xff] %v2459
        %3709 = vst [vmem:[%s3332] ss:$4 sm:$0xff] %v2460
        %3710 = vst [vmem:[%s3334] ss:$4 sm:$0xff] %v2461
        %3711 = vst [vmem:[%s3336] ss:$4 sm:$0xff] %v2462
        %3712 = vst [vmem:[%s3338] ss:$4 sm:$0xff] %v2463
        %3713 = vst [vmem:[%s3340] ss:$4 sm:$0xff] %v2464
        %3714 = vst [vmem:[%s3342] ss:$4 sm:$0xff] %v2465
        %3715 = vst [vmem:[%s3344] ss:$4 sm:$0xff] %v2466
        %v3716 = vld.sshfl [vmem:[#allocation1] sm:$0xff pattern:$0x73625140]
        %v3717 = vld.sshfl [vmem:[#allocation1 + $0x20] sm:$0xff pattern:$0x73625140]
        %3718 = vst [vmem:[#allocation1] ss:$4 sm:$0xff] %v3108
        %3719 = vst [vmem:[%s3332] ss:$4 sm:$0xff] %v3110
        %3720 = vst [vmem:[%s3334] ss:$4 sm:$0xff] %v3112
        %3721 = vst [vmem:[%s3336] ss:$4 sm:$0xff] %v3114
        %3722 = vst [vmem:[%s3338] ss:$4 sm:$0xff] %v3116
        %3723 = vst [vmem:[%s3340] ss:$4 sm:$0xff] %v3118
        %3724 = vst [vmem:[%s3342] ss:$4 sm:$0xff] %v3120
        %3725 = vst [vmem:[%s3344] ss:$4 sm:$0xff] %v3122
        %v3726 = vld.sshfl [vmem:[#allocation1] sm:$0xff pattern:$0x73625140]
        %v3727 = vld.sshfl [vmem:[#allocation1 + $0x20] sm:$0xff pattern:$0x73625140]
        %3728 = vst [vmem:[#allocation1] ss:$4 sm:$0xff] %v3124
        %3729 = vst [vmem:[%s3332] ss:$4 sm:$0xff] %v3126
        %3730 = vst [vmem:[%s3334] ss:$4 sm:$0xff] %v3128
        %3731 = vst [vmem:[%s3336] ss:$4 sm:$0xff] %v3130
        %3732 = vst [vmem:[%s3338] ss:$4 sm:$0xff] %v3132
        %3733 = vst [vmem:[%s3340] ss:$4 sm:$0xff] %v3134
        %3734 = vst [vmem:[%s3342] ss:$4 sm:$0xff] %v3136
        %3735 = vst [vmem:[%s3344] ss:$4 sm:$0xff] %v3138
        %v3736 = vld.sshfl [vmem:[#allocation1] sm:$0xff pattern:$0x73625140]
        %v3737 = vld.sshfl [vmem:[#allocation1 + $0x20] sm:$0xff pattern:$0x73625140]
        %3738 = vst [vmem:[#allocation1] ss:$4 sm:$0xff] %v2467
        %3739 = vst [vmem:[%s3332] ss:$4 sm:$0xff] %v2468
        %3740 = vst [vmem:[%s3334] ss:$4 sm:$0xff] %v2469
        %3741 = vst [vmem:[%s3336] ss:$4 sm:$0xff] %v2470
        %3742 = vst [vmem:[%s3338] ss:$4 sm:$0xff] %v2471
        %3743 = vst [vmem:[%s3340] ss:$4 sm:$0xff] %v2472
        %3744 = vst [vmem:[%s3342] ss:$4 sm:$0xff] %v2473
        %3745 = vst [vmem:[%s3344] ss:$4 sm:$0xff] %v2474
        %v3746 = vld.sshfl [vmem:[#allocation1] sm:$0xff pattern:$0x73625140]
        %v3747 = vld.sshfl [vmem:[#allocation1 + $0x20] sm:$0xff pattern:$0x73625140]
        %3748 = vst [vmem:[#allocation1] ss:$4 sm:$0xff] %v2475
        %3749 = vst [vmem:[%s3332] ss:$4 sm:$0xff] %v2476
        %3750 = vst [vmem:[%s3334] ss:$4 sm:$0xff] %v2477
        %3751 = vst [vmem:[%s3336] ss:$4 sm:$0xff] %v2478
        %3752 = vst [vmem:[%s3338] ss:$4 sm:$0xff] %v2479
        %3753 = vst [vmem:[%s3340] ss:$4 sm:$0xff] %v2480
        %3754 = vst [vmem:[%s3342] ss:$4 sm:$0xff] %v2481
        %3755 = vst [vmem:[%s3344] ss:$4 sm:$0xff] %v2482
        %v3756 = vld.sshfl [vmem:[#allocation1] sm:$0xff pattern:$0x73625140]
        %v3757 = vld.sshfl [vmem:[#allocation1 + $0x20] sm:$0xff pattern:$0x73625140]
        %3758 = vst [vmem:[#allocation1] ss:$4 sm:$0xff] %v3140
        %3759 = vst [vmem:[%s3332] ss:$4 sm:$0xff] %v3142
        %3760 = vst [vmem:[%s3334] ss:$4 sm:$0xff] %v3144
        %3761 = vst [vmem:[%s3336] ss:$4 sm:$0xff] %v3146
        %3762 = vst [vmem:[%s3338] ss:$4 sm:$0xff] %v3148
        %3763 = vst [vmem:[%s3340] ss:$4 sm:$0xff] %v3150
        %3764 = vst [vmem:[%s3342] ss:$4 sm:$0xff] %v3152
        %3765 = vst [vmem:[%s3344] ss:$4 sm:$0xff] %v3154
        %v3766 = vld.sshfl [vmem:[#allocation1] sm:$0xff pattern:$0x73625140]
        %v3767 = vld.sshfl [vmem:[#allocation1 + $0x20] sm:$0xff pattern:$0x73625140]
        %3768 = vst [vmem:[#allocation1] ss:$4 sm:$0xff] %v3156
        %3769 = vst [vmem:[%s3332] ss:$4 sm:$0xff] %v3158
        %3770 = vst [vmem:[%s3334] ss:$4 sm:$0xff] %v3160
        %3771 = vst [vmem:[%s3336] ss:$4 sm:$0xff] %v3162
        %3772 = vst [vmem:[%s3338] ss:$4 sm:$0xff] %v3164
        %3773 = vst [vmem:[%s3340] ss:$4 sm:$0xff] %v3166
        %3774 = vst [vmem:[%s3342] ss:$4 sm:$0xff] %v3168
        %3775 = vst [vmem:[%s3344] ss:$4 sm:$0xff] %v3170
        %v3776 = vld.sshfl [vmem:[#allocation1] sm:$0xff pattern:$0x73625140]
        %v3777 = vld.sshfl [vmem:[#allocation1 + $0x20] sm:$0xff pattern:$0x73625140]
        %3778 = vst [vmem:[#allocation1] ss:$4 sm:$0xff] %v2483
        %3779 = vst [vmem:[%s3332] ss:$4 sm:$0xff] %v2484
        %3780 = vst [vmem:[%s3334] ss:$4 sm:$0xff] %v2485
        %3781 = vst [vmem:[%s3336] ss:$4 sm:$0xff] %v2486
        %3782 = vst [vmem:[%s3338] ss:$4 sm:$0xff] %v2487
        %3783 = vst [vmem:[%s3340] ss:$4 sm:$0xff] %v2488
        %3784 = vst [vmem:[%s3342] ss:$4 sm:$0xff] %v2489
        %3785 = vst [vmem:[%s3344] ss:$4 sm:$0xff] %v2490
        %v3786 = vld.sshfl [vmem:[#allocation1] sm:$0xff pattern:$0x73625140]
        %v3787 = vld.sshfl [vmem:[#allocation1 + $0x20] sm:$0xff pattern:$0x73625140]
        %3788 = vst [vmem:[#allocation1] ss:$4 sm:$0xff] %v2491
        %3789 = vst [vmem:[%s3332] ss:$4 sm:$0xff] %v2492
        %3790 = vst [vmem:[%s3334] ss:$4 sm:$0xff] %v2493
        %3791 = vst [vmem:[%s3336] ss:$4 sm:$0xff] %v2494
        %3792 = vst [vmem:[%s3338] ss:$4 sm:$0xff] %v2495
        %3793 = vst [vmem:[%s3340] ss:$4 sm:$0xff] %v2496
        %3794 = vst [vmem:[%s3342] ss:$4 sm:$0xff] %v2497
        %3795 = vst [vmem:[%s3344] ss:$4 sm:$0xff] %v2498
        %v3796 = vld.sshfl [vmem:[#allocation1] sm:$0xff pattern:$0x73625140]
        %v3797 = vld.sshfl [vmem:[#allocation1 + $0x20] sm:$0xff pattern:$0x73625140]
        %3798 = vst [vmem:[#allocation1] ss:$4 sm:$0xff] %v3172
        %3799 = vst [vmem:[%s3332] ss:$4 sm:$0xff] %v3174
        %3800 = vst [vmem:[%s3334] ss:$4 sm:$0xff] %v3176
        %3801 = vst [vmem:[%s3336] ss:$4 sm:$0xff] %v3178
        %3802 = vst [vmem:[%s3338] ss:$4 sm:$0xff] %v3180
        %3803 = vst [vmem:[%s3340] ss:$4 sm:$0xff] %v3182
        %3804 = vst [vmem:[%s3342] ss:$4 sm:$0xff] %v3184
        %3805 = vst [vmem:[%s3344] ss:$4 sm:$0xff] %v3186
        %v3806 = vld.sshfl [vmem:[#allocation1] sm:$0xff pattern:$0x73625140]
        %v3807 = vld.sshfl [vmem:[#allocation1 + $0x20] sm:$0xff pattern:$0x73625140]
        %3808 = vst [vmem:[#allocation1] ss:$4 sm:$0xff] %v3188
        %3809 = vst [vmem:[%s3332] ss:$4 sm:$0xff] %v3190
        %3810 = vst [vmem:[%s3334] ss:$4 sm:$0xff] %v3192
        %3811 = vst [vmem:[%s3336] ss:$4 sm:$0xff] %v3194
        %3812 = vst [vmem:[%s3338] ss:$4 sm:$0xff] %v3196
        %3813 = vst [vmem:[%s3340] ss:$4 sm:$0xff] %v3198
        %3814 = vst [vmem:[%s3342] ss:$4 sm:$0xff] %v3200
        %3815 = vst [vmem:[%s3344] ss:$4 sm:$0xff] %v3202
        %v3816 = vld.sshfl [vmem:[#allocation1] sm:$0xff pattern:$0x73625140]
        %v3817 = vld.sshfl [vmem:[#allocation1 + $0x20] sm:$0xff pattern:$0x73625140]
        %3818 = vst [vmem:[#allocation1] ss:$4 sm:$0xff] %v2499
        %3819 = vst [vmem:[%s3332] ss:$4 sm:$0xff] %v2500
        %3820 = vst [vmem:[%s3334] ss:$4 sm:$0xff] %v2501
        %3821 = vst [vmem:[%s3336] ss:$4 sm:$0xff] %v2502
        %3822 = vst [vmem:[%s3338] ss:$4 sm:$0xff] %v2503
        %3823 = vst [vmem:[%s3340] ss:$4 sm:$0xff] %v2504
        %3824 = vst [vmem:[%s3342] ss:$4 sm:$0xff] %v2505
        %3825 = vst [vmem:[%s3344] ss:$4 sm:$0xff] %v2506
        %v3826 = vld.sshfl [vmem:[#allocation1] sm:$0xff pattern:$0x73625140]
        %v3827 = vld.sshfl [vmem:[#allocation1 + $0x20] sm:$0xff pattern:$0x73625140]
        %3828 = vst [vmem:[#allocation1] ss:$4 sm:$0xff] %v2507
        %3829 = vst [vmem:[%s3332] ss:$4 sm:$0xff] %v2508
        %3830 = vst [vmem:[%s3334] ss:$4 sm:$0xff] %v2509
        %3831 = vst [vmem:[%s3336] ss:$4 sm:$0xff] %v2510
        %3832 = vst [vmem:[%s3338] ss:$4 sm:$0xff] %v2511
        %3833 = vst [vmem:[%s3340] ss:$4 sm:$0xff] %v2512
        %3834 = vst [vmem:[%s3342] ss:$4 sm:$0xff] %v2513
        %3835 = vst [vmem:[%s3344] ss:$4 sm:$0xff] %v2514
        %v3836 = vld.sshfl [vmem:[#allocation1] sm:$0xff pattern:$0x73625140]
        %v3837 = vld.sshfl [vmem:[#allocation1 + $0x20] sm:$0xff pattern:$0x73625140]
        %3838 = vst [vmem:[#allocation1] ss:$4 sm:$0xff] %v3204
        %3839 = vst [vmem:[%s3332] ss:$4 sm:$0xff] %v3206
        %3840 = vst [vmem:[%s3334] ss:$4 sm:$0xff] %v3208
        %3841 = vst [vmem:[%s3336] ss:$4 sm:$0xff] %v3210
        %3842 = vst [vmem:[%s3338] ss:$4 sm:$0xff] %v3212
        %3843 = vst [vmem:[%s3340] ss:$4 sm:$0xff] %v3214
        %3844 = vst [vmem:[%s3342] ss:$4 sm:$0xff] %v3216
        %3845 = vst [vmem:[%s3344] ss:$4 sm:$0xff] %v3218
        %v3846 = vld.sshfl [vmem:[#allocation1] sm:$0xff pattern:$0x73625140]
        %v3847 = vld.sshfl [vmem:[#allocation1 + $0x20] sm:$0xff pattern:$0x73625140]
        %3848 = vst [vmem:[#allocation1] ss:$4 sm:$0xff] %v3220
        %3849 = vst [vmem:[%s3332] ss:$4 sm:$0xff] %v3222
        %3850 = vst [vmem:[%s3334] ss:$4 sm:$0xff] %v3224
        %3851 = vst [vmem:[%s3336] ss:$4 sm:$0xff] %v3226
        %3852 = vst [vmem:[%s3338] ss:$4 sm:$0xff] %v3228
        %3853 = vst [vmem:[%s3340] ss:$4 sm:$0xff] %v3230
        %3854 = vst [vmem:[%s3342] ss:$4 sm:$0xff] %v3232
        %3855 = vst [vmem:[%s3344] ss:$4 sm:$0xff] %v3234
        %v3856 = vld.sshfl [vmem:[#allocation1] sm:$0xff pattern:$0x73625140]
        %v3857 = vld.sshfl [vmem:[#allocation1 + $0x20] sm:$0xff pattern:$0x73625140]
        %3858 = vst [vmem:[#allocation1] ss:$4 sm:$0xff] %v2515
        %3859 = vst [vmem:[%s3332] ss:$4 sm:$0xff] %v2516
        %3860 = vst [vmem:[%s3334] ss:$4 sm:$0xff] %v2517
        %3861 = vst [vmem:[%s3336] ss:$4 sm:$0xff] %v2518
        %3862 = vst [vmem:[%s3338] ss:$4 sm:$0xff] %v2519
        %3863 = vst [vmem:[%s3340] ss:$4 sm:$0xff] %v2520
        %3864 = vst [vmem:[%s3342] ss:$4 sm:$0xff] %v2521
        %3865 = vst [vmem:[%s3344] ss:$4 sm:$0xff] %v2522
        %v3866 = vld.sshfl [vmem:[#allocation1] sm:$0xff pattern:$0x73625140]
        %v3867 = vld.sshfl [vmem:[#allocation1 + $0x20] sm:$0xff pattern:$0x73625140]
        %3868 = vst [vmem:[#allocation1] ss:$4 sm:$0xff] %v2523
        %3869 = vst [vmem:[%s3332] ss:$4 sm:$0xff] %v2524
        %3870 = vst [vmem:[%s3334] ss:$4 sm:$0xff] %v2525
        %3871 = vst [vmem:[%s3336] ss:$4 sm:$0xff] %v2526
        %3872 = vst [vmem:[%s3338] ss:$4 sm:$0xff] %v2527
        %3873 = vst [vmem:[%s3340] ss:$4 sm:$0xff] %v2528
        %3874 = vst [vmem:[%s3342] ss:$4 sm:$0xff] %v2529
        %3875 = vst [vmem:[%s3344] ss:$4 sm:$0xff] %v2530
        %v3876 = vld.sshfl [vmem:[#allocation1] sm:$0xff pattern:$0x73625140]
        %v3877 = vld.sshfl [vmem:[#allocation1 + $0x20] sm:$0xff pattern:$0x73625140]
        %3878 = vst [vmem:[#allocation1] ss:$4 sm:$0xff] %v3236
        %3879 = vst [vmem:[%s3332] ss:$4 sm:$0xff] %v3238
        %3880 = vst [vmem:[%s3334] ss:$4 sm:$0xff] %v3240
        %3881 = vst [vmem:[%s3336] ss:$4 sm:$0xff] %v3242
        %3882 = vst [vmem:[%s3338] ss:$4 sm:$0xff] %v3244
        %3883 = vst [vmem:[%s3340] ss:$4 sm:$0xff] %v3246
        %3884 = vst [vmem:[%s3342] ss:$4 sm:$0xff] %v3248
        %3885 = vst [vmem:[%s3344] ss:$4 sm:$0xff] %v3250
        %v3886 = vld.sshfl [vmem:[#allocation1] sm:$0xff pattern:$0x73625140]
        %v3887 = vld.sshfl [vmem:[#allocation1 + $0x20] sm:$0xff pattern:$0x73625140]
        %3888 = vst [vmem:[#allocation1] ss:$4 sm:$0xff] %v3252
        %3889 = vst [vmem:[%s3332] ss:$4 sm:$0xff] %v3254
        %3890 = vst [vmem:[%s3334] ss:$4 sm:$0xff] %v3256
        %3891 = vst [vmem:[%s3336] ss:$4 sm:$0xff] %v3258
        %3892 = vst [vmem:[%s3338] ss:$4 sm:$0xff] %v3260
        %3893 = vst [vmem:[%s3340] ss:$4 sm:$0xff] %v3262
        %3894 = vst [vmem:[%s3342] ss:$4 sm:$0xff] %v3264
        %3895 = vst [vmem:[%s3344] ss:$4 sm:$0xff] %v3266
        %v3896 = vld.sshfl [vmem:[#allocation1] sm:$0xff pattern:$0x73625140]
        %v3897 = vld.sshfl [vmem:[#allocation1 + $0x20] sm:$0xff pattern:$0x73625140]
        %3898 = vst [vmem:[#allocation1] ss:$4 sm:$0xff] %v2531
        %3899 = vst [vmem:[%s3332] ss:$4 sm:$0xff] %v2532
        %3900 = vst [vmem:[%s3334] ss:$4 sm:$0xff] %v2533
        %3901 = vst [vmem:[%s3336] ss:$4 sm:$0xff] %v2534
        %3902 = vst [vmem:[%s3338] ss:$4 sm:$0xff] %v2535
        %3903 = vst [vmem:[%s3340] ss:$4 sm:$0xff] %v2536
        %3904 = vst [vmem:[%s3342] ss:$4 sm:$0xff] %v2537
        %3905 = vst [vmem:[%s3344] ss:$4 sm:$0xff] %v2538
        %v3906 = vld.sshfl [vmem:[#allocation1] sm:$0xff pattern:$0x73625140]
        %v3907 = vld.sshfl [vmem:[#allocation1 + $0x20] sm:$0xff pattern:$0x73625140]
        %3908 = vst [vmem:[#allocation1] ss:$4 sm:$0xff] %v2539
        %3909 = vst [vmem:[%s3332] ss:$4 sm:$0xff] %v2540
        %3910 = vst [vmem:[%s3334] ss:$4 sm:$0xff] %v2541
        %3911 = vst [vmem:[%s3336] ss:$4 sm:$0xff] %v2542
        %3912 = vst [vmem:[%s3338] ss:$4 sm:$0xff] %v2543
        %3913 = vst [vmem:[%s3340] ss:$4 sm:$0xff] %v2544
        %3914 = vst [vmem:[%s3342] ss:$4 sm:$0xff] %v2545
        %3915 = vst [vmem:[%s3344] ss:$4 sm:$0xff] %v2546
        %v3916 = vld.sshfl [vmem:[#allocation1] sm:$0xff pattern:$0x73625140]
        %v3917 = vld.sshfl [vmem:[#allocation1 + $0x20] sm:$0xff pattern:$0x73625140]
        %3918 = vst [vmem:[#allocation1] ss:$4 sm:$0xff] %v3268
        %3919 = vst [vmem:[%s3332] ss:$4 sm:$0xff] %v3270
        %3920 = vst [vmem:[%s3334] ss:$4 sm:$0xff] %v3272
        %3921 = vst [vmem:[%s3336] ss:$4 sm:$0xff] %v3274
        %3922 = vst [vmem:[%s3338] ss:$4 sm:$0xff] %v3276
        %3923 = vst [vmem:[%s3340] ss:$4 sm:$0xff] %v3278
        %3924 = vst [vmem:[%s3342] ss:$4 sm:$0xff] %v3280
        %3925 = vst [vmem:[%s3344] ss:$4 sm:$0xff] %v3282
        %v3926 = vld.sshfl [vmem:[#allocation1] sm:$0xff pattern:$0x73625140]
        %v3927 = vld.sshfl [vmem:[#allocation1 + $0x20] sm:$0xff pattern:$0x73625140]
        %3928 = vst [vmem:[#allocation1] ss:$4 sm:$0xff] %v3284
        %3929 = vst [vmem:[%s3332] ss:$4 sm:$0xff] %v3286
        %3930 = vst [vmem:[%s3334] ss:$4 sm:$0xff] %v3288
        %3931 = vst [vmem:[%s3336] ss:$4 sm:$0xff] %v3290
        %3932 = vst [vmem:[%s3338] ss:$4 sm:$0xff] %v3292
        %3933 = vst [vmem:[%s3340] ss:$4 sm:$0xff] %v3294
        %3934 = vst [vmem:[%s3342] ss:$4 sm:$0xff] %v3296
        %3935 = vst [vmem:[%s3344] ss:$4 sm:$0xff] %v3298
        %v3936 = vld.sshfl [vmem:[#allocation1] sm:$0xff pattern:$0x73625140]
        %v3937 = vld.sshfl [vmem:[#allocation1 + $0x20] sm:$0xff pattern:$0x73625140]
        %3938 = vst [vmem:[#allocation1] ss:$4 sm:$0xff] %v2547
        %3939 = vst [vmem:[%s3332] ss:$4 sm:$0xff] %v2548
        %3940 = vst [vmem:[%s3334] ss:$4 sm:$0xff] %v2549
        %3941 = vst [vmem:[%s3336] ss:$4 sm:$0xff] %v2550
        %3942 = vst [vmem:[%s3338] ss:$4 sm:$0xff] %v2551
        %3943 = vst [vmem:[%s3340] ss:$4 sm:$0xff] %v2552
        %3944 = vst [vmem:[%s3342] ss:$4 sm:$0xff] %v2553
        %3945 = vst [vmem:[%s3344] ss:$4 sm:$0xff] %v2554
        %v3946 = vld.sshfl [vmem:[#allocation1] sm:$0xff pattern:$0x73625140]
        %v3947 = vld.sshfl [vmem:[#allocation1 + $0x20] sm:$0xff pattern:$0x73625140]
        %3948 = vst [vmem:[#allocation1] ss:$4 sm:$0xff] %v2555
        %3949 = vst [vmem:[%s3332] ss:$4 sm:$0xff] %v2556
        %3950 = vst [vmem:[%s3334] ss:$4 sm:$0xff] %v2557
        %3951 = vst [vmem:[%s3336] ss:$4 sm:$0xff] %v2558
        %3952 = vst [vmem:[%s3338] ss:$4 sm:$0xff] %v2559
        %3953 = vst [vmem:[%s3340] ss:$4 sm:$0xff] %v2560
        %3954 = vst [vmem:[%s3342] ss:$4 sm:$0xff] %v2561
        %3955 = vst [vmem:[%s3344] ss:$4 sm:$0xff] %v2562
        %v3956 = vld.sshfl [vmem:[#allocation1] sm:$0xff pattern:$0x73625140]
        %v3957 = vld.sshfl [vmem:[#allocation1 + $0x20] sm:$0xff pattern:$0x73625140]
        %3958 = vst [vmem:[#allocation1] ss:$4 sm:$0xff] %v3300
        %3959 = vst [vmem:[%s3332] ss:$4 sm:$0xff] %v3302
        %3960 = vst [vmem:[%s3334] ss:$4 sm:$0xff] %v3304
        %3961 = vst [vmem:[%s3336] ss:$4 sm:$0xff] %v3306
        %3962 = vst [vmem:[%s3338] ss:$4 sm:$0xff] %v3308
        %3963 = vst [vmem:[%s3340] ss:$4 sm:$0xff] %v3310
        %3964 = vst [vmem:[%s3342] ss:$4 sm:$0xff] %v3312
        %3965 = vst [vmem:[%s3344] ss:$4 sm:$0xff] %v3314
        %v3966 = vld.sshfl [vmem:[#allocation1] sm:$0xff pattern:$0x73625140]
        %v3967 = vld.sshfl [vmem:[#allocation1 + $0x20] sm:$0xff pattern:$0x73625140]
        %3968 = vst [vmem:[#allocation1] ss:$4 sm:$0xff] %v3316
        %3969 = vst [vmem:[%s3332] ss:$4 sm:$0xff] %v3318
        %3970 = vst [vmem:[%s3334] ss:$4 sm:$0xff] %v3320
        %3971 = vst [vmem:[%s3336] ss:$4 sm:$0xff] %v3322
        %3972 = vst [vmem:[%s3338] ss:$4 sm:$0xff] %v3324
        %3973 = vst [vmem:[%s3340] ss:$4 sm:$0xff] %v3326
        %3974 = vst [vmem:[%s3342] ss:$4 sm:$0xff] %v3328
        %3975 = vst [vmem:[%s3344] ss:$4 sm:$0xff] %v3330
        %v3976 = vld.sshfl [vmem:[#allocation1] sm:$0xff pattern:$0x73625140]
        %v3977 = vld.sshfl [vmem:[#allocation1 + $0x20] sm:$0xff pattern:$0x73625140]
        %4106 = vxpose.xlu0.b32.start [1/16] %v3346, 128
        %4107 = vxpose.xlu0.b32.cont [2/16] %v3347, 128
        %4108 = vxpose.xlu0.b32.cont [3/16] %v3356, 128
        %4109 = vxpose.xlu0.b32.cont [4/16] %v3357, 128
        %4110 = vxpose.xlu0.b32.cont [5/16] %v3366, 128
        %4111 = vxpose.xlu0.b32.cont [6/16] %v3367, 128
        %4112 = vxpose.xlu0.b32.cont [7/16] %v3376, 128
        %4113 = vxpose.xlu0.b32.cont [8/16] %v3377, 128
        %4114 = vxpose.xlu0.b32.cont [9/16] %v3386, 128
        %4115 = vxpose.xlu0.b32.cont [10/16] %v3387, 128
        %4116 = vxpose.xlu0.b32.cont [11/16] %v3396, 128
        %4117 = vxpose.xlu0.b32.cont [12/16] %v3397, 128
        %4118 = vxpose.xlu0.b32.cont [13/16] %v3406, 128
        %4119 = vxpose.xlu0.b32.cont [14/16] %v3407, 128
        %4120 = vxpose.xlu0.b32.cont [15/16] %v3416, 128
        %4121 = vxpose.xlu0.b32.end [16/16] %v3417, 128
        %v4122 = vpop.trf.xlu0
        %v4123 = vpop.trf.xlu0
        %v4124 = vpop.trf.xlu0
        %v4125 = vpop.trf.xlu0
        %v4126 = vpop.trf.xlu0
        %v4127 = vpop.trf.xlu0
        %v4128 = vpop.trf.xlu0
        %v4129 = vpop.trf.xlu0
        %v4130 = vpop.trf.xlu0
        %v4131 = vpop.trf.xlu0
        %v4132 = vpop.trf.xlu0
        %v4133 = vpop.trf.xlu0
        %v4134 = vpop.trf.xlu0
        %v4135 = vpop.trf.xlu0
        %v4136 = vpop.trf.xlu0
        %v4137 = vpop.trf.xlu0
        %4138 = vxpose.xlu0.b32.start [1/16] %v3426, 128
        %4139 = vxpose.xlu0.b32.cont [2/16] %v3427, 128
        %4140 = vxpose.xlu0.b32.cont [3/16] %v3436, 128
        %4141 = vxpose.xlu0.b32.cont [4/16] %v3437, 128
        %4142 = vxpose.xlu0.b32.cont [5/16] %v3446, 128
        %4143 = vxpose.xlu0.b32.cont [6/16] %v3447, 128
        %4144 = vxpose.xlu0.b32.cont [7/16] %v3456, 128
        %4145 = vxpose.xlu0.b32.cont [8/16] %v3457, 128
        %4146 = vxpose.xlu0.b32.cont [9/16] %v3466, 128
        %4147 = vxpose.xlu0.b32.cont [10/16] %v3467, 128
        %4148 = vxpose.xlu0.b32.cont [11/16] %v3476, 128
        %4149 = vxpose.xlu0.b32.cont [12/16] %v3477, 128
        %4150 = vxpose.xlu0.b32.cont [13/16] %v3486, 128
        %4151 = vxpose.xlu0.b32.cont [14/16] %v3487, 128
        %4152 = vxpose.xlu0.b32.cont [15/16] %v3496, 128
        %4153 = vxpose.xlu0.b32.end [16/16] %v3497, 128
        %v4154 = vpop.trf.xlu0
        %v4155 = vpop.trf.xlu0
        %v4156 = vpop.trf.xlu0
        %v4157 = vpop.trf.xlu0
        %v4158 = vpop.trf.xlu0
        %v4159 = vpop.trf.xlu0
        %v4160 = vpop.trf.xlu0
        %v4161 = vpop.trf.xlu0
        %v4162 = vpop.trf.xlu0
        %v4163 = vpop.trf.xlu0
        %v4164 = vpop.trf.xlu0
        %v4165 = vpop.trf.xlu0
        %v4166 = vpop.trf.xlu0
        %v4167 = vpop.trf.xlu0
        %v4168 = vpop.trf.xlu0
        %v4169 = vpop.trf.xlu0
        %4170 = vxpose.xlu0.b32.start [1/16] %v3506, 128
        %4171 = vxpose.xlu0.b32.cont [2/16] %v3507, 128
        %4172 = vxpose.xlu0.b32.cont [3/16] %v3516, 128
        %4173 = vxpose.xlu0.b32.cont [4/16] %v3517, 128
        %4174 = vxpose.xlu0.b32.cont [5/16] %v3526, 128
        %4175 = vxpose.xlu0.b32.cont [6/16] %v3527, 128
        %4176 = vxpose.xlu0.b32.cont [7/16] %v3536, 128
        %4177 = vxpose.xlu0.b32.cont [8/16] %v3537, 128
        %4178 = vxpose.xlu0.b32.cont [9/16] %v3546, 128
        %4179 = vxpose.xlu0.b32.cont [10/16] %v3547, 128
        %4180 = vxpose.xlu0.b32.cont [11/16] %v3556, 128
        %4181 = vxpose.xlu0.b32.cont [12/16] %v3557, 128
        %4182 = vxpose.xlu0.b32.cont [13/16] %v3566, 128
        %4183 = vxpose.xlu0.b32.cont [14/16] %v3567, 128
        %4184 = vxpose.xlu0.b32.cont [15/16] %v3576, 128
        %4185 = vxpose.xlu0.b32.end [16/16] %v3577, 128
        %v4186 = vpop.trf.xlu0
        %v4187 = vpop.trf.xlu0
        %v4188 = vpop.trf.xlu0
        %v4189 = vpop.trf.xlu0
        %v4190 = vpop.trf.xlu0
        %v4191 = vpop.trf.xlu0
        %v4192 = vpop.trf.xlu0
        %v4193 = vpop.trf.xlu0
        %v4194 = vpop.trf.xlu0
        %v4195 = vpop.trf.xlu0
        %v4196 = vpop.trf.xlu0
        %v4197 = vpop.trf.xlu0
        %v4198 = vpop.trf.xlu0
        %v4199 = vpop.trf.xlu0
        %v4200 = vpop.trf.xlu0
        %v4201 = vpop.trf.xlu0
        %4202 = vxpose.xlu0.b32.start [1/16] %v3586, 128
        %4203 = vxpose.xlu0.b32.cont [2/16] %v3587, 128
        %4204 = vxpose.xlu0.b32.cont [3/16] %v3596, 128
        %4205 = vxpose.xlu0.b32.cont [4/16] %v3597, 128
        %4206 = vxpose.xlu0.b32.cont [5/16] %v3606, 128
        %4207 = vxpose.xlu0.b32.cont [6/16] %v3607, 128
        %4208 = vxpose.xlu0.b32.cont [7/16] %v3616, 128
        %4209 = vxpose.xlu0.b32.cont [8/16] %v3617, 128
        %4210 = vxpose.xlu0.b32.cont [9/16] %v3626, 128
        %4211 = vxpose.xlu0.b32.cont [10/16] %v3627, 128
        %4212 = vxpose.xlu0.b32.cont [11/16] %v3636, 128
        %4213 = vxpose.xlu0.b32.cont [12/16] %v3637, 128
        %4214 = vxpose.xlu0.b32.cont [13/16] %v3646, 128
        %4215 = vxpose.xlu0.b32.cont [14/16] %v3647, 128
        %4216 = vxpose.xlu0.b32.cont [15/16] %v3656, 128
        %4217 = vxpose.xlu0.b32.end [16/16] %v3657, 128
        %v4218 = vpop.trf.xlu0
        %v4219 = vpop.trf.xlu0
        %v4220 = vpop.trf.xlu0
        %v4221 = vpop.trf.xlu0
        %v4222 = vpop.trf.xlu0
        %v4223 = vpop.trf.xlu0
        %v4224 = vpop.trf.xlu0
        %v4225 = vpop.trf.xlu0
        %v4226 = vpop.trf.xlu0
        %v4227 = vpop.trf.xlu0
        %v4228 = vpop.trf.xlu0
        %v4229 = vpop.trf.xlu0
        %v4230 = vpop.trf.xlu0
        %v4231 = vpop.trf.xlu0
        %v4232 = vpop.trf.xlu0
        %v4233 = vpop.trf.xlu0
        %4234 = vxpose.xlu0.b32.start [1/16] %v3666, 128
        %4235 = vxpose.xlu0.b32.cont [2/16] %v3667, 128
        %4236 = vxpose.xlu0.b32.cont [3/16] %v3676, 128
        %4237 = vxpose.xlu0.b32.cont [4/16] %v3677, 128
        %4238 = vxpose.xlu0.b32.cont [5/16] %v3686, 128
        %4239 = vxpose.xlu0.b32.cont [6/16] %v3687, 128
        %4240 = vxpose.xlu0.b32.cont [7/16] %v3696, 128
        %4241 = vxpose.xlu0.b32.cont [8/16] %v3697, 128
        %4242 = vxpose.xlu0.b32.cont [9/16] %v3706, 128
        %4243 = vxpose.xlu0.b32.cont [10/16] %v3707, 128
        %4244 = vxpose.xlu0.b32.cont [11/16] %v3716, 128
        %4245 = vxpose.xlu0.b32.cont [12/16] %v3717, 128
        %4246 = vxpose.xlu0.b32.cont [13/16] %v3726, 128
        %4247 = vxpose.xlu0.b32.cont [14/16] %v3727, 128
        %4248 = vxpose.xlu0.b32.cont [15/16] %v3736, 128
        %4249 = vxpose.xlu0.b32.end [16/16] %v3737, 128
        %v4250 = vpop.trf.xlu0
        %v4251 = vpop.trf.xlu0
        %v4252 = vpop.trf.xlu0
        %v4253 = vpop.trf.xlu0
        %v4254 = vpop.trf.xlu0
        %v4255 = vpop.trf.xlu0
        %v4256 = vpop.trf.xlu0
        %v4257 = vpop.trf.xlu0
        %v4258 = vpop.trf.xlu0
        %v4259 = vpop.trf.xlu0
        %v4260 = vpop.trf.xlu0
        %v4261 = vpop.trf.xlu0
        %v4262 = vpop.trf.xlu0
        %v4263 = vpop.trf.xlu0
        %v4264 = vpop.trf.xlu0
        %v4265 = vpop.trf.xlu0
        %4266 = vxpose.xlu0.b32.start [1/16] %v3746, 128
        %4267 = vxpose.xlu0.b32.cont [2/16] %v3747, 128
        %4268 = vxpose.xlu0.b32.cont [3/16] %v3756, 128
        %4269 = vxpose.xlu0.b32.cont [4/16] %v3757, 128
        %4270 = vxpose.xlu0.b32.cont [5/16] %v3766, 128
        %4271 = vxpose.xlu0.b32.cont [6/16] %v3767, 128
        %4272 = vxpose.xlu0.b32.cont [7/16] %v3776, 128
        %4273 = vxpose.xlu0.b32.cont [8/16] %v3777, 128
        %4274 = vxpose.xlu0.b32.cont [9/16] %v3786, 128
        %4275 = vxpose.xlu0.b32.cont [10/16] %v3787, 128
        %4276 = vxpose.xlu0.b32.cont [11/16] %v3796, 128
        %4277 = vxpose.xlu0.b32.cont [12/16] %v3797, 128
        %4278 = vxpose.xlu0.b32.cont [13/16] %v3806, 128
        %4279 = vxpose.xlu0.b32.cont [14/16] %v3807, 128
        %4280 = vxpose.xlu0.b32.cont [15/16] %v3816, 128
        %4281 = vxpose.xlu0.b32.end [16/16] %v3817, 128
        %v4282 = vpop.trf.xlu0
        %v4283 = vpop.trf.xlu0
        %v4284 = vpop.trf.xlu0
        %v4285 = vpop.trf.xlu0
        %v4286 = vpop.trf.xlu0
        %v4287 = vpop.trf.xlu0
        %v4288 = vpop.trf.xlu0
        %v4289 = vpop.trf.xlu0
        %v4290 = vpop.trf.xlu0
        %v4291 = vpop.trf.xlu0
        %v4292 = vpop.trf.xlu0
        %v4293 = vpop.trf.xlu0
        %v4294 = vpop.trf.xlu0
        %v4295 = vpop.trf.xlu0
        %v4296 = vpop.trf.xlu0
        %v4297 = vpop.trf.xlu0
        %4298 = vxpose.xlu0.b32.start [1/16] %v3826, 128
        %4299 = vxpose.xlu0.b32.cont [2/16] %v3827, 128
        %4300 = vxpose.xlu0.b32.cont [3/16] %v3836, 128
        %4301 = vxpose.xlu0.b32.cont [4/16] %v3837, 128
        %4302 = vxpose.xlu0.b32.cont [5/16] %v3846, 128
        %4303 = vxpose.xlu0.b32.cont [6/16] %v3847, 128
        %4304 = vxpose.xlu0.b32.cont [7/16] %v3856, 128
        %4305 = vxpose.xlu0.b32.cont [8/16] %v3857, 128
        %4306 = vxpose.xlu0.b32.cont [9/16] %v3866, 128
        %4307 = vxpose.xlu0.b32.cont [10/16] %v3867, 128
        %4308 = vxpose.xlu0.b32.cont [11/16] %v3876, 128
        %4309 = vxpose.xlu0.b32.cont [12/16] %v3877, 128
        %4310 = vxpose.xlu0.b32.cont [13/16] %v3886, 128
        %4311 = vxpose.xlu0.b32.cont [14/16] %v3887, 128
        %4312 = vxpose.xlu0.b32.cont [15/16] %v3896, 128
        %4313 = vxpose.xlu0.b32.end [16/16] %v3897, 128
        %v4314 = vpop.trf.xlu0
        %v4315 = vpop.trf.xlu0
        %v4316 = vpop.trf.xlu0
        %v4317 = vpop.trf.xlu0
        %v4318 = vpop.trf.xlu0
        %v4319 = vpop.trf.xlu0
        %v4320 = vpop.trf.xlu0
        %v4321 = vpop.trf.xlu0
        %v4322 = vpop.trf.xlu0
        %v4323 = vpop.trf.xlu0
        %v4324 = vpop.trf.xlu0
        %v4325 = vpop.trf.xlu0
        %v4326 = vpop.trf.xlu0
        %v4327 = vpop.trf.xlu0
        %v4328 = vpop.trf.xlu0
        %v4329 = vpop.trf.xlu0
        %4330 = vxpose.xlu0.b32.start [1/16] %v3906, 128
        %4331 = vxpose.xlu0.b32.cont [2/16] %v3907, 128
        %4332 = vxpose.xlu0.b32.cont [3/16] %v3916, 128
        %4333 = vxpose.xlu0.b32.cont [4/16] %v3917, 128
        %4334 = vxpose.xlu0.b32.cont [5/16] %v3926, 128
        %4335 = vxpose.xlu0.b32.cont [6/16] %v3927, 128
        %4336 = vxpose.xlu0.b32.cont [7/16] %v3936, 128
        %4337 = vxpose.xlu0.b32.cont [8/16] %v3937, 128
        %4338 = vxpose.xlu0.b32.cont [9/16] %v3946, 128
        %4339 = vxpose.xlu0.b32.cont [10/16] %v3947, 128
        %4340 = vxpose.xlu0.b32.cont [11/16] %v3956, 128
        %4341 = vxpose.xlu0.b32.cont [12/16] %v3957, 128
        %4342 = vxpose.xlu0.b32.cont [13/16] %v3966, 128
        %4343 = vxpose.xlu0.b32.cont [14/16] %v3967, 128
        %4344 = vxpose.xlu0.b32.cont [15/16] %v3976, 128
        %4345 = vxpose.xlu0.b32.end [16/16] %v3977, 128
        %v4346 = vpop.trf.xlu0
        %v4347 = vpop.trf.xlu0
        %v4348 = vpop.trf.xlu0
        %v4349 = vpop.trf.xlu0
        %v4350 = vpop.trf.xlu0
        %v4351 = vpop.trf.xlu0
        %v4352 = vpop.trf.xlu0
        %v4353 = vpop.trf.xlu0
        %v4354 = vpop.trf.xlu0
        %v4355 = vpop.trf.xlu0
        %v4356 = vpop.trf.xlu0
        %v4357 = vpop.trf.xlu0
        %v4358 = vpop.trf.xlu0
        %v4359 = vpop.trf.xlu0
        %v4360 = vpop.trf.xlu0
        %v4361 = vpop.trf.xlu0
        %v4362 = vld [vmem:[%s3] sm:$0xf]
        %4364 = vset.pattern.permute.xlu0 0
        %4365 = vperm.xlu0 %4364, %v4362
        %v4366 = vpop.permute.xlu0 %4365
        %v4368 = vadd.f32 %v4122, %v4366
        %v4369 = vadd.f32 %v4154, %v4366
        %v4370 = vadd.f32 %v4186, %v4366
        %v4371 = vadd.f32 %v4218, %v4366
        %v4372 = vadd.f32 %v4250, %v4366
        %v4373 = vadd.f32 %v4282, %v4366
        %v4374 = vadd.f32 %v4314, %v4366
        %v4375 = vadd.f32 %v4346, %v4366
        %v4376 = vld [vmem:[%s431] sm:$0xff]
        %v4377 = vld [vmem:[%s431 + $0x8] sm:$0xff]
        %v4378 = vld [vmem:[%s431 + $0x10] sm:$0xff]
        %v4379 = vld [vmem:[%s431 + $0x18] sm:$0xff]
        %4384 = vst [vmem:[#allocation1] ss:$2 sm:$0xff] %v4376
        %s4385 = scalar_lea.vmem [#allocation1], 16
        %4386 = vst [vmem:[%s4385] ss:$2 sm:$0xff] %v4377
        %s4387 = scalar_lea.vmem [#allocation1], 32
        %4388 = vst [vmem:[%s4387] ss:$2 sm:$0xff] %v4378
        %s4389 = scalar_lea.vmem [#allocation1], 48
        %4390 = vst [vmem:[%s4389] ss:$2 sm:$0xff] %v4379
        %v4391 = vld.sshfl [vmem:[#allocation1] sm:$0xff pattern:$0x75316420]
        %v4392 = vld.sshfl [vmem:[#allocation1 + $0x8] sm:$0xff pattern:$0x75316420]
        %v4393 = vld.sshfl [vmem:[#allocation1 + $0x10] sm:$0xff pattern:$0x75316420]
        %v4394 = vld.sshfl [vmem:[#allocation1 + $0x18] sm:$0xff pattern:$0x75316420]
        %v4395 = vld.sshfl [vmem:[#allocation1 + $0x20] sm:$0xff pattern:$0x75316420]
        %v4396 = vld.sshfl [vmem:[#allocation1 + $0x28] sm:$0xff pattern:$0x75316420]
        %v4397 = vld.sshfl [vmem:[#allocation1 + $0x30] sm:$0xff pattern:$0x75316420]
        %v4398 = vld.sshfl [vmem:[#allocation1 + $0x38] sm:$0xff pattern:$0x75316420]
        %v4407 = vadd.f32 %v4368, %v4391
        %v4408 = vadd.f32 %v4369, %v4392
        %v4409 = vadd.f32 %v4370, %v4393
        %v4410 = vadd.f32 %v4371, %v4394
        %v4411 = vadd.f32 %v4372, %v4395
        %v4412 = vadd.f32 %v4373, %v4396
        %v4413 = vadd.f32 %v4374, %v4397
        %v4414 = vadd.f32 %v4375, %v4398
        %4415 = vst [vmem:[#allocation2 + $0x8] sm:$0xf] %v4407
        %4416 = vst [vmem:[#allocation2 + $0x10] sm:$0xf] %v4408
        %4417 = vst [vmem:[#allocation2 + $0x18] sm:$0xf] %v4409
        %4418 = vst [vmem:[#allocation2 + $0x20] sm:$0xf] %v4410
        %4419 = vst [vmem:[#allocation2 + $0x28] sm:$0xf] %v4411
        %4420 = vst [vmem:[#allocation2 + $0x30] sm:$0xf] %v4412
        %4421 = vst [vmem:[#allocation2 + $0x38] sm:$0xf] %v4413
        %4422 = vst [vmem:[#allocation2 + $0x40] sm:$0xf] %v4414
        %v4423 = vld [vmem:[%s10] sm:$0xff]
        %v4424 = vld [vmem:[%s11] sm:$0xff]
        %4426 = vset.pattern.permute.xlu0 0
        %4427 = vperm.xlu0 %4426, %v4424
        %v4428 = vpop.permute.xlu0 %4427
        %v4431 = vsel %vm588, %v4423, 0
        %v4434 = vsel %vm685, %v4407, 0
        %v4437 = vsel %vm685, %v4408, 0
        %v4440 = vsel %vm685, %v4409, 0
        %v4443 = vsel %vm685, %v4410, 0
        %v4446 = vsel %vm685, %v4411, 0
        %v4449 = vsel %vm685, %v4412, 0
        %v4452 = vsel %vm685, %v4413, 0
        %v4455 = vsel %vm685, %v4414, 0
        %4457 = vmatpush.msra.mxu0 0.0
        %4458 = vmatpush.msra.mxu0 0.0
        %4459 = vmatpush.msra.mxu0 0.0
        %4460 = vmatpush.msra.mxu0 0.0
        %4461 = vmatpush.msra.mxu0 0.0
        %4462 = vmatpush.msra.mxu0 0.0
        %4463 = vmatpush.msra.mxu0 0.0
        %4464 = vmatpush.msra.mxu0 0.0
        %4465 = vmatpush.msra.mxu0 0.0
        %4466 = vmatpush.msra.mxu0 0.0
        %4467 = vmatpush.msra.mxu0 0.0
        %4468 = vmatpush.msra.mxu0 0.0
        %4469 = vmatpush.msra.mxu0 0.0
        %4470 = vmatpush.msra.mxu0 0.0
        %4471 = vmatpush.msra.mxu0 0.0
        %4472 = vmatpush.msra.mxu0 %v4434
        %4473 = vmatmul.f32.gmra.mxu0 %v4431
        %v4474 = vpop.f32.mrf.mxu0
        %v4475 = vadd.f32 %v4428, %v4474
        %4476 = vdwg.mxu0
        %4477 = vmatpush.msra.mxu0 0.0
        %4478 = vmatpush.msra.mxu0 0.0
        %4479 = vmatpush.msra.mxu0 0.0
        %4480 = vmatpush.msra.mxu0 0.0
        %4481 = vmatpush.msra.mxu0 0.0
        %4482 = vmatpush.msra.mxu0 0.0
        %4483 = vmatpush.msra.mxu0 0.0
        %4484 = vmatpush.msra.mxu0 0.0
        %4485 = vmatpush.msra.mxu0 0.0
        %4486 = vmatpush.msra.mxu0 0.0
        %4487 = vmatpush.msra.mxu0 0.0
        %4488 = vmatpush.msra.mxu0 0.0
        %4489 = vmatpush.msra.mxu0 0.0
        %4490 = vmatpush.msra.mxu0 0.0
        %4491 = vmatpush.msra.mxu0 0.0
        %4492 = vmatpush.msra.mxu0 %v4437
        %4493 = vmatmul.f32.gmra.mxu0 %v4431
        %v4494 = vpop.f32.mrf.mxu0
        %v4495 = vadd.f32 %v4428, %v4494
        %4496 = vdwg.mxu0
        %4497 = vmatpush.msra.mxu0 0.0
        %4498 = vmatpush.msra.mxu0 0.0
        %4499 = vmatpush.msra.mxu0 0.0
        %4500 = vmatpush.msra.mxu0 0.0
        %4501 = vmatpush.msra.mxu0 0.0
        %4502 = vmatpush.msra.mxu0 0.0
        %4503 = vmatpush.msra.mxu0 0.0
        %4504 = vmatpush.msra.mxu0 0.0
        %4505 = vmatpush.msra.mxu0 0.0
        %4506 = vmatpush.msra.mxu0 0.0
        %4507 = vmatpush.msra.mxu0 0.0
        %4508 = vmatpush.msra.mxu0 0.0
        %4509 = vmatpush.msra.mxu0 0.0
        %4510 = vmatpush.msra.mxu0 0.0
        %4511 = vmatpush.msra.mxu0 0.0
        %4512 = vmatpush.msra.mxu0 %v4440
        %4513 = vmatmul.f32.gmra.mxu0 %v4431
        %v4514 = vpop.f32.mrf.mxu0
        %v4515 = vadd.f32 %v4428, %v4514
        %4516 = vdwg.mxu0
        %4517 = vmatpush.msra.mxu0 0.0
        %4518 = vmatpush.msra.mxu0 0.0
        %4519 = vmatpush.msra.mxu0 0.0
        %4520 = vmatpush.msra.mxu0 0.0
        %4521 = vmatpush.msra.mxu0 0.0
        %4522 = vmatpush.msra.mxu0 0.0
        %4523 = vmatpush.msra.mxu0 0.0
        %4524 = vmatpush.msra.mxu0 0.0
        %4525 = vmatpush.msra.mxu0 0.0
        %4526 = vmatpush.msra.mxu0 0.0
        %4527 = vmatpush.msra.mxu0 0.0
        %4528 = vmatpush.msra.mxu0 0.0
        %4529 = vmatpush.msra.mxu0 0.0
        %4530 = vmatpush.msra.mxu0 0.0
        %4531 = vmatpush.msra.mxu0 0.0
        %4532 = vmatpush.msra.mxu0 %v4443
        %4533 = vmatmul.f32.gmra.mxu0 %v4431
        %v4534 = vpop.f32.mrf.mxu0
        %v4535 = vadd.f32 %v4428, %v4534
        %4536 = vdwg.mxu0
        %4537 = vmatpush.msra.mxu0 0.0
        %4538 = vmatpush.msra.mxu0 0.0
        %4539 = vmatpush.msra.mxu0 0.0
        %4540 = vmatpush.msra.mxu0 0.0
        %4541 = vmatpush.msra.mxu0 0.0
        %4542 = vmatpush.msra.mxu0 0.0
        %4543 = vmatpush.msra.mxu0 0.0
        %4544 = vmatpush.msra.mxu0 0.0
        %4545 = vmatpush.msra.mxu0 0.0
        %4546 = vmatpush.msra.mxu0 0.0
        %4547 = vmatpush.msra.mxu0 0.0
        %4548 = vmatpush.msra.mxu0 0.0
        %4549 = vmatpush.msra.mxu0 0.0
        %4550 = vmatpush.msra.mxu0 0.0
        %4551 = vmatpush.msra.mxu0 0.0
        %4552 = vmatpush.msra.mxu0 %v4446
        %4553 = vmatmul.f32.gmra.mxu0 %v4431
        %v4554 = vpop.f32.mrf.mxu0
        %v4555 = vadd.f32 %v4428, %v4554
        %4556 = vdwg.mxu0
        %4557 = vmatpush.msra.mxu0 0.0
        %4558 = vmatpush.msra.mxu0 0.0
        %4559 = vmatpush.msra.mxu0 0.0
        %4560 = vmatpush.msra.mxu0 0.0
        %4561 = vmatpush.msra.mxu0 0.0
        %4562 = vmatpush.msra.mxu0 0.0
        %4563 = vmatpush.msra.mxu0 0.0
        %4564 = vmatpush.msra.mxu0 0.0
        %4565 = vmatpush.msra.mxu0 0.0
        %4566 = vmatpush.msra.mxu0 0.0
        %4567 = vmatpush.msra.mxu0 0.0
        %4568 = vmatpush.msra.mxu0 0.0
        %4569 = vmatpush.msra.mxu0 0.0
        %4570 = vmatpush.msra.mxu0 0.0
        %4571 = vmatpush.msra.mxu0 0.0
        %4572 = vmatpush.msra.mxu0 %v4449
        %4573 = vmatmul.f32.gmra.mxu0 %v4431
        %v4574 = vpop.f32.mrf.mxu0
        %v4575 = vadd.f32 %v4428, %v4574
        %4576 = vdwg.mxu0
        %4577 = vmatpush.msra.mxu0 0.0
        %4578 = vmatpush.msra.mxu0 0.0
        %4579 = vmatpush.msra.mxu0 0.0
        %4580 = vmatpush.msra.mxu0 0.0
        %4581 = vmatpush.msra.mxu0 0.0
        %4582 = vmatpush.msra.mxu0 0.0
        %4583 = vmatpush.msra.mxu0 0.0
        %4584 = vmatpush.msra.mxu0 0.0
        %4585 = vmatpush.msra.mxu0 0.0
        %4586 = vmatpush.msra.mxu0 0.0
        %4587 = vmatpush.msra.mxu0 0.0
        %4588 = vmatpush.msra.mxu0 0.0
        %4589 = vmatpush.msra.mxu0 0.0
        %4590 = vmatpush.msra.mxu0 0.0
        %4591 = vmatpush.msra.mxu0 0.0
        %4592 = vmatpush.msra.mxu0 %v4452
        %4593 = vmatmul.f32.gmra.mxu0 %v4431
        %v4594 = vpop.f32.mrf.mxu0
        %v4595 = vadd.f32 %v4428, %v4594
        %4596 = vdwg.mxu0
        %4597 = vmatpush.msra.mxu0 0.0
        %4598 = vmatpush.msra.mxu0 0.0
        %4599 = vmatpush.msra.mxu0 0.0
        %4600 = vmatpush.msra.mxu0 0.0
        %4601 = vmatpush.msra.mxu0 0.0
        %4602 = vmatpush.msra.mxu0 0.0
        %4603 = vmatpush.msra.mxu0 0.0
        %4604 = vmatpush.msra.mxu0 0.0
        %4605 = vmatpush.msra.mxu0 0.0
        %4606 = vmatpush.msra.mxu0 0.0
        %4607 = vmatpush.msra.mxu0 0.0
        %4608 = vmatpush.msra.mxu0 0.0
        %4609 = vmatpush.msra.mxu0 0.0
        %4610 = vmatpush.msra.mxu0 0.0
        %4611 = vmatpush.msra.mxu0 0.0
        %4612 = vmatpush.msra.mxu0 %v4455
        %4613 = vmatmul.f32.gmra.mxu0 %v4431
        %v4614 = vpop.f32.mrf.mxu0
        %v4615 = vadd.f32 %v4428, %v4614
        %4616 = vdwg.mxu0
        %4617 = vst [vmem:[%s421] sm:$0xff] %v4475
        %4618 = vst [vmem:[%s421 + $0x8] sm:$0xff] %v4495
        %4619 = vst [vmem:[%s421 + $0x10] sm:$0xff] %v4515
        %4620 = vst [vmem:[%s421 + $0x18] sm:$0xff] %v4535
        %4621 = vst [vmem:[%s421 + $0x20] sm:$0xff] %v4555
        %4622 = vst [vmem:[%s421 + $0x28] sm:$0xff] %v4575
        %4623 = vst [vmem:[%s421 + $0x30] sm:$0xff] %v4595
        %4624 = vst [vmem:[%s421 + $0x38] sm:$0xff] %v4615
        %s4625 = scalar_lea.vmem %s4, 32
        %v4626 = vld [vmem:[%s4625] sm:$0xff]
        %v4627 = vld [vmem:[#allocation2 + $0x8] sm:$0xf]
        %v4628 = vld [vmem:[#allocation2 + $0x10] sm:$0xf]
        %v4629 = vld [vmem:[#allocation2 + $0x18] sm:$0xf]
        %v4630 = vld [vmem:[#allocation2 + $0x20] sm:$0xf]
        %v4631 = vld [vmem:[#allocation2 + $0x28] sm:$0xf]
        %v4632 = vld [vmem:[#allocation2 + $0x30] sm:$0xf]
        %v4633 = vld [vmem:[#allocation2 + $0x38] sm:$0xf]
        %v4634 = vld [vmem:[#allocation2 + $0x40] sm:$0xf]
        %v4635 = vld [vmem:[#allocation2] sm:$0xf]
        %v4636 = vsel %vm537, 1, 0
        %v4637 = vsel %vm538, 1, 0
        %v4638 = vsel %vm539, 1, 0
        %v4639 = vsel %vm540, 1, 0
        %v4640 = vsel %vm541, 1, 0
        %v4641 = vsel %vm542, 1, 0
        %v4642 = vsel %vm543, 1, 0
        %v4643 = vsel %vm544, 1, 0
        %vm4644 = vcmp.eq.s32.totalorder %v4636, 1
        %vm4645 = vcmp.eq.s32.totalorder %v4637, 1
        %vm4646 = vcmp.eq.s32.totalorder %v4638, 1
        %vm4647 = vcmp.eq.s32.totalorder %v4639, 1
        %vm4648 = vcmp.eq.s32.totalorder %v4640, 1
        %vm4649 = vcmp.eq.s32.totalorder %v4641, 1
        %vm4650 = vcmp.eq.s32.totalorder %v4642, 1
        %vm4651 = vcmp.eq.s32.totalorder %v4643, 1
        %4661 = vrot.lane.b32.xlu0 %v4635, 33
        %v4662 = vpop.permute.xlu0 %4661
        %4663 = vrot.lane.b32.xlu0 %v4627, 33
        %v4664 = vpop.permute.xlu0 %4663
        %4665 = vrot.lane.b32.xlu0 %v4628, 33
        %v4666 = vpop.permute.xlu0 %4665
        %4667 = vrot.lane.b32.xlu0 %v4629, 33
        %v4668 = vpop.permute.xlu0 %4667
        %4669 = vrot.lane.b32.xlu0 %v4630, 33
        %v4670 = vpop.permute.xlu0 %4669
        %4671 = vrot.lane.b32.xlu0 %v4631, 33
        %v4672 = vpop.permute.xlu0 %4671
        %4673 = vrot.lane.b32.xlu0 %v4632, 33
        %v4674 = vpop.permute.xlu0 %4673
        %4675 = vrot.lane.b32.xlu0 %v4633, 33
        %v4676 = vpop.permute.xlu0 %4675
        %4677 = vrot.lane.b32.xlu0 %v4634, 33
        %v4678 = vpop.permute.xlu0 %4677
        %vm4679 = vcmask 269312
        %v4680 = vsel %vm4679, %v4662, %v4664
        %v4681 = vsel %vm4679, %v4664, %v4666
        %v4682 = vsel %vm4679, %v4666, %v4668
        %v4683 = vsel %vm4679, %v4668, %v4670
        %v4684 = vsel %vm4679, %v4670, %v4672
        %v4685 = vsel %vm4679, %v4672, %v4674
        %v4686 = vsel %vm4679, %v4674, %v4676
        %v4687 = vsel %vm4679, %v4676, %v4678
        %v4696 = vsel %vm4644, %v4680, 0.0
        %v4697 = vsel %vm4645, %v4681, 0.0
        %v4698 = vsel %vm4646, %v4682, 0.0
        %v4699 = vsel %vm4647, %v4683, 0.0
        %v4700 = vsel %vm4648, %v4684, 0.0
        %v4701 = vsel %vm4649, %v4685, 0.0
        %v4702 = vsel %vm4650, %v4686, 0.0
        %v4703 = vsel %vm4651, %v4687, 0.0
        %v4704 = vld [vmem:[%s4] sm:$0xff]
        %v4706 = vsel %vm588, %v4704, 0
        %v4709 = vsel %vm685, %v4696, 0
        %v4712 = vsel %vm685, %v4697, 0
        %v4715 = vsel %vm685, %v4698, 0
        %v4718 = vsel %vm685, %v4699, 0
        %v4721 = vsel %vm685, %v4700, 0
        %v4724 = vsel %vm685, %v4701, 0
        %v4727 = vsel %vm685, %v4702, 0
        %v4730 = vsel %vm685, %v4703, 0
        %4732 = vmatpush.msra.mxu0 0.0
        %4733 = vmatpush.msra.mxu0 0.0
        %4734 = vmatpush.msra.mxu0 0.0
        %4735 = vmatpush.msra.mxu0 0.0
        %4736 = vmatpush.msra.mxu0 0.0
        %4737 = vmatpush.msra.mxu0 0.0
        %4738 = vmatpush.msra.mxu0 0.0
        %4739 = vmatpush.msra.mxu0 0.0
        %4740 = vmatpush.msra.mxu0 0.0
        %4741 = vmatpush.msra.mxu0 0.0
        %4742 = vmatpush.msra.mxu0 0.0
        %4743 = vmatpush.msra.mxu0 0.0
        %4744 = vmatpush.msra.mxu0 0.0
        %4745 = vmatpush.msra.mxu0 0.0
        %4746 = vmatpush.msra.mxu0 0.0
        %4747 = vmatpush.msra.mxu0 %v4709
        %4748 = vmatmul.f32.gmra.mxu0 %v4706
        %v4749 = vpop.f32.mrf.mxu0
        %v4750 = vadd.f32 0.0, %v4749
        %4751 = vdwg.mxu0
        %4752 = vmatpush.msra.mxu0 0.0
        %4753 = vmatpush.msra.mxu0 0.0
        %4754 = vmatpush.msra.mxu0 0.0
        %4755 = vmatpush.msra.mxu0 0.0
        %4756 = vmatpush.msra.mxu0 0.0
        %4757 = vmatpush.msra.mxu0 0.0
        %4758 = vmatpush.msra.mxu0 0.0
        %4759 = vmatpush.msra.mxu0 0.0
        %4760 = vmatpush.msra.mxu0 0.0
        %4761 = vmatpush.msra.mxu0 0.0
        %4762 = vmatpush.msra.mxu0 0.0
        %4763 = vmatpush.msra.mxu0 0.0
        %4764 = vmatpush.msra.mxu0 0.0
        %4765 = vmatpush.msra.mxu0 0.0
        %4766 = vmatpush.msra.mxu0 0.0
        %4767 = vmatpush.msra.mxu0 %v4712
        %4768 = vmatmul.f32.gmra.mxu0 %v4706
        %v4769 = vpop.f32.mrf.mxu0
        %v4770 = vadd.f32 0.0, %v4769
        %4771 = vdwg.mxu0
        %4772 = vmatpush.msra.mxu0 0.0
        %4773 = vmatpush.msra.mxu0 0.0
        %4774 = vmatpush.msra.mxu0 0.0
        %4775 = vmatpush.msra.mxu0 0.0
        %4776 = vmatpush.msra.mxu0 0.0
        %4777 = vmatpush.msra.mxu0 0.0
        %4778 = vmatpush.msra.mxu0 0.0
        %4779 = vmatpush.msra.mxu0 0.0
        %4780 = vmatpush.msra.mxu0 0.0
        %4781 = vmatpush.msra.mxu0 0.0
        %4782 = vmatpush.msra.mxu0 0.0
        %4783 = vmatpush.msra.mxu0 0.0
        %4784 = vmatpush.msra.mxu0 0.0
        %4785 = vmatpush.msra.mxu0 0.0
        %4786 = vmatpush.msra.mxu0 0.0
        %4787 = vmatpush.msra.mxu0 %v4715
        %4788 = vmatmul.f32.gmra.mxu0 %v4706
        %v4789 = vpop.f32.mrf.mxu0
        %v4790 = vadd.f32 0.0, %v4789
        %4791 = vdwg.mxu0
        %4792 = vmatpush.msra.mxu0 0.0
        %4793 = vmatpush.msra.mxu0 0.0
        %4794 = vmatpush.msra.mxu0 0.0
        %4795 = vmatpush.msra.mxu0 0.0
        %4796 = vmatpush.msra.mxu0 0.0
        %4797 = vmatpush.msra.mxu0 0.0
        %4798 = vmatpush.msra.mxu0 0.0
        %4799 = vmatpush.msra.mxu0 0.0
        %4800 = vmatpush.msra.mxu0 0.0
        %4801 = vmatpush.msra.mxu0 0.0
        %4802 = vmatpush.msra.mxu0 0.0
        %4803 = vmatpush.msra.mxu0 0.0
        %4804 = vmatpush.msra.mxu0 0.0
        %4805 = vmatpush.msra.mxu0 0.0
        %4806 = vmatpush.msra.mxu0 0.0
        %4807 = vmatpush.msra.mxu0 %v4718
        %4808 = vmatmul.f32.gmra.mxu0 %v4706
        %v4809 = vpop.f32.mrf.mxu0
        %v4810 = vadd.f32 0.0, %v4809
        %4811 = vdwg.mxu0
        %4812 = vmatpush.msra.mxu0 0.0
        %4813 = vmatpush.msra.mxu0 0.0
        %4814 = vmatpush.msra.mxu0 0.0
        %4815 = vmatpush.msra.mxu0 0.0
        %4816 = vmatpush.msra.mxu0 0.0
        %4817 = vmatpush.msra.mxu0 0.0
        %4818 = vmatpush.msra.mxu0 0.0
        %4819 = vmatpush.msra.mxu0 0.0
        %4820 = vmatpush.msra.mxu0 0.0
        %4821 = vmatpush.msra.mxu0 0.0
        %4822 = vmatpush.msra.mxu0 0.0
        %4823 = vmatpush.msra.mxu0 0.0
        %4824 = vmatpush.msra.mxu0 0.0
        %4825 = vmatpush.msra.mxu0 0.0
        %4826 = vmatpush.msra.mxu0 0.0
        %4827 = vmatpush.msra.mxu0 %v4721
        %4828 = vmatmul.f32.gmra.mxu0 %v4706
        %v4829 = vpop.f32.mrf.mxu0
        %v4830 = vadd.f32 0.0, %v4829
        %4831 = vdwg.mxu0
        %4832 = vmatpush.msra.mxu0 0.0
        %4833 = vmatpush.msra.mxu0 0.0
        %4834 = vmatpush.msra.mxu0 0.0
        %4835 = vmatpush.msra.mxu0 0.0
        %4836 = vmatpush.msra.mxu0 0.0
        %4837 = vmatpush.msra.mxu0 0.0
        %4838 = vmatpush.msra.mxu0 0.0
        %4839 = vmatpush.msra.mxu0 0.0
        %4840 = vmatpush.msra.mxu0 0.0
        %4841 = vmatpush.msra.mxu0 0.0
        %4842 = vmatpush.msra.mxu0 0.0
        %4843 = vmatpush.msra.mxu0 0.0
        %4844 = vmatpush.msra.mxu0 0.0
        %4845 = vmatpush.msra.mxu0 0.0
        %4846 = vmatpush.msra.mxu0 0.0
        %4847 = vmatpush.msra.mxu0 %v4724
        %4848 = vmatmul.f32.gmra.mxu0 %v4706
        %v4849 = vpop.f32.mrf.mxu0
        %v4850 = vadd.f32 0.0, %v4849
        %4851 = vdwg.mxu0
        %4852 = vmatpush.msra.mxu0 0.0
        %4853 = vmatpush.msra.mxu0 0.0
        %4854 = vmatpush.msra.mxu0 0.0
        %4855 = vmatpush.msra.mxu0 0.0
        %4856 = vmatpush.msra.mxu0 0.0
        %4857 = vmatpush.msra.mxu0 0.0
        %4858 = vmatpush.msra.mxu0 0.0
        %4859 = vmatpush.msra.mxu0 0.0
        %4860 = vmatpush.msra.mxu0 0.0
        %4861 = vmatpush.msra.mxu0 0.0
        %4862 = vmatpush.msra.mxu0 0.0
        %4863 = vmatpush.msra.mxu0 0.0
        %4864 = vmatpush.msra.mxu0 0.0
        %4865 = vmatpush.msra.mxu0 0.0
        %4866 = vmatpush.msra.mxu0 0.0
        %4867 = vmatpush.msra.mxu0 %v4727
        %4868 = vmatmul.f32.gmra.mxu0 %v4706
        %v4869 = vpop.f32.mrf.mxu0
        %v4870 = vadd.f32 0.0, %v4869
        %4871 = vdwg.mxu0
        %4872 = vmatpush.msra.mxu0 0.0
        %4873 = vmatpush.msra.mxu0 0.0
        %4874 = vmatpush.msra.mxu0 0.0
        %4875 = vmatpush.msra.mxu0 0.0
        %4876 = vmatpush.msra.mxu0 0.0
        %4877 = vmatpush.msra.mxu0 0.0
        %4878 = vmatpush.msra.mxu0 0.0
        %4879 = vmatpush.msra.mxu0 0.0
        %4880 = vmatpush.msra.mxu0 0.0
        %4881 = vmatpush.msra.mxu0 0.0
        %4882 = vmatpush.msra.mxu0 0.0
        %4883 = vmatpush.msra.mxu0 0.0
        %4884 = vmatpush.msra.mxu0 0.0
        %4885 = vmatpush.msra.mxu0 0.0
        %4886 = vmatpush.msra.mxu0 0.0
        %4887 = vmatpush.msra.mxu0 %v4730
        %4888 = vmatmul.f32.gmra.mxu0 %v4706
        %v4889 = vpop.f32.mrf.mxu0
        %v4890 = vadd.f32 0.0, %v4889
        %4891 = vdwg.mxu0
        %v4893 = vsel %vm588, %v4626, 0
        %v4895 = vsel %vm685, %v4627, 0
        %v4897 = vsel %vm685, %v4628, 0
        %v4899 = vsel %vm685, %v4629, 0
        %v4901 = vsel %vm685, %v4630, 0
        %v4903 = vsel %vm685, %v4631, 0
        %v4905 = vsel %vm685, %v4632, 0
        %v4907 = vsel %vm685, %v4633, 0
        %v4909 = vsel %vm685, %v4634, 0
        %4911 = vmatpush.msra.mxu0 0.0
        %4912 = vmatpush.msra.mxu0 0.0
        %4913 = vmatpush.msra.mxu0 0.0
        %4914 = vmatpush.msra.mxu0 0.0
        %4915 = vmatpush.msra.mxu0 0.0
        %4916 = vmatpush.msra.mxu0 0.0
        %4917 = vmatpush.msra.mxu0 0.0
        %4918 = vmatpush.msra.mxu0 0.0
        %4919 = vmatpush.msra.mxu0 0.0
        %4920 = vmatpush.msra.mxu0 0.0
        %4921 = vmatpush.msra.mxu0 0.0
        %4922 = vmatpush.msra.mxu0 0.0
        %4923 = vmatpush.msra.mxu0 0.0
        %4924 = vmatpush.msra.mxu0 0.0
        %4925 = vmatpush.msra.mxu0 0.0
        %4926 = vmatpush.msra.mxu0 %v4895
        %4927 = vmatmul.f32.gmra.mxu0 %v4893
        %v4928 = vpop.f32.mrf.mxu0
        %v4929 = vadd.f32 %v4750, %v4928
        %4930 = vdwg.mxu0
        %4931 = vmatpush.msra.mxu0 0.0
        %4932 = vmatpush.msra.mxu0 0.0
        %4933 = vmatpush.msra.mxu0 0.0
        %4934 = vmatpush.msra.mxu0 0.0
        %4935 = vmatpush.msra.mxu0 0.0
        %4936 = vmatpush.msra.mxu0 0.0
        %4937 = vmatpush.msra.mxu0 0.0
        %4938 = vmatpush.msra.mxu0 0.0
        %4939 = vmatpush.msra.mxu0 0.0
        %4940 = vmatpush.msra.mxu0 0.0
        %4941 = vmatpush.msra.mxu0 0.0
        %4942 = vmatpush.msra.mxu0 0.0
        %4943 = vmatpush.msra.mxu0 0.0
        %4944 = vmatpush.msra.mxu0 0.0
        %4945 = vmatpush.msra.mxu0 0.0
        %4946 = vmatpush.msra.mxu0 %v4897
        %4947 = vmatmul.f32.gmra.mxu0 %v4893
        %v4948 = vpop.f32.mrf.mxu0
        %v4949 = vadd.f32 %v4770, %v4948
        %4950 = vdwg.mxu0
        %4951 = vmatpush.msra.mxu0 0.0
        %4952 = vmatpush.msra.mxu0 0.0
        %4953 = vmatpush.msra.mxu0 0.0
        %4954 = vmatpush.msra.mxu0 0.0
        %4955 = vmatpush.msra.mxu0 0.0
        %4956 = vmatpush.msra.mxu0 0.0
        %4957 = vmatpush.msra.mxu0 0.0
        %4958 = vmatpush.msra.mxu0 0.0
        %4959 = vmatpush.msra.mxu0 0.0
        %4960 = vmatpush.msra.mxu0 0.0
        %4961 = vmatpush.msra.mxu0 0.0
        %4962 = vmatpush.msra.mxu0 0.0
        %4963 = vmatpush.msra.mxu0 0.0
        %4964 = vmatpush.msra.mxu0 0.0
        %4965 = vmatpush.msra.mxu0 0.0
        %4966 = vmatpush.msra.mxu0 %v4899
        %4967 = vmatmul.f32.gmra.mxu0 %v4893
        %v4968 = vpop.f32.mrf.mxu0
        %v4969 = vadd.f32 %v4790, %v4968
        %4970 = vdwg.mxu0
        %4971 = vmatpush.msra.mxu0 0.0
        %4972 = vmatpush.msra.mxu0 0.0
        %4973 = vmatpush.msra.mxu0 0.0
        %4974 = vmatpush.msra.mxu0 0.0
        %4975 = vmatpush.msra.mxu0 0.0
        %4976 = vmatpush.msra.mxu0 0.0
        %4977 = vmatpush.msra.mxu0 0.0
        %4978 = vmatpush.msra.mxu0 0.0
        %4979 = vmatpush.msra.mxu0 0.0
        %4980 = vmatpush.msra.mxu0 0.0
        %4981 = vmatpush.msra.mxu0 0.0
        %4982 = vmatpush.msra.mxu0 0.0
        %4983 = vmatpush.msra.mxu0 0.0
        %4984 = vmatpush.msra.mxu0 0.0
        %4985 = vmatpush.msra.mxu0 0.0
        %4986 = vmatpush.msra.mxu0 %v4901
        %4987 = vmatmul.f32.gmra.mxu0 %v4893
        %v4988 = vpop.f32.mrf.mxu0
        %v4989 = vadd.f32 %v4810, %v4988
        %4990 = vdwg.mxu0
        %4991 = vmatpush.msra.mxu0 0.0
        %4992 = vmatpush.msra.mxu0 0.0
        %4993 = vmatpush.msra.mxu0 0.0
        %4994 = vmatpush.msra.mxu0 0.0
        %4995 = vmatpush.msra.mxu0 0.0
        %4996 = vmatpush.msra.mxu0 0.0
        %4997 = vmatpush.msra.mxu0 0.0
        %4998 = vmatpush.msra.mxu0 0.0
        %4999 = vmatpush.msra.mxu0 0.0
        %5000 = vmatpush.msra.mxu0 0.0
        %5001 = vmatpush.msra.mxu0 0.0
        %5002 = vmatpush.msra.mxu0 0.0
        %5003 = vmatpush.msra.mxu0 0.0
        %5004 = vmatpush.msra.mxu0 0.0
        %5005 = vmatpush.msra.mxu0 0.0
        %5006 = vmatpush.msra.mxu0 %v4903
        %5007 = vmatmul.f32.gmra.mxu0 %v4893
        %v5008 = vpop.f32.mrf.mxu0
        %v5009 = vadd.f32 %v4830, %v5008
        %5010 = vdwg.mxu0
        %5011 = vmatpush.msra.mxu0 0.0
        %5012 = vmatpush.msra.mxu0 0.0
        %5013 = vmatpush.msra.mxu0 0.0
        %5014 = vmatpush.msra.mxu0 0.0
        %5015 = vmatpush.msra.mxu0 0.0
        %5016 = vmatpush.msra.mxu0 0.0
        %5017 = vmatpush.msra.mxu0 0.0
        %5018 = vmatpush.msra.mxu0 0.0
        %5019 = vmatpush.msra.mxu0 0.0
        %5020 = vmatpush.msra.mxu0 0.0
        %5021 = vmatpush.msra.mxu0 0.0
        %5022 = vmatpush.msra.mxu0 0.0
        %5023 = vmatpush.msra.mxu0 0.0
        %5024 = vmatpush.msra.mxu0 0.0
        %5025 = vmatpush.msra.mxu0 0.0
        %5026 = vmatpush.msra.mxu0 %v4905
        %5027 = vmatmul.f32.gmra.mxu0 %v4893
        %v5028 = vpop.f32.mrf.mxu0
        %v5029 = vadd.f32 %v4850, %v5028
        %5030 = vdwg.mxu0
        %5031 = vmatpush.msra.mxu0 0.0
        %5032 = vmatpush.msra.mxu0 0.0
        %5033 = vmatpush.msra.mxu0 0.0
        %5034 = vmatpush.msra.mxu0 0.0
        %5035 = vmatpush.msra.mxu0 0.0
        %5036 = vmatpush.msra.mxu0 0.0
        %5037 = vmatpush.msra.mxu0 0.0
        %5038 = vmatpush.msra.mxu0 0.0
        %5039 = vmatpush.msra.mxu0 0.0
        %5040 = vmatpush.msra.mxu0 0.0
        %5041 = vmatpush.msra.mxu0 0.0
        %5042 = vmatpush.msra.mxu0 0.0
        %5043 = vmatpush.msra.mxu0 0.0
        %5044 = vmatpush.msra.mxu0 0.0
        %5045 = vmatpush.msra.mxu0 0.0
        %5046 = vmatpush.msra.mxu0 %v4907
        %5047 = vmatmul.f32.gmra.mxu0 %v4893
        %v5048 = vpop.f32.mrf.mxu0
        %v5049 = vadd.f32 %v4870, %v5048
        %5050 = vdwg.mxu0
        %5051 = vmatpush.msra.mxu0 0.0
        %5052 = vmatpush.msra.mxu0 0.0
        %5053 = vmatpush.msra.mxu0 0.0
        %5054 = vmatpush.msra.mxu0 0.0
        %5055 = vmatpush.msra.mxu0 0.0
        %5056 = vmatpush.msra.mxu0 0.0
        %5057 = vmatpush.msra.mxu0 0.0
        %5058 = vmatpush.msra.mxu0 0.0
        %5059 = vmatpush.msra.mxu0 0.0
        %5060 = vmatpush.msra.mxu0 0.0
        %5061 = vmatpush.msra.mxu0 0.0
        %5062 = vmatpush.msra.mxu0 0.0
        %5063 = vmatpush.msra.mxu0 0.0
        %5064 = vmatpush.msra.mxu0 0.0
        %5065 = vmatpush.msra.mxu0 0.0
        %5066 = vmatpush.msra.mxu0 %v4909
        %5067 = vmatmul.f32.gmra.mxu0 %v4893
        %v5068 = vpop.f32.mrf.mxu0
        %v5069 = vadd.f32 %v4890, %v5068
        %5070 = vdwg.mxu0
        %s5071 = scalar_lea.vmem %s4, 8
        %v5072 = vld [vmem:[%s5071] sm:$0xff]
        %5073 = vrot.lane.b32.xlu0 %v4635, 32
        %v5074 = vpop.permute.xlu0 %5073
        %5075 = vrot.lane.b32.xlu0 %v4627, 32
        %v5076 = vpop.permute.xlu0 %5075
        %5077 = vrot.lane.b32.xlu0 %v4628, 32
        %v5078 = vpop.permute.xlu0 %5077
        %5079 = vrot.lane.b32.xlu0 %v4629, 32
        %v5080 = vpop.permute.xlu0 %5079
        %5081 = vrot.lane.b32.xlu0 %v4630, 32
        %v5082 = vpop.permute.xlu0 %5081
        %5083 = vrot.lane.b32.xlu0 %v4631, 32
        %v5084 = vpop.permute.xlu0 %5083
        %5085 = vrot.lane.b32.xlu0 %v4632, 32
        %v5086 = vpop.permute.xlu0 %5085
        %5087 = vrot.lane.b32.xlu0 %v4633, 32
        %v5088 = vpop.permute.xlu0 %5087
        %5089 = vrot.lane.b32.xlu0 %v4634, 32
        %v5090 = vpop.permute.xlu0 %5089
        %vm5091 = vcmask 261120
        %v5092 = vsel %vm5091, %v5074, %v5076
        %v5093 = vsel %vm5091, %v5076, %v5078
        %v5094 = vsel %vm5091, %v5078, %v5080
        %v5095 = vsel %vm5091, %v5080, %v5082
        %v5096 = vsel %vm5091, %v5082, %v5084
        %v5097 = vsel %vm5091, %v5084, %v5086
        %v5098 = vsel %vm5091, %v5086, %v5088
        %v5099 = vsel %vm5091, %v5088, %v5090
        %v5101 = vsel %vm588, %v5072, 0
        %v5103 = vsel %vm685, %v5092, 0
        %v5105 = vsel %vm685, %v5093, 0
        %v5107 = vsel %vm685, %v5094, 0
        %v5109 = vsel %vm685, %v5095, 0
        %v5111 = vsel %vm685, %v5096, 0
        %v5113 = vsel %vm685, %v5097, 0
        %v5115 = vsel %vm685, %v5098, 0
        %v5117 = vsel %vm685, %v5099, 0
        %5119 = vmatpush.msra.mxu0 0.0
        %5120 = vmatpush.msra.mxu0 0.0
        %5121 = vmatpush.msra.mxu0 0.0
        %5122 = vmatpush.msra.mxu0 0.0
        %5123 = vmatpush.msra.mxu0 0.0
        %5124 = vmatpush.msra.mxu0 0.0
        %5125 = vmatpush.msra.mxu0 0.0
        %5126 = vmatpush.msra.mxu0 0.0
        %5127 = vmatpush.msra.mxu0 0.0
        %5128 = vmatpush.msra.mxu0 0.0
        %5129 = vmatpush.msra.mxu0 0.0
        %5130 = vmatpush.msra.mxu0 0.0
        %5131 = vmatpush.msra.mxu0 0.0
        %5132 = vmatpush.msra.mxu0 0.0
        %5133 = vmatpush.msra.mxu0 0.0
        %5134 = vmatpush.msra.mxu0 %v5103
        %5135 = vmatmul.f32.gmra.mxu0 %v5101
        %v5136 = vpop.f32.mrf.mxu0
        %v5137 = vadd.f32 0.0, %v5136
        %5138 = vdwg.mxu0
        %5139 = vmatpush.msra.mxu0 0.0
        %5140 = vmatpush.msra.mxu0 0.0
        %5141 = vmatpush.msra.mxu0 0.0
        %5142 = vmatpush.msra.mxu0 0.0
        %5143 = vmatpush.msra.mxu0 0.0
        %5144 = vmatpush.msra.mxu0 0.0
        %5145 = vmatpush.msra.mxu0 0.0
        %5146 = vmatpush.msra.mxu0 0.0
        %5147 = vmatpush.msra.mxu0 0.0
        %5148 = vmatpush.msra.mxu0 0.0
        %5149 = vmatpush.msra.mxu0 0.0
        %5150 = vmatpush.msra.mxu0 0.0
        %5151 = vmatpush.msra.mxu0 0.0
        %5152 = vmatpush.msra.mxu0 0.0
        %5153 = vmatpush.msra.mxu0 0.0
        %5154 = vmatpush.msra.mxu0 %v5105
        %5155 = vmatmul.f32.gmra.mxu0 %v5101
        %v5156 = vpop.f32.mrf.mxu0
        %v5157 = vadd.f32 0.0, %v5156
        %5158 = vdwg.mxu0
        %5159 = vmatpush.msra.mxu0 0.0
        %5160 = vmatpush.msra.mxu0 0.0
        %5161 = vmatpush.msra.mxu0 0.0
        %5162 = vmatpush.msra.mxu0 0.0
        %5163 = vmatpush.msra.mxu0 0.0
        %5164 = vmatpush.msra.mxu0 0.0
        %5165 = vmatpush.msra.mxu0 0.0
        %5166 = vmatpush.msra.mxu0 0.0
        %5167 = vmatpush.msra.mxu0 0.0
        %5168 = vmatpush.msra.mxu0 0.0
        %5169 = vmatpush.msra.mxu0 0.0
        %5170 = vmatpush.msra.mxu0 0.0
        %5171 = vmatpush.msra.mxu0 0.0
        %5172 = vmatpush.msra.mxu0 0.0
        %5173 = vmatpush.msra.mxu0 0.0
        %5174 = vmatpush.msra.mxu0 %v5107
        %5175 = vmatmul.f32.gmra.mxu0 %v5101
        %v5176 = vpop.f32.mrf.mxu0
        %v5177 = vadd.f32 0.0, %v5176
        %5178 = vdwg.mxu0
        %5179 = vmatpush.msra.mxu0 0.0
        %5180 = vmatpush.msra.mxu0 0.0
        %5181 = vmatpush.msra.mxu0 0.0
        %5182 = vmatpush.msra.mxu0 0.0
        %5183 = vmatpush.msra.mxu0 0.0
        %5184 = vmatpush.msra.mxu0 0.0
        %5185 = vmatpush.msra.mxu0 0.0
        %5186 = vmatpush.msra.mxu0 0.0
        %5187 = vmatpush.msra.mxu0 0.0
        %5188 = vmatpush.msra.mxu0 0.0
        %5189 = vmatpush.msra.mxu0 0.0
        %5190 = vmatpush.msra.mxu0 0.0
        %5191 = vmatpush.msra.mxu0 0.0
        %5192 = vmatpush.msra.mxu0 0.0
        %5193 = vmatpush.msra.mxu0 0.0
        %5194 = vmatpush.msra.mxu0 %v5109
        %5195 = vmatmul.f32.gmra.mxu0 %v5101
        %v5196 = vpop.f32.mrf.mxu0
        %v5197 = vadd.f32 0.0, %v5196
        %5198 = vdwg.mxu0
        %5199 = vmatpush.msra.mxu0 0.0
        %5200 = vmatpush.msra.mxu0 0.0
        %5201 = vmatpush.msra.mxu0 0.0
        %5202 = vmatpush.msra.mxu0 0.0
        %5203 = vmatpush.msra.mxu0 0.0
        %5204 = vmatpush.msra.mxu0 0.0
        %5205 = vmatpush.msra.mxu0 0.0
        %5206 = vmatpush.msra.mxu0 0.0
        %5207 = vmatpush.msra.mxu0 0.0
        %5208 = vmatpush.msra.mxu0 0.0
        %5209 = vmatpush.msra.mxu0 0.0
        %5210 = vmatpush.msra.mxu0 0.0
        %5211 = vmatpush.msra.mxu0 0.0
        %5212 = vmatpush.msra.mxu0 0.0
        %5213 = vmatpush.msra.mxu0 0.0
        %5214 = vmatpush.msra.mxu0 %v5111
        %5215 = vmatmul.f32.gmra.mxu0 %v5101
        %v5216 = vpop.f32.mrf.mxu0
        %v5217 = vadd.f32 0.0, %v5216
        %5218 = vdwg.mxu0
        %5219 = vmatpush.msra.mxu0 0.0
        %5220 = vmatpush.msra.mxu0 0.0
        %5221 = vmatpush.msra.mxu0 0.0
        %5222 = vmatpush.msra.mxu0 0.0
        %5223 = vmatpush.msra.mxu0 0.0
        %5224 = vmatpush.msra.mxu0 0.0
        %5225 = vmatpush.msra.mxu0 0.0
        %5226 = vmatpush.msra.mxu0 0.0
        %5227 = vmatpush.msra.mxu0 0.0
        %5228 = vmatpush.msra.mxu0 0.0
        %5229 = vmatpush.msra.mxu0 0.0
        %5230 = vmatpush.msra.mxu0 0.0
        %5231 = vmatpush.msra.mxu0 0.0
        %5232 = vmatpush.msra.mxu0 0.0
        %5233 = vmatpush.msra.mxu0 0.0
        %5234 = vmatpush.msra.mxu0 %v5113
        %5235 = vmatmul.f32.gmra.mxu0 %v5101
        %v5236 = vpop.f32.mrf.mxu0
        %v5237 = vadd.f32 0.0, %v5236
        %5238 = vdwg.mxu0
        %5239 = vmatpush.msra.mxu0 0.0
        %5240 = vmatpush.msra.mxu0 0.0
        %5241 = vmatpush.msra.mxu0 0.0
        %5242 = vmatpush.msra.mxu0 0.0
        %5243 = vmatpush.msra.mxu0 0.0
        %5244 = vmatpush.msra.mxu0 0.0
        %5245 = vmatpush.msra.mxu0 0.0
        %5246 = vmatpush.msra.mxu0 0.0
        %5247 = vmatpush.msra.mxu0 0.0
        %5248 = vmatpush.msra.mxu0 0.0
        %5249 = vmatpush.msra.mxu0 0.0
        %5250 = vmatpush.msra.mxu0 0.0
        %5251 = vmatpush.msra.mxu0 0.0
        %5252 = vmatpush.msra.mxu0 0.0
        %5253 = vmatpush.msra.mxu0 0.0
        %5254 = vmatpush.msra.mxu0 %v5115
        %5255 = vmatmul.f32.gmra.mxu0 %v5101
        %v5256 = vpop.f32.mrf.mxu0
        %v5257 = vadd.f32 0.0, %v5256
        %5258 = vdwg.mxu0
        %5259 = vmatpush.msra.mxu0 0.0
        %5260 = vmatpush.msra.mxu0 0.0
        %5261 = vmatpush.msra.mxu0 0.0
        %5262 = vmatpush.msra.mxu0 0.0
        %5263 = vmatpush.msra.mxu0 0.0
        %5264 = vmatpush.msra.mxu0 0.0
        %5265 = vmatpush.msra.mxu0 0.0
        %5266 = vmatpush.msra.mxu0 0.0
        %5267 = vmatpush.msra.mxu0 0.0
        %5268 = vmatpush.msra.mxu0 0.0
        %5269 = vmatpush.msra.mxu0 0.0
        %5270 = vmatpush.msra.mxu0 0.0
        %5271 = vmatpush.msra.mxu0 0.0
        %5272 = vmatpush.msra.mxu0 0.0
        %5273 = vmatpush.msra.mxu0 0.0
        %5274 = vmatpush.msra.mxu0 %v5117
        %5275 = vmatmul.f32.gmra.mxu0 %v5101
        %v5276 = vpop.f32.mrf.mxu0
        %v5277 = vadd.f32 0.0, %v5276
        %5278 = vdwg.mxu0
        %v5279 = vadd.f32 %v4929, %v5137
        %v5280 = vadd.f32 %v4949, %v5157
        %v5281 = vadd.f32 %v4969, %v5177
        %v5282 = vadd.f32 %v4989, %v5197
        %v5283 = vadd.f32 %v5009, %v5217
        %v5284 = vadd.f32 %v5029, %v5237
        %v5285 = vadd.f32 %v5049, %v5257
        %v5286 = vadd.f32 %v5069, %v5277
        %v5287 = vsel %vm545, 1, 0
        %v5288 = vsel %vm546, 1, 0
        %v5289 = vsel %vm547, 1, 0
        %v5290 = vsel %vm548, 1, 0
        %v5291 = vsel %vm549, 1, 0
        %v5292 = vsel %vm550, 1, 0
        %v5293 = vsel %vm551, 1, 0
        %v5294 = vsel %vm552, 1, 0
        %vm5295 = vcmp.eq.s32.totalorder %v5287, 1
        %vm5296 = vcmp.eq.s32.totalorder %v5288, 1
        %vm5297 = vcmp.eq.s32.totalorder %v5289, 1
        %vm5298 = vcmp.eq.s32.totalorder %v5290, 1
        %vm5299 = vcmp.eq.s32.totalorder %v5291, 1
        %vm5300 = vcmp.eq.s32.totalorder %v5292, 1
        %vm5301 = vcmp.eq.s32.totalorder %v5293, 1
        %vm5302 = vcmp.eq.s32.totalorder %v5294, 1
        %5303 = vrot.lane.b32.xlu0 %v4635, 31
        %v5304 = vpop.permute.xlu0 %5303
        %5305 = vrot.lane.b32.xlu0 %v4627, 31
        %v5306 = vpop.permute.xlu0 %5305
        %5307 = vrot.lane.b32.xlu0 %v4628, 31
        %v5308 = vpop.permute.xlu0 %5307
        %5309 = vrot.lane.b32.xlu0 %v4629, 31
        %v5310 = vpop.permute.xlu0 %5309
        %5311 = vrot.lane.b32.xlu0 %v4630, 31
        %v5312 = vpop.permute.xlu0 %5311
        %5313 = vrot.lane.b32.xlu0 %v4631, 31
        %v5314 = vpop.permute.xlu0 %5313
        %5315 = vrot.lane.b32.xlu0 %v4632, 31
        %v5316 = vpop.permute.xlu0 %5315
        %5317 = vrot.lane.b32.xlu0 %v4633, 31
        %v5318 = vpop.permute.xlu0 %5317
        %5319 = vrot.lane.b32.xlu0 %v4634, 31
        %v5320 = vpop.permute.xlu0 %5319
        %vm5321 = vcmask 252928
        %v5322 = vsel %vm5321, %v5304, %v5306
        %v5323 = vsel %vm5321, %v5306, %v5308
        %v5324 = vsel %vm5321, %v5308, %v5310
        %v5325 = vsel %vm5321, %v5310, %v5312
        %v5326 = vsel %vm5321, %v5312, %v5314
        %v5327 = vsel %vm5321, %v5314, %v5316
        %v5328 = vsel %vm5321, %v5316, %v5318
        %v5329 = vsel %vm5321, %v5318, %v5320
        %v5338 = vsel %vm5295, %v5322, 0.0
        %v5339 = vsel %vm5296, %v5323, 0.0
        %v5340 = vsel %vm5297, %v5324, 0.0
        %v5341 = vsel %vm5298, %v5325, 0.0
        %v5342 = vsel %vm5299, %v5326, 0.0
        %v5343 = vsel %vm5300, %v5327, 0.0
        %v5344 = vsel %vm5301, %v5328, 0.0
        %v5345 = vsel %vm5302, %v5329, 0.0
        %s5346 = scalar_lea.vmem %s4, 16
        %v5347 = vld [vmem:[%s5346] sm:$0xff]
        %v5349 = vsel %vm588, %v5347, 0
        %v5352 = vsel %vm685, %v5338, 0
        %v5355 = vsel %vm685, %v5339, 0
        %v5358 = vsel %vm685, %v5340, 0
        %v5361 = vsel %vm685, %v5341, 0
        %v5364 = vsel %vm685, %v5342, 0
        %v5367 = vsel %vm685, %v5343, 0
        %v5370 = vsel %vm685, %v5344, 0
        %v5373 = vsel %vm685, %v5345, 0
        %5375 = vmatpush.msra.mxu0 0.0
        %5376 = vmatpush.msra.mxu0 0.0
        %5377 = vmatpush.msra.mxu0 0.0
        %5378 = vmatpush.msra.mxu0 0.0
        %5379 = vmatpush.msra.mxu0 0.0
        %5380 = vmatpush.msra.mxu0 0.0
        %5381 = vmatpush.msra.mxu0 0.0
        %5382 = vmatpush.msra.mxu0 0.0
        %5383 = vmatpush.msra.mxu0 0.0
        %5384 = vmatpush.msra.mxu0 0.0
        %5385 = vmatpush.msra.mxu0 0.0
        %5386 = vmatpush.msra.mxu0 0.0
        %5387 = vmatpush.msra.mxu0 0.0
        %5388 = vmatpush.msra.mxu0 0.0
        %5389 = vmatpush.msra.mxu0 0.0
        %5390 = vmatpush.msra.mxu0 %v5352
        %5391 = vmatmul.f32.gmra.mxu0 %v5349
        %v5392 = vpop.f32.mrf.mxu0
        %v5393 = vadd.f32 0.0, %v5392
        %5394 = vdwg.mxu0
        %5395 = vmatpush.msra.mxu0 0.0
        %5396 = vmatpush.msra.mxu0 0.0
        %5397 = vmatpush.msra.mxu0 0.0
        %5398 = vmatpush.msra.mxu0 0.0
        %5399 = vmatpush.msra.mxu0 0.0
        %5400 = vmatpush.msra.mxu0 0.0
        %5401 = vmatpush.msra.mxu0 0.0
        %5402 = vmatpush.msra.mxu0 0.0
        %5403 = vmatpush.msra.mxu0 0.0
        %5404 = vmatpush.msra.mxu0 0.0
        %5405 = vmatpush.msra.mxu0 0.0
        %5406 = vmatpush.msra.mxu0 0.0
        %5407 = vmatpush.msra.mxu0 0.0
        %5408 = vmatpush.msra.mxu0 0.0
        %5409 = vmatpush.msra.mxu0 0.0
        %5410 = vmatpush.msra.mxu0 %v5355
        %5411 = vmatmul.f32.gmra.mxu0 %v5349
        %v5412 = vpop.f32.mrf.mxu0
        %v5413 = vadd.f32 0.0, %v5412
        %5414 = vdwg.mxu0
        %5415 = vmatpush.msra.mxu0 0.0
        %5416 = vmatpush.msra.mxu0 0.0
        %5417 = vmatpush.msra.mxu0 0.0
        %5418 = vmatpush.msra.mxu0 0.0
        %5419 = vmatpush.msra.mxu0 0.0
        %5420 = vmatpush.msra.mxu0 0.0
        %5421 = vmatpush.msra.mxu0 0.0
        %5422 = vmatpush.msra.mxu0 0.0
        %5423 = vmatpush.msra.mxu0 0.0
        %5424 = vmatpush.msra.mxu0 0.0
        %5425 = vmatpush.msra.mxu0 0.0
        %5426 = vmatpush.msra.mxu0 0.0
        %5427 = vmatpush.msra.mxu0 0.0
        %5428 = vmatpush.msra.mxu0 0.0
        %5429 = vmatpush.msra.mxu0 0.0
        %5430 = vmatpush.msra.mxu0 %v5358
        %5431 = vmatmul.f32.gmra.mxu0 %v5349
        %v5432 = vpop.f32.mrf.mxu0
        %v5433 = vadd.f32 0.0, %v5432
        %5434 = vdwg.mxu0
        %5435 = vmatpush.msra.mxu0 0.0
        %5436 = vmatpush.msra.mxu0 0.0
        %5437 = vmatpush.msra.mxu0 0.0
        %5438 = vmatpush.msra.mxu0 0.0
        %5439 = vmatpush.msra.mxu0 0.0
        %5440 = vmatpush.msra.mxu0 0.0
        %5441 = vmatpush.msra.mxu0 0.0
        %5442 = vmatpush.msra.mxu0 0.0
        %5443 = vmatpush.msra.mxu0 0.0
        %5444 = vmatpush.msra.mxu0 0.0
        %5445 = vmatpush.msra.mxu0 0.0
        %5446 = vmatpush.msra.mxu0 0.0
        %5447 = vmatpush.msra.mxu0 0.0
        %5448 = vmatpush.msra.mxu0 0.0
        %5449 = vmatpush.msra.mxu0 0.0
        %5450 = vmatpush.msra.mxu0 %v5361
        %5451 = vmatmul.f32.gmra.mxu0 %v5349
        %v5452 = vpop.f32.mrf.mxu0
        %v5453 = vadd.f32 0.0, %v5452
        %5454 = vdwg.mxu0
        %5455 = vmatpush.msra.mxu0 0.0
        %5456 = vmatpush.msra.mxu0 0.0
        %5457 = vmatpush.msra.mxu0 0.0
        %5458 = vmatpush.msra.mxu0 0.0
        %5459 = vmatpush.msra.mxu0 0.0
        %5460 = vmatpush.msra.mxu0 0.0
        %5461 = vmatpush.msra.mxu0 0.0
        %5462 = vmatpush.msra.mxu0 0.0
        %5463 = vmatpush.msra.mxu0 0.0
        %5464 = vmatpush.msra.mxu0 0.0
        %5465 = vmatpush.msra.mxu0 0.0
        %5466 = vmatpush.msra.mxu0 0.0
        %5467 = vmatpush.msra.mxu0 0.0
        %5468 = vmatpush.msra.mxu0 0.0
        %5469 = vmatpush.msra.mxu0 0.0
        %5470 = vmatpush.msra.mxu0 %v5364
        %5471 = vmatmul.f32.gmra.mxu0 %v5349
        %v5472 = vpop.f32.mrf.mxu0
        %v5473 = vadd.f32 0.0, %v5472
        %5474 = vdwg.mxu0
        %5475 = vmatpush.msra.mxu0 0.0
        %5476 = vmatpush.msra.mxu0 0.0
        %5477 = vmatpush.msra.mxu0 0.0
        %5478 = vmatpush.msra.mxu0 0.0
        %5479 = vmatpush.msra.mxu0 0.0
        %5480 = vmatpush.msra.mxu0 0.0
        %5481 = vmatpush.msra.mxu0 0.0
        %5482 = vmatpush.msra.mxu0 0.0
        %5483 = vmatpush.msra.mxu0 0.0
        %5484 = vmatpush.msra.mxu0 0.0
        %5485 = vmatpush.msra.mxu0 0.0
        %5486 = vmatpush.msra.mxu0 0.0
        %5487 = vmatpush.msra.mxu0 0.0
        %5488 = vmatpush.msra.mxu0 0.0
        %5489 = vmatpush.msra.mxu0 0.0
        %5490 = vmatpush.msra.mxu0 %v5367
        %5491 = vmatmul.f32.gmra.mxu0 %v5349
        %v5492 = vpop.f32.mrf.mxu0
        %v5493 = vadd.f32 0.0, %v5492
        %5494 = vdwg.mxu0
        %5495 = vmatpush.msra.mxu0 0.0
        %5496 = vmatpush.msra.mxu0 0.0
        %5497 = vmatpush.msra.mxu0 0.0
        %5498 = vmatpush.msra.mxu0 0.0
        %5499 = vmatpush.msra.mxu0 0.0
        %5500 = vmatpush.msra.mxu0 0.0
        %5501 = vmatpush.msra.mxu0 0.0
        %5502 = vmatpush.msra.mxu0 0.0
        %5503 = vmatpush.msra.mxu0 0.0
        %5504 = vmatpush.msra.mxu0 0.0
        %5505 = vmatpush.msra.mxu0 0.0
        %5506 = vmatpush.msra.mxu0 0.0
        %5507 = vmatpush.msra.mxu0 0.0
        %5508 = vmatpush.msra.mxu0 0.0
        %5509 = vmatpush.msra.mxu0 0.0
        %5510 = vmatpush.msra.mxu0 %v5370
        %5511 = vmatmul.f32.gmra.mxu0 %v5349
        %v5512 = vpop.f32.mrf.mxu0
        %v5513 = vadd.f32 0.0, %v5512
        %5514 = vdwg.mxu0
        %5515 = vmatpush.msra.mxu0 0.0
        %5516 = vmatpush.msra.mxu0 0.0
        %5517 = vmatpush.msra.mxu0 0.0
        %5518 = vmatpush.msra.mxu0 0.0
        %5519 = vmatpush.msra.mxu0 0.0
        %5520 = vmatpush.msra.mxu0 0.0
        %5521 = vmatpush.msra.mxu0 0.0
        %5522 = vmatpush.msra.mxu0 0.0
        %5523 = vmatpush.msra.mxu0 0.0
        %5524 = vmatpush.msra.mxu0 0.0
        %5525 = vmatpush.msra.mxu0 0.0
        %5526 = vmatpush.msra.mxu0 0.0
        %5527 = vmatpush.msra.mxu0 0.0
        %5528 = vmatpush.msra.mxu0 0.0
        %5529 = vmatpush.msra.mxu0 0.0
        %5530 = vmatpush.msra.mxu0 %v5373
        %5531 = vmatmul.f32.gmra.mxu0 %v5349
        %v5532 = vpop.f32.mrf.mxu0
        %v5533 = vadd.f32 0.0, %v5532
        %5534 = vdwg.mxu0
        %v5535 = vadd.f32 %v5279, %v5393
        %v5536 = vadd.f32 %v5280, %v5413
        %v5537 = vadd.f32 %v5281, %v5433
        %v5538 = vadd.f32 %v5282, %v5453
        %v5539 = vadd.f32 %v5283, %v5473
        %v5540 = vadd.f32 %v5284, %v5493
        %v5541 = vadd.f32 %v5285, %v5513
        %v5542 = vadd.f32 %v5286, %v5533
        %5543 = vrot.lane.b32.xlu0 %v4635, 1
        %v5544 = vpop.permute.xlu0 %5543
        %5545 = vrot.lane.b32.xlu0 %v4627, 1
        %v5546 = vpop.permute.xlu0 %5545
        %5547 = vrot.lane.b32.xlu0 %v4628, 1
        %v5548 = vpop.permute.xlu0 %5547
        %5549 = vrot.lane.b32.xlu0 %v4629, 1
        %v5550 = vpop.permute.xlu0 %5549
        %5551 = vrot.lane.b32.xlu0 %v4630, 1
        %v5552 = vpop.permute.xlu0 %5551
        %5553 = vrot.lane.b32.xlu0 %v4631, 1
        %v5554 = vpop.permute.xlu0 %5553
        %5555 = vrot.lane.b32.xlu0 %v4632, 1
        %v5556 = vpop.permute.xlu0 %5555
        %5557 = vrot.lane.b32.xlu0 %v4633, 1
        %v5558 = vpop.permute.xlu0 %5557
        %5559 = vrot.lane.b32.xlu0 %v4634, 1
        %v5560 = vpop.permute.xlu0 %5559
        %vm5561 = vcmask 7168
        %v5562 = vsel %vm5561, %v5544, %v5546
        %v5563 = vsel %vm5561, %v5546, %v5548
        %v5564 = vsel %vm5561, %v5548, %v5550
        %v5565 = vsel %vm5561, %v5550, %v5552
        %v5566 = vsel %vm5561, %v5552, %v5554
        %v5567 = vsel %vm5561, %v5554, %v5556
        %v5568 = vsel %vm5561, %v5556, %v5558
        %v5569 = vsel %vm5561, %v5558, %v5560
        %v5578 = vsel %vm4644, %v5562, 0.0
        %v5579 = vsel %vm4645, %v5563, 0.0
        %v5580 = vsel %vm4646, %v5564, 0.0
        %v5581 = vsel %vm4647, %v5565, 0.0
        %v5582 = vsel %vm4648, %v5566, 0.0
        %v5583 = vsel %vm4649, %v5567, 0.0
        %v5584 = vsel %vm4650, %v5568, 0.0
        %v5585 = vsel %vm4651, %v5569, 0.0
        %s5586 = scalar_lea.vmem %s4, 24
        %v5587 = vld [vmem:[%s5586] sm:$0xff]
        %v5589 = vsel %vm588, %v5587, 0
        %v5592 = vsel %vm685, %v5578, 0
        %v5595 = vsel %vm685, %v5579, 0
        %v5598 = vsel %vm685, %v5580, 0
        %v5601 = vsel %vm685, %v5581, 0
        %v5604 = vsel %vm685, %v5582, 0
        %v5607 = vsel %vm685, %v5583, 0
        %v5610 = vsel %vm685, %v5584, 0
        %v5613 = vsel %vm685, %v5585, 0
        %5615 = vmatpush.msra.mxu0 0.0
        %5616 = vmatpush.msra.mxu0 0.0
        %5617 = vmatpush.msra.mxu0 0.0
        %5618 = vmatpush.msra.mxu0 0.0
        %5619 = vmatpush.msra.mxu0 0.0
        %5620 = vmatpush.msra.mxu0 0.0
        %5621 = vmatpush.msra.mxu0 0.0
        %5622 = vmatpush.msra.mxu0 0.0
        %5623 = vmatpush.msra.mxu0 0.0
        %5624 = vmatpush.msra.mxu0 0.0
        %5625 = vmatpush.msra.mxu0 0.0
        %5626 = vmatpush.msra.mxu0 0.0
        %5627 = vmatpush.msra.mxu0 0.0
        %5628 = vmatpush.msra.mxu0 0.0
        %5629 = vmatpush.msra.mxu0 0.0
        %5630 = vmatpush.msra.mxu0 %v5592
        %5631 = vmatmul.f32.gmra.mxu0 %v5589
        %v5632 = vpop.f32.mrf.mxu0
        %v5633 = vadd.f32 0.0, %v5632
        %5634 = vdwg.mxu0
        %5635 = vmatpush.msra.mxu0 0.0
        %5636 = vmatpush.msra.mxu0 0.0
        %5637 = vmatpush.msra.mxu0 0.0
        %5638 = vmatpush.msra.mxu0 0.0
        %5639 = vmatpush.msra.mxu0 0.0
        %5640 = vmatpush.msra.mxu0 0.0
        %5641 = vmatpush.msra.mxu0 0.0
        %5642 = vmatpush.msra.mxu0 0.0
        %5643 = vmatpush.msra.mxu0 0.0
        %5644 = vmatpush.msra.mxu0 0.0
        %5645 = vmatpush.msra.mxu0 0.0
        %5646 = vmatpush.msra.mxu0 0.0
        %5647 = vmatpush.msra.mxu0 0.0
        %5648 = vmatpush.msra.mxu0 0.0
        %5649 = vmatpush.msra.mxu0 0.0
        %5650 = vmatpush.msra.mxu0 %v5595
        %5651 = vmatmul.f32.gmra.mxu0 %v5589
        %v5652 = vpop.f32.mrf.mxu0
        %v5653 = vadd.f32 0.0, %v5652
        %5654 = vdwg.mxu0
        %5655 = vmatpush.msra.mxu0 0.0
        %5656 = vmatpush.msra.mxu0 0.0
        %5657 = vmatpush.msra.mxu0 0.0
        %5658 = vmatpush.msra.mxu0 0.0
        %5659 = vmatpush.msra.mxu0 0.0
        %5660 = vmatpush.msra.mxu0 0.0
        %5661 = vmatpush.msra.mxu0 0.0
        %5662 = vmatpush.msra.mxu0 0.0
        %5663 = vmatpush.msra.mxu0 0.0
        %5664 = vmatpush.msra.mxu0 0.0
        %5665 = vmatpush.msra.mxu0 0.0
        %5666 = vmatpush.msra.mxu0 0.0
        %5667 = vmatpush.msra.mxu0 0.0
        %5668 = vmatpush.msra.mxu0 0.0
        %5669 = vmatpush.msra.mxu0 0.0
        %5670 = vmatpush.msra.mxu0 %v5598
        %5671 = vmatmul.f32.gmra.mxu0 %v5589
        %v5672 = vpop.f32.mrf.mxu0
        %v5673 = vadd.f32 0.0, %v5672
        %5674 = vdwg.mxu0
        %5675 = vmatpush.msra.mxu0 0.0
        %5676 = vmatpush.msra.mxu0 0.0
        %5677 = vmatpush.msra.mxu0 0.0
        %5678 = vmatpush.msra.mxu0 0.0
        %5679 = vmatpush.msra.mxu0 0.0
        %5680 = vmatpush.msra.mxu0 0.0
        %5681 = vmatpush.msra.mxu0 0.0
        %5682 = vmatpush.msra.mxu0 0.0
        %5683 = vmatpush.msra.mxu0 0.0
        %5684 = vmatpush.msra.mxu0 0.0
        %5685 = vmatpush.msra.mxu0 0.0
        %5686 = vmatpush.msra.mxu0 0.0
        %5687 = vmatpush.msra.mxu0 0.0
        %5688 = vmatpush.msra.mxu0 0.0
        %5689 = vmatpush.msra.mxu0 0.0
        %5690 = vmatpush.msra.mxu0 %v5601
        %5691 = vmatmul.f32.gmra.mxu0 %v5589
        %v5692 = vpop.f32.mrf.mxu0
        %v5693 = vadd.f32 0.0, %v5692
        %5694 = vdwg.mxu0
        %5695 = vmatpush.msra.mxu0 0.0
        %5696 = vmatpush.msra.mxu0 0.0
        %5697 = vmatpush.msra.mxu0 0.0
        %5698 = vmatpush.msra.mxu0 0.0
        %5699 = vmatpush.msra.mxu0 0.0
        %5700 = vmatpush.msra.mxu0 0.0
        %5701 = vmatpush.msra.mxu0 0.0
        %5702 = vmatpush.msra.mxu0 0.0
        %5703 = vmatpush.msra.mxu0 0.0
        %5704 = vmatpush.msra.mxu0 0.0
        %5705 = vmatpush.msra.mxu0 0.0
        %5706 = vmatpush.msra.mxu0 0.0
        %5707 = vmatpush.msra.mxu0 0.0
        %5708 = vmatpush.msra.mxu0 0.0
        %5709 = vmatpush.msra.mxu0 0.0
        %5710 = vmatpush.msra.mxu0 %v5604
        %5711 = vmatmul.f32.gmra.mxu0 %v5589
        %v5712 = vpop.f32.mrf.mxu0
        %v5713 = vadd.f32 0.0, %v5712
        %5714 = vdwg.mxu0
        %5715 = vmatpush.msra.mxu0 0.0
        %5716 = vmatpush.msra.mxu0 0.0
        %5717 = vmatpush.msra.mxu0 0.0
        %5718 = vmatpush.msra.mxu0 0.0
        %5719 = vmatpush.msra.mxu0 0.0
        %5720 = vmatpush.msra.mxu0 0.0
        %5721 = vmatpush.msra.mxu0 0.0
        %5722 = vmatpush.msra.mxu0 0.0
        %5723 = vmatpush.msra.mxu0 0.0
        %5724 = vmatpush.msra.mxu0 0.0
        %5725 = vmatpush.msra.mxu0 0.0
        %5726 = vmatpush.msra.mxu0 0.0
        %5727 = vmatpush.msra.mxu0 0.0
        %5728 = vmatpush.msra.mxu0 0.0
        %5729 = vmatpush.msra.mxu0 0.0
        %5730 = vmatpush.msra.mxu0 %v5607
        %5731 = vmatmul.f32.gmra.mxu0 %v5589
        %v5732 = vpop.f32.mrf.mxu0
        %v5733 = vadd.f32 0.0, %v5732
        %5734 = vdwg.mxu0
        %5735 = vmatpush.msra.mxu0 0.0
        %5736 = vmatpush.msra.mxu0 0.0
        %5737 = vmatpush.msra.mxu0 0.0
        %5738 = vmatpush.msra.mxu0 0.0
        %5739 = vmatpush.msra.mxu0 0.0
        %5740 = vmatpush.msra.mxu0 0.0
        %5741 = vmatpush.msra.mxu0 0.0
        %5742 = vmatpush.msra.mxu0 0.0
        %5743 = vmatpush.msra.mxu0 0.0
        %5744 = vmatpush.msra.mxu0 0.0
        %5745 = vmatpush.msra.mxu0 0.0
        %5746 = vmatpush.msra.mxu0 0.0
        %5747 = vmatpush.msra.mxu0 0.0
        %5748 = vmatpush.msra.mxu0 0.0
        %5749 = vmatpush.msra.mxu0 0.0
        %5750 = vmatpush.msra.mxu0 %v5610
        %5751 = vmatmul.f32.gmra.mxu0 %v5589
        %v5752 = vpop.f32.mrf.mxu0
        %v5753 = vadd.f32 0.0, %v5752
        %5754 = vdwg.mxu0
        %5755 = vmatpush.msra.mxu0 0.0
        %5756 = vmatpush.msra.mxu0 0.0
        %5757 = vmatpush.msra.mxu0 0.0
        %5758 = vmatpush.msra.mxu0 0.0
        %5759 = vmatpush.msra.mxu0 0.0
        %5760 = vmatpush.msra.mxu0 0.0
        %5761 = vmatpush.msra.mxu0 0.0
        %5762 = vmatpush.msra.mxu0 0.0
        %5763 = vmatpush.msra.mxu0 0.0
        %5764 = vmatpush.msra.mxu0 0.0
        %5765 = vmatpush.msra.mxu0 0.0
        %5766 = vmatpush.msra.mxu0 0.0
        %5767 = vmatpush.msra.mxu0 0.0
        %5768 = vmatpush.msra.mxu0 0.0
        %5769 = vmatpush.msra.mxu0 0.0
        %5770 = vmatpush.msra.mxu0 %v5613
        %5771 = vmatmul.f32.gmra.mxu0 %v5589
        %v5772 = vpop.f32.mrf.mxu0
        %v5773 = vadd.f32 0.0, %v5772
        %5774 = vdwg.mxu0
        %v5775 = vadd.f32 %v5535, %v5633
        %v5776 = vadd.f32 %v5536, %v5653
        %v5777 = vadd.f32 %v5537, %v5673
        %v5778 = vadd.f32 %v5538, %v5693
        %v5779 = vadd.f32 %v5539, %v5713
        %v5780 = vadd.f32 %v5540, %v5733
        %v5781 = vadd.f32 %v5541, %v5753
        %v5782 = vadd.f32 %v5542, %v5773
        %v5783 = vld [vmem:[#allocation2 + $0x8] sm:$0xf]
        %v5784 = vld [vmem:[#allocation2 + $0x10] sm:$0xf]
        %v5785 = vld [vmem:[#allocation2 + $0x18] sm:$0xf]
        %v5786 = vld [vmem:[#allocation2 + $0x20] sm:$0xf]
        %v5787 = vld [vmem:[#allocation2 + $0x28] sm:$0xf]
        %v5788 = vld [vmem:[#allocation2 + $0x30] sm:$0xf]
        %v5789 = vld [vmem:[#allocation2 + $0x38] sm:$0xf]
        %v5790 = vld [vmem:[#allocation2 + $0x40] sm:$0xf]
        %v5791 = vld [vmem:[#allocation2 + $0x48] sm:$0xf]
        %5801 = vrot.lane.b32.xlu0 %v5783, 127
        %v5802 = vpop.permute.xlu0 %5801
        %5803 = vrot.lane.b32.xlu0 %v5784, 127
        %v5804 = vpop.permute.xlu0 %5803
        %5805 = vrot.lane.b32.xlu0 %v5785, 127
        %v5806 = vpop.permute.xlu0 %5805
        %5807 = vrot.lane.b32.xlu0 %v5786, 127
        %v5808 = vpop.permute.xlu0 %5807
        %5809 = vrot.lane.b32.xlu0 %v5787, 127
        %v5810 = vpop.permute.xlu0 %5809
        %5811 = vrot.lane.b32.xlu0 %v5788, 127
        %v5812 = vpop.permute.xlu0 %5811
        %5813 = vrot.lane.b32.xlu0 %v5789, 127
        %v5814 = vpop.permute.xlu0 %5813
        %5815 = vrot.lane.b32.xlu0 %v5790, 127
        %v5816 = vpop.permute.xlu0 %5815
        %5817 = vrot.lane.b32.xlu0 %v5791, 127
        %v5818 = vpop.permute.xlu0 %5817
        %vm5819 = vcmask 1039360
        %v5820 = vsel %vm5819, %v5802, %v5804
        %v5821 = vsel %vm5819, %v5804, %v5806
        %v5822 = vsel %vm5819, %v5806, %v5808
        %v5823 = vsel %vm5819, %v5808, %v5810
        %v5824 = vsel %vm5819, %v5810, %v5812
        %v5825 = vsel %vm5819, %v5812, %v5814
        %v5826 = vsel %vm5819, %v5814, %v5816
        %v5827 = vsel %vm5819, %v5816, %v5818
        %v5836 = vsel %vm5295, %v5820, 0.0
        %v5837 = vsel %vm5296, %v5821, 0.0
        %v5838 = vsel %vm5297, %v5822, 0.0
        %v5839 = vsel %vm5298, %v5823, 0.0
        %v5840 = vsel %vm5299, %v5824, 0.0
        %v5841 = vsel %vm5300, %v5825, 0.0
        %v5842 = vsel %vm5301, %v5826, 0.0
        %v5843 = vsel %vm5302, %v5827, 0.0
        %s5844 = scalar_lea.vmem %s4, 40
        %v5845 = vld [vmem:[%s5844] sm:$0xff]
        %v5847 = vsel %vm588, %v5845, 0
        %v5850 = vsel %vm685, %v5836, 0
        %v5853 = vsel %vm685, %v5837, 0
        %v5856 = vsel %vm685, %v5838, 0
        %v5859 = vsel %vm685, %v5839, 0
        %v5862 = vsel %vm685, %v5840, 0
        %v5865 = vsel %vm685, %v5841, 0
        %v5868 = vsel %vm685, %v5842, 0
        %v5871 = vsel %vm685, %v5843, 0
        %5873 = vmatpush.msra.mxu0 0.0
        %5874 = vmatpush.msra.mxu0 0.0
        %5875 = vmatpush.msra.mxu0 0.0
        %5876 = vmatpush.msra.mxu0 0.0
        %5877 = vmatpush.msra.mxu0 0.0
        %5878 = vmatpush.msra.mxu0 0.0
        %5879 = vmatpush.msra.mxu0 0.0
        %5880 = vmatpush.msra.mxu0 0.0
        %5881 = vmatpush.msra.mxu0 0.0
        %5882 = vmatpush.msra.mxu0 0.0
        %5883 = vmatpush.msra.mxu0 0.0
        %5884 = vmatpush.msra.mxu0 0.0
        %5885 = vmatpush.msra.mxu0 0.0
        %5886 = vmatpush.msra.mxu0 0.0
        %5887 = vmatpush.msra.mxu0 0.0
        %5888 = vmatpush.msra.mxu0 %v5850
        %5889 = vmatmul.f32.gmra.mxu0 %v5847
        %v5890 = vpop.f32.mrf.mxu0
        %v5891 = vadd.f32 0.0, %v5890
        %5892 = vdwg.mxu0
        %5893 = vmatpush.msra.mxu0 0.0
        %5894 = vmatpush.msra.mxu0 0.0
        %5895 = vmatpush.msra.mxu0 0.0
        %5896 = vmatpush.msra.mxu0 0.0
        %5897 = vmatpush.msra.mxu0 0.0
        %5898 = vmatpush.msra.mxu0 0.0
        %5899 = vmatpush.msra.mxu0 0.0
        %5900 = vmatpush.msra.mxu0 0.0
        %5901 = vmatpush.msra.mxu0 0.0
        %5902 = vmatpush.msra.mxu0 0.0
        %5903 = vmatpush.msra.mxu0 0.0
        %5904 = vmatpush.msra.mxu0 0.0
        %5905 = vmatpush.msra.mxu0 0.0
        %5906 = vmatpush.msra.mxu0 0.0
        %5907 = vmatpush.msra.mxu0 0.0
        %5908 = vmatpush.msra.mxu0 %v5853
        %5909 = vmatmul.f32.gmra.mxu0 %v5847
        %v5910 = vpop.f32.mrf.mxu0
        %v5911 = vadd.f32 0.0, %v5910
        %5912 = vdwg.mxu0
        %5913 = vmatpush.msra.mxu0 0.0
        %5914 = vmatpush.msra.mxu0 0.0
        %5915 = vmatpush.msra.mxu0 0.0
        %5916 = vmatpush.msra.mxu0 0.0
        %5917 = vmatpush.msra.mxu0 0.0
        %5918 = vmatpush.msra.mxu0 0.0
        %5919 = vmatpush.msra.mxu0 0.0
        %5920 = vmatpush.msra.mxu0 0.0
        %5921 = vmatpush.msra.mxu0 0.0
        %5922 = vmatpush.msra.mxu0 0.0
        %5923 = vmatpush.msra.mxu0 0.0
        %5924 = vmatpush.msra.mxu0 0.0
        %5925 = vmatpush.msra.mxu0 0.0
        %5926 = vmatpush.msra.mxu0 0.0
        %5927 = vmatpush.msra.mxu0 0.0
        %5928 = vmatpush.msra.mxu0 %v5856
        %5929 = vmatmul.f32.gmra.mxu0 %v5847
        %v5930 = vpop.f32.mrf.mxu0
        %v5931 = vadd.f32 0.0, %v5930
        %5932 = vdwg.mxu0
        %5933 = vmatpush.msra.mxu0 0.0
        %5934 = vmatpush.msra.mxu0 0.0
        %5935 = vmatpush.msra.mxu0 0.0
        %5936 = vmatpush.msra.mxu0 0.0
        %5937 = vmatpush.msra.mxu0 0.0
        %5938 = vmatpush.msra.mxu0 0.0
        %5939 = vmatpush.msra.mxu0 0.0
        %5940 = vmatpush.msra.mxu0 0.0
        %5941 = vmatpush.msra.mxu0 0.0
        %5942 = vmatpush.msra.mxu0 0.0
        %5943 = vmatpush.msra.mxu0 0.0
        %5944 = vmatpush.msra.mxu0 0.0
        %5945 = vmatpush.msra.mxu0 0.0
        %5946 = vmatpush.msra.mxu0 0.0
        %5947 = vmatpush.msra.mxu0 0.0
        %5948 = vmatpush.msra.mxu0 %v5859
        %5949 = vmatmul.f32.gmra.mxu0 %v5847
        %v5950 = vpop.f32.mrf.mxu0
        %v5951 = vadd.f32 0.0, %v5950
        %5952 = vdwg.mxu0
        %5953 = vmatpush.msra.mxu0 0.0
        %5954 = vmatpush.msra.mxu0 0.0
        %5955 = vmatpush.msra.mxu0 0.0
        %5956 = vmatpush.msra.mxu0 0.0
        %5957 = vmatpush.msra.mxu0 0.0
        %5958 = vmatpush.msra.mxu0 0.0
        %5959 = vmatpush.msra.mxu0 0.0
        %5960 = vmatpush.msra.mxu0 0.0
        %5961 = vmatpush.msra.mxu0 0.0
        %5962 = vmatpush.msra.mxu0 0.0
        %5963 = vmatpush.msra.mxu0 0.0
        %5964 = vmatpush.msra.mxu0 0.0
        %5965 = vmatpush.msra.mxu0 0.0
        %5966 = vmatpush.msra.mxu0 0.0
        %5967 = vmatpush.msra.mxu0 0.0
        %5968 = vmatpush.msra.mxu0 %v5862
        %5969 = vmatmul.f32.gmra.mxu0 %v5847
        %v5970 = vpop.f32.mrf.mxu0
        %v5971 = vadd.f32 0.0, %v5970
        %5972 = vdwg.mxu0
        %5973 = vmatpush.msra.mxu0 0.0
        %5974 = vmatpush.msra.mxu0 0.0
        %5975 = vmatpush.msra.mxu0 0.0
        %5976 = vmatpush.msra.mxu0 0.0
        %5977 = vmatpush.msra.mxu0 0.0
        %5978 = vmatpush.msra.mxu0 0.0
        %5979 = vmatpush.msra.mxu0 0.0
        %5980 = vmatpush.msra.mxu0 0.0
        %5981 = vmatpush.msra.mxu0 0.0
        %5982 = vmatpush.msra.mxu0 0.0
        %5983 = vmatpush.msra.mxu0 0.0
        %5984 = vmatpush.msra.mxu0 0.0
        %5985 = vmatpush.msra.mxu0 0.0
        %5986 = vmatpush.msra.mxu0 0.0
        %5987 = vmatpush.msra.mxu0 0.0
        %5988 = vmatpush.msra.mxu0 %v5865
        %5989 = vmatmul.f32.gmra.mxu0 %v5847
        %v5990 = vpop.f32.mrf.mxu0
        %v5991 = vadd.f32 0.0, %v5990
        %5992 = vdwg.mxu0
        %5993 = vmatpush.msra.mxu0 0.0
        %5994 = vmatpush.msra.mxu0 0.0
        %5995 = vmatpush.msra.mxu0 0.0
        %5996 = vmatpush.msra.mxu0 0.0
        %5997 = vmatpush.msra.mxu0 0.0
        %5998 = vmatpush.msra.mxu0 0.0
        %5999 = vmatpush.msra.mxu0 0.0
        %6000 = vmatpush.msra.mxu0 0.0
        %6001 = vmatpush.msra.mxu0 0.0
        %6002 = vmatpush.msra.mxu0 0.0
        %6003 = vmatpush.msra.mxu0 0.0
        %6004 = vmatpush.msra.mxu0 0.0
        %6005 = vmatpush.msra.mxu0 0.0
        %6006 = vmatpush.msra.mxu0 0.0
        %6007 = vmatpush.msra.mxu0 0.0
        %6008 = vmatpush.msra.mxu0 %v5868
        %6009 = vmatmul.f32.gmra.mxu0 %v5847
        %v6010 = vpop.f32.mrf.mxu0
        %v6011 = vadd.f32 0.0, %v6010
        %6012 = vdwg.mxu0
        %6013 = vmatpush.msra.mxu0 0.0
        %6014 = vmatpush.msra.mxu0 0.0
        %6015 = vmatpush.msra.mxu0 0.0
        %6016 = vmatpush.msra.mxu0 0.0
        %6017 = vmatpush.msra.mxu0 0.0
        %6018 = vmatpush.msra.mxu0 0.0
        %6019 = vmatpush.msra.mxu0 0.0
        %6020 = vmatpush.msra.mxu0 0.0
        %6021 = vmatpush.msra.mxu0 0.0
        %6022 = vmatpush.msra.mxu0 0.0
        %6023 = vmatpush.msra.mxu0 0.0
        %6024 = vmatpush.msra.mxu0 0.0
        %6025 = vmatpush.msra.mxu0 0.0
        %6026 = vmatpush.msra.mxu0 0.0
        %6027 = vmatpush.msra.mxu0 0.0
        %6028 = vmatpush.msra.mxu0 %v5871
        %6029 = vmatmul.f32.gmra.mxu0 %v5847
        %v6030 = vpop.f32.mrf.mxu0
        %v6031 = vadd.f32 0.0, %v6030
        %6032 = vdwg.mxu0
        %v6033 = vadd.f32 %v5775, %v5891
        %v6034 = vadd.f32 %v5776, %v5911
        %v6035 = vadd.f32 %v5777, %v5931
        %v6036 = vadd.f32 %v5778, %v5951
        %v6037 = vadd.f32 %v5779, %v5971
        %v6038 = vadd.f32 %v5780, %v5991
        %v6039 = vadd.f32 %v5781, %v6011
        %v6040 = vadd.f32 %v5782, %v6031
        %6041 = vrot.lane.b32.xlu0 %v5783, 97
        %v6042 = vpop.permute.xlu0 %6041
        %6043 = vrot.lane.b32.xlu0 %v5784, 97
        %v6044 = vpop.permute.xlu0 %6043
        %6045 = vrot.lane.b32.xlu0 %v5785, 97
        %v6046 = vpop.permute.xlu0 %6045
        %6047 = vrot.lane.b32.xlu0 %v5786, 97
        %v6048 = vpop.permute.xlu0 %6047
        %6049 = vrot.lane.b32.xlu0 %v5787, 97
        %v6050 = vpop.permute.xlu0 %6049
        %6051 = vrot.lane.b32.xlu0 %v5788, 97
        %v6052 = vpop.permute.xlu0 %6051
        %6053 = vrot.lane.b32.xlu0 %v5789, 97
        %v6054 = vpop.permute.xlu0 %6053
        %6055 = vrot.lane.b32.xlu0 %v5790, 97
        %v6056 = vpop.permute.xlu0 %6055
        %6057 = vrot.lane.b32.xlu0 %v5791, 97
        %v6058 = vpop.permute.xlu0 %6057
        %vm6059 = vcmask 793600
        %v6060 = vsel %vm6059, %v6042, %v6044
        %v6061 = vsel %vm6059, %v6044, %v6046
        %v6062 = vsel %vm6059, %v6046, %v6048
        %v6063 = vsel %vm6059, %v6048, %v6050
        %v6064 = vsel %vm6059, %v6050, %v6052
        %v6065 = vsel %vm6059, %v6052, %v6054
        %v6066 = vsel %vm6059, %v6054, %v6056
        %v6067 = vsel %vm6059, %v6056, %v6058
        %v6076 = vsel %vm4644, %v6060, 0.0
        %v6077 = vsel %vm4645, %v6061, 0.0
        %v6078 = vsel %vm4646, %v6062, 0.0
        %v6079 = vsel %vm4647, %v6063, 0.0
        %v6080 = vsel %vm4648, %v6064, 0.0
        %v6081 = vsel %vm4649, %v6065, 0.0
        %v6082 = vsel %vm4650, %v6066, 0.0
        %v6083 = vsel %vm4651, %v6067, 0.0
        %s6084 = scalar_lea.vmem %s4, 48
        %v6085 = vld [vmem:[%s6084] sm:$0xff]
        %v6087 = vsel %vm588, %v6085, 0
        %v6090 = vsel %vm685, %v6076, 0
        %v6093 = vsel %vm685, %v6077, 0
        %v6096 = vsel %vm685, %v6078, 0
        %v6099 = vsel %vm685, %v6079, 0
        %v6102 = vsel %vm685, %v6080, 0
        %v6105 = vsel %vm685, %v6081, 0
        %v6108 = vsel %vm685, %v6082, 0
        %v6111 = vsel %vm685, %v6083, 0
        %6113 = vmatpush.msra.mxu0 0.0
        %6114 = vmatpush.msra.mxu0 0.0
        %6115 = vmatpush.msra.mxu0 0.0
        %6116 = vmatpush.msra.mxu0 0.0
        %6117 = vmatpush.msra.mxu0 0.0
        %6118 = vmatpush.msra.mxu0 0.0
        %6119 = vmatpush.msra.mxu0 0.0
        %6120 = vmatpush.msra.mxu0 0.0
        %6121 = vmatpush.msra.mxu0 0.0
        %6122 = vmatpush.msra.mxu0 0.0
        %6123 = vmatpush.msra.mxu0 0.0
        %6124 = vmatpush.msra.mxu0 0.0
        %6125 = vmatpush.msra.mxu0 0.0
        %6126 = vmatpush.msra.mxu0 0.0
        %6127 = vmatpush.msra.mxu0 0.0
        %6128 = vmatpush.msra.mxu0 %v6090
        %6129 = vmatmul.f32.gmra.mxu0 %v6087
        %v6130 = vpop.f32.mrf.mxu0
        %v6131 = vadd.f32 0.0, %v6130
        %6132 = vdwg.mxu0
        %6133 = vmatpush.msra.mxu0 0.0
        %6134 = vmatpush.msra.mxu0 0.0
        %6135 = vmatpush.msra.mxu0 0.0
        %6136 = vmatpush.msra.mxu0 0.0
        %6137 = vmatpush.msra.mxu0 0.0
        %6138 = vmatpush.msra.mxu0 0.0
        %6139 = vmatpush.msra.mxu0 0.0
        %6140 = vmatpush.msra.mxu0 0.0
        %6141 = vmatpush.msra.mxu0 0.0
        %6142 = vmatpush.msra.mxu0 0.0
        %6143 = vmatpush.msra.mxu0 0.0
        %6144 = vmatpush.msra.mxu0 0.0
        %6145 = vmatpush.msra.mxu0 0.0
        %6146 = vmatpush.msra.mxu0 0.0
        %6147 = vmatpush.msra.mxu0 0.0
        %6148 = vmatpush.msra.mxu0 %v6093
        %6149 = vmatmul.f32.gmra.mxu0 %v6087
        %v6150 = vpop.f32.mrf.mxu0
        %v6151 = vadd.f32 0.0, %v6150
        %6152 = vdwg.mxu0
        %6153 = vmatpush.msra.mxu0 0.0
        %6154 = vmatpush.msra.mxu0 0.0
        %6155 = vmatpush.msra.mxu0 0.0
        %6156 = vmatpush.msra.mxu0 0.0
        %6157 = vmatpush.msra.mxu0 0.0
        %6158 = vmatpush.msra.mxu0 0.0
        %6159 = vmatpush.msra.mxu0 0.0
        %6160 = vmatpush.msra.mxu0 0.0
        %6161 = vmatpush.msra.mxu0 0.0
        %6162 = vmatpush.msra.mxu0 0.0
        %6163 = vmatpush.msra.mxu0 0.0
        %6164 = vmatpush.msra.mxu0 0.0
        %6165 = vmatpush.msra.mxu0 0.0
        %6166 = vmatpush.msra.mxu0 0.0
        %6167 = vmatpush.msra.mxu0 0.0
        %6168 = vmatpush.msra.mxu0 %v6096
        %6169 = vmatmul.f32.gmra.mxu0 %v6087
        %v6170 = vpop.f32.mrf.mxu0
        %v6171 = vadd.f32 0.0, %v6170
        %6172 = vdwg.mxu0
        %6173 = vmatpush.msra.mxu0 0.0
        %6174 = vmatpush.msra.mxu0 0.0
        %6175 = vmatpush.msra.mxu0 0.0
        %6176 = vmatpush.msra.mxu0 0.0
        %6177 = vmatpush.msra.mxu0 0.0
        %6178 = vmatpush.msra.mxu0 0.0
        %6179 = vmatpush.msra.mxu0 0.0
        %6180 = vmatpush.msra.mxu0 0.0
        %6181 = vmatpush.msra.mxu0 0.0
        %6182 = vmatpush.msra.mxu0 0.0
        %6183 = vmatpush.msra.mxu0 0.0
        %6184 = vmatpush.msra.mxu0 0.0
        %6185 = vmatpush.msra.mxu0 0.0
        %6186 = vmatpush.msra.mxu0 0.0
        %6187 = vmatpush.msra.mxu0 0.0
        %6188 = vmatpush.msra.mxu0 %v6099
        %6189 = vmatmul.f32.gmra.mxu0 %v6087
        %v6190 = vpop.f32.mrf.mxu0
        %v6191 = vadd.f32 0.0, %v6190
        %6192 = vdwg.mxu0
        %6193 = vmatpush.msra.mxu0 0.0
        %6194 = vmatpush.msra.mxu0 0.0
        %6195 = vmatpush.msra.mxu0 0.0
        %6196 = vmatpush.msra.mxu0 0.0
        %6197 = vmatpush.msra.mxu0 0.0
        %6198 = vmatpush.msra.mxu0 0.0
        %6199 = vmatpush.msra.mxu0 0.0
        %6200 = vmatpush.msra.mxu0 0.0
        %6201 = vmatpush.msra.mxu0 0.0
        %6202 = vmatpush.msra.mxu0 0.0
        %6203 = vmatpush.msra.mxu0 0.0
        %6204 = vmatpush.msra.mxu0 0.0
        %6205 = vmatpush.msra.mxu0 0.0
        %6206 = vmatpush.msra.mxu0 0.0
        %6207 = vmatpush.msra.mxu0 0.0
        %6208 = vmatpush.msra.mxu0 %v6102
        %6209 = vmatmul.f32.gmra.mxu0 %v6087
        %v6210 = vpop.f32.mrf.mxu0
        %v6211 = vadd.f32 0.0, %v6210
        %6212 = vdwg.mxu0
        %6213 = vmatpush.msra.mxu0 0.0
        %6214 = vmatpush.msra.mxu0 0.0
        %6215 = vmatpush.msra.mxu0 0.0
        %6216 = vmatpush.msra.mxu0 0.0
        %6217 = vmatpush.msra.mxu0 0.0
        %6218 = vmatpush.msra.mxu0 0.0
        %6219 = vmatpush.msra.mxu0 0.0
        %6220 = vmatpush.msra.mxu0 0.0
        %6221 = vmatpush.msra.mxu0 0.0
        %6222 = vmatpush.msra.mxu0 0.0
        %6223 = vmatpush.msra.mxu0 0.0
        %6224 = vmatpush.msra.mxu0 0.0
        %6225 = vmatpush.msra.mxu0 0.0
        %6226 = vmatpush.msra.mxu0 0.0
        %6227 = vmatpush.msra.mxu0 0.0
        %6228 = vmatpush.msra.mxu0 %v6105
        %6229 = vmatmul.f32.gmra.mxu0 %v6087
        %v6230 = vpop.f32.mrf.mxu0
        %v6231 = vadd.f32 0.0, %v6230
        %6232 = vdwg.mxu0
        %6233 = vmatpush.msra.mxu0 0.0
        %6234 = vmatpush.msra.mxu0 0.0
        %6235 = vmatpush.msra.mxu0 0.0
        %6236 = vmatpush.msra.mxu0 0.0
        %6237 = vmatpush.msra.mxu0 0.0
        %6238 = vmatpush.msra.mxu0 0.0
        %6239 = vmatpush.msra.mxu0 0.0
        %6240 = vmatpush.msra.mxu0 0.0
        %6241 = vmatpush.msra.mxu0 0.0
        %6242 = vmatpush.msra.mxu0 0.0
        %6243 = vmatpush.msra.mxu0 0.0
        %6244 = vmatpush.msra.mxu0 0.0
        %6245 = vmatpush.msra.mxu0 0.0
        %6246 = vmatpush.msra.mxu0 0.0
        %6247 = vmatpush.msra.mxu0 0.0
        %6248 = vmatpush.msra.mxu0 %v6108
        %6249 = vmatmul.f32.gmra.mxu0 %v6087
        %v6250 = vpop.f32.mrf.mxu0
        %v6251 = vadd.f32 0.0, %v6250
        %6252 = vdwg.mxu0
        %6253 = vmatpush.msra.mxu0 0.0
        %6254 = vmatpush.msra.mxu0 0.0
        %6255 = vmatpush.msra.mxu0 0.0
        %6256 = vmatpush.msra.mxu0 0.0
        %6257 = vmatpush.msra.mxu0 0.0
        %6258 = vmatpush.msra.mxu0 0.0
        %6259 = vmatpush.msra.mxu0 0.0
        %6260 = vmatpush.msra.mxu0 0.0
        %6261 = vmatpush.msra.mxu0 0.0
        %6262 = vmatpush.msra.mxu0 0.0
        %6263 = vmatpush.msra.mxu0 0.0
        %6264 = vmatpush.msra.mxu0 0.0
        %6265 = vmatpush.msra.mxu0 0.0
        %6266 = vmatpush.msra.mxu0 0.0
        %6267 = vmatpush.msra.mxu0 0.0
        %6268 = vmatpush.msra.mxu0 %v6111
        %6269 = vmatmul.f32.gmra.mxu0 %v6087
        %v6270 = vpop.f32.mrf.mxu0
        %v6271 = vadd.f32 0.0, %v6270
        %6272 = vdwg.mxu0
        %v6273 = vadd.f32 %v6033, %v6131
        %v6274 = vadd.f32 %v6034, %v6151
        %v6275 = vadd.f32 %v6035, %v6171
        %v6276 = vadd.f32 %v6036, %v6191
        %v6277 = vadd.f32 %v6037, %v6211
        %v6278 = vadd.f32 %v6038, %v6231
        %v6279 = vadd.f32 %v6039, %v6251
        %v6280 = vadd.f32 %v6040, %v6271
        %s6281 = scalar_lea.vmem %s4, 56
        %v6282 = vld [vmem:[%s6281] sm:$0xff]
        %6283 = vrot.lane.b32.xlu0 %v5783, 96
        %v6284 = vpop.permute.xlu0 %6283
        %6285 = vrot.lane.b32.xlu0 %v5784, 96
        %v6286 = vpop.permute.xlu0 %6285
        %6287 = vrot.lane.b32.xlu0 %v5785, 96
        %v6288 = vpop.permute.xlu0 %6287
        %6289 = vrot.lane.b32.xlu0 %v5786, 96
        %v6290 = vpop.permute.xlu0 %6289
        %6291 = vrot.lane.b32.xlu0 %v5787, 96
        %v6292 = vpop.permute.xlu0 %6291
        %6293 = vrot.lane.b32.xlu0 %v5788, 96
        %v6294 = vpop.permute.xlu0 %6293
        %6295 = vrot.lane.b32.xlu0 %v5789, 96
        %v6296 = vpop.permute.xlu0 %6295
        %6297 = vrot.lane.b32.xlu0 %v5790, 96
        %v6298 = vpop.permute.xlu0 %6297
        %6299 = vrot.lane.b32.xlu0 %v5791, 96
        %v6300 = vpop.permute.xlu0 %6299
        %vm6301 = vcmask 785408
        %v6302 = vsel %vm6301, %v6284, %v6286
        %v6303 = vsel %vm6301, %v6286, %v6288
        %v6304 = vsel %vm6301, %v6288, %v6290
        %v6305 = vsel %vm6301, %v6290, %v6292
        %v6306 = vsel %vm6301, %v6292, %v6294
        %v6307 = vsel %vm6301, %v6294, %v6296
        %v6308 = vsel %vm6301, %v6296, %v6298
        %v6309 = vsel %vm6301, %v6298, %v6300
        %v6311 = vsel %vm588, %v6282, 0
        %v6313 = vsel %vm685, %v6302, 0
        %v6315 = vsel %vm685, %v6303, 0
        %v6317 = vsel %vm685, %v6304, 0
        %v6319 = vsel %vm685, %v6305, 0
        %v6321 = vsel %vm685, %v6306, 0
        %v6323 = vsel %vm685, %v6307, 0
        %v6325 = vsel %vm685, %v6308, 0
        %v6327 = vsel %vm685, %v6309, 0
        %6329 = vmatpush.msra.mxu0 0.0
        %6330 = vmatpush.msra.mxu0 0.0
        %6331 = vmatpush.msra.mxu0 0.0
        %6332 = vmatpush.msra.mxu0 0.0
        %6333 = vmatpush.msra.mxu0 0.0
        %6334 = vmatpush.msra.mxu0 0.0
        %6335 = vmatpush.msra.mxu0 0.0
        %6336 = vmatpush.msra.mxu0 0.0
        %6337 = vmatpush.msra.mxu0 0.0
        %6338 = vmatpush.msra.mxu0 0.0
        %6339 = vmatpush.msra.mxu0 0.0
        %6340 = vmatpush.msra.mxu0 0.0
        %6341 = vmatpush.msra.mxu0 0.0
        %6342 = vmatpush.msra.mxu0 0.0
        %6343 = vmatpush.msra.mxu0 0.0
        %6344 = vmatpush.msra.mxu0 %v6313
        %6345 = vmatmul.f32.gmra.mxu0 %v6311
        %v6346 = vpop.f32.mrf.mxu0
        %v6347 = vadd.f32 0.0, %v6346
        %6348 = vdwg.mxu0
        %6349 = vmatpush.msra.mxu0 0.0
        %6350 = vmatpush.msra.mxu0 0.0
        %6351 = vmatpush.msra.mxu0 0.0
        %6352 = vmatpush.msra.mxu0 0.0
        %6353 = vmatpush.msra.mxu0 0.0
        %6354 = vmatpush.msra.mxu0 0.0
        %6355 = vmatpush.msra.mxu0 0.0
        %6356 = vmatpush.msra.mxu0 0.0
        %6357 = vmatpush.msra.mxu0 0.0
        %6358 = vmatpush.msra.mxu0 0.0
        %6359 = vmatpush.msra.mxu0 0.0
        %6360 = vmatpush.msra.mxu0 0.0
        %6361 = vmatpush.msra.mxu0 0.0
        %6362 = vmatpush.msra.mxu0 0.0
        %6363 = vmatpush.msra.mxu0 0.0
        %6364 = vmatpush.msra.mxu0 %v6315
        %6365 = vmatmul.f32.gmra.mxu0 %v6311
        %v6366 = vpop.f32.mrf.mxu0
        %v6367 = vadd.f32 0.0, %v6366
        %6368 = vdwg.mxu0
        %6369 = vmatpush.msra.mxu0 0.0
        %6370 = vmatpush.msra.mxu0 0.0
        %6371 = vmatpush.msra.mxu0 0.0
        %6372 = vmatpush.msra.mxu0 0.0
        %6373 = vmatpush.msra.mxu0 0.0
        %6374 = vmatpush.msra.mxu0 0.0
        %6375 = vmatpush.msra.mxu0 0.0
        %6376 = vmatpush.msra.mxu0 0.0
        %6377 = vmatpush.msra.mxu0 0.0
        %6378 = vmatpush.msra.mxu0 0.0
        %6379 = vmatpush.msra.mxu0 0.0
        %6380 = vmatpush.msra.mxu0 0.0
        %6381 = vmatpush.msra.mxu0 0.0
        %6382 = vmatpush.msra.mxu0 0.0
        %6383 = vmatpush.msra.mxu0 0.0
        %6384 = vmatpush.msra.mxu0 %v6317
        %6385 = vmatmul.f32.gmra.mxu0 %v6311
        %v6386 = vpop.f32.mrf.mxu0
        %v6387 = vadd.f32 0.0, %v6386
        %6388 = vdwg.mxu0
        %6389 = vmatpush.msra.mxu0 0.0
        %6390 = vmatpush.msra.mxu0 0.0
        %6391 = vmatpush.msra.mxu0 0.0
        %6392 = vmatpush.msra.mxu0 0.0
        %6393 = vmatpush.msra.mxu0 0.0
        %6394 = vmatpush.msra.mxu0 0.0
        %6395 = vmatpush.msra.mxu0 0.0
        %6396 = vmatpush.msra.mxu0 0.0
        %6397 = vmatpush.msra.mxu0 0.0
        %6398 = vmatpush.msra.mxu0 0.0
        %6399 = vmatpush.msra.mxu0 0.0
        %6400 = vmatpush.msra.mxu0 0.0
        %6401 = vmatpush.msra.mxu0 0.0
        %6402 = vmatpush.msra.mxu0 0.0
        %6403 = vmatpush.msra.mxu0 0.0
        %6404 = vmatpush.msra.mxu0 %v6319
        %6405 = vmatmul.f32.gmra.mxu0 %v6311
        %v6406 = vpop.f32.mrf.mxu0
        %v6407 = vadd.f32 0.0, %v6406
        %6408 = vdwg.mxu0
        %6409 = vmatpush.msra.mxu0 0.0
        %6410 = vmatpush.msra.mxu0 0.0
        %6411 = vmatpush.msra.mxu0 0.0
        %6412 = vmatpush.msra.mxu0 0.0
        %6413 = vmatpush.msra.mxu0 0.0
        %6414 = vmatpush.msra.mxu0 0.0
        %6415 = vmatpush.msra.mxu0 0.0
        %6416 = vmatpush.msra.mxu0 0.0
        %6417 = vmatpush.msra.mxu0 0.0
        %6418 = vmatpush.msra.mxu0 0.0
        %6419 = vmatpush.msra.mxu0 0.0
        %6420 = vmatpush.msra.mxu0 0.0
        %6421 = vmatpush.msra.mxu0 0.0
        %6422 = vmatpush.msra.mxu0 0.0
        %6423 = vmatpush.msra.mxu0 0.0
        %6424 = vmatpush.msra.mxu0 %v6321
        %6425 = vmatmul.f32.gmra.mxu0 %v6311
        %v6426 = vpop.f32.mrf.mxu0
        %v6427 = vadd.f32 0.0, %v6426
        %6428 = vdwg.mxu0
        %6429 = vmatpush.msra.mxu0 0.0
        %6430 = vmatpush.msra.mxu0 0.0
        %6431 = vmatpush.msra.mxu0 0.0
        %6432 = vmatpush.msra.mxu0 0.0
        %6433 = vmatpush.msra.mxu0 0.0
        %6434 = vmatpush.msra.mxu0 0.0
        %6435 = vmatpush.msra.mxu0 0.0
        %6436 = vmatpush.msra.mxu0 0.0
        %6437 = vmatpush.msra.mxu0 0.0
        %6438 = vmatpush.msra.mxu0 0.0
        %6439 = vmatpush.msra.mxu0 0.0
        %6440 = vmatpush.msra.mxu0 0.0
        %6441 = vmatpush.msra.mxu0 0.0
        %6442 = vmatpush.msra.mxu0 0.0
        %6443 = vmatpush.msra.mxu0 0.0
        %6444 = vmatpush.msra.mxu0 %v6323
        %6445 = vmatmul.f32.gmra.mxu0 %v6311
        %v6446 = vpop.f32.mrf.mxu0
        %v6447 = vadd.f32 0.0, %v6446
        %6448 = vdwg.mxu0
        %6449 = vmatpush.msra.mxu0 0.0
        %6450 = vmatpush.msra.mxu0 0.0
        %6451 = vmatpush.msra.mxu0 0.0
        %6452 = vmatpush.msra.mxu0 0.0
        %6453 = vmatpush.msra.mxu0 0.0
        %6454 = vmatpush.msra.mxu0 0.0
        %6455 = vmatpush.msra.mxu0 0.0
        %6456 = vmatpush.msra.mxu0 0.0
        %6457 = vmatpush.msra.mxu0 0.0
        %6458 = vmatpush.msra.mxu0 0.0
        %6459 = vmatpush.msra.mxu0 0.0
        %6460 = vmatpush.msra.mxu0 0.0
        %6461 = vmatpush.msra.mxu0 0.0
        %6462 = vmatpush.msra.mxu0 0.0
        %6463 = vmatpush.msra.mxu0 0.0
        %6464 = vmatpush.msra.mxu0 %v6325
        %6465 = vmatmul.f32.gmra.mxu0 %v6311
        %v6466 = vpop.f32.mrf.mxu0
        %v6467 = vadd.f32 0.0, %v6466
        %6468 = vdwg.mxu0
        %6469 = vmatpush.msra.mxu0 0.0
        %6470 = vmatpush.msra.mxu0 0.0
        %6471 = vmatpush.msra.mxu0 0.0
        %6472 = vmatpush.msra.mxu0 0.0
        %6473 = vmatpush.msra.mxu0 0.0
        %6474 = vmatpush.msra.mxu0 0.0
        %6475 = vmatpush.msra.mxu0 0.0
        %6476 = vmatpush.msra.mxu0 0.0
        %6477 = vmatpush.msra.mxu0 0.0
        %6478 = vmatpush.msra.mxu0 0.0
        %6479 = vmatpush.msra.mxu0 0.0
        %6480 = vmatpush.msra.mxu0 0.0
        %6481 = vmatpush.msra.mxu0 0.0
        %6482 = vmatpush.msra.mxu0 0.0
        %6483 = vmatpush.msra.mxu0 0.0
        %6484 = vmatpush.msra.mxu0 %v6327
        %6485 = vmatmul.f32.gmra.mxu0 %v6311
        %v6486 = vpop.f32.mrf.mxu0
        %v6487 = vadd.f32 0.0, %v6486
        %6488 = vdwg.mxu0
        %v6489 = vadd.f32 %v6273, %v6347
        %v6490 = vadd.f32 %v6274, %v6367
        %v6491 = vadd.f32 %v6275, %v6387
        %v6492 = vadd.f32 %v6276, %v6407
        %v6493 = vadd.f32 %v6277, %v6427
        %v6494 = vadd.f32 %v6278, %v6447
        %v6495 = vadd.f32 %v6279, %v6467
        %v6496 = vadd.f32 %v6280, %v6487
        %6497 = vrot.lane.b32.xlu0 %v5783, 95
        %v6498 = vpop.permute.xlu0 %6497
        %6499 = vrot.lane.b32.xlu0 %v5784, 95
        %v6500 = vpop.permute.xlu0 %6499
        %6501 = vrot.lane.b32.xlu0 %v5785, 95
        %v6502 = vpop.permute.xlu0 %6501
        %6503 = vrot.lane.b32.xlu0 %v5786, 95
        %v6504 = vpop.permute.xlu0 %6503
        %6505 = vrot.lane.b32.xlu0 %v5787, 95
        %v6506 = vpop.permute.xlu0 %6505
        %6507 = vrot.lane.b32.xlu0 %v5788, 95
        %v6508 = vpop.permute.xlu0 %6507
        %6509 = vrot.lane.b32.xlu0 %v5789, 95
        %v6510 = vpop.permute.xlu0 %6509
        %6511 = vrot.lane.b32.xlu0 %v5790, 95
        %v6512 = vpop.permute.xlu0 %6511
        %6513 = vrot.lane.b32.xlu0 %v5791, 95
        %v6514 = vpop.permute.xlu0 %6513
        %vm6515 = vcmask 777216
        %v6516 = vsel %vm6515, %v6498, %v6500
        %v6517 = vsel %vm6515, %v6500, %v6502
        %v6518 = vsel %vm6515, %v6502, %v6504
        %v6519 = vsel %vm6515, %v6504, %v6506
        %v6520 = vsel %vm6515, %v6506, %v6508
        %v6521 = vsel %vm6515, %v6508, %v6510
        %v6522 = vsel %vm6515, %v6510, %v6512
        %v6523 = vsel %vm6515, %v6512, %v6514
        %v6532 = vsel %vm5295, %v6516, 0.0
        %v6533 = vsel %vm5296, %v6517, 0.0
        %v6534 = vsel %vm5297, %v6518, 0.0
        %v6535 = vsel %vm5298, %v6519, 0.0
        %v6536 = vsel %vm5299, %v6520, 0.0
        %v6537 = vsel %vm5300, %v6521, 0.0
        %v6538 = vsel %vm5301, %v6522, 0.0
        %v6539 = vsel %vm5302, %v6523, 0.0
        %s6540 = scalar_lea.vmem %s4, 64
        %v6541 = vld [vmem:[%s6540] sm:$0xff]
        %v6543 = vsel %vm588, %v6541, 0
        %v6546 = vsel %vm685, %v6532, 0
        %v6549 = vsel %vm685, %v6533, 0
        %v6552 = vsel %vm685, %v6534, 0
        %v6555 = vsel %vm685, %v6535, 0
        %v6558 = vsel %vm685, %v6536, 0
        %v6561 = vsel %vm685, %v6537, 0
        %v6564 = vsel %vm685, %v6538, 0
        %v6567 = vsel %vm685, %v6539, 0
        %6569 = vmatpush.msra.mxu0 0.0
        %6570 = vmatpush.msra.mxu0 0.0
        %6571 = vmatpush.msra.mxu0 0.0
        %6572 = vmatpush.msra.mxu0 0.0
        %6573 = vmatpush.msra.mxu0 0.0
        %6574 = vmatpush.msra.mxu0 0.0
        %6575 = vmatpush.msra.mxu0 0.0
        %6576 = vmatpush.msra.mxu0 0.0
        %6577 = vmatpush.msra.mxu0 0.0
        %6578 = vmatpush.msra.mxu0 0.0
        %6579 = vmatpush.msra.mxu0 0.0
        %6580 = vmatpush.msra.mxu0 0.0
        %6581 = vmatpush.msra.mxu0 0.0
        %6582 = vmatpush.msra.mxu0 0.0
        %6583 = vmatpush.msra.mxu0 0.0
        %6584 = vmatpush.msra.mxu0 %v6546
        %6585 = vmatmul.f32.gmra.mxu0 %v6543
        %v6586 = vpop.f32.mrf.mxu0
        %v6587 = vadd.f32 0.0, %v6586
        %6588 = vdwg.mxu0
        %6589 = vmatpush.msra.mxu0 0.0
        %6590 = vmatpush.msra.mxu0 0.0
        %6591 = vmatpush.msra.mxu0 0.0
        %6592 = vmatpush.msra.mxu0 0.0
        %6593 = vmatpush.msra.mxu0 0.0
        %6594 = vmatpush.msra.mxu0 0.0
        %6595 = vmatpush.msra.mxu0 0.0
        %6596 = vmatpush.msra.mxu0 0.0
        %6597 = vmatpush.msra.mxu0 0.0
        %6598 = vmatpush.msra.mxu0 0.0
        %6599 = vmatpush.msra.mxu0 0.0
        %6600 = vmatpush.msra.mxu0 0.0
        %6601 = vmatpush.msra.mxu0 0.0
        %6602 = vmatpush.msra.mxu0 0.0
        %6603 = vmatpush.msra.mxu0 0.0
        %6604 = vmatpush.msra.mxu0 %v6549
        %6605 = vmatmul.f32.gmra.mxu0 %v6543
        %v6606 = vpop.f32.mrf.mxu0
        %v6607 = vadd.f32 0.0, %v6606
        %6608 = vdwg.mxu0
        %6609 = vmatpush.msra.mxu0 0.0
        %6610 = vmatpush.msra.mxu0 0.0
        %6611 = vmatpush.msra.mxu0 0.0
        %6612 = vmatpush.msra.mxu0 0.0
        %6613 = vmatpush.msra.mxu0 0.0
        %6614 = vmatpush.msra.mxu0 0.0
        %6615 = vmatpush.msra.mxu0 0.0
        %6616 = vmatpush.msra.mxu0 0.0
        %6617 = vmatpush.msra.mxu0 0.0
        %6618 = vmatpush.msra.mxu0 0.0
        %6619 = vmatpush.msra.mxu0 0.0
        %6620 = vmatpush.msra.mxu0 0.0
        %6621 = vmatpush.msra.mxu0 0.0
        %6622 = vmatpush.msra.mxu0 0.0
        %6623 = vmatpush.msra.mxu0 0.0
        %6624 = vmatpush.msra.mxu0 %v6552
        %6625 = vmatmul.f32.gmra.mxu0 %v6543
        %v6626 = vpop.f32.mrf.mxu0
        %v6627 = vadd.f32 0.0, %v6626
        %6628 = vdwg.mxu0
        %6629 = vmatpush.msra.mxu0 0.0
        %6630 = vmatpush.msra.mxu0 0.0
        %6631 = vmatpush.msra.mxu0 0.0
        %6632 = vmatpush.msra.mxu0 0.0
        %6633 = vmatpush.msra.mxu0 0.0
        %6634 = vmatpush.msra.mxu0 0.0
        %6635 = vmatpush.msra.mxu0 0.0
        %6636 = vmatpush.msra.mxu0 0.0
        %6637 = vmatpush.msra.mxu0 0.0
        %6638 = vmatpush.msra.mxu0 0.0
        %6639 = vmatpush.msra.mxu0 0.0
        %6640 = vmatpush.msra.mxu0 0.0
        %6641 = vmatpush.msra.mxu0 0.0
        %6642 = vmatpush.msra.mxu0 0.0
        %6643 = vmatpush.msra.mxu0 0.0
        %6644 = vmatpush.msra.mxu0 %v6555
        %6645 = vmatmul.f32.gmra.mxu0 %v6543
        %v6646 = vpop.f32.mrf.mxu0
        %v6647 = vadd.f32 0.0, %v6646
        %6648 = vdwg.mxu0
        %6649 = vmatpush.msra.mxu0 0.0
        %6650 = vmatpush.msra.mxu0 0.0
        %6651 = vmatpush.msra.mxu0 0.0
        %6652 = vmatpush.msra.mxu0 0.0
        %6653 = vmatpush.msra.mxu0 0.0
        %6654 = vmatpush.msra.mxu0 0.0
        %6655 = vmatpush.msra.mxu0 0.0
        %6656 = vmatpush.msra.mxu0 0.0
        %6657 = vmatpush.msra.mxu0 0.0
        %6658 = vmatpush.msra.mxu0 0.0
        %6659 = vmatpush.msra.mxu0 0.0
        %6660 = vmatpush.msra.mxu0 0.0
        %6661 = vmatpush.msra.mxu0 0.0
        %6662 = vmatpush.msra.mxu0 0.0
        %6663 = vmatpush.msra.mxu0 0.0
        %6664 = vmatpush.msra.mxu0 %v6558
        %6665 = vmatmul.f32.gmra.mxu0 %v6543
        %v6666 = vpop.f32.mrf.mxu0
        %v6667 = vadd.f32 0.0, %v6666
        %6668 = vdwg.mxu0
        %6669 = vmatpush.msra.mxu0 0.0
        %6670 = vmatpush.msra.mxu0 0.0
        %6671 = vmatpush.msra.mxu0 0.0
        %6672 = vmatpush.msra.mxu0 0.0
        %6673 = vmatpush.msra.mxu0 0.0
        %6674 = vmatpush.msra.mxu0 0.0
        %6675 = vmatpush.msra.mxu0 0.0
        %6676 = vmatpush.msra.mxu0 0.0
        %6677 = vmatpush.msra.mxu0 0.0
        %6678 = vmatpush.msra.mxu0 0.0
        %6679 = vmatpush.msra.mxu0 0.0
        %6680 = vmatpush.msra.mxu0 0.0
        %6681 = vmatpush.msra.mxu0 0.0
        %6682 = vmatpush.msra.mxu0 0.0
        %6683 = vmatpush.msra.mxu0 0.0
        %6684 = vmatpush.msra.mxu0 %v6561
        %6685 = vmatmul.f32.gmra.mxu0 %v6543
        %v6686 = vpop.f32.mrf.mxu0
        %v6687 = vadd.f32 0.0, %v6686
        %6688 = vdwg.mxu0
        %6689 = vmatpush.msra.mxu0 0.0
        %6690 = vmatpush.msra.mxu0 0.0
        %6691 = vmatpush.msra.mxu0 0.0
        %6692 = vmatpush.msra.mxu0 0.0
        %6693 = vmatpush.msra.mxu0 0.0
        %6694 = vmatpush.msra.mxu0 0.0
        %6695 = vmatpush.msra.mxu0 0.0
        %6696 = vmatpush.msra.mxu0 0.0
        %6697 = vmatpush.msra.mxu0 0.0
        %6698 = vmatpush.msra.mxu0 0.0
        %6699 = vmatpush.msra.mxu0 0.0
        %6700 = vmatpush.msra.mxu0 0.0
        %6701 = vmatpush.msra.mxu0 0.0
        %6702 = vmatpush.msra.mxu0 0.0
        %6703 = vmatpush.msra.mxu0 0.0
        %6704 = vmatpush.msra.mxu0 %v6564
        %6705 = vmatmul.f32.gmra.mxu0 %v6543
        %v6706 = vpop.f32.mrf.mxu0
        %v6707 = vadd.f32 0.0, %v6706
        %6708 = vdwg.mxu0
        %6709 = vmatpush.msra.mxu0 0.0
        %6710 = vmatpush.msra.mxu0 0.0
        %6711 = vmatpush.msra.mxu0 0.0
        %6712 = vmatpush.msra.mxu0 0.0
        %6713 = vmatpush.msra.mxu0 0.0
        %6714 = vmatpush.msra.mxu0 0.0
        %6715 = vmatpush.msra.mxu0 0.0
        %6716 = vmatpush.msra.mxu0 0.0
        %6717 = vmatpush.msra.mxu0 0.0
        %6718 = vmatpush.msra.mxu0 0.0
        %6719 = vmatpush.msra.mxu0 0.0
        %6720 = vmatpush.msra.mxu0 0.0
        %6721 = vmatpush.msra.mxu0 0.0
        %6722 = vmatpush.msra.mxu0 0.0
        %6723 = vmatpush.msra.mxu0 0.0
        %6724 = vmatpush.msra.mxu0 %v6567
        %6725 = vmatmul.f32.gmra.mxu0 %v6543
        %v6726 = vpop.f32.mrf.mxu0
        %v6727 = vadd.f32 0.0, %v6726
        %6728 = vdwg.mxu0
        %v6729 = vadd.f32 %v6489, %v6587
        %v6730 = vadd.f32 %v6490, %v6607
        %v6731 = vadd.f32 %v6491, %v6627
        %v6732 = vadd.f32 %v6492, %v6647
        %v6733 = vadd.f32 %v6493, %v6667
        %v6734 = vadd.f32 %v6494, %v6687
        %v6735 = vadd.f32 %v6495, %v6707
        %v6736 = vadd.f32 %v6496, %v6727
        %v6737 = vld [vmem:[%s5] sm:$0xff]
        %6739 = vset.pattern.permute.xlu0 0
        %6740 = vperm.xlu0 %6739, %v6737
        %v6741 = vpop.permute.xlu0 %6740
        %v6743 = vmul.f32 %v6729, %v6741
        %v6744 = vmul.f32 %v6730, %v6741
        %v6745 = vmul.f32 %v6731, %v6741
        %v6746 = vmul.f32 %v6732, %v6741
        %v6747 = vmul.f32 %v6733, %v6741
        %v6748 = vmul.f32 %v6734, %v6741
        %v6749 = vmul.f32 %v6735, %v6741
        %v6750 = vmul.f32 %v6736, %v6741
        %v6751 = vld [vmem:[%s6] sm:$0xff]
        %6753 = vset.pattern.permute.xlu0 0
        %6754 = vperm.xlu0 %6753, %v6751
        %v6755 = vpop.permute.xlu0 %6754
        %v6757 = vadd.f32 %v6743, %v6755
        %v6758 = vadd.f32 %v6744, %v6755
        %v6759 = vadd.f32 %v6745, %v6755
        %v6760 = vadd.f32 %v6746, %v6755
        %v6761 = vadd.f32 %v6747, %v6755
        %v6762 = vadd.f32 %v6748, %v6755
        %v6763 = vadd.f32 %v6749, %v6755
        %v6764 = vadd.f32 %v6750, %v6755
        %v6765 = vmax.f32 %v6757, 0.0
        %v6766 = vmax.f32 %v6758, 0.0
        %v6767 = vmax.f32 %v6759, 0.0
        %v6768 = vmax.f32 %v6760, 0.0
        %v6769 = vmax.f32 %v6761, 0.0
        %v6770 = vmax.f32 %v6762, 0.0
        %v6771 = vmax.f32 %v6763, 0.0
        %v6772 = vmax.f32 %v6764, 0.0
        %6773 = vst [vmem:[#allocation2 + $0x8] sm:$0xff] %v6765
        %6774 = vst [vmem:[#allocation2 + $0x10] sm:$0xff] %v6766
        %6775 = vst [vmem:[#allocation2 + $0x18] sm:$0xff] %v6767
        %6776 = vst [vmem:[#allocation2 + $0x20] sm:$0xff] %v6768
        %6777 = vst [vmem:[#allocation2 + $0x28] sm:$0xff] %v6769
        %6778 = vst [vmem:[#allocation2 + $0x30] sm:$0xff] %v6770
        %6779 = vst [vmem:[#allocation2 + $0x38] sm:$0xff] %v6771
        %6780 = vst [vmem:[#allocation2 + $0x40] sm:$0xff] %v6772
        %s6781 = scalar_lea.vmem %s7, 32
        %v6782 = vld [vmem:[%s6781] sm:$0xff]
        %v6783 = vld [vmem:[#allocation2 + $0x8] sm:$0xff]
        %v6784 = vld [vmem:[#allocation2 + $0x10] sm:$0xff]
        %v6785 = vld [vmem:[#allocation2 + $0x18] sm:$0xff]
        %v6786 = vld [vmem:[#allocation2 + $0x20] sm:$0xff]
        %v6787 = vld [vmem:[#allocation2 + $0x28] sm:$0xff]
        %v6788 = vld [vmem:[#allocation2 + $0x30] sm:$0xff]
        %v6789 = vld [vmem:[#allocation2 + $0x38] sm:$0xff]
        %v6790 = vld [vmem:[#allocation2 + $0x40] sm:$0xff]
        %v6791 = vld [vmem:[#allocation2] sm:$0xff]
        %6801 = vrot.lane.b32.xlu0 %v6791, 33
        %v6802 = vpop.permute.xlu0 %6801
        %6803 = vrot.lane.b32.xlu0 %v6783, 33
        %v6804 = vpop.permute.xlu0 %6803
        %6805 = vrot.lane.b32.xlu0 %v6784, 33
        %v6806 = vpop.permute.xlu0 %6805
        %6807 = vrot.lane.b32.xlu0 %v6785, 33
        %v6808 = vpop.permute.xlu0 %6807
        %6809 = vrot.lane.b32.xlu0 %v6786, 33
        %v6810 = vpop.permute.xlu0 %6809
        %6811 = vrot.lane.b32.xlu0 %v6787, 33
        %v6812 = vpop.permute.xlu0 %6811
        %6813 = vrot.lane.b32.xlu0 %v6788, 33
        %v6814 = vpop.permute.xlu0 %6813
        %6815 = vrot.lane.b32.xlu0 %v6789, 33
        %v6816 = vpop.permute.xlu0 %6815
        %6817 = vrot.lane.b32.xlu0 %v6790, 33
        %v6818 = vpop.permute.xlu0 %6817
        %v6819 = vsel %vm4679, %v6802, %v6804
        %v6820 = vsel %vm4679, %v6804, %v6806
        %v6821 = vsel %vm4679, %v6806, %v6808
        %v6822 = vsel %vm4679, %v6808, %v6810
        %v6823 = vsel %vm4679, %v6810, %v6812
        %v6824 = vsel %vm4679, %v6812, %v6814
        %v6825 = vsel %vm4679, %v6814, %v6816
        %v6826 = vsel %vm4679, %v6816, %v6818
        %v6835 = vsel %vm4644, %v6819, 0.0
        %v6836 = vsel %vm4645, %v6820, 0.0
        %v6837 = vsel %vm4646, %v6821, 0.0
        %v6838 = vsel %vm4647, %v6822, 0.0
        %v6839 = vsel %vm4648, %v6823, 0.0
        %v6840 = vsel %vm4649, %v6824, 0.0
        %v6841 = vsel %vm4650, %v6825, 0.0
        %v6842 = vsel %vm4651, %v6826, 0.0
        %v6843 = vld [vmem:[%s7] sm:$0xff]
        %vm6844 = vcmask 64512
        %v6846 = vsel %vm6844, %v6843, 0
        %6848 = vmatpush.msra.mxu0 0.0
        %6849 = vmatpush.msra.mxu0 0.0
        %6850 = vmatpush.msra.mxu0 0.0
        %6851 = vmatpush.msra.mxu0 0.0
        %6852 = vmatpush.msra.mxu0 0.0
        %6853 = vmatpush.msra.mxu0 0.0
        %6854 = vmatpush.msra.mxu0 0.0
        %6855 = vmatpush.msra.mxu0 0.0
        %6856 = vmatpush.msra.mxu0 0.0
        %6857 = vmatpush.msra.mxu0 0.0
        %6858 = vmatpush.msra.mxu0 0.0
        %6859 = vmatpush.msra.mxu0 0.0
        %6860 = vmatpush.msra.mxu0 0.0
        %6861 = vmatpush.msra.mxu0 0.0
        %6862 = vmatpush.msra.mxu0 0.0
        %6863 = vmatpush.msra.mxu0 %v6835
        %6864 = vmatmul.f32.gmra.mxu0 %v6846
        %v6865 = vpop.f32.mrf.mxu0
        %v6866 = vadd.f32 0.0, %v6865
        %6867 = vdwg.mxu0
        %6868 = vmatpush.msra.mxu0 0.0
        %6869 = vmatpush.msra.mxu0 0.0
        %6870 = vmatpush.msra.mxu0 0.0
        %6871 = vmatpush.msra.mxu0 0.0
        %6872 = vmatpush.msra.mxu0 0.0
        %6873 = vmatpush.msra.mxu0 0.0
        %6874 = vmatpush.msra.mxu0 0.0
        %6875 = vmatpush.msra.mxu0 0.0
        %6876 = vmatpush.msra.mxu0 0.0
        %6877 = vmatpush.msra.mxu0 0.0
        %6878 = vmatpush.msra.mxu0 0.0
        %6879 = vmatpush.msra.mxu0 0.0
        %6880 = vmatpush.msra.mxu0 0.0
        %6881 = vmatpush.msra.mxu0 0.0
        %6882 = vmatpush.msra.mxu0 0.0
        %6883 = vmatpush.msra.mxu0 %v6836
        %6884 = vmatmul.f32.gmra.mxu0 %v6846
        %v6885 = vpop.f32.mrf.mxu0
        %v6886 = vadd.f32 0.0, %v6885
        %6887 = vdwg.mxu0
        %6888 = vmatpush.msra.mxu0 0.0
        %6889 = vmatpush.msra.mxu0 0.0
        %6890 = vmatpush.msra.mxu0 0.0
        %6891 = vmatpush.msra.mxu0 0.0
        %6892 = vmatpush.msra.mxu0 0.0
        %6893 = vmatpush.msra.mxu0 0.0
        %6894 = vmatpush.msra.mxu0 0.0
        %6895 = vmatpush.msra.mxu0 0.0
        %6896 = vmatpush.msra.mxu0 0.0
        %6897 = vmatpush.msra.mxu0 0.0
        %6898 = vmatpush.msra.mxu0 0.0
        %6899 = vmatpush.msra.mxu0 0.0
        %6900 = vmatpush.msra.mxu0 0.0
        %6901 = vmatpush.msra.mxu0 0.0
        %6902 = vmatpush.msra.mxu0 0.0
        %6903 = vmatpush.msra.mxu0 %v6837
        %6904 = vmatmul.f32.gmra.mxu0 %v6846
        %v6905 = vpop.f32.mrf.mxu0
        %v6906 = vadd.f32 0.0, %v6905
        %6907 = vdwg.mxu0
        %6908 = vmatpush.msra.mxu0 0.0
        %6909 = vmatpush.msra.mxu0 0.0
        %6910 = vmatpush.msra.mxu0 0.0
        %6911 = vmatpush.msra.mxu0 0.0
        %6912 = vmatpush.msra.mxu0 0.0
        %6913 = vmatpush.msra.mxu0 0.0
        %6914 = vmatpush.msra.mxu0 0.0
        %6915 = vmatpush.msra.mxu0 0.0
        %6916 = vmatpush.msra.mxu0 0.0
        %6917 = vmatpush.msra.mxu0 0.0
        %6918 = vmatpush.msra.mxu0 0.0
        %6919 = vmatpush.msra.mxu0 0.0
        %6920 = vmatpush.msra.mxu0 0.0
        %6921 = vmatpush.msra.mxu0 0.0
        %6922 = vmatpush.msra.mxu0 0.0
        %6923 = vmatpush.msra.mxu0 %v6838
        %6924 = vmatmul.f32.gmra.mxu0 %v6846
        %v6925 = vpop.f32.mrf.mxu0
        %v6926 = vadd.f32 0.0, %v6925
        %6927 = vdwg.mxu0
        %6928 = vmatpush.msra.mxu0 0.0
        %6929 = vmatpush.msra.mxu0 0.0
        %6930 = vmatpush.msra.mxu0 0.0
        %6931 = vmatpush.msra.mxu0 0.0
        %6932 = vmatpush.msra.mxu0 0.0
        %6933 = vmatpush.msra.mxu0 0.0
        %6934 = vmatpush.msra.mxu0 0.0
        %6935 = vmatpush.msra.mxu0 0.0
        %6936 = vmatpush.msra.mxu0 0.0
        %6937 = vmatpush.msra.mxu0 0.0
        %6938 = vmatpush.msra.mxu0 0.0
        %6939 = vmatpush.msra.mxu0 0.0
        %6940 = vmatpush.msra.mxu0 0.0
        %6941 = vmatpush.msra.mxu0 0.0
        %6942 = vmatpush.msra.mxu0 0.0
        %6943 = vmatpush.msra.mxu0 %v6839
        %6944 = vmatmul.f32.gmra.mxu0 %v6846
        %v6945 = vpop.f32.mrf.mxu0
        %v6946 = vadd.f32 0.0, %v6945
        %6947 = vdwg.mxu0
        %6948 = vmatpush.msra.mxu0 0.0
        %6949 = vmatpush.msra.mxu0 0.0
        %6950 = vmatpush.msra.mxu0 0.0
        %6951 = vmatpush.msra.mxu0 0.0
        %6952 = vmatpush.msra.mxu0 0.0
        %6953 = vmatpush.msra.mxu0 0.0
        %6954 = vmatpush.msra.mxu0 0.0
        %6955 = vmatpush.msra.mxu0 0.0
        %6956 = vmatpush.msra.mxu0 0.0
        %6957 = vmatpush.msra.mxu0 0.0
        %6958 = vmatpush.msra.mxu0 0.0
        %6959 = vmatpush.msra.mxu0 0.0
        %6960 = vmatpush.msra.mxu0 0.0
        %6961 = vmatpush.msra.mxu0 0.0
        %6962 = vmatpush.msra.mxu0 0.0
        %6963 = vmatpush.msra.mxu0 %v6840
        %6964 = vmatmul.f32.gmra.mxu0 %v6846
        %v6965 = vpop.f32.mrf.mxu0
        %v6966 = vadd.f32 0.0, %v6965
        %6967 = vdwg.mxu0
        %6968 = vmatpush.msra.mxu0 0.0
        %6969 = vmatpush.msra.mxu0 0.0
        %6970 = vmatpush.msra.mxu0 0.0
        %6971 = vmatpush.msra.mxu0 0.0
        %6972 = vmatpush.msra.mxu0 0.0
        %6973 = vmatpush.msra.mxu0 0.0
        %6974 = vmatpush.msra.mxu0 0.0
        %6975 = vmatpush.msra.mxu0 0.0
        %6976 = vmatpush.msra.mxu0 0.0
        %6977 = vmatpush.msra.mxu0 0.0
        %6978 = vmatpush.msra.mxu0 0.0
        %6979 = vmatpush.msra.mxu0 0.0
        %6980 = vmatpush.msra.mxu0 0.0
        %6981 = vmatpush.msra.mxu0 0.0
        %6982 = vmatpush.msra.mxu0 0.0
        %6983 = vmatpush.msra.mxu0 %v6841
        %6984 = vmatmul.f32.gmra.mxu0 %v6846
        %v6985 = vpop.f32.mrf.mxu0
        %v6986 = vadd.f32 0.0, %v6985
        %6987 = vdwg.mxu0
        %6988 = vmatpush.msra.mxu0 0.0
        %6989 = vmatpush.msra.mxu0 0.0
        %6990 = vmatpush.msra.mxu0 0.0
        %6991 = vmatpush.msra.mxu0 0.0
        %6992 = vmatpush.msra.mxu0 0.0
        %6993 = vmatpush.msra.mxu0 0.0
        %6994 = vmatpush.msra.mxu0 0.0
        %6995 = vmatpush.msra.mxu0 0.0
        %6996 = vmatpush.msra.mxu0 0.0
        %6997 = vmatpush.msra.mxu0 0.0
        %6998 = vmatpush.msra.mxu0 0.0
        %6999 = vmatpush.msra.mxu0 0.0
        %7000 = vmatpush.msra.mxu0 0.0
        %7001 = vmatpush.msra.mxu0 0.0
        %7002 = vmatpush.msra.mxu0 0.0
        %7003 = vmatpush.msra.mxu0 %v6842
        %7004 = vmatmul.f32.gmra.mxu0 %v6846
        %v7005 = vpop.f32.mrf.mxu0
        %v7006 = vadd.f32 0.0, %v7005
        %7007 = vdwg.mxu0
        %v7009 = vsel %vm6844, %v6782, 0
        %7011 = vmatpush.msra.mxu0 0.0
        %7012 = vmatpush.msra.mxu0 0.0
        %7013 = vmatpush.msra.mxu0 0.0
        %7014 = vmatpush.msra.mxu0 0.0
        %7015 = vmatpush.msra.mxu0 0.0
        %7016 = vmatpush.msra.mxu0 0.0
        %7017 = vmatpush.msra.mxu0 0.0
        %7018 = vmatpush.msra.mxu0 0.0
        %7019 = vmatpush.msra.mxu0 0.0
        %7020 = vmatpush.msra.mxu0 0.0
        %7021 = vmatpush.msra.mxu0 0.0
        %7022 = vmatpush.msra.mxu0 0.0
        %7023 = vmatpush.msra.mxu0 0.0
        %7024 = vmatpush.msra.mxu0 0.0
        %7025 = vmatpush.msra.mxu0 0.0
        %7026 = vmatpush.msra.mxu0 %v6783
        %7027 = vmatmul.f32.gmra.mxu0 %v7009
        %v7028 = vpop.f32.mrf.mxu0
        %v7029 = vadd.f32 %v6866, %v7028
        %7030 = vdwg.mxu0
        %7031 = vmatpush.msra.mxu0 0.0
        %7032 = vmatpush.msra.mxu0 0.0
        %7033 = vmatpush.msra.mxu0 0.0
        %7034 = vmatpush.msra.mxu0 0.0
        %7035 = vmatpush.msra.mxu0 0.0
        %7036 = vmatpush.msra.mxu0 0.0
        %7037 = vmatpush.msra.mxu0 0.0
        %7038 = vmatpush.msra.mxu0 0.0
        %7039 = vmatpush.msra.mxu0 0.0
        %7040 = vmatpush.msra.mxu0 0.0
        %7041 = vmatpush.msra.mxu0 0.0
        %7042 = vmatpush.msra.mxu0 0.0
        %7043 = vmatpush.msra.mxu0 0.0
        %7044 = vmatpush.msra.mxu0 0.0
        %7045 = vmatpush.msra.mxu0 0.0
        %7046 = vmatpush.msra.mxu0 %v6784
        %7047 = vmatmul.f32.gmra.mxu0 %v7009
        %v7048 = vpop.f32.mrf.mxu0
        %v7049 = vadd.f32 %v6886, %v7048
        %7050 = vdwg.mxu0
        %7051 = vmatpush.msra.mxu0 0.0
        %7052 = vmatpush.msra.mxu0 0.0
        %7053 = vmatpush.msra.mxu0 0.0
        %7054 = vmatpush.msra.mxu0 0.0
        %7055 = vmatpush.msra.mxu0 0.0
        %7056 = vmatpush.msra.mxu0 0.0
        %7057 = vmatpush.msra.mxu0 0.0
        %7058 = vmatpush.msra.mxu0 0.0
        %7059 = vmatpush.msra.mxu0 0.0
        %7060 = vmatpush.msra.mxu0 0.0
        %7061 = vmatpush.msra.mxu0 0.0
        %7062 = vmatpush.msra.mxu0 0.0
        %7063 = vmatpush.msra.mxu0 0.0
        %7064 = vmatpush.msra.mxu0 0.0
        %7065 = vmatpush.msra.mxu0 0.0
        %7066 = vmatpush.msra.mxu0 %v6785
        %7067 = vmatmul.f32.gmra.mxu0 %v7009
        %v7068 = vpop.f32.mrf.mxu0
        %v7069 = vadd.f32 %v6906, %v7068
        %7070 = vdwg.mxu0
        %7071 = vmatpush.msra.mxu0 0.0
        %7072 = vmatpush.msra.mxu0 0.0
        %7073 = vmatpush.msra.mxu0 0.0
        %7074 = vmatpush.msra.mxu0 0.0
        %7075 = vmatpush.msra.mxu0 0.0
        %7076 = vmatpush.msra.mxu0 0.0
        %7077 = vmatpush.msra.mxu0 0.0
        %7078 = vmatpush.msra.mxu0 0.0
        %7079 = vmatpush.msra.mxu0 0.0
        %7080 = vmatpush.msra.mxu0 0.0
        %7081 = vmatpush.msra.mxu0 0.0
        %7082 = vmatpush.msra.mxu0 0.0
        %7083 = vmatpush.msra.mxu0 0.0
        %7084 = vmatpush.msra.mxu0 0.0
        %7085 = vmatpush.msra.mxu0 0.0
        %7086 = vmatpush.msra.mxu0 %v6786
        %7087 = vmatmul.f32.gmra.mxu0 %v7009
        %v7088 = vpop.f32.mrf.mxu0
        %v7089 = vadd.f32 %v6926, %v7088
        %7090 = vdwg.mxu0
        %7091 = vmatpush.msra.mxu0 0.0
        %7092 = vmatpush.msra.mxu0 0.0
        %7093 = vmatpush.msra.mxu0 0.0
        %7094 = vmatpush.msra.mxu0 0.0
        %7095 = vmatpush.msra.mxu0 0.0
        %7096 = vmatpush.msra.mxu0 0.0
        %7097 = vmatpush.msra.mxu0 0.0
        %7098 = vmatpush.msra.mxu0 0.0
        %7099 = vmatpush.msra.mxu0 0.0
        %7100 = vmatpush.msra.mxu0 0.0
        %7101 = vmatpush.msra.mxu0 0.0
        %7102 = vmatpush.msra.mxu0 0.0
        %7103 = vmatpush.msra.mxu0 0.0
        %7104 = vmatpush.msra.mxu0 0.0
        %7105 = vmatpush.msra.mxu0 0.0
        %7106 = vmatpush.msra.mxu0 %v6787
        %7107 = vmatmul.f32.gmra.mxu0 %v7009
        %v7108 = vpop.f32.mrf.mxu0
        %v7109 = vadd.f32 %v6946, %v7108
        %7110 = vdwg.mxu0
        %7111 = vmatpush.msra.mxu0 0.0
        %7112 = vmatpush.msra.mxu0 0.0
        %7113 = vmatpush.msra.mxu0 0.0
        %7114 = vmatpush.msra.mxu0 0.0
        %7115 = vmatpush.msra.mxu0 0.0
        %7116 = vmatpush.msra.mxu0 0.0
        %7117 = vmatpush.msra.mxu0 0.0
        %7118 = vmatpush.msra.mxu0 0.0
        %7119 = vmatpush.msra.mxu0 0.0
        %7120 = vmatpush.msra.mxu0 0.0
        %7121 = vmatpush.msra.mxu0 0.0
        %7122 = vmatpush.msra.mxu0 0.0
        %7123 = vmatpush.msra.mxu0 0.0
        %7124 = vmatpush.msra.mxu0 0.0
        %7125 = vmatpush.msra.mxu0 0.0
        %7126 = vmatpush.msra.mxu0 %v6788
        %7127 = vmatmul.f32.gmra.mxu0 %v7009
        %v7128 = vpop.f32.mrf.mxu0
        %v7129 = vadd.f32 %v6966, %v7128
        %7130 = vdwg.mxu0
        %7131 = vmatpush.msra.mxu0 0.0
        %7132 = vmatpush.msra.mxu0 0.0
        %7133 = vmatpush.msra.mxu0 0.0
        %7134 = vmatpush.msra.mxu0 0.0
        %7135 = vmatpush.msra.mxu0 0.0
        %7136 = vmatpush.msra.mxu0 0.0
        %7137 = vmatpush.msra.mxu0 0.0
        %7138 = vmatpush.msra.mxu0 0.0
        %7139 = vmatpush.msra.mxu0 0.0
        %7140 = vmatpush.msra.mxu0 0.0
        %7141 = vmatpush.msra.mxu0 0.0
        %7142 = vmatpush.msra.mxu0 0.0
        %7143 = vmatpush.msra.mxu0 0.0
        %7144 = vmatpush.msra.mxu0 0.0
        %7145 = vmatpush.msra.mxu0 0.0
        %7146 = vmatpush.msra.mxu0 %v6789
        %7147 = vmatmul.f32.gmra.mxu0 %v7009
        %v7148 = vpop.f32.mrf.mxu0
        %v7149 = vadd.f32 %v6986, %v7148
        %7150 = vdwg.mxu0
        %7151 = vmatpush.msra.mxu0 0.0
        %7152 = vmatpush.msra.mxu0 0.0
        %7153 = vmatpush.msra.mxu0 0.0
        %7154 = vmatpush.msra.mxu0 0.0
        %7155 = vmatpush.msra.mxu0 0.0
        %7156 = vmatpush.msra.mxu0 0.0
        %7157 = vmatpush.msra.mxu0 0.0
        %7158 = vmatpush.msra.mxu0 0.0
        %7159 = vmatpush.msra.mxu0 0.0
        %7160 = vmatpush.msra.mxu0 0.0
        %7161 = vmatpush.msra.mxu0 0.0
        %7162 = vmatpush.msra.mxu0 0.0
        %7163 = vmatpush.msra.mxu0 0.0
        %7164 = vmatpush.msra.mxu0 0.0
        %7165 = vmatpush.msra.mxu0 0.0
        %7166 = vmatpush.msra.mxu0 %v6790
        %7167 = vmatmul.f32.gmra.mxu0 %v7009
        %v7168 = vpop.f32.mrf.mxu0
        %v7169 = vadd.f32 %v7006, %v7168
        %7170 = vdwg.mxu0
        %s7171 = scalar_lea.vmem %s7, 8
        %v7172 = vld [vmem:[%s7171] sm:$0xff]
        %7173 = vrot.lane.b32.xlu0 %v6791, 32
        %v7174 = vpop.permute.xlu0 %7173
        %7175 = vrot.lane.b32.xlu0 %v6783, 32
        %v7176 = vpop.permute.xlu0 %7175
        %7177 = vrot.lane.b32.xlu0 %v6784, 32
        %v7178 = vpop.permute.xlu0 %7177
        %7179 = vrot.lane.b32.xlu0 %v6785, 32
        %v7180 = vpop.permute.xlu0 %7179
        %7181 = vrot.lane.b32.xlu0 %v6786, 32
        %v7182 = vpop.permute.xlu0 %7181
        %7183 = vrot.lane.b32.xlu0 %v6787, 32
        %v7184 = vpop.permute.xlu0 %7183
        %7185 = vrot.lane.b32.xlu0 %v6788, 32
        %v7186 = vpop.permute.xlu0 %7185
        %7187 = vrot.lane.b32.xlu0 %v6789, 32
        %v7188 = vpop.permute.xlu0 %7187
        %7189 = vrot.lane.b32.xlu0 %v6790, 32
        %v7190 = vpop.permute.xlu0 %7189
        %v7191 = vsel %vm5091, %v7174, %v7176
        %v7192 = vsel %vm5091, %v7176, %v7178
        %v7193 = vsel %vm5091, %v7178, %v7180
        %v7194 = vsel %vm5091, %v7180, %v7182
        %v7195 = vsel %vm5091, %v7182, %v7184
        %v7196 = vsel %vm5091, %v7184, %v7186
        %v7197 = vsel %vm5091, %v7186, %v7188
        %v7198 = vsel %vm5091, %v7188, %v7190
        %v7208 = vsel %vm6844, %v7172, 0
        %7210 = vmatpush.msra.mxu0 0.0
        %7211 = vmatpush.msra.mxu0 0.0
        %7212 = vmatpush.msra.mxu0 0.0
        %7213 = vmatpush.msra.mxu0 0.0
        %7214 = vmatpush.msra.mxu0 0.0
        %7215 = vmatpush.msra.mxu0 0.0
        %7216 = vmatpush.msra.mxu0 0.0
        %7217 = vmatpush.msra.mxu0 0.0
        %7218 = vmatpush.msra.mxu0 0.0
        %7219 = vmatpush.msra.mxu0 0.0
        %7220 = vmatpush.msra.mxu0 0.0
        %7221 = vmatpush.msra.mxu0 0.0
        %7222 = vmatpush.msra.mxu0 0.0
        %7223 = vmatpush.msra.mxu0 0.0
        %7224 = vmatpush.msra.mxu0 0.0
        %7225 = vmatpush.msra.mxu0 %v7191
        %7226 = vmatmul.f32.gmra.mxu0 %v7208
        %v7227 = vpop.f32.mrf.mxu0
        %v7228 = vadd.f32 0.0, %v7227
        %7229 = vdwg.mxu0
        %7230 = vmatpush.msra.mxu0 0.0
        %7231 = vmatpush.msra.mxu0 0.0
        %7232 = vmatpush.msra.mxu0 0.0
        %7233 = vmatpush.msra.mxu0 0.0
        %7234 = vmatpush.msra.mxu0 0.0
        %7235 = vmatpush.msra.mxu0 0.0
        %7236 = vmatpush.msra.mxu0 0.0
        %7237 = vmatpush.msra.mxu0 0.0
        %7238 = vmatpush.msra.mxu0 0.0
        %7239 = vmatpush.msra.mxu0 0.0
        %7240 = vmatpush.msra.mxu0 0.0
        %7241 = vmatpush.msra.mxu0 0.0
        %7242 = vmatpush.msra.mxu0 0.0
        %7243 = vmatpush.msra.mxu0 0.0
        %7244 = vmatpush.msra.mxu0 0.0
        %7245 = vmatpush.msra.mxu0 %v7192
        %7246 = vmatmul.f32.gmra.mxu0 %v7208
        %v7247 = vpop.f32.mrf.mxu0
        %v7248 = vadd.f32 0.0, %v7247
        %7249 = vdwg.mxu0
        %7250 = vmatpush.msra.mxu0 0.0
        %7251 = vmatpush.msra.mxu0 0.0
        %7252 = vmatpush.msra.mxu0 0.0
        %7253 = vmatpush.msra.mxu0 0.0
        %7254 = vmatpush.msra.mxu0 0.0
        %7255 = vmatpush.msra.mxu0 0.0
        %7256 = vmatpush.msra.mxu0 0.0
        %7257 = vmatpush.msra.mxu0 0.0
        %7258 = vmatpush.msra.mxu0 0.0
        %7259 = vmatpush.msra.mxu0 0.0
        %7260 = vmatpush.msra.mxu0 0.0
        %7261 = vmatpush.msra.mxu0 0.0
        %7262 = vmatpush.msra.mxu0 0.0
        %7263 = vmatpush.msra.mxu0 0.0
        %7264 = vmatpush.msra.mxu0 0.0
        %7265 = vmatpush.msra.mxu0 %v7193
        %7266 = vmatmul.f32.gmra.mxu0 %v7208
        %v7267 = vpop.f32.mrf.mxu0
        %v7268 = vadd.f32 0.0, %v7267
        %7269 = vdwg.mxu0
        %7270 = vmatpush.msra.mxu0 0.0
        %7271 = vmatpush.msra.mxu0 0.0
        %7272 = vmatpush.msra.mxu0 0.0
        %7273 = vmatpush.msra.mxu0 0.0
        %7274 = vmatpush.msra.mxu0 0.0
        %7275 = vmatpush.msra.mxu0 0.0
        %7276 = vmatpush.msra.mxu0 0.0
        %7277 = vmatpush.msra.mxu0 0.0
        %7278 = vmatpush.msra.mxu0 0.0
        %7279 = vmatpush.msra.mxu0 0.0
        %7280 = vmatpush.msra.mxu0 0.0
        %7281 = vmatpush.msra.mxu0 0.0
        %7282 = vmatpush.msra.mxu0 0.0
        %7283 = vmatpush.msra.mxu0 0.0
        %7284 = vmatpush.msra.mxu0 0.0
        %7285 = vmatpush.msra.mxu0 %v7194
        %7286 = vmatmul.f32.gmra.mxu0 %v7208
        %v7287 = vpop.f32.mrf.mxu0
        %v7288 = vadd.f32 0.0, %v7287
        %7289 = vdwg.mxu0
        %7290 = vmatpush.msra.mxu0 0.0
        %7291 = vmatpush.msra.mxu0 0.0
        %7292 = vmatpush.msra.mxu0 0.0
        %7293 = vmatpush.msra.mxu0 0.0
        %7294 = vmatpush.msra.mxu0 0.0
        %7295 = vmatpush.msra.mxu0 0.0
        %7296 = vmatpush.msra.mxu0 0.0
        %7297 = vmatpush.msra.mxu0 0.0
        %7298 = vmatpush.msra.mxu0 0.0
        %7299 = vmatpush.msra.mxu0 0.0
        %7300 = vmatpush.msra.mxu0 0.0
        %7301 = vmatpush.msra.mxu0 0.0
        %7302 = vmatpush.msra.mxu0 0.0
        %7303 = vmatpush.msra.mxu0 0.0
        %7304 = vmatpush.msra.mxu0 0.0
        %7305 = vmatpush.msra.mxu0 %v7195
        %7306 = vmatmul.f32.gmra.mxu0 %v7208
        %v7307 = vpop.f32.mrf.mxu0
        %v7308 = vadd.f32 0.0, %v7307
        %7309 = vdwg.mxu0
        %7310 = vmatpush.msra.mxu0 0.0
        %7311 = vmatpush.msra.mxu0 0.0
        %7312 = vmatpush.msra.mxu0 0.0
        %7313 = vmatpush.msra.mxu0 0.0
        %7314 = vmatpush.msra.mxu0 0.0
        %7315 = vmatpush.msra.mxu0 0.0
        %7316 = vmatpush.msra.mxu0 0.0
        %7317 = vmatpush.msra.mxu0 0.0
        %7318 = vmatpush.msra.mxu0 0.0
        %7319 = vmatpush.msra.mxu0 0.0
        %7320 = vmatpush.msra.mxu0 0.0
        %7321 = vmatpush.msra.mxu0 0.0
        %7322 = vmatpush.msra.mxu0 0.0
        %7323 = vmatpush.msra.mxu0 0.0
        %7324 = vmatpush.msra.mxu0 0.0
        %7325 = vmatpush.msra.mxu0 %v7196
        %7326 = vmatmul.f32.gmra.mxu0 %v7208
        %v7327 = vpop.f32.mrf.mxu0
        %v7328 = vadd.f32 0.0, %v7327
        %7329 = vdwg.mxu0
        %7330 = vmatpush.msra.mxu0 0.0
        %7331 = vmatpush.msra.mxu0 0.0
        %7332 = vmatpush.msra.mxu0 0.0
        %7333 = vmatpush.msra.mxu0 0.0
        %7334 = vmatpush.msra.mxu0 0.0
        %7335 = vmatpush.msra.mxu0 0.0
        %7336 = vmatpush.msra.mxu0 0.0
        %7337 = vmatpush.msra.mxu0 0.0
        %7338 = vmatpush.msra.mxu0 0.0
        %7339 = vmatpush.msra.mxu0 0.0
        %7340 = vmatpush.msra.mxu0 0.0
        %7341 = vmatpush.msra.mxu0 0.0
        %7342 = vmatpush.msra.mxu0 0.0
        %7343 = vmatpush.msra.mxu0 0.0
        %7344 = vmatpush.msra.mxu0 0.0
        %7345 = vmatpush.msra.mxu0 %v7197
        %7346 = vmatmul.f32.gmra.mxu0 %v7208
        %v7347 = vpop.f32.mrf.mxu0
        %v7348 = vadd.f32 0.0, %v7347
        %7349 = vdwg.mxu0
        %7350 = vmatpush.msra.mxu0 0.0
        %7351 = vmatpush.msra.mxu0 0.0
        %7352 = vmatpush.msra.mxu0 0.0
        %7353 = vmatpush.msra.mxu0 0.0
        %7354 = vmatpush.msra.mxu0 0.0
        %7355 = vmatpush.msra.mxu0 0.0
        %7356 = vmatpush.msra.mxu0 0.0
        %7357 = vmatpush.msra.mxu0 0.0
        %7358 = vmatpush.msra.mxu0 0.0
        %7359 = vmatpush.msra.mxu0 0.0
        %7360 = vmatpush.msra.mxu0 0.0
        %7361 = vmatpush.msra.mxu0 0.0
        %7362 = vmatpush.msra.mxu0 0.0
        %7363 = vmatpush.msra.mxu0 0.0
        %7364 = vmatpush.msra.mxu0 0.0
        %7365 = vmatpush.msra.mxu0 %v7198
        %7366 = vmatmul.f32.gmra.mxu0 %v7208
        %v7367 = vpop.f32.mrf.mxu0
        %v7368 = vadd.f32 0.0, %v7367
        %7369 = vdwg.mxu0
        %v7370 = vadd.f32 %v7029, %v7228
        %v7371 = vadd.f32 %v7049, %v7248
        %v7372 = vadd.f32 %v7069, %v7268
        %v7373 = vadd.f32 %v7089, %v7288
        %v7374 = vadd.f32 %v7109, %v7308
        %v7375 = vadd.f32 %v7129, %v7328
        %v7376 = vadd.f32 %v7149, %v7348
        %v7377 = vadd.f32 %v7169, %v7368
        %7378 = vrot.lane.b32.xlu0 %v6791, 31
        %v7379 = vpop.permute.xlu0 %7378
        %7380 = vrot.lane.b32.xlu0 %v6783, 31
        %v7381 = vpop.permute.xlu0 %7380
        %7382 = vrot.lane.b32.xlu0 %v6784, 31
        %v7383 = vpop.permute.xlu0 %7382
        %7384 = vrot.lane.b32.xlu0 %v6785, 31
        %v7385 = vpop.permute.xlu0 %7384
        %7386 = vrot.lane.b32.xlu0 %v6786, 31
        %v7387 = vpop.permute.xlu0 %7386
        %7388 = vrot.lane.b32.xlu0 %v6787, 31
        %v7389 = vpop.permute.xlu0 %7388
        %7390 = vrot.lane.b32.xlu0 %v6788, 31
        %v7391 = vpop.permute.xlu0 %7390
        %7392 = vrot.lane.b32.xlu0 %v6789, 31
        %v7393 = vpop.permute.xlu0 %7392
        %7394 = vrot.lane.b32.xlu0 %v6790, 31
        %v7395 = vpop.permute.xlu0 %7394
        %v7396 = vsel %vm5321, %v7379, %v7381
        %v7397 = vsel %vm5321, %v7381, %v7383
        %v7398 = vsel %vm5321, %v7383, %v7385
        %v7399 = vsel %vm5321, %v7385, %v7387
        %v7400 = vsel %vm5321, %v7387, %v7389
        %v7401 = vsel %vm5321, %v7389, %v7391
        %v7402 = vsel %vm5321, %v7391, %v7393
        %v7403 = vsel %vm5321, %v7393, %v7395
        %v7412 = vsel %vm5295, %v7396, 0.0
        %v7413 = vsel %vm5296, %v7397, 0.0
        %v7414 = vsel %vm5297, %v7398, 0.0
        %v7415 = vsel %vm5298, %v7399, 0.0
        %v7416 = vsel %vm5299, %v7400, 0.0
        %v7417 = vsel %vm5300, %v7401, 0.0
        %v7418 = vsel %vm5301, %v7402, 0.0
        %v7419 = vsel %vm5302, %v7403, 0.0
        %s7420 = scalar_lea.vmem %s7, 16
        %v7421 = vld [vmem:[%s7420] sm:$0xff]
        %v7423 = vsel %vm6844, %v7421, 0
        %7425 = vmatpush.msra.mxu0 0.0
        %7426 = vmatpush.msra.mxu0 0.0
        %7427 = vmatpush.msra.mxu0 0.0
        %7428 = vmatpush.msra.mxu0 0.0
        %7429 = vmatpush.msra.mxu0 0.0
        %7430 = vmatpush.msra.mxu0 0.0
        %7431 = vmatpush.msra.mxu0 0.0
        %7432 = vmatpush.msra.mxu0 0.0
        %7433 = vmatpush.msra.mxu0 0.0
        %7434 = vmatpush.msra.mxu0 0.0
        %7435 = vmatpush.msra.mxu0 0.0
        %7436 = vmatpush.msra.mxu0 0.0
        %7437 = vmatpush.msra.mxu0 0.0
        %7438 = vmatpush.msra.mxu0 0.0
        %7439 = vmatpush.msra.mxu0 0.0
        %7440 = vmatpush.msra.mxu0 %v7412
        %7441 = vmatmul.f32.gmra.mxu0 %v7423
        %v7442 = vpop.f32.mrf.mxu0
        %v7443 = vadd.f32 0.0, %v7442
        %7444 = vdwg.mxu0
        %7445 = vmatpush.msra.mxu0 0.0
        %7446 = vmatpush.msra.mxu0 0.0
        %7447 = vmatpush.msra.mxu0 0.0
        %7448 = vmatpush.msra.mxu0 0.0
        %7449 = vmatpush.msra.mxu0 0.0
        %7450 = vmatpush.msra.mxu0 0.0
        %7451 = vmatpush.msra.mxu0 0.0
        %7452 = vmatpush.msra.mxu0 0.0
        %7453 = vmatpush.msra.mxu0 0.0
        %7454 = vmatpush.msra.mxu0 0.0
        %7455 = vmatpush.msra.mxu0 0.0
        %7456 = vmatpush.msra.mxu0 0.0
        %7457 = vmatpush.msra.mxu0 0.0
        %7458 = vmatpush.msra.mxu0 0.0
        %7459 = vmatpush.msra.mxu0 0.0
        %7460 = vmatpush.msra.mxu0 %v7413
        %7461 = vmatmul.f32.gmra.mxu0 %v7423
        %v7462 = vpop.f32.mrf.mxu0
        %v7463 = vadd.f32 0.0, %v7462
        %7464 = vdwg.mxu0
        %7465 = vmatpush.msra.mxu0 0.0
        %7466 = vmatpush.msra.mxu0 0.0
        %7467 = vmatpush.msra.mxu0 0.0
        %7468 = vmatpush.msra.mxu0 0.0
        %7469 = vmatpush.msra.mxu0 0.0
        %7470 = vmatpush.msra.mxu0 0.0
        %7471 = vmatpush.msra.mxu0 0.0
        %7472 = vmatpush.msra.mxu0 0.0
        %7473 = vmatpush.msra.mxu0 0.0
        %7474 = vmatpush.msra.mxu0 0.0
        %7475 = vmatpush.msra.mxu0 0.0
        %7476 = vmatpush.msra.mxu0 0.0
        %7477 = vmatpush.msra.mxu0 0.0
        %7478 = vmatpush.msra.mxu0 0.0
        %7479 = vmatpush.msra.mxu0 0.0
        %7480 = vmatpush.msra.mxu0 %v7414
        %7481 = vmatmul.f32.gmra.mxu0 %v7423
        %v7482 = vpop.f32.mrf.mxu0
        %v7483 = vadd.f32 0.0, %v7482
        %7484 = vdwg.mxu0
        %7485 = vmatpush.msra.mxu0 0.0
        %7486 = vmatpush.msra.mxu0 0.0
        %7487 = vmatpush.msra.mxu0 0.0
        %7488 = vmatpush.msra.mxu0 0.0
        %7489 = vmatpush.msra.mxu0 0.0
        %7490 = vmatpush.msra.mxu0 0.0
        %7491 = vmatpush.msra.mxu0 0.0
        %7492 = vmatpush.msra.mxu0 0.0
        %7493 = vmatpush.msra.mxu0 0.0
        %7494 = vmatpush.msra.mxu0 0.0
        %7495 = vmatpush.msra.mxu0 0.0
        %7496 = vmatpush.msra.mxu0 0.0
        %7497 = vmatpush.msra.mxu0 0.0
        %7498 = vmatpush.msra.mxu0 0.0
        %7499 = vmatpush.msra.mxu0 0.0
        %7500 = vmatpush.msra.mxu0 %v7415
        %7501 = vmatmul.f32.gmra.mxu0 %v7423
        %v7502 = vpop.f32.mrf.mxu0
        %v7503 = vadd.f32 0.0, %v7502
        %7504 = vdwg.mxu0
        %7505 = vmatpush.msra.mxu0 0.0
        %7506 = vmatpush.msra.mxu0 0.0
        %7507 = vmatpush.msra.mxu0 0.0
        %7508 = vmatpush.msra.mxu0 0.0
        %7509 = vmatpush.msra.mxu0 0.0
        %7510 = vmatpush.msra.mxu0 0.0
        %7511 = vmatpush.msra.mxu0 0.0
        %7512 = vmatpush.msra.mxu0 0.0
        %7513 = vmatpush.msra.mxu0 0.0
        %7514 = vmatpush.msra.mxu0 0.0
        %7515 = vmatpush.msra.mxu0 0.0
        %7516 = vmatpush.msra.mxu0 0.0
        %7517 = vmatpush.msra.mxu0 0.0
        %7518 = vmatpush.msra.mxu0 0.0
        %7519 = vmatpush.msra.mxu0 0.0
        %7520 = vmatpush.msra.mxu0 %v7416
        %7521 = vmatmul.f32.gmra.mxu0 %v7423
        %v7522 = vpop.f32.mrf.mxu0
        %v7523 = vadd.f32 0.0, %v7522
        %7524 = vdwg.mxu0
        %7525 = vmatpush.msra.mxu0 0.0
        %7526 = vmatpush.msra.mxu0 0.0
        %7527 = vmatpush.msra.mxu0 0.0
        %7528 = vmatpush.msra.mxu0 0.0
        %7529 = vmatpush.msra.mxu0 0.0
        %7530 = vmatpush.msra.mxu0 0.0
        %7531 = vmatpush.msra.mxu0 0.0
        %7532 = vmatpush.msra.mxu0 0.0
        %7533 = vmatpush.msra.mxu0 0.0
        %7534 = vmatpush.msra.mxu0 0.0
        %7535 = vmatpush.msra.mxu0 0.0
        %7536 = vmatpush.msra.mxu0 0.0
        %7537 = vmatpush.msra.mxu0 0.0
        %7538 = vmatpush.msra.mxu0 0.0
        %7539 = vmatpush.msra.mxu0 0.0
        %7540 = vmatpush.msra.mxu0 %v7417
        %7541 = vmatmul.f32.gmra.mxu0 %v7423
        %v7542 = vpop.f32.mrf.mxu0
        %v7543 = vadd.f32 0.0, %v7542
        %7544 = vdwg.mxu0
        %7545 = vmatpush.msra.mxu0 0.0
        %7546 = vmatpush.msra.mxu0 0.0
        %7547 = vmatpush.msra.mxu0 0.0
        %7548 = vmatpush.msra.mxu0 0.0
        %7549 = vmatpush.msra.mxu0 0.0
        %7550 = vmatpush.msra.mxu0 0.0
        %7551 = vmatpush.msra.mxu0 0.0
        %7552 = vmatpush.msra.mxu0 0.0
        %7553 = vmatpush.msra.mxu0 0.0
        %7554 = vmatpush.msra.mxu0 0.0
        %7555 = vmatpush.msra.mxu0 0.0
        %7556 = vmatpush.msra.mxu0 0.0
        %7557 = vmatpush.msra.mxu0 0.0
        %7558 = vmatpush.msra.mxu0 0.0
        %7559 = vmatpush.msra.mxu0 0.0
        %7560 = vmatpush.msra.mxu0 %v7418
        %7561 = vmatmul.f32.gmra.mxu0 %v7423
        %v7562 = vpop.f32.mrf.mxu0
        %v7563 = vadd.f32 0.0, %v7562
        %7564 = vdwg.mxu0
        %7565 = vmatpush.msra.mxu0 0.0
        %7566 = vmatpush.msra.mxu0 0.0
        %7567 = vmatpush.msra.mxu0 0.0
        %7568 = vmatpush.msra.mxu0 0.0
        %7569 = vmatpush.msra.mxu0 0.0
        %7570 = vmatpush.msra.mxu0 0.0
        %7571 = vmatpush.msra.mxu0 0.0
        %7572 = vmatpush.msra.mxu0 0.0
        %7573 = vmatpush.msra.mxu0 0.0
        %7574 = vmatpush.msra.mxu0 0.0
        %7575 = vmatpush.msra.mxu0 0.0
        %7576 = vmatpush.msra.mxu0 0.0
        %7577 = vmatpush.msra.mxu0 0.0
        %7578 = vmatpush.msra.mxu0 0.0
        %7579 = vmatpush.msra.mxu0 0.0
        %7580 = vmatpush.msra.mxu0 %v7419
        %7581 = vmatmul.f32.gmra.mxu0 %v7423
        %v7582 = vpop.f32.mrf.mxu0
        %v7583 = vadd.f32 0.0, %v7582
        %7584 = vdwg.mxu0
        %v7585 = vadd.f32 %v7370, %v7443
        %v7586 = vadd.f32 %v7371, %v7463
        %v7587 = vadd.f32 %v7372, %v7483
        %v7588 = vadd.f32 %v7373, %v7503
        %v7589 = vadd.f32 %v7374, %v7523
        %v7590 = vadd.f32 %v7375, %v7543
        %v7591 = vadd.f32 %v7376, %v7563
        %v7592 = vadd.f32 %v7377, %v7583
        %7593 = vrot.lane.b32.xlu0 %v6791, 1
        %v7594 = vpop.permute.xlu0 %7593
        %7595 = vrot.lane.b32.xlu0 %v6783, 1
        %v7596 = vpop.permute.xlu0 %7595
        %7597 = vrot.lane.b32.xlu0 %v6784, 1
        %v7598 = vpop.permute.xlu0 %7597
        %7599 = vrot.lane.b32.xlu0 %v6785, 1
        %v7600 = vpop.permute.xlu0 %7599
        %7601 = vrot.lane.b32.xlu0 %v6786, 1
        %v7602 = vpop.permute.xlu0 %7601
        %7603 = vrot.lane.b32.xlu0 %v6787, 1
        %v7604 = vpop.permute.xlu0 %7603
        %7605 = vrot.lane.b32.xlu0 %v6788, 1
        %v7606 = vpop.permute.xlu0 %7605
        %7607 = vrot.lane.b32.xlu0 %v6789, 1
        %v7608 = vpop.permute.xlu0 %7607
        %7609 = vrot.lane.b32.xlu0 %v6790, 1
        %v7610 = vpop.permute.xlu0 %7609
        %v7611 = vsel %vm5561, %v7594, %v7596
        %v7612 = vsel %vm5561, %v7596, %v7598
        %v7613 = vsel %vm5561, %v7598, %v7600
        %v7614 = vsel %vm5561, %v7600, %v7602
        %v7615 = vsel %vm5561, %v7602, %v7604
        %v7616 = vsel %vm5561, %v7604, %v7606
        %v7617 = vsel %vm5561, %v7606, %v7608
        %v7618 = vsel %vm5561, %v7608, %v7610
        %v7627 = vsel %vm4644, %v7611, 0.0
        %v7628 = vsel %vm4645, %v7612, 0.0
        %v7629 = vsel %vm4646, %v7613, 0.0
        %v7630 = vsel %vm4647, %v7614, 0.0
        %v7631 = vsel %vm4648, %v7615, 0.0
        %v7632 = vsel %vm4649, %v7616, 0.0
        %v7633 = vsel %vm4650, %v7617, 0.0
        %v7634 = vsel %vm4651, %v7618, 0.0
        %s7635 = scalar_lea.vmem %s7, 24
        %v7636 = vld [vmem:[%s7635] sm:$0xff]
        %v7638 = vsel %vm6844, %v7636, 0
        %7640 = vmatpush.msra.mxu0 0.0
        %7641 = vmatpush.msra.mxu0 0.0
        %7642 = vmatpush.msra.mxu0 0.0
        %7643 = vmatpush.msra.mxu0 0.0
        %7644 = vmatpush.msra.mxu0 0.0
        %7645 = vmatpush.msra.mxu0 0.0
        %7646 = vmatpush.msra.mxu0 0.0
        %7647 = vmatpush.msra.mxu0 0.0
        %7648 = vmatpush.msra.mxu0 0.0
        %7649 = vmatpush.msra.mxu0 0.0
        %7650 = vmatpush.msra.mxu0 0.0
        %7651 = vmatpush.msra.mxu0 0.0
        %7652 = vmatpush.msra.mxu0 0.0
        %7653 = vmatpush.msra.mxu0 0.0
        %7654 = vmatpush.msra.mxu0 0.0
        %7655 = vmatpush.msra.mxu0 %v7627
        %7656 = vmatmul.f32.gmra.mxu0 %v7638
        %v7657 = vpop.f32.mrf.mxu0
        %v7658 = vadd.f32 0.0, %v7657
        %7659 = vdwg.mxu0
        %7660 = vmatpush.msra.mxu0 0.0
        %7661 = vmatpush.msra.mxu0 0.0
        %7662 = vmatpush.msra.mxu0 0.0
        %7663 = vmatpush.msra.mxu0 0.0
        %7664 = vmatpush.msra.mxu0 0.0
        %7665 = vmatpush.msra.mxu0 0.0
        %7666 = vmatpush.msra.mxu0 0.0
        %7667 = vmatpush.msra.mxu0 0.0
        %7668 = vmatpush.msra.mxu0 0.0
        %7669 = vmatpush.msra.mxu0 0.0
        %7670 = vmatpush.msra.mxu0 0.0
        %7671 = vmatpush.msra.mxu0 0.0
        %7672 = vmatpush.msra.mxu0 0.0
        %7673 = vmatpush.msra.mxu0 0.0
        %7674 = vmatpush.msra.mxu0 0.0
        %7675 = vmatpush.msra.mxu0 %v7628
        %7676 = vmatmul.f32.gmra.mxu0 %v7638
        %v7677 = vpop.f32.mrf.mxu0
        %v7678 = vadd.f32 0.0, %v7677
        %7679 = vdwg.mxu0
        %7680 = vmatpush.msra.mxu0 0.0
        %7681 = vmatpush.msra.mxu0 0.0
        %7682 = vmatpush.msra.mxu0 0.0
        %7683 = vmatpush.msra.mxu0 0.0
        %7684 = vmatpush.msra.mxu0 0.0
        %7685 = vmatpush.msra.mxu0 0.0
        %7686 = vmatpush.msra.mxu0 0.0
        %7687 = vmatpush.msra.mxu0 0.0
        %7688 = vmatpush.msra.mxu0 0.0
        %7689 = vmatpush.msra.mxu0 0.0
        %7690 = vmatpush.msra.mxu0 0.0
        %7691 = vmatpush.msra.mxu0 0.0
        %7692 = vmatpush.msra.mxu0 0.0
        %7693 = vmatpush.msra.mxu0 0.0
        %7694 = vmatpush.msra.mxu0 0.0
        %7695 = vmatpush.msra.mxu0 %v7629
        %7696 = vmatmul.f32.gmra.mxu0 %v7638
        %v7697 = vpop.f32.mrf.mxu0
        %v7698 = vadd.f32 0.0, %v7697
        %7699 = vdwg.mxu0
        %7700 = vmatpush.msra.mxu0 0.0
        %7701 = vmatpush.msra.mxu0 0.0
        %7702 = vmatpush.msra.mxu0 0.0
        %7703 = vmatpush.msra.mxu0 0.0
        %7704 = vmatpush.msra.mxu0 0.0
        %7705 = vmatpush.msra.mxu0 0.0
        %7706 = vmatpush.msra.mxu0 0.0
        %7707 = vmatpush.msra.mxu0 0.0
        %7708 = vmatpush.msra.mxu0 0.0
        %7709 = vmatpush.msra.mxu0 0.0
        %7710 = vmatpush.msra.mxu0 0.0
        %7711 = vmatpush.msra.mxu0 0.0
        %7712 = vmatpush.msra.mxu0 0.0
        %7713 = vmatpush.msra.mxu0 0.0
        %7714 = vmatpush.msra.mxu0 0.0
        %7715 = vmatpush.msra.mxu0 %v7630
        %7716 = vmatmul.f32.gmra.mxu0 %v7638
        %v7717 = vpop.f32.mrf.mxu0
        %v7718 = vadd.f32 0.0, %v7717
        %7719 = vdwg.mxu0
        %7720 = vmatpush.msra.mxu0 0.0
        %7721 = vmatpush.msra.mxu0 0.0
        %7722 = vmatpush.msra.mxu0 0.0
        %7723 = vmatpush.msra.mxu0 0.0
        %7724 = vmatpush.msra.mxu0 0.0
        %7725 = vmatpush.msra.mxu0 0.0
        %7726 = vmatpush.msra.mxu0 0.0
        %7727 = vmatpush.msra.mxu0 0.0
        %7728 = vmatpush.msra.mxu0 0.0
        %7729 = vmatpush.msra.mxu0 0.0
        %7730 = vmatpush.msra.mxu0 0.0
        %7731 = vmatpush.msra.mxu0 0.0
        %7732 = vmatpush.msra.mxu0 0.0
        %7733 = vmatpush.msra.mxu0 0.0
        %7734 = vmatpush.msra.mxu0 0.0
        %7735 = vmatpush.msra.mxu0 %v7631
        %7736 = vmatmul.f32.gmra.mxu0 %v7638
        %v7737 = vpop.f32.mrf.mxu0
        %v7738 = vadd.f32 0.0, %v7737
        %7739 = vdwg.mxu0
        %7740 = vmatpush.msra.mxu0 0.0
        %7741 = vmatpush.msra.mxu0 0.0
        %7742 = vmatpush.msra.mxu0 0.0
        %7743 = vmatpush.msra.mxu0 0.0
        %7744 = vmatpush.msra.mxu0 0.0
        %7745 = vmatpush.msra.mxu0 0.0
        %7746 = vmatpush.msra.mxu0 0.0
        %7747 = vmatpush.msra.mxu0 0.0
        %7748 = vmatpush.msra.mxu0 0.0
        %7749 = vmatpush.msra.mxu0 0.0
        %7750 = vmatpush.msra.mxu0 0.0
        %7751 = vmatpush.msra.mxu0 0.0
        %7752 = vmatpush.msra.mxu0 0.0
        %7753 = vmatpush.msra.mxu0 0.0
        %7754 = vmatpush.msra.mxu0 0.0
        %7755 = vmatpush.msra.mxu0 %v7632
        %7756 = vmatmul.f32.gmra.mxu0 %v7638
        %v7757 = vpop.f32.mrf.mxu0
        %v7758 = vadd.f32 0.0, %v7757
        %7759 = vdwg.mxu0
        %7760 = vmatpush.msra.mxu0 0.0
        %7761 = vmatpush.msra.mxu0 0.0
        %7762 = vmatpush.msra.mxu0 0.0
        %7763 = vmatpush.msra.mxu0 0.0
        %7764 = vmatpush.msra.mxu0 0.0
        %7765 = vmatpush.msra.mxu0 0.0
        %7766 = vmatpush.msra.mxu0 0.0
        %7767 = vmatpush.msra.mxu0 0.0
        %7768 = vmatpush.msra.mxu0 0.0
        %7769 = vmatpush.msra.mxu0 0.0
        %7770 = vmatpush.msra.mxu0 0.0
        %7771 = vmatpush.msra.mxu0 0.0
        %7772 = vmatpush.msra.mxu0 0.0
        %7773 = vmatpush.msra.mxu0 0.0
        %7774 = vmatpush.msra.mxu0 0.0
        %7775 = vmatpush.msra.mxu0 %v7633
        %7776 = vmatmul.f32.gmra.mxu0 %v7638
        %v7777 = vpop.f32.mrf.mxu0
        %v7778 = vadd.f32 0.0, %v7777
        %7779 = vdwg.mxu0
        %7780 = vmatpush.msra.mxu0 0.0
        %7781 = vmatpush.msra.mxu0 0.0
        %7782 = vmatpush.msra.mxu0 0.0
        %7783 = vmatpush.msra.mxu0 0.0
        %7784 = vmatpush.msra.mxu0 0.0
        %7785 = vmatpush.msra.mxu0 0.0
        %7786 = vmatpush.msra.mxu0 0.0
        %7787 = vmatpush.msra.mxu0 0.0
        %7788 = vmatpush.msra.mxu0 0.0
        %7789 = vmatpush.msra.mxu0 0.0
        %7790 = vmatpush.msra.mxu0 0.0
        %7791 = vmatpush.msra.mxu0 0.0
        %7792 = vmatpush.msra.mxu0 0.0
        %7793 = vmatpush.msra.mxu0 0.0
        %7794 = vmatpush.msra.mxu0 0.0
        %7795 = vmatpush.msra.mxu0 %v7634
        %7796 = vmatmul.f32.gmra.mxu0 %v7638
        %v7797 = vpop.f32.mrf.mxu0
        %v7798 = vadd.f32 0.0, %v7797
        %7799 = vdwg.mxu0
        %v7800 = vadd.f32 %v7585, %v7658
        %v7801 = vadd.f32 %v7586, %v7678
        %v7802 = vadd.f32 %v7587, %v7698
        %v7803 = vadd.f32 %v7588, %v7718
        %v7804 = vadd.f32 %v7589, %v7738
        %v7805 = vadd.f32 %v7590, %v7758
        %v7806 = vadd.f32 %v7591, %v7778
        %v7807 = vadd.f32 %v7592, %v7798
        %v7808 = vld [vmem:[#allocation2 + $0x8] sm:$0xff]
        %v7809 = vld [vmem:[#allocation2 + $0x10] sm:$0xff]
        %v7810 = vld [vmem:[#allocation2 + $0x18] sm:$0xff]
        %v7811 = vld [vmem:[#allocation2 + $0x20] sm:$0xff]
        %v7812 = vld [vmem:[#allocation2 + $0x28] sm:$0xff]
        %v7813 = vld [vmem:[#allocation2 + $0x30] sm:$0xff]
        %v7814 = vld [vmem:[#allocation2 + $0x38] sm:$0xff]
        %v7815 = vld [vmem:[#allocation2 + $0x40] sm:$0xff]
        %v7816 = vld [vmem:[#allocation2 + $0x48] sm:$0xff]
        %7826 = vrot.lane.b32.xlu0 %v7808, 127
        %v7827 = vpop.permute.xlu0 %7826
        %7828 = vrot.lane.b32.xlu0 %v7809, 127
        %v7829 = vpop.permute.xlu0 %7828
        %7830 = vrot.lane.b32.xlu0 %v7810, 127
        %v7831 = vpop.permute.xlu0 %7830
        %7832 = vrot.lane.b32.xlu0 %v7811, 127
        %v7833 = vpop.permute.xlu0 %7832
        %7834 = vrot.lane.b32.xlu0 %v7812, 127
        %v7835 = vpop.permute.xlu0 %7834
        %7836 = vrot.lane.b32.xlu0 %v7813, 127
        %v7837 = vpop.permute.xlu0 %7836
        %7838 = vrot.lane.b32.xlu0 %v7814, 127
        %v7839 = vpop.permute.xlu0 %7838
        %7840 = vrot.lane.b32.xlu0 %v7815, 127
        %v7841 = vpop.permute.xlu0 %7840
        %7842 = vrot.lane.b32.xlu0 %v7816, 127
        %v7843 = vpop.permute.xlu0 %7842
        %v7844 = vsel %vm5819, %v7827, %v7829
        %v7845 = vsel %vm5819, %v7829, %v7831
        %v7846 = vsel %vm5819, %v7831, %v7833
        %v7847 = vsel %vm5819, %v7833, %v7835
        %v7848 = vsel %vm5819, %v7835, %v7837
        %v7849 = vsel %vm5819, %v7837, %v7839
        %v7850 = vsel %vm5819, %v7839, %v7841
        %v7851 = vsel %vm5819, %v7841, %v7843
        %v7860 = vsel %vm5295, %v7844, 0.0
        %v7861 = vsel %vm5296, %v7845, 0.0
        %v7862 = vsel %vm5297, %v7846, 0.0
        %v7863 = vsel %vm5298, %v7847, 0.0
        %v7864 = vsel %vm5299, %v7848, 0.0
        %v7865 = vsel %vm5300, %v7849, 0.0
        %v7866 = vsel %vm5301, %v7850, 0.0
        %v7867 = vsel %vm5302, %v7851, 0.0
        %s7868 = scalar_lea.vmem %s7, 40
        %v7869 = vld [vmem:[%s7868] sm:$0xff]
        %v7871 = vsel %vm6844, %v7869, 0
        %7873 = vmatpush.msra.mxu0 0.0
        %7874 = vmatpush.msra.mxu0 0.0
        %7875 = vmatpush.msra.mxu0 0.0
        %7876 = vmatpush.msra.mxu0 0.0
        %7877 = vmatpush.msra.mxu0 0.0
        %7878 = vmatpush.msra.mxu0 0.0
        %7879 = vmatpush.msra.mxu0 0.0
        %7880 = vmatpush.msra.mxu0 0.0
        %7881 = vmatpush.msra.mxu0 0.0
        %7882 = vmatpush.msra.mxu0 0.0
        %7883 = vmatpush.msra.mxu0 0.0
        %7884 = vmatpush.msra.mxu0 0.0
        %7885 = vmatpush.msra.mxu0 0.0
        %7886 = vmatpush.msra.mxu0 0.0
        %7887 = vmatpush.msra.mxu0 0.0
        %7888 = vmatpush.msra.mxu0 %v7860
        %7889 = vmatmul.f32.gmra.mxu0 %v7871
        %v7890 = vpop.f32.mrf.mxu0
        %v7891 = vadd.f32 0.0, %v7890
        %7892 = vdwg.mxu0
        %7893 = vmatpush.msra.mxu0 0.0
        %7894 = vmatpush.msra.mxu0 0.0
        %7895 = vmatpush.msra.mxu0 0.0
        %7896 = vmatpush.msra.mxu0 0.0
        %7897 = vmatpush.msra.mxu0 0.0
        %7898 = vmatpush.msra.mxu0 0.0
        %7899 = vmatpush.msra.mxu0 0.0
        %7900 = vmatpush.msra.mxu0 0.0
        %7901 = vmatpush.msra.mxu0 0.0
        %7902 = vmatpush.msra.mxu0 0.0
        %7903 = vmatpush.msra.mxu0 0.0
        %7904 = vmatpush.msra.mxu0 0.0
        %7905 = vmatpush.msra.mxu0 0.0
        %7906 = vmatpush.msra.mxu0 0.0
        %7907 = vmatpush.msra.mxu0 0.0
        %7908 = vmatpush.msra.mxu0 %v7861
        %7909 = vmatmul.f32.gmra.mxu0 %v7871
        %v7910 = vpop.f32.mrf.mxu0
        %v7911 = vadd.f32 0.0, %v7910
        %7912 = vdwg.mxu0
        %7913 = vmatpush.msra.mxu0 0.0
        %7914 = vmatpush.msra.mxu0 0.0
        %7915 = vmatpush.msra.mxu0 0.0
        %7916 = vmatpush.msra.mxu0 0.0
        %7917 = vmatpush.msra.mxu0 0.0
        %7918 = vmatpush.msra.mxu0 0.0
        %7919 = vmatpush.msra.mxu0 0.0
        %7920 = vmatpush.msra.mxu0 0.0
        %7921 = vmatpush.msra.mxu0 0.0
        %7922 = vmatpush.msra.mxu0 0.0
        %7923 = vmatpush.msra.mxu0 0.0
        %7924 = vmatpush.msra.mxu0 0.0
        %7925 = vmatpush.msra.mxu0 0.0
        %7926 = vmatpush.msra.mxu0 0.0
        %7927 = vmatpush.msra.mxu0 0.0
        %7928 = vmatpush.msra.mxu0 %v7862
        %7929 = vmatmul.f32.gmra.mxu0 %v7871
        %v7930 = vpop.f32.mrf.mxu0
        %v7931 = vadd.f32 0.0, %v7930
        %7932 = vdwg.mxu0
        %7933 = vmatpush.msra.mxu0 0.0
        %7934 = vmatpush.msra.mxu0 0.0
        %7935 = vmatpush.msra.mxu0 0.0
        %7936 = vmatpush.msra.mxu0 0.0
        %7937 = vmatpush.msra.mxu0 0.0
        %7938 = vmatpush.msra.mxu0 0.0
        %7939 = vmatpush.msra.mxu0 0.0
        %7940 = vmatpush.msra.mxu0 0.0
        %7941 = vmatpush.msra.mxu0 0.0
        %7942 = vmatpush.msra.mxu0 0.0
        %7943 = vmatpush.msra.mxu0 0.0
        %7944 = vmatpush.msra.mxu0 0.0
        %7945 = vmatpush.msra.mxu0 0.0
        %7946 = vmatpush.msra.mxu0 0.0
        %7947 = vmatpush.msra.mxu0 0.0
        %7948 = vmatpush.msra.mxu0 %v7863
        %7949 = vmatmul.f32.gmra.mxu0 %v7871
        %v7950 = vpop.f32.mrf.mxu0
        %v7951 = vadd.f32 0.0, %v7950
        %7952 = vdwg.mxu0
        %7953 = vmatpush.msra.mxu0 0.0
        %7954 = vmatpush.msra.mxu0 0.0
        %7955 = vmatpush.msra.mxu0 0.0
        %7956 = vmatpush.msra.mxu0 0.0
        %7957 = vmatpush.msra.mxu0 0.0
        %7958 = vmatpush.msra.mxu0 0.0
        %7959 = vmatpush.msra.mxu0 0.0
        %7960 = vmatpush.msra.mxu0 0.0
        %7961 = vmatpush.msra.mxu0 0.0
        %7962 = vmatpush.msra.mxu0 0.0
        %7963 = vmatpush.msra.mxu0 0.0
        %7964 = vmatpush.msra.mxu0 0.0
        %7965 = vmatpush.msra.mxu0 0.0
        %7966 = vmatpush.msra.mxu0 0.0
        %7967 = vmatpush.msra.mxu0 0.0
        %7968 = vmatpush.msra.mxu0 %v7864
        %7969 = vmatmul.f32.gmra.mxu0 %v7871
        %v7970 = vpop.f32.mrf.mxu0
        %v7971 = vadd.f32 0.0, %v7970
        %7972 = vdwg.mxu0
        %7973 = vmatpush.msra.mxu0 0.0
        %7974 = vmatpush.msra.mxu0 0.0
        %7975 = vmatpush.msra.mxu0 0.0
        %7976 = vmatpush.msra.mxu0 0.0
        %7977 = vmatpush.msra.mxu0 0.0
        %7978 = vmatpush.msra.mxu0 0.0
        %7979 = vmatpush.msra.mxu0 0.0
        %7980 = vmatpush.msra.mxu0 0.0
        %7981 = vmatpush.msra.mxu0 0.0
        %7982 = vmatpush.msra.mxu0 0.0
        %7983 = vmatpush.msra.mxu0 0.0
        %7984 = vmatpush.msra.mxu0 0.0
        %7985 = vmatpush.msra.mxu0 0.0
        %7986 = vmatpush.msra.mxu0 0.0
        %7987 = vmatpush.msra.mxu0 0.0
        %7988 = vmatpush.msra.mxu0 %v7865
        %7989 = vmatmul.f32.gmra.mxu0 %v7871
        %v7990 = vpop.f32.mrf.mxu0
        %v7991 = vadd.f32 0.0, %v7990
        %7992 = vdwg.mxu0
        %7993 = vmatpush.msra.mxu0 0.0
        %7994 = vmatpush.msra.mxu0 0.0
        %7995 = vmatpush.msra.mxu0 0.0
        %7996 = vmatpush.msra.mxu0 0.0
        %7997 = vmatpush.msra.mxu0 0.0
        %7998 = vmatpush.msra.mxu0 0.0
        %7999 = vmatpush.msra.mxu0 0.0
        %8000 = vmatpush.msra.mxu0 0.0
        %8001 = vmatpush.msra.mxu0 0.0
        %8002 = vmatpush.msra.mxu0 0.0
        %8003 = vmatpush.msra.mxu0 0.0
        %8004 = vmatpush.msra.mxu0 0.0
        %8005 = vmatpush.msra.mxu0 0.0
        %8006 = vmatpush.msra.mxu0 0.0
        %8007 = vmatpush.msra.mxu0 0.0
        %8008 = vmatpush.msra.mxu0 %v7866
        %8009 = vmatmul.f32.gmra.mxu0 %v7871
        %v8010 = vpop.f32.mrf.mxu0
        %v8011 = vadd.f32 0.0, %v8010
        %8012 = vdwg.mxu0
        %8013 = vmatpush.msra.mxu0 0.0
        %8014 = vmatpush.msra.mxu0 0.0
        %8015 = vmatpush.msra.mxu0 0.0
        %8016 = vmatpush.msra.mxu0 0.0
        %8017 = vmatpush.msra.mxu0 0.0
        %8018 = vmatpush.msra.mxu0 0.0
        %8019 = vmatpush.msra.mxu0 0.0
        %8020 = vmatpush.msra.mxu0 0.0
        %8021 = vmatpush.msra.mxu0 0.0
        %8022 = vmatpush.msra.mxu0 0.0
        %8023 = vmatpush.msra.mxu0 0.0
        %8024 = vmatpush.msra.mxu0 0.0
        %8025 = vmatpush.msra.mxu0 0.0
        %8026 = vmatpush.msra.mxu0 0.0
        %8027 = vmatpush.msra.mxu0 0.0
        %8028 = vmatpush.msra.mxu0 %v7867
        %8029 = vmatmul.f32.gmra.mxu0 %v7871
        %v8030 = vpop.f32.mrf.mxu0
        %v8031 = vadd.f32 0.0, %v8030
        %8032 = vdwg.mxu0
        %v8033 = vadd.f32 %v7800, %v7891
        %v8034 = vadd.f32 %v7801, %v7911
        %v8035 = vadd.f32 %v7802, %v7931
        %v8036 = vadd.f32 %v7803, %v7951
        %v8037 = vadd.f32 %v7804, %v7971
        %v8038 = vadd.f32 %v7805, %v7991
        %v8039 = vadd.f32 %v7806, %v8011
        %v8040 = vadd.f32 %v7807, %v8031
        %8041 = vrot.lane.b32.xlu0 %v7808, 97
        %v8042 = vpop.permute.xlu0 %8041
        %8043 = vrot.lane.b32.xlu0 %v7809, 97
        %v8044 = vpop.permute.xlu0 %8043
        %8045 = vrot.lane.b32.xlu0 %v7810, 97
        %v8046 = vpop.permute.xlu0 %8045
        %8047 = vrot.lane.b32.xlu0 %v7811, 97
        %v8048 = vpop.permute.xlu0 %8047
        %8049 = vrot.lane.b32.xlu0 %v7812, 97
        %v8050 = vpop.permute.xlu0 %8049
        %8051 = vrot.lane.b32.xlu0 %v7813, 97
        %v8052 = vpop.permute.xlu0 %8051
        %8053 = vrot.lane.b32.xlu0 %v7814, 97
        %v8054 = vpop.permute.xlu0 %8053
        %8055 = vrot.lane.b32.xlu0 %v7815, 97
        %v8056 = vpop.permute.xlu0 %8055
        %8057 = vrot.lane.b32.xlu0 %v7816, 97
        %v8058 = vpop.permute.xlu0 %8057
        %v8059 = vsel %vm6059, %v8042, %v8044
        %v8060 = vsel %vm6059, %v8044, %v8046
        %v8061 = vsel %vm6059, %v8046, %v8048
        %v8062 = vsel %vm6059, %v8048, %v8050
        %v8063 = vsel %vm6059, %v8050, %v8052
        %v8064 = vsel %vm6059, %v8052, %v8054
        %v8065 = vsel %vm6059, %v8054, %v8056
        %v8066 = vsel %vm6059, %v8056, %v8058
        %v8075 = vsel %vm4644, %v8059, 0.0
        %v8076 = vsel %vm4645, %v8060, 0.0
        %v8077 = vsel %vm4646, %v8061, 0.0
        %v8078 = vsel %vm4647, %v8062, 0.0
        %v8079 = vsel %vm4648, %v8063, 0.0
        %v8080 = vsel %vm4649, %v8064, 0.0
        %v8081 = vsel %vm4650, %v8065, 0.0
        %v8082 = vsel %vm4651, %v8066, 0.0
        %s8083 = scalar_lea.vmem %s7, 48
        %v8084 = vld [vmem:[%s8083] sm:$0xff]
        %v8086 = vsel %vm6844, %v8084, 0
        %8088 = vmatpush.msra.mxu0 0.0
        %8089 = vmatpush.msra.mxu0 0.0
        %8090 = vmatpush.msra.mxu0 0.0
        %8091 = vmatpush.msra.mxu0 0.0
        %8092 = vmatpush.msra.mxu0 0.0
        %8093 = vmatpush.msra.mxu0 0.0
        %8094 = vmatpush.msra.mxu0 0.0
        %8095 = vmatpush.msra.mxu0 0.0
        %8096 = vmatpush.msra.mxu0 0.0
        %8097 = vmatpush.msra.mxu0 0.0
        %8098 = vmatpush.msra.mxu0 0.0
        %8099 = vmatpush.msra.mxu0 0.0
        %8100 = vmatpush.msra.mxu0 0.0
        %8101 = vmatpush.msra.mxu0 0.0
        %8102 = vmatpush.msra.mxu0 0.0
        %8103 = vmatpush.msra.mxu0 %v8075
        %8104 = vmatmul.f32.gmra.mxu0 %v8086
        %v8105 = vpop.f32.mrf.mxu0
        %v8106 = vadd.f32 0.0, %v8105
        %8107 = vdwg.mxu0
        %8108 = vmatpush.msra.mxu0 0.0
        %8109 = vmatpush.msra.mxu0 0.0
        %8110 = vmatpush.msra.mxu0 0.0
        %8111 = vmatpush.msra.mxu0 0.0
        %8112 = vmatpush.msra.mxu0 0.0
        %8113 = vmatpush.msra.mxu0 0.0
        %8114 = vmatpush.msra.mxu0 0.0
        %8115 = vmatpush.msra.mxu0 0.0
        %8116 = vmatpush.msra.mxu0 0.0
        %8117 = vmatpush.msra.mxu0 0.0
        %8118 = vmatpush.msra.mxu0 0.0
        %8119 = vmatpush.msra.mxu0 0.0
        %8120 = vmatpush.msra.mxu0 0.0
        %8121 = vmatpush.msra.mxu0 0.0
        %8122 = vmatpush.msra.mxu0 0.0
        %8123 = vmatpush.msra.mxu0 %v8076
        %8124 = vmatmul.f32.gmra.mxu0 %v8086
        %v8125 = vpop.f32.mrf.mxu0
        %v8126 = vadd.f32 0.0, %v8125
        %8127 = vdwg.mxu0
        %8128 = vmatpush.msra.mxu0 0.0
        %8129 = vmatpush.msra.mxu0 0.0
        %8130 = vmatpush.msra.mxu0 0.0
        %8131 = vmatpush.msra.mxu0 0.0
        %8132 = vmatpush.msra.mxu0 0.0
        %8133 = vmatpush.msra.mxu0 0.0
        %8134 = vmatpush.msra.mxu0 0.0
        %8135 = vmatpush.msra.mxu0 0.0
        %8136 = vmatpush.msra.mxu0 0.0
        %8137 = vmatpush.msra.mxu0 0.0
        %8138 = vmatpush.msra.mxu0 0.0
        %8139 = vmatpush.msra.mxu0 0.0
        %8140 = vmatpush.msra.mxu0 0.0
        %8141 = vmatpush.msra.mxu0 0.0
        %8142 = vmatpush.msra.mxu0 0.0
        %8143 = vmatpush.msra.mxu0 %v8077
        %8144 = vmatmul.f32.gmra.mxu0 %v8086
        %v8145 = vpop.f32.mrf.mxu0
        %v8146 = vadd.f32 0.0, %v8145
        %8147 = vdwg.mxu0
        %8148 = vmatpush.msra.mxu0 0.0
        %8149 = vmatpush.msra.mxu0 0.0
        %8150 = vmatpush.msra.mxu0 0.0
        %8151 = vmatpush.msra.mxu0 0.0
        %8152 = vmatpush.msra.mxu0 0.0
        %8153 = vmatpush.msra.mxu0 0.0
        %8154 = vmatpush.msra.mxu0 0.0
        %8155 = vmatpush.msra.mxu0 0.0
        %8156 = vmatpush.msra.mxu0 0.0
        %8157 = vmatpush.msra.mxu0 0.0
        %8158 = vmatpush.msra.mxu0 0.0
        %8159 = vmatpush.msra.mxu0 0.0
        %8160 = vmatpush.msra.mxu0 0.0
        %8161 = vmatpush.msra.mxu0 0.0
        %8162 = vmatpush.msra.mxu0 0.0
        %8163 = vmatpush.msra.mxu0 %v8078
        %8164 = vmatmul.f32.gmra.mxu0 %v8086
        %v8165 = vpop.f32.mrf.mxu0
        %v8166 = vadd.f32 0.0, %v8165
        %8167 = vdwg.mxu0
        %8168 = vmatpush.msra.mxu0 0.0
        %8169 = vmatpush.msra.mxu0 0.0
        %8170 = vmatpush.msra.mxu0 0.0
        %8171 = vmatpush.msra.mxu0 0.0
        %8172 = vmatpush.msra.mxu0 0.0
        %8173 = vmatpush.msra.mxu0 0.0
        %8174 = vmatpush.msra.mxu0 0.0
        %8175 = vmatpush.msra.mxu0 0.0
        %8176 = vmatpush.msra.mxu0 0.0
        %8177 = vmatpush.msra.mxu0 0.0
        %8178 = vmatpush.msra.mxu0 0.0
        %8179 = vmatpush.msra.mxu0 0.0
        %8180 = vmatpush.msra.mxu0 0.0
        %8181 = vmatpush.msra.mxu0 0.0
        %8182 = vmatpush.msra.mxu0 0.0
        %8183 = vmatpush.msra.mxu0 %v8079
        %8184 = vmatmul.f32.gmra.mxu0 %v8086
        %v8185 = vpop.f32.mrf.mxu0
        %v8186 = vadd.f32 0.0, %v8185
        %8187 = vdwg.mxu0
        %8188 = vmatpush.msra.mxu0 0.0
        %8189 = vmatpush.msra.mxu0 0.0
        %8190 = vmatpush.msra.mxu0 0.0
        %8191 = vmatpush.msra.mxu0 0.0
        %8192 = vmatpush.msra.mxu0 0.0
        %8193 = vmatpush.msra.mxu0 0.0
        %8194 = vmatpush.msra.mxu0 0.0
        %8195 = vmatpush.msra.mxu0 0.0
        %8196 = vmatpush.msra.mxu0 0.0
        %8197 = vmatpush.msra.mxu0 0.0
        %8198 = vmatpush.msra.mxu0 0.0
        %8199 = vmatpush.msra.mxu0 0.0
        %8200 = vmatpush.msra.mxu0 0.0
        %8201 = vmatpush.msra.mxu0 0.0
        %8202 = vmatpush.msra.mxu0 0.0
        %8203 = vmatpush.msra.mxu0 %v8080
        %8204 = vmatmul.f32.gmra.mxu0 %v8086
        %v8205 = vpop.f32.mrf.mxu0
        %v8206 = vadd.f32 0.0, %v8205
        %8207 = vdwg.mxu0
        %8208 = vmatpush.msra.mxu0 0.0
        %8209 = vmatpush.msra.mxu0 0.0
        %8210 = vmatpush.msra.mxu0 0.0
        %8211 = vmatpush.msra.mxu0 0.0
        %8212 = vmatpush.msra.mxu0 0.0
        %8213 = vmatpush.msra.mxu0 0.0
        %8214 = vmatpush.msra.mxu0 0.0
        %8215 = vmatpush.msra.mxu0 0.0
        %8216 = vmatpush.msra.mxu0 0.0
        %8217 = vmatpush.msra.mxu0 0.0
        %8218 = vmatpush.msra.mxu0 0.0
        %8219 = vmatpush.msra.mxu0 0.0
        %8220 = vmatpush.msra.mxu0 0.0
        %8221 = vmatpush.msra.mxu0 0.0
        %8222 = vmatpush.msra.mxu0 0.0
        %8223 = vmatpush.msra.mxu0 %v8081
        %8224 = vmatmul.f32.gmra.mxu0 %v8086
        %v8225 = vpop.f32.mrf.mxu0
        %v8226 = vadd.f32 0.0, %v8225
        %8227 = vdwg.mxu0
        %8228 = vmatpush.msra.mxu0 0.0
        %8229 = vmatpush.msra.mxu0 0.0
        %8230 = vmatpush.msra.mxu0 0.0
        %8231 = vmatpush.msra.mxu0 0.0
        %8232 = vmatpush.msra.mxu0 0.0
        %8233 = vmatpush.msra.mxu0 0.0
        %8234 = vmatpush.msra.mxu0 0.0
        %8235 = vmatpush.msra.mxu0 0.0
        %8236 = vmatpush.msra.mxu0 0.0
        %8237 = vmatpush.msra.mxu0 0.0
        %8238 = vmatpush.msra.mxu0 0.0
        %8239 = vmatpush.msra.mxu0 0.0
        %8240 = vmatpush.msra.mxu0 0.0
        %8241 = vmatpush.msra.mxu0 0.0
        %8242 = vmatpush.msra.mxu0 0.0
        %8243 = vmatpush.msra.mxu0 %v8082
        %8244 = vmatmul.f32.gmra.mxu0 %v8086
        %v8245 = vpop.f32.mrf.mxu0
        %v8246 = vadd.f32 0.0, %v8245
        %8247 = vdwg.mxu0
        %v8248 = vadd.f32 %v8033, %v8106
        %v8249 = vadd.f32 %v8034, %v8126
        %v8250 = vadd.f32 %v8035, %v8146
        %v8251 = vadd.f32 %v8036, %v8166
        %v8252 = vadd.f32 %v8037, %v8186
        %v8253 = vadd.f32 %v8038, %v8206
        %v8254 = vadd.f32 %v8039, %v8226
        %v8255 = vadd.f32 %v8040, %v8246
        %s8256 = scalar_lea.vmem %s7, 56
        %v8257 = vld [vmem:[%s8256] sm:$0xff]
        %8258 = vrot.lane.b32.xlu0 %v7808, 96
        %v8259 = vpop.permute.xlu0 %8258
        %8260 = vrot.lane.b32.xlu0 %v7809, 96
        %v8261 = vpop.permute.xlu0 %8260
        %8262 = vrot.lane.b32.xlu0 %v7810, 96
        %v8263 = vpop.permute.xlu0 %8262
        %8264 = vrot.lane.b32.xlu0 %v7811, 96
        %v8265 = vpop.permute.xlu0 %8264
        %8266 = vrot.lane.b32.xlu0 %v7812, 96
        %v8267 = vpop.permute.xlu0 %8266
        %8268 = vrot.lane.b32.xlu0 %v7813, 96
        %v8269 = vpop.permute.xlu0 %8268
        %8270 = vrot.lane.b32.xlu0 %v7814, 96
        %v8271 = vpop.permute.xlu0 %8270
        %8272 = vrot.lane.b32.xlu0 %v7815, 96
        %v8273 = vpop.permute.xlu0 %8272
        %8274 = vrot.lane.b32.xlu0 %v7816, 96
        %v8275 = vpop.permute.xlu0 %8274
        %v8276 = vsel %vm6301, %v8259, %v8261
        %v8277 = vsel %vm6301, %v8261, %v8263
        %v8278 = vsel %vm6301, %v8263, %v8265
        %v8279 = vsel %vm6301, %v8265, %v8267
        %v8280 = vsel %vm6301, %v8267, %v8269
        %v8281 = vsel %vm6301, %v8269, %v8271
        %v8282 = vsel %vm6301, %v8271, %v8273
        %v8283 = vsel %vm6301, %v8273, %v8275
        %v8293 = vsel %vm6844, %v8257, 0
        %8295 = vmatpush.msra.mxu0 0.0
        %8296 = vmatpush.msra.mxu0 0.0
        %8297 = vmatpush.msra.mxu0 0.0
        %8298 = vmatpush.msra.mxu0 0.0
        %8299 = vmatpush.msra.mxu0 0.0
        %8300 = vmatpush.msra.mxu0 0.0
        %8301 = vmatpush.msra.mxu0 0.0
        %8302 = vmatpush.msra.mxu0 0.0
        %8303 = vmatpush.msra.mxu0 0.0
        %8304 = vmatpush.msra.mxu0 0.0
        %8305 = vmatpush.msra.mxu0 0.0
        %8306 = vmatpush.msra.mxu0 0.0
        %8307 = vmatpush.msra.mxu0 0.0
        %8308 = vmatpush.msra.mxu0 0.0
        %8309 = vmatpush.msra.mxu0 0.0
        %8310 = vmatpush.msra.mxu0 %v8276
        %8311 = vmatmul.f32.gmra.mxu0 %v8293
        %v8312 = vpop.f32.mrf.mxu0
        %v8313 = vadd.f32 0.0, %v8312
        %8314 = vdwg.mxu0
        %8315 = vmatpush.msra.mxu0 0.0
        %8316 = vmatpush.msra.mxu0 0.0
        %8317 = vmatpush.msra.mxu0 0.0
        %8318 = vmatpush.msra.mxu0 0.0
        %8319 = vmatpush.msra.mxu0 0.0
        %8320 = vmatpush.msra.mxu0 0.0
        %8321 = vmatpush.msra.mxu0 0.0
        %8322 = vmatpush.msra.mxu0 0.0
        %8323 = vmatpush.msra.mxu0 0.0
        %8324 = vmatpush.msra.mxu0 0.0
        %8325 = vmatpush.msra.mxu0 0.0
        %8326 = vmatpush.msra.mxu0 0.0
        %8327 = vmatpush.msra.mxu0 0.0
        %8328 = vmatpush.msra.mxu0 0.0
        %8329 = vmatpush.msra.mxu0 0.0
        %8330 = vmatpush.msra.mxu0 %v8277
        %8331 = vmatmul.f32.gmra.mxu0 %v8293
        %v8332 = vpop.f32.mrf.mxu0
        %v8333 = vadd.f32 0.0, %v8332
        %8334 = vdwg.mxu0
        %8335 = vmatpush.msra.mxu0 0.0
        %8336 = vmatpush.msra.mxu0 0.0
        %8337 = vmatpush.msra.mxu0 0.0
        %8338 = vmatpush.msra.mxu0 0.0
        %8339 = vmatpush.msra.mxu0 0.0
        %8340 = vmatpush.msra.mxu0 0.0
        %8341 = vmatpush.msra.mxu0 0.0
        %8342 = vmatpush.msra.mxu0 0.0
        %8343 = vmatpush.msra.mxu0 0.0
        %8344 = vmatpush.msra.mxu0 0.0
        %8345 = vmatpush.msra.mxu0 0.0
        %8346 = vmatpush.msra.mxu0 0.0
        %8347 = vmatpush.msra.mxu0 0.0
        %8348 = vmatpush.msra.mxu0 0.0
        %8349 = vmatpush.msra.mxu0 0.0
        %8350 = vmatpush.msra.mxu0 %v8278
        %8351 = vmatmul.f32.gmra.mxu0 %v8293
        %v8352 = vpop.f32.mrf.mxu0
        %v8353 = vadd.f32 0.0, %v8352
        %8354 = vdwg.mxu0
        %8355 = vmatpush.msra.mxu0 0.0
        %8356 = vmatpush.msra.mxu0 0.0
        %8357 = vmatpush.msra.mxu0 0.0
        %8358 = vmatpush.msra.mxu0 0.0
        %8359 = vmatpush.msra.mxu0 0.0
        %8360 = vmatpush.msra.mxu0 0.0
        %8361 = vmatpush.msra.mxu0 0.0
        %8362 = vmatpush.msra.mxu0 0.0
        %8363 = vmatpush.msra.mxu0 0.0
        %8364 = vmatpush.msra.mxu0 0.0
        %8365 = vmatpush.msra.mxu0 0.0
        %8366 = vmatpush.msra.mxu0 0.0
        %8367 = vmatpush.msra.mxu0 0.0
        %8368 = vmatpush.msra.mxu0 0.0
        %8369 = vmatpush.msra.mxu0 0.0
        %8370 = vmatpush.msra.mxu0 %v8279
        %8371 = vmatmul.f32.gmra.mxu0 %v8293
        %v8372 = vpop.f32.mrf.mxu0
        %v8373 = vadd.f32 0.0, %v8372
        %8374 = vdwg.mxu0
        %8375 = vmatpush.msra.mxu0 0.0
        %8376 = vmatpush.msra.mxu0 0.0
        %8377 = vmatpush.msra.mxu0 0.0
        %8378 = vmatpush.msra.mxu0 0.0
        %8379 = vmatpush.msra.mxu0 0.0
        %8380 = vmatpush.msra.mxu0 0.0
        %8381 = vmatpush.msra.mxu0 0.0
        %8382 = vmatpush.msra.mxu0 0.0
        %8383 = vmatpush.msra.mxu0 0.0
        %8384 = vmatpush.msra.mxu0 0.0
        %8385 = vmatpush.msra.mxu0 0.0
        %8386 = vmatpush.msra.mxu0 0.0
        %8387 = vmatpush.msra.mxu0 0.0
        %8388 = vmatpush.msra.mxu0 0.0
        %8389 = vmatpush.msra.mxu0 0.0
        %8390 = vmatpush.msra.mxu0 %v8280
        %8391 = vmatmul.f32.gmra.mxu0 %v8293
        %v8392 = vpop.f32.mrf.mxu0
        %v8393 = vadd.f32 0.0, %v8392
        %8394 = vdwg.mxu0
        %8395 = vmatpush.msra.mxu0 0.0
        %8396 = vmatpush.msra.mxu0 0.0
        %8397 = vmatpush.msra.mxu0 0.0
        %8398 = vmatpush.msra.mxu0 0.0
        %8399 = vmatpush.msra.mxu0 0.0
        %8400 = vmatpush.msra.mxu0 0.0
        %8401 = vmatpush.msra.mxu0 0.0
        %8402 = vmatpush.msra.mxu0 0.0
        %8403 = vmatpush.msra.mxu0 0.0
        %8404 = vmatpush.msra.mxu0 0.0
        %8405 = vmatpush.msra.mxu0 0.0
        %8406 = vmatpush.msra.mxu0 0.0
        %8407 = vmatpush.msra.mxu0 0.0
        %8408 = vmatpush.msra.mxu0 0.0
        %8409 = vmatpush.msra.mxu0 0.0
        %8410 = vmatpush.msra.mxu0 %v8281
        %8411 = vmatmul.f32.gmra.mxu0 %v8293
        %v8412 = vpop.f32.mrf.mxu0
        %v8413 = vadd.f32 0.0, %v8412
        %8414 = vdwg.mxu0
        %8415 = vmatpush.msra.mxu0 0.0
        %8416 = vmatpush.msra.mxu0 0.0
        %8417 = vmatpush.msra.mxu0 0.0
        %8418 = vmatpush.msra.mxu0 0.0
        %8419 = vmatpush.msra.mxu0 0.0
        %8420 = vmatpush.msra.mxu0 0.0
        %8421 = vmatpush.msra.mxu0 0.0
        %8422 = vmatpush.msra.mxu0 0.0
        %8423 = vmatpush.msra.mxu0 0.0
        %8424 = vmatpush.msra.mxu0 0.0
        %8425 = vmatpush.msra.mxu0 0.0
        %8426 = vmatpush.msra.mxu0 0.0
        %8427 = vmatpush.msra.mxu0 0.0
        %8428 = vmatpush.msra.mxu0 0.0
        %8429 = vmatpush.msra.mxu0 0.0
        %8430 = vmatpush.msra.mxu0 %v8282
        %8431 = vmatmul.f32.gmra.mxu0 %v8293
        %v8432 = vpop.f32.mrf.mxu0
        %v8433 = vadd.f32 0.0, %v8432
        %8434 = vdwg.mxu0
        %8435 = vmatpush.msra.mxu0 0.0
        %8436 = vmatpush.msra.mxu0 0.0
        %8437 = vmatpush.msra.mxu0 0.0
        %8438 = vmatpush.msra.mxu0 0.0
        %8439 = vmatpush.msra.mxu0 0.0
        %8440 = vmatpush.msra.mxu0 0.0
        %8441 = vmatpush.msra.mxu0 0.0
        %8442 = vmatpush.msra.mxu0 0.0
        %8443 = vmatpush.msra.mxu0 0.0
        %8444 = vmatpush.msra.mxu0 0.0
        %8445 = vmatpush.msra.mxu0 0.0
        %8446 = vmatpush.msra.mxu0 0.0
        %8447 = vmatpush.msra.mxu0 0.0
        %8448 = vmatpush.msra.mxu0 0.0
        %8449 = vmatpush.msra.mxu0 0.0
        %8450 = vmatpush.msra.mxu0 %v8283
        %8451 = vmatmul.f32.gmra.mxu0 %v8293
        %v8452 = vpop.f32.mrf.mxu0
        %v8453 = vadd.f32 0.0, %v8452
        %8454 = vdwg.mxu0
        %v8455 = vadd.f32 %v8248, %v8313
        %v8456 = vadd.f32 %v8249, %v8333
        %v8457 = vadd.f32 %v8250, %v8353
        %v8458 = vadd.f32 %v8251, %v8373
        %v8459 = vadd.f32 %v8252, %v8393
        %v8460 = vadd.f32 %v8253, %v8413
        %v8461 = vadd.f32 %v8254, %v8433
        %v8462 = vadd.f32 %v8255, %v8453
        %8463 = vrot.lane.b32.xlu0 %v7808, 95
        %v8464 = vpop.permute.xlu0 %8463
        %8465 = vrot.lane.b32.xlu0 %v7809, 95
        %v8466 = vpop.permute.xlu0 %8465
        %8467 = vrot.lane.b32.xlu0 %v7810, 95
        %v8468 = vpop.permute.xlu0 %8467
        %8469 = vrot.lane.b32.xlu0 %v7811, 95
        %v8470 = vpop.permute.xlu0 %8469
        %8471 = vrot.lane.b32.xlu0 %v7812, 95
        %v8472 = vpop.permute.xlu0 %8471
        %8473 = vrot.lane.b32.xlu0 %v7813, 95
        %v8474 = vpop.permute.xlu0 %8473
        %8475 = vrot.lane.b32.xlu0 %v7814, 95
        %v8476 = vpop.permute.xlu0 %8475
        %8477 = vrot.lane.b32.xlu0 %v7815, 95
        %v8478 = vpop.permute.xlu0 %8477
        %8479 = vrot.lane.b32.xlu0 %v7816, 95
        %v8480 = vpop.permute.xlu0 %8479
        %v8481 = vsel %vm6515, %v8464, %v8466
        %v8482 = vsel %vm6515, %v8466, %v8468
        %v8483 = vsel %vm6515, %v8468, %v8470
        %v8484 = vsel %vm6515, %v8470, %v8472
        %v8485 = vsel %vm6515, %v8472, %v8474
        %v8486 = vsel %vm6515, %v8474, %v8476
        %v8487 = vsel %vm6515, %v8476, %v8478
        %v8488 = vsel %vm6515, %v8478, %v8480
        %v8497 = vsel %vm5295, %v8481, 0.0
        %v8498 = vsel %vm5296, %v8482, 0.0
        %v8499 = vsel %vm5297, %v8483, 0.0
        %v8500 = vsel %vm5298, %v8484, 0.0
        %v8501 = vsel %vm5299, %v8485, 0.0
        %v8502 = vsel %vm5300, %v8486, 0.0
        %v8503 = vsel %vm5301, %v8487, 0.0
        %v8504 = vsel %vm5302, %v8488, 0.0
        %s8505 = scalar_lea.vmem %s7, 64
        %v8506 = vld [vmem:[%s8505] sm:$0xff]
        %v8508 = vsel %vm6844, %v8506, 0
        %8510 = vmatpush.msra.mxu0 0.0
        %8511 = vmatpush.msra.mxu0 0.0
        %8512 = vmatpush.msra.mxu0 0.0
        %8513 = vmatpush.msra.mxu0 0.0
        %8514 = vmatpush.msra.mxu0 0.0
        %8515 = vmatpush.msra.mxu0 0.0
        %8516 = vmatpush.msra.mxu0 0.0
        %8517 = vmatpush.msra.mxu0 0.0
        %8518 = vmatpush.msra.mxu0 0.0
        %8519 = vmatpush.msra.mxu0 0.0
        %8520 = vmatpush.msra.mxu0 0.0
        %8521 = vmatpush.msra.mxu0 0.0
        %8522 = vmatpush.msra.mxu0 0.0
        %8523 = vmatpush.msra.mxu0 0.0
        %8524 = vmatpush.msra.mxu0 0.0
        %8525 = vmatpush.msra.mxu0 %v8497
        %8526 = vmatmul.f32.gmra.mxu0 %v8508
        %v8527 = vpop.f32.mrf.mxu0
        %v8528 = vadd.f32 0.0, %v8527
        %8529 = vdwg.mxu0
        %8530 = vmatpush.msra.mxu0 0.0
        %8531 = vmatpush.msra.mxu0 0.0
        %8532 = vmatpush.msra.mxu0 0.0
        %8533 = vmatpush.msra.mxu0 0.0
        %8534 = vmatpush.msra.mxu0 0.0
        %8535 = vmatpush.msra.mxu0 0.0
        %8536 = vmatpush.msra.mxu0 0.0
        %8537 = vmatpush.msra.mxu0 0.0
        %8538 = vmatpush.msra.mxu0 0.0
        %8539 = vmatpush.msra.mxu0 0.0
        %8540 = vmatpush.msra.mxu0 0.0
        %8541 = vmatpush.msra.mxu0 0.0
        %8542 = vmatpush.msra.mxu0 0.0
        %8543 = vmatpush.msra.mxu0 0.0
        %8544 = vmatpush.msra.mxu0 0.0
        %8545 = vmatpush.msra.mxu0 %v8498
        %8546 = vmatmul.f32.gmra.mxu0 %v8508
        %v8547 = vpop.f32.mrf.mxu0
        %v8548 = vadd.f32 0.0, %v8547
        %8549 = vdwg.mxu0
        %8550 = vmatpush.msra.mxu0 0.0
        %8551 = vmatpush.msra.mxu0 0.0
        %8552 = vmatpush.msra.mxu0 0.0
        %8553 = vmatpush.msra.mxu0 0.0
        %8554 = vmatpush.msra.mxu0 0.0
        %8555 = vmatpush.msra.mxu0 0.0
        %8556 = vmatpush.msra.mxu0 0.0
        %8557 = vmatpush.msra.mxu0 0.0
        %8558 = vmatpush.msra.mxu0 0.0
        %8559 = vmatpush.msra.mxu0 0.0
        %8560 = vmatpush.msra.mxu0 0.0
        %8561 = vmatpush.msra.mxu0 0.0
        %8562 = vmatpush.msra.mxu0 0.0
        %8563 = vmatpush.msra.mxu0 0.0
        %8564 = vmatpush.msra.mxu0 0.0
        %8565 = vmatpush.msra.mxu0 %v8499
        %8566 = vmatmul.f32.gmra.mxu0 %v8508
        %v8567 = vpop.f32.mrf.mxu0
        %v8568 = vadd.f32 0.0, %v8567
        %8569 = vdwg.mxu0
        %8570 = vmatpush.msra.mxu0 0.0
        %8571 = vmatpush.msra.mxu0 0.0
        %8572 = vmatpush.msra.mxu0 0.0
        %8573 = vmatpush.msra.mxu0 0.0
        %8574 = vmatpush.msra.mxu0 0.0
        %8575 = vmatpush.msra.mxu0 0.0
        %8576 = vmatpush.msra.mxu0 0.0
        %8577 = vmatpush.msra.mxu0 0.0
        %8578 = vmatpush.msra.mxu0 0.0
        %8579 = vmatpush.msra.mxu0 0.0
        %8580 = vmatpush.msra.mxu0 0.0
        %8581 = vmatpush.msra.mxu0 0.0
        %8582 = vmatpush.msra.mxu0 0.0
        %8583 = vmatpush.msra.mxu0 0.0
        %8584 = vmatpush.msra.mxu0 0.0
        %8585 = vmatpush.msra.mxu0 %v8500
        %8586 = vmatmul.f32.gmra.mxu0 %v8508
        %v8587 = vpop.f32.mrf.mxu0
        %v8588 = vadd.f32 0.0, %v8587
        %8589 = vdwg.mxu0
        %8590 = vmatpush.msra.mxu0 0.0
        %8591 = vmatpush.msra.mxu0 0.0
        %8592 = vmatpush.msra.mxu0 0.0
        %8593 = vmatpush.msra.mxu0 0.0
        %8594 = vmatpush.msra.mxu0 0.0
        %8595 = vmatpush.msra.mxu0 0.0
        %8596 = vmatpush.msra.mxu0 0.0
        %8597 = vmatpush.msra.mxu0 0.0
        %8598 = vmatpush.msra.mxu0 0.0
        %8599 = vmatpush.msra.mxu0 0.0
        %8600 = vmatpush.msra.mxu0 0.0
        %8601 = vmatpush.msra.mxu0 0.0
        %8602 = vmatpush.msra.mxu0 0.0
        %8603 = vmatpush.msra.mxu0 0.0
        %8604 = vmatpush.msra.mxu0 0.0
        %8605 = vmatpush.msra.mxu0 %v8501
        %8606 = vmatmul.f32.gmra.mxu0 %v8508
        %v8607 = vpop.f32.mrf.mxu0
        %v8608 = vadd.f32 0.0, %v8607
        %8609 = vdwg.mxu0
        %8610 = vmatpush.msra.mxu0 0.0
        %8611 = vmatpush.msra.mxu0 0.0
        %8612 = vmatpush.msra.mxu0 0.0
        %8613 = vmatpush.msra.mxu0 0.0
        %8614 = vmatpush.msra.mxu0 0.0
        %8615 = vmatpush.msra.mxu0 0.0
        %8616 = vmatpush.msra.mxu0 0.0
        %8617 = vmatpush.msra.mxu0 0.0
        %8618 = vmatpush.msra.mxu0 0.0
        %8619 = vmatpush.msra.mxu0 0.0
        %8620 = vmatpush.msra.mxu0 0.0
        %8621 = vmatpush.msra.mxu0 0.0
        %8622 = vmatpush.msra.mxu0 0.0
        %8623 = vmatpush.msra.mxu0 0.0
        %8624 = vmatpush.msra.mxu0 0.0
        %8625 = vmatpush.msra.mxu0 %v8502
        %8626 = vmatmul.f32.gmra.mxu0 %v8508
        %v8627 = vpop.f32.mrf.mxu0
        %v8628 = vadd.f32 0.0, %v8627
        %8629 = vdwg.mxu0
        %8630 = vmatpush.msra.mxu0 0.0
        %8631 = vmatpush.msra.mxu0 0.0
        %8632 = vmatpush.msra.mxu0 0.0
        %8633 = vmatpush.msra.mxu0 0.0
        %8634 = vmatpush.msra.mxu0 0.0
        %8635 = vmatpush.msra.mxu0 0.0
        %8636 = vmatpush.msra.mxu0 0.0
        %8637 = vmatpush.msra.mxu0 0.0
        %8638 = vmatpush.msra.mxu0 0.0
        %8639 = vmatpush.msra.mxu0 0.0
        %8640 = vmatpush.msra.mxu0 0.0
        %8641 = vmatpush.msra.mxu0 0.0
        %8642 = vmatpush.msra.mxu0 0.0
        %8643 = vmatpush.msra.mxu0 0.0
        %8644 = vmatpush.msra.mxu0 0.0
        %8645 = vmatpush.msra.mxu0 %v8503
        %8646 = vmatmul.f32.gmra.mxu0 %v8508
        %v8647 = vpop.f32.mrf.mxu0
        %v8648 = vadd.f32 0.0, %v8647
        %8649 = vdwg.mxu0
        %8650 = vmatpush.msra.mxu0 0.0
        %8651 = vmatpush.msra.mxu0 0.0
        %8652 = vmatpush.msra.mxu0 0.0
        %8653 = vmatpush.msra.mxu0 0.0
        %8654 = vmatpush.msra.mxu0 0.0
        %8655 = vmatpush.msra.mxu0 0.0
        %8656 = vmatpush.msra.mxu0 0.0
        %8657 = vmatpush.msra.mxu0 0.0
        %8658 = vmatpush.msra.mxu0 0.0
        %8659 = vmatpush.msra.mxu0 0.0
        %8660 = vmatpush.msra.mxu0 0.0
        %8661 = vmatpush.msra.mxu0 0.0
        %8662 = vmatpush.msra.mxu0 0.0
        %8663 = vmatpush.msra.mxu0 0.0
        %8664 = vmatpush.msra.mxu0 0.0
        %8665 = vmatpush.msra.mxu0 %v8504
        %8666 = vmatmul.f32.gmra.mxu0 %v8508
        %v8667 = vpop.f32.mrf.mxu0
        %v8668 = vadd.f32 0.0, %v8667
        %8669 = vdwg.mxu0
        %v8670 = vadd.f32 %v8455, %v8528
        %v8671 = vadd.f32 %v8456, %v8548
        %v8672 = vadd.f32 %v8457, %v8568
        %v8673 = vadd.f32 %v8458, %v8588
        %v8674 = vadd.f32 %v8459, %v8608
        %v8675 = vadd.f32 %v8460, %v8628
        %v8676 = vadd.f32 %v8461, %v8648
        %v8677 = vadd.f32 %v8462, %v8668
        %v8678 = vld [vmem:[%s8] sm:$0xff]
        %8680 = vset.pattern.permute.xlu0 0
        %8681 = vperm.xlu0 %8680, %v8678
        %v8682 = vpop.permute.xlu0 %8681
        %v8684 = vmul.f32 %v8670, %v8682
        %v8685 = vmul.f32 %v8671, %v8682
        %v8686 = vmul.f32 %v8672, %v8682
        %v8687 = vmul.f32 %v8673, %v8682
        %v8688 = vmul.f32 %v8674, %v8682
        %v8689 = vmul.f32 %v8675, %v8682
        %v8690 = vmul.f32 %v8676, %v8682
        %v8691 = vmul.f32 %v8677, %v8682
        %v8692 = vld [vmem:[%s9] sm:$0xff]
        %8694 = vset.pattern.permute.xlu0 0
        %8695 = vperm.xlu0 %8694, %v8692
        %v8696 = vpop.permute.xlu0 %8695
        %v8698 = vadd.f32 %v8684, %v8696
        %v8699 = vadd.f32 %v8685, %v8696
        %v8700 = vadd.f32 %v8686, %v8696
        %v8701 = vadd.f32 %v8687, %v8696
        %v8702 = vadd.f32 %v8688, %v8696
        %v8703 = vadd.f32 %v8689, %v8696
        %v8704 = vadd.f32 %v8690, %v8696
        %v8705 = vadd.f32 %v8691, %v8696
        %v8706 = vld [vmem:[%s421] sm:$0xff]
        %v8707 = vld [vmem:[%s421 + $0x8] sm:$0xff]
        %v8708 = vld [vmem:[%s421 + $0x10] sm:$0xff]
        %v8709 = vld [vmem:[%s421 + $0x18] sm:$0xff]
        %v8710 = vld [vmem:[%s421 + $0x20] sm:$0xff]
        %v8711 = vld [vmem:[%s421 + $0x28] sm:$0xff]
        %v8712 = vld [vmem:[%s421 + $0x30] sm:$0xff]
        %v8713 = vld [vmem:[%s421 + $0x38] sm:$0xff]
        %v8714 = vadd.f32 %v8698, %v8706
        %v8715 = vadd.f32 %v8699, %v8707
        %v8716 = vadd.f32 %v8700, %v8708
        %v8717 = vadd.f32 %v8701, %v8709
        %v8718 = vadd.f32 %v8702, %v8710
        %v8719 = vadd.f32 %v8703, %v8711
        %v8720 = vadd.f32 %v8704, %v8712
        %v8721 = vadd.f32 %v8705, %v8713
        %v8722 = vmax.f32 %v8714, 0.0
        %v8723 = vmax.f32 %v8715, 0.0
        %v8724 = vmax.f32 %v8716, 0.0
        %v8725 = vmax.f32 %v8717, 0.0
        %v8726 = vmax.f32 %v8718, 0.0
        %v8727 = vmax.f32 %v8719, 0.0
        %v8728 = vmax.f32 %v8720, 0.0
        %v8729 = vmax.f32 %v8721, 0.0
        %8730 = vst [vmem:[%s421] sm:$0xff] %v8722
        %8731 = vst [vmem:[%s421 + $0x8] sm:$0xff] %v8723
        %8732 = vst [vmem:[%s421 + $0x10] sm:$0xff] %v8724
        %8733 = vst [vmem:[%s421 + $0x18] sm:$0xff] %v8725
        %8734 = vst [vmem:[%s421 + $0x20] sm:$0xff] %v8726
        %8735 = vst [vmem:[%s421 + $0x28] sm:$0xff] %v8727
        %8736 = vst [vmem:[%s421 + $0x30] sm:$0xff] %v8728
        %8737 = vst [vmem:[%s421 + $0x38] sm:$0xff] %v8729
        %s8738 = sand.u32 %s296, 1
        %s8739 = scalar_lea.sflag [#allocation4], %s8738
        %s8740 = sand.u32 %s296, 1
        %s8741 = smul.addr %s8740, 64
        %s8742 = scalar_lea.vmem [#allocation3], %s8741
        // Predicated region
        $region69: #{tpu_custom_call.1} parent=67 // pred_check
          %p8743 = pneg %p306
        $region70: #{tpu_custom_call.1} parent=67 // pred_check_branch
          %8745 = sbr.rel (%p8743) target = $region72
        $region71: #{tpu_custom_call.1} parent=67 // pred_region
          %8747 = vsyncadd %s8739, 0
          %s8748 = smul.addr %s26, 8
          %s8749 = smul.addr %s8748, 8
          %s8750 = scalar_lea.hbm %s12, %s8749
          %s8752 = sshll.u32 %s8742, 4
          %s8753 = int_to_ptr.vmem [resolvable:$true] %s8752
          %s8754 = sshll.u32 %s8750, 4
          %s8755 = int_to_ptr.hbm [resolvable:$true] %s8754
          %8757 = dma.vmem_to_hbm [thread:$0]  %s8753, 1024, %s8755, %s8739
        $region72: #{tpu_custom_call.1} parent=67 // pred_fallthru
          _
      $region68: #{tpu_custom_call.1} parent=5 // pred_fallthru
        _
      %p8758 = scmp.le.s32.totalorder 2, %s21
      // Predicated region
      $region73: #{tpu_custom_call.1} parent=5 // pred_check
        %p8759 = pneg %p8758
      $region74: #{tpu_custom_call.1} parent=5 // pred_check_branch
        %8761 = sbr.rel (%p8759) target = $region76
      $region75: #{tpu_custom_call.1} parent=5 // pred_region
        %s8762 = ssub.s32 %s21, 2
        // Predicated region
        $region77: #{tpu_custom_call.1} parent=75 // pred_check
          %p8763 = pneg %p312
        $region78: #{tpu_custom_call.1} parent=75 // pred_check_branch
          %8765 = sbr.rel (%p8763) target = $region80
        $region79: #{tpu_custom_call.1} parent=75 // pred_region
          %s8766 = sand.u32 %s297, 1
          %s8767 = scalar_lea.sflag [#allocation4], %s8766
          %s8768 = sand.u32 %s297, 1
          %s8769 = smul.addr %s8768, 64
          %s8770 = scalar_lea.vmem [#allocation3], %s8769
          %8772 = dma.done %s8767, 1024
        $region80: #{tpu_custom_call.1} parent=75 // pred_fallthru
          _
      $region76: #{tpu_custom_call.1} parent=5 // pred_fallthru
        _
    $region6: #{tpu_custom_call.1} parent=1 // loop_footer
      %s25 = sadd.s32 1, %s21
    $region7: #{tpu_custom_call.1} parent=1 // loop_footer_branch
      %20 = sbr.rel target = $region3
    $region8: #{tpu_custom_call.1} parent=1 // loop_exit
      _
    %8773 = vsyncpa [#allocation4], 1
    %s8774 = scalar_lea.sflag [#allocation4], 1
    %8775 = vsyncpa %s8774, 1

</llo_original>
